<compile_context>
chip_gen: v5e
topology: v5e:2x2
jax: 0.10.0
libtpu: 0.0.40
codegen_flags: <defaults>
</compile_context>

<pallas_src>
import math

import jax
import jax.numpy as jnp
from jax.experimental import pallas as pl
from jax.experimental.pallas import tpu as pltpu


N_BRANCH_LAYERS = 2  # conv layers per (SMILES / Protein) branch


# ----------------------------------------------------------------------------
# Network structure (static spec)
# ----------------------------------------------------------------------------
def make_net_spec(fs, fp):
    """Per-conv-layer static spec, in execution order:
       [smiles0, smiles1, protein0, protein1, trunk0..trunk7]."""
    C = fs + fp
    specs = [
        dict(kh=11, pad=5, win=28, f=fs, pool=False),   # cnn_SMILES conv1
        dict(kh=7,  pad=3, win=fs, f=fs, pool=True),    # cnn_SMILES conv2 + pool
        dict(kh=11, pad=5, win=20, f=fp, pool=False),   # cnn_Protein conv1
        dict(kh=7,  pad=3, win=fp, f=fp, pool=True),    # cnn_Protein conv2 + pool
        dict(kh=7,  pad=3, win=C,  f=C,  pool=True),    # trunk conv1 + pool
        dict(kh=7,  pad=3, win=C,  f=C,  pool=True),    # trunk conv2 + pool
    ]
    specs += [dict(kh=3, pad=1, win=C, f=C, pool=False) for _ in range(5)]
    specs += [dict(kh=3, pad=1, win=C, f=C, pool=True)]  # trunk conv8 + pool
    return specs


def tower_seq_lens(specs, L):
    """Input sequence length of each conv layer (same order as specs) and the
       final sequence length after the last pool."""
    seq = []
    T = L
    for s in specs[:N_BRANCH_LAYERS]:                      # SMILES branch
        seq.append(T)
        if s['pool']:
            T //= 3
    t_branch = T
    T = L
    for s in specs[N_BRANCH_LAYERS:2 * N_BRANCH_LAYERS]:   # Protein branch
        seq.append(T)
        if s['pool']:
            T //= 3
    assert T == t_branch
    for s in specs[2 * N_BRANCH_LAYERS:]:                  # trunk
        seq.append(T)
        if s['pool']:
            T //= 3
    return seq, T


# ----------------------------------------------------------------------------
# Fused conv-tower kernel (12x Conv+BN+ReLU, 4x MaxPool, concat) — one call
# ----------------------------------------------------------------------------
def make_tower_kernel(specs, L):
    n_conv = len(specs)

    def kernel(*args):
        xs_ref, xp_ref = args[0], args[1]
        w_refs = args[2:2 + n_conv]                       # (kh, win, f) bf16
        bn_refs = args[2 + n_conv:2 + 2 * n_conv]         # (2, f) f32 [scale; shift]
        o_ref = args[2 + 2 * n_conv]                      # (t_final, C) f32
        pad_ref = args[2 + 2 * n_conv + 1]                # VMEM scratch (padded input)
        buf_ref = args[2 + 2 * n_conv + 2]                # VMEM scratch (pre-pool staging)
        lane_w = pad_ref.shape[1]

        def conv_bn_relu_pool(h, T, idx):
            s = specs[idx]
            kh, pad, win, f = s['kh'], s['pad'], s['win'], s['f']

            # ---- stage zero-halo-padded input in VMEM (in-kernel padding) ----
            if pad > 0:
                zeros = jnp.zeros((pad, lane_w), pad_ref.dtype)
                pad_ref[0:pad, :] = zeros
                pad_ref[pad + T:pad + T + pad, :] = zeros
            pad_ref[pad:pad + T, 0:win] = h

            # ---- conv as kh shifted MXU matmuls: bf16 operands, f32 acc ----
            acc = jnp.zeros((T, f), jnp.float32)
            for d in range(kh):
                x_tap = pad_ref[d:d + T, 0:win].astype(jnp.bfloat16)
                acc = acc + jnp.dot(x_tap, w_refs[idx][d],
                                    preferred_element_type=jnp.float32)

            # ---- folded BatchNorm (inference) + ReLU epilogue in f32 ----
            scale = bn_refs[idx][0:1, :]
            shift = bn_refs[idx][1:2, :]
            h = jnp.maximum(acc * scale + shift, 0.0)

            # ---- fused MaxPool2d((3,1),(3,1)) over the sequence axis ----
            if s['pool']:
                To = T // 3
                buf_ref[0:T, 0:f] = h
                p0 = buf_ref[pl.ds(0, To, stride=3), pl.ds(0, f)]
                p1 = buf_ref[pl.ds(1, To, stride=3), pl.ds(0, f)]
                p2 = buf_ref[pl.ds(2, To, stride=3), pl.ds(0, f)]
                h = jnp.maximum(jnp.maximum(p0, p1), p2)
                T = To
            return h, T

        # cnn_SMILES
        h, T = xs_ref[...], L
        for i in range(N_BRANCH_LAYERS):
            h, T = conv_bn_relu_pool(h, T, i)
        h_smiles = h                                       # (L//3, fs)

        # cnn_Protein
        h, T = xp_ref[...], L
        for i in range(N_BRANCH_LAYERS, 2 * N_BRANCH_LAYERS):
            h, T = conv_bn_relu_pool(h, T, i)
        h_protein = h                                      # (L//3, fp)

        # torch.cat(dim=3) -> concat along the channel (lane) axis
        h = jnp.concatenate([h_smiles, h_protein], axis=-1)

        # cnn_layers trunk
        for i in range(2 * N_BRANCH_LAYERS, n_conv):
            h, T = conv_bn_relu_pool(h, T, i)

        o_ref[...] = h.astype(o_ref.dtype)                 # (t_final, C)

    return kernel


def conv_tower(x_smiles, x_protein, conv_params, specs):
    """x_smiles: (B, L, 28) f32, x_protein: (B, L, 20) f32 -> (B, t_final, C) f32."""
    B, L, win_s = x_smiles.shape
    _, _, win_p = x_protein.shape
    n_conv = len(specs)
    seq_lens, t_final = tower_seq_lens(specs, L)
    C = specs[-1]['f']

    pad_rows = max(seq_lens[i] + 2 * specs[i]['pad'] for i in range(n_conv))
    pad_rows = ((pad_rows + 7) // 8) * 8
    lane_w = max(max(s['win'], s['f']) for s in specs)
    lane_w = ((lane_w + 127) // 128) * 128

    kernel = make_tower_kernel(specs, L)

    in_specs = [
        pl.BlockSpec((None, L, win_s), lambda b: (b, 0, 0)),
        pl.BlockSpec((None, L, win_p), lambda b: (b, 0, 0)),
    ]
    args = [x_smiles, x_protein]
    for p in conv_params:
        in_specs.append(pl.BlockSpec(p['w'].shape, lambda b: (0, 0, 0)))
        args.append(p['w'])
    for p in conv_params:
        in_specs.append(pl.BlockSpec(p['bn'].shape, lambda b: (0, 0)))
        args.append(p['bn'])

    flops = 2 * B * sum(seq_lens[i] * specs[i]['kh'] * specs[i]['win'] * specs[i]['f']
                        for i in range(n_conv))
    bytes_accessed = (x_smiles.size * x_smiles.dtype.itemsize
                      + x_protein.size * x_protein.dtype.itemsize
                      + B * t_final * C * 4
                      + sum(p['w'].size * p['w'].dtype.itemsize
                            + p['bn'].size * p['bn'].dtype.itemsize
                            for p in conv_params))

    return pl.pallas_call(
        kernel,
        out_shape=jax.ShapeDtypeStruct((B, t_final, C), jnp.float32),
        grid_spec=pltpu.PrefetchScalarGridSpec(
            num_scalar_prefetch=0,
            grid=(B,),
            in_specs=in_specs,
            out_specs=pl.BlockSpec((None, t_final, C), lambda b: (b, 0, 0)),
            scratch_shapes=[
                pltpu.VMEM((pad_rows, lane_w), jnp.float32),   # padded layer input
                pltpu.VMEM((pad_rows, lane_w), jnp.float32),   # pre-pool staging
            ],
        ),
        compiler_params=pltpu.CompilerParams(
            dimension_semantics=("parallel",)),
        cost_estimate=pl.CostEstimate(flops=int(flops), transcendentals=0,
                                      bytes_accessed=int(bytes_accessed)),
    )(*args)


# ----------------------------------------------------------------------------
# Fused MLP head kernel (Linear x4, Dropout = identity in eval mode)
# ----------------------------------------------------------------------------
def mlp_kernel(*args):
    x_ref = args[0]
    o_ref = args[-1]
    wb = args[1:-1]
    h = x_ref[...]                                          # (B, D) f32, VMEM-resident
    for i in range(len(wb) // 2):
        w_ref, b_ref = wb[2 * i], wb[2 * i + 1]
        h = jnp.dot(h.astype(w_ref.dtype), w_ref[...],
                    preferred_element_type=jnp.float32) + b_ref[...]
        # Dropout(0.5) after the hidden Linears is eval-mode identity.
    o_ref[...] = h


def mlp_head(x, linear_params):
    """x: (B, D) f32; linear_params: list of (w_bf16 (Din,Dout), b_f32 (1,Dout))."""
    B = x.shape[0]
    args = [x]
    flops = 0
    bytes_accessed = x.size * x.dtype.itemsize
    for (w, b) in linear_params:
        args.append(w)
        args.append(b)
        flops += 2 * B * w.shape[0] * w.shape[1]
        bytes_accessed += w.size * w.dtype.itemsize + b.size * b.dtype.itemsize
    out_dim = linear_params[-1][0].shape[1]
    bytes_accessed += B * out_dim * 4
    return pl.pallas_call(
        mlp_kernel,
        out_shape=jax.ShapeDtypeStruct((B, out_dim), jnp.float32),
        cost_estimate=pl.CostEstimate(flops=int(flops), transcendentals=0,
                                      bytes_accessed=int(bytes_accessed)),
    )(*args)


# ----------------------------------------------------------------------------
# Parameter construction (deterministic, synthetic)
# ----------------------------------------------------------------------------
def make_conv_bn(key, kh, win, f, eps=1e-5):
    ks = jax.random.split(key, 6)
    # PyTorch Conv2d weight is (F, 1, kh, Win); store it tap-major (kh, Win, F), bf16.
    w = jax.random.normal(ks[0], (f, kh, win), jnp.float32) / math.sqrt(kh * win)
    bias = 0.1 * jax.random.normal(ks[1], (f,), jnp.float32)
    gamma = 1.0 + 0.1 * jax.random.normal(ks[2], (f,), jnp.float32)
    beta = 0.1 * jax.random.normal(ks[3], (f,), jnp.float32)
    mean = 0.1 * jax.random.normal(ks[4], (f,), jnp.float32)
    var = jnp.abs(jax.random.normal(ks[5], (f,), jnp.float32)) + 0.5
    s = gamma / jnp.sqrt(var + eps)
    return dict(
        w=jnp.transpose(w, (1, 2, 0)).astype(jnp.bfloat16),     # (kh, Win, F)
        bn=jnp.stack([s, (bias - mean) * s + beta], axis=0),    # (2, F) [scale; shift]
    )


def init_params(key, fs, fp, L, hidden):
    specs = make_net_spec(fs, fp)
    keys = jax.random.split(key, 32)
    ki = iter(keys)

    conv = [make_conv_bn(next(ki), s['kh'], s['win'], s['f']) for s in specs]

    _, t_final = tower_seq_lens(specs, L)
    C = fs + fp
    D = C * t_final

    dims = [D, hidden, hidden, hidden, 1]
    linear = []
    for i in range(4):
        kw, kb = jax.random.split(next(ki))
        w = (jax.random.normal(kw, (dims[i], dims[i + 1]), jnp.float32)
             / math.sqrt(dims[i])).astype(jnp.bfloat16)
        b = 0.1 * jax.random.normal(kb, (1, dims[i + 1]), jnp.float32)
        linear.append((w, b))

    return dict(conv=conv, linear=linear), specs


# ----------------------------------------------------------------------------
# Forward pass (mirrors Net.forward)
# ----------------------------------------------------------------------------
def net_forward(x, params, specs):
    # x arrives in PyTorch NCHW shape (B, 1, L, 48); squeeze the channel.
    B = x.shape[0]
    x = x[:, 0]                           # (B, L, 48), layout (B, T, F)
    x_smiles = x[:, :, 0:28]
    x_protein = x[:, :, 28:]

    feats = conv_tower(x_smiles, x_protein, params['conv'], specs)  # (B, t, C)

    # PyTorch flattens (B, C, t, 1) row-major -> channel-major order.
    _, t, c = feats.shape
    flat = jnp.transpose(feats, (0, 2, 1)).reshape(B, c * t)

    return mlp_head(flat, params['linear'])                          # (B, 1)


# ----------------------------------------------------------------------------
if __name__ == "__main__":
    B, L = 2, 81                       # small sequence length (4 pools of 3 -> t=1)
    n_smiles_filters = 64              # scaled-down stand-ins for 128/128
    n_protein_filters = 64             # (keeps C = 128 lane-dense)
    hidden = 256                       # scaled-down stand-in for 2048

    key = jax.random.PRNGKey(0)
    kparams, kx = jax.random.split(key)
    params, specs = init_params(kparams, n_smiles_filters, n_protein_filters, L, hidden)

    x = jax.random.normal(kx, (B, 1, L, 48), jnp.float32)   # NCHW, W = 28 + 20

    out = net_forward(x, params, specs)
    out = jax.block_until_ready(out)
    assert out.shape == (B, 1), out.shape
    assert bool(jnp.all(jnp.isfinite(out)))
    print("KERNEL_OK")
</pallas_src>

<mosaic_0001>
module attributes {stable_mosaic.version = 11 : i64} {
  func.func @kernel(%arg0: i32, %arg1: memref<1x81x28xf32, #tpu.memory_space<vmem>>, %arg2: memref<1x81x20xf32, #tpu.memory_space<vmem>>, %arg3: memref<11x28x64xbf16, #tpu.memory_space<vmem>>, %arg4: memref<7x64x64xbf16, #tpu.memory_space<vmem>>, %arg5: memref<11x20x64xbf16, #tpu.memory_space<vmem>>, %arg6: memref<7x64x64xbf16, #tpu.memory_space<vmem>>, %arg7: memref<7x128x128xbf16, #tpu.memory_space<vmem>>, %arg8: memref<7x128x128xbf16, #tpu.memory_space<vmem>>, %arg9: memref<3x128x128xbf16, #tpu.memory_space<vmem>>, %arg10: memref<3x128x128xbf16, #tpu.memory_space<vmem>>, %arg11: memref<3x128x128xbf16, #tpu.memory_space<vmem>>, %arg12: memref<3x128x128xbf16, #tpu.memory_space<vmem>>, %arg13: memref<3x128x128xbf16, #tpu.memory_space<vmem>>, %arg14: memref<3x128x128xbf16, #tpu.memory_space<vmem>>, %arg15: memref<2x64xf32, #tpu.memory_space<vmem>>, %arg16: memref<2x64xf32, #tpu.memory_space<vmem>>, %arg17: memref<2x64xf32, #tpu.memory_space<vmem>>, %arg18: memref<2x64xf32, #tpu.memory_space<vmem>>, %arg19: memref<2x128xf32, #tpu.memory_space<vmem>>, %arg20: memref<2x128xf32, #tpu.memory_space<vmem>>, %arg21: memref<2x128xf32, #tpu.memory_space<vmem>>, %arg22: memref<2x128xf32, #tpu.memory_space<vmem>>, %arg23: memref<2x128xf32, #tpu.memory_space<vmem>>, %arg24: memref<2x128xf32, #tpu.memory_space<vmem>>, %arg25: memref<2x128xf32, #tpu.memory_space<vmem>>, %arg26: memref<2x128xf32, #tpu.memory_space<vmem>>, %arg27: memref<1x1x128xf32, #tpu.memory_space<vmem>>, %arg28: memref<96x128xf32, #tpu.memory_space<vmem>>, %arg29: memref<96x128xf32, #tpu.memory_space<vmem>>) attributes {dimension_semantics = [#tpu.dimension_semantics<parallel>], iteration_bounds = array<i64: 2>, scalar_prefetch = 0 : i64, scratch_operands = 2 : i64, tpu.core_type = #tpu.core_type<tc>, window_params = [{transform_indices = @transform_0, window_bounds = array<i64: 1, 81, 28>}, {transform_indices = @transform_1, window_bounds = array<i64: 1, 81, 20>}, {pipeline_mode = #tpu.pipeline_mode<synchronous>, transform_indices = @transform_2, window_bounds = array<i64: 11, 28, 64>}, {pipeline_mode = #tpu.pipeline_mode<synchronous>, transform_indices = @transform_3, window_bounds = array<i64: 7, 64, 64>}, {pipeline_mode = #tpu.pipeline_mode<synchronous>, transform_indices = @transform_4, window_bounds = array<i64: 11, 20, 64>}, {pipeline_mode = #tpu.pipeline_mode<synchronous>, transform_indices = @transform_5, window_bounds = array<i64: 7, 64, 64>}, {pipeline_mode = #tpu.pipeline_mode<synchronous>, transform_indices = @transform_6, window_bounds = array<i64: 7, 128, 128>}, {pipeline_mode = #tpu.pipeline_mode<synchronous>, transform_indices = @transform_7, window_bounds = array<i64: 7, 128, 128>}, {pipeline_mode = #tpu.pipeline_mode<synchronous>, transform_indices = @transform_8, window_bounds = array<i64: 3, 128, 128>}, {pipeline_mode = #tpu.pipeline_mode<synchronous>, transform_indices = @transform_9, window_bounds = array<i64: 3, 128, 128>}, {pipeline_mode = #tpu.pipeline_mode<synchronous>, transform_indices = @transform_10, window_bounds = array<i64: 3, 128, 128>}, {pipeline_mode = #tpu.pipeline_mode<synchronous>, transform_indices = @transform_11, window_bounds = array<i64: 3, 128, 128>}, {pipeline_mode = #tpu.pipeline_mode<synchronous>, transform_indices = @transform_12, window_bounds = array<i64: 3, 128, 128>}, {pipeline_mode = #tpu.pipeline_mode<synchronous>, transform_indices = @transform_13, window_bounds = array<i64: 3, 128, 128>}, {pipeline_mode = #tpu.pipeline_mode<synchronous>, transform_indices = @transform_14, window_bounds = array<i64: 2, 64>}, {pipeline_mode = #tpu.pipeline_mode<synchronous>, transform_indices = @transform_15, window_bounds = array<i64: 2, 64>}, {pipeline_mode = #tpu.pipeline_mode<synchronous>, transform_indices = @transform_16, window_bounds = array<i64: 2, 64>}, {pipeline_mode = #tpu.pipeline_mode<synchronous>, transform_indices = @transform_17, window_bounds = array<i64: 2, 64>}, {pipeline_mode = #tpu.pipeline_mode<synchronous>, transform_indices = @transform_18, window_bounds = array<i64: 2, 128>}, {pipeline_mode = #tpu.pipeline_mode<synchronous>, transform_indices = @transform_19, window_bounds = array<i64: 2, 128>}, {pipeline_mode = #tpu.pipeline_mode<synchronous>, transform_indices = @transform_20, window_bounds = array<i64: 2, 128>}, {pipeline_mode = #tpu.pipeline_mode<synchronous>, transform_indices = @transform_21, window_bounds = array<i64: 2, 128>}, {pipeline_mode = #tpu.pipeline_mode<synchronous>, transform_indices = @transform_22, window_bounds = array<i64: 2, 128>}, {pipeline_mode = #tpu.pipeline_mode<synchronous>, transform_indices = @transform_23, window_bounds = array<i64: 2, 128>}, {pipeline_mode = #tpu.pipeline_mode<synchronous>, transform_indices = @transform_24, window_bounds = array<i64: 2, 128>}, {pipeline_mode = #tpu.pipeline_mode<synchronous>, transform_indices = @transform_25, window_bounds = array<i64: 2, 128>}, {transform_indices = @transform_26, window_bounds = array<i64: 1, 1, 128>}]} {
    %c0 = arith.constant 0 : index
    %c0_0 = arith.constant 0 : index
    %c0_1 = arith.constant 0 : index
    %0 = vector.load %arg1[%c0, %c0_0, %c0_1] : memref<1x81x28xf32, #tpu.memory_space<vmem>>, vector<1x81x28xf32>
    %1 = vector.shape_cast %0 : vector<1x81x28xf32> to vector<81x28xf32>
    %cst = arith.constant 0.000000e+00 : f32
    %2 = vector.broadcast %cst : f32 to vector<5x128xf32>
    %c0_2 = arith.constant 0 : index
    %c0_3 = arith.constant 0 : index
    %3 = vector.load %arg28[%c0_2, %c0_3] : memref<96x128xf32, #tpu.memory_space<vmem>>, vector<5x128xf32>
    tpu.vector_store %arg28[%c0_2, %c0_3], %2 {strides = array<i32>} : memref<96x128xf32, #tpu.memory_space<vmem>>, vector<5x128xf32>,
    %c86 = arith.constant 86 : index
    %c0_4 = arith.constant 0 : index
    %4 = vector.load %arg28[%c86, %c0_4] : memref<96x128xf32, #tpu.memory_space<vmem>>, vector<5x128xf32>
    tpu.vector_store %arg28[%c86, %c0_4], %2 {strides = array<i32>} : memref<96x128xf32, #tpu.memory_space<vmem>>, vector<5x128xf32>,
    %c5 = arith.constant 5 : index
    %c0_5 = arith.constant 0 : index
    %5 = vector.load %arg28[%c5, %c0_5] : memref<96x128xf32, #tpu.memory_space<vmem>>, vector<81x28xf32>
    tpu.vector_store %arg28[%c5, %c0_5], %1 {strides = array<i32>} : memref<96x128xf32, #tpu.memory_space<vmem>>, vector<81x28xf32>,
    %cst_6 = arith.constant 0.000000e+00 : f32
    %6 = vector.broadcast %cst_6 : f32 to vector<81x64xf32>
    %c0_7 = arith.constant 0 : index
    %c0_8 = arith.constant 0 : index
    %7 = vector.load %arg28[%c0_7, %c0_8] : memref<96x128xf32, #tpu.memory_space<vmem>>, vector<81x28xf32>
    %8 = arith.truncf %7 : vector<81x28xf32> to vector<81x28xbf16>
    %c0_9 = arith.constant 0 : index
    %c0_10 = arith.constant 0 : index
    %c0_11 = arith.constant 0 : index
    %9 = vector.load %arg3[%c0_9, %c0_10, %c0_11] : memref<11x28x64xbf16, #tpu.memory_space<vmem>>, vector<1x28x64xbf16>
    %10 = vector.shape_cast %9 : vector<1x28x64xbf16> to vector<28x64xbf16>
    %cst_12 = arith.constant dense<0.000000e+00> : vector<81x64xf32>
    %11 = tpu.matmul %8, %10, %cst_12 {dimension_numbers = #tpu.dot_dimension_numbers<[1], [0], [0], [1], [0, 0, 1, 1], [], []>} : vector<81x28xbf16>, vector<28x64xbf16>, vector<81x64xf32> -> vector<81x64xf32>
    %12 = arith.addf %6, %11 : vector<81x64xf32>
    %c1 = arith.constant 1 : index
    %c0_13 = arith.constant 0 : index
    %13 = vector.load %arg28[%c1, %c0_13] : memref<96x128xf32, #tpu.memory_space<vmem>>, vector<81x28xf32>
    %14 = arith.truncf %13 : vector<81x28xf32> to vector<81x28xbf16>
    %c1_14 = arith.constant 1 : index
    %c0_15 = arith.constant 0 : index
    %c0_16 = arith.constant 0 : index
    %15 = vector.load %arg3[%c1_14, %c0_15, %c0_16] : memref<11x28x64xbf16, #tpu.memory_space<vmem>>, vector<1x28x64xbf16>
    %16 = vector.shape_cast %15 : vector<1x28x64xbf16> to vector<28x64xbf16>
    %cst_17 = arith.constant dense<0.000000e+00> : vector<81x64xf32>
    %17 = tpu.matmul %14, %16, %cst_17 {dimension_numbers = #tpu.dot_dimension_numbers<[1], [0], [0], [1], [0, 0, 1, 1], [], []>} : vector<81x28xbf16>, vector<28x64xbf16>, vector<81x64xf32> -> vector<81x64xf32>
    %18 = arith.addf %12, %17 : vector<81x64xf32>
    %c2 = arith.constant 2 : index
    %c0_18 = arith.constant 0 : index
    %19 = vector.load %arg28[%c2, %c0_18] : memref<96x128xf32, #tpu.memory_space<vmem>>, vector<81x28xf32>
    %20 = arith.truncf %19 : vector<81x28xf32> to vector<81x28xbf16>
    %c2_19 = arith.constant 2 : index
    %c0_20 = arith.constant 0 : index
    %c0_21 = arith.constant 0 : index
    %21 = vector.load %arg3[%c2_19, %c0_20, %c0_21] : memref<11x28x64xbf16, #tpu.memory_space<vmem>>, vector<1x28x64xbf16>
    %22 = vector.shape_cast %21 : vector<1x28x64xbf16> to vector<28x64xbf16>
    %cst_22 = arith.constant dense<0.000000e+00> : vector<81x64xf32>
    %23 = tpu.matmul %20, %22, %cst_22 {dimension_numbers = #tpu.dot_dimension_numbers<[1], [0], [0], [1], [0, 0, 1, 1], [], []>} : vector<81x28xbf16>, vector<28x64xbf16>, vector<81x64xf32> -> vector<81x64xf32>
    %24 = arith.addf %18, %23 : vector<81x64xf32>
    %c3 = arith.constant 3 : index
    %c0_23 = arith.constant 0 : index
    %25 = vector.load %arg28[%c3, %c0_23] : memref<96x128xf32, #tpu.memory_space<vmem>>, vector<81x28xf32>
    %26 = arith.truncf %25 : vector<81x28xf32> to vector<81x28xbf16>
    %c3_24 = arith.constant 3 : index
    %c0_25 = arith.constant 0 : index
    %c0_26 = arith.constant 0 : index
    %27 = vector.load %arg3[%c3_24, %c0_25, %c0_26] : memref<11x28x64xbf16, #tpu.memory_space<vmem>>, vector<1x28x64xbf16>
    %28 = vector.shape_cast %27 : vector<1x28x64xbf16> to vector<28x64xbf16>
    %cst_27 = arith.constant dense<0.000000e+00> : vector<81x64xf32>
    %29 = tpu.matmul %26, %28, %cst_27 {dimension_numbers = #tpu.dot_dimension_numbers<[1], [0], [0], [1], [0, 0, 1, 1], [], []>} : vector<81x28xbf16>, vector<28x64xbf16>, vector<81x64xf32> -> vector<81x64xf32>
    %30 = arith.addf %24, %29 : vector<81x64xf32>
    %c4 = arith.constant 4 : index
    %c0_28 = arith.constant 0 : index
    %31 = vector.load %arg28[%c4, %c0_28] : memref<96x128xf32, #tpu.memory_space<vmem>>, vector<81x28xf32>
    %32 = arith.truncf %31 : vector<81x28xf32> to vector<81x28xbf16>
    %c4_29 = arith.constant 4 : index
    %c0_30 = arith.constant 0 : index
    %c0_31 = arith.constant 0 : index
    %33 = vector.load %arg3[%c4_29, %c0_30, %c0_31] : memref<11x28x64xbf16, #tpu.memory_space<vmem>>, vector<1x28x64xbf16>
    %34 = vector.shape_cast %33 : vector<1x28x64xbf16> to vector<28x64xbf16>
    %cst_32 = arith.constant dense<0.000000e+00> : vector<81x64xf32>
    %35 = tpu.matmul %32, %34, %cst_32 {dimension_numbers = #tpu.dot_dimension_numbers<[1], [0], [0], [1], [0, 0, 1, 1], [], []>} : vector<81x28xbf16>, vector<28x64xbf16>, vector<81x64xf32> -> vector<81x64xf32>
    %36 = arith.addf %30, %35 : vector<81x64xf32>
    %c5_33 = arith.constant 5 : index
    %c0_34 = arith.constant 0 : index
    %37 = vector.load %arg28[%c5_33, %c0_34] : memref<96x128xf32, #tpu.memory_space<vmem>>, vector<81x28xf32>
    %38 = arith.truncf %37 : vector<81x28xf32> to vector<81x28xbf16>
    %c5_35 = arith.constant 5 : index
    %c0_36 = arith.constant 0 : index
    %c0_37 = arith.constant 0 : index
    %39 = vector.load %arg3[%c5_35, %c0_36, %c0_37] : memref<11x28x64xbf16, #tpu.memory_space<vmem>>, vector<1x28x64xbf16>
    %40 = vector.shape_cast %39 : vector<1x28x64xbf16> to vector<28x64xbf16>
    %cst_38 = arith.constant dense<0.000000e+00> : vector<81x64xf32>
    %41 = tpu.matmul %38, %40, %cst_38 {dimension_numbers = #tpu.dot_dimension_numbers<[1], [0], [0], [1], [0, 0, 1, 1], [], []>} : vector<81x28xbf16>, vector<28x64xbf16>, vector<81x64xf32> -> vector<81x64xf32>
    %42 = arith.addf %36, %41 : vector<81x64xf32>
    %c6 = arith.constant 6 : index
    %c0_39 = arith.constant 0 : index
    %43 = vector.load %arg28[%c6, %c0_39] : memref<96x128xf32, #tpu.memory_space<vmem>>, vector<81x28xf32>
    %44 = arith.truncf %43 : vector<81x28xf32> to vector<81x28xbf16>
    %c6_40 = arith.constant 6 : index
    %c0_41 = arith.constant 0 : index
    %c0_42 = arith.constant 0 : index
    %45 = vector.load %arg3[%c6_40, %c0_41, %c0_42] : memref<11x28x64xbf16, #tpu.memory_space<vmem>>, vector<1x28x64xbf16>
    %46 = vector.shape_cast %45 : vector<1x28x64xbf16> to vector<28x64xbf16>
    %cst_43 = arith.constant dense<0.000000e+00> : vector<81x64xf32>
    %47 = tpu.matmul %44, %46, %cst_43 {dimension_numbers = #tpu.dot_dimension_numbers<[1], [0], [0], [1], [0, 0, 1, 1], [], []>} : vector<81x28xbf16>, vector<28x64xbf16>, vector<81x64xf32> -> vector<81x64xf32>
    %48 = arith.addf %42, %47 : vector<81x64xf32>
    %c7 = arith.constant 7 : index
    %c0_44 = arith.constant 0 : index
    %49 = vector.load %arg28[%c7, %c0_44] : memref<96x128xf32, #tpu.memory_space<vmem>>, vector<81x28xf32>
    %50 = arith.truncf %49 : vector<81x28xf32> to vector<81x28xbf16>
    %c7_45 = arith.constant 7 : index
    %c0_46 = arith.constant 0 : index
    %c0_47 = arith.constant 0 : index
    %51 = vector.load %arg3[%c7_45, %c0_46, %c0_47] : memref<11x28x64xbf16, #tpu.memory_space<vmem>>, vector<1x28x64xbf16>
    %52 = vector.shape_cast %51 : vector<1x28x64xbf16> to vector<28x64xbf16>
    %cst_48 = arith.constant dense<0.000000e+00> : vector<81x64xf32>
    %53 = tpu.matmul %50, %52, %cst_48 {dimension_numbers = #tpu.dot_dimension_numbers<[1], [0], [0], [1], [0, 0, 1, 1], [], []>} : vector<81x28xbf16>, vector<28x64xbf16>, vector<81x64xf32> -> vector<81x64xf32>
    %54 = arith.addf %48, %53 : vector<81x64xf32>
    %c8 = arith.constant 8 : index
    %c0_49 = arith.constant 0 : index
    %55 = vector.load %arg28[%c8, %c0_49] : memref<96x128xf32, #tpu.memory_space<vmem>>, vector<81x28xf32>
    %56 = arith.truncf %55 : vector<81x28xf32> to vector<81x28xbf16>
    %c8_50 = arith.constant 8 : index
    %c0_51 = arith.constant 0 : index
    %c0_52 = arith.constant 0 : index
    %57 = vector.load %arg3[%c8_50, %c0_51, %c0_52] : memref<11x28x64xbf16, #tpu.memory_space<vmem>>, vector<1x28x64xbf16>
    %58 = vector.shape_cast %57 : vector<1x28x64xbf16> to vector<28x64xbf16>
    %cst_53 = arith.constant dense<0.000000e+00> : vector<81x64xf32>
    %59 = tpu.matmul %56, %58, %cst_53 {dimension_numbers = #tpu.dot_dimension_numbers<[1], [0], [0], [1], [0, 0, 1, 1], [], []>} : vector<81x28xbf16>, vector<28x64xbf16>, vector<81x64xf32> -> vector<81x64xf32>
    %60 = arith.addf %54, %59 : vector<81x64xf32>
    %c9 = arith.constant 9 : index
    %c0_54 = arith.constant 0 : index
    %61 = vector.load %arg28[%c9, %c0_54] : memref<96x128xf32, #tpu.memory_space<vmem>>, vector<81x28xf32>
    %62 = arith.truncf %61 : vector<81x28xf32> to vector<81x28xbf16>
    %c9_55 = arith.constant 9 : index
    %c0_56 = arith.constant 0 : index
    %c0_57 = arith.constant 0 : index
    %63 = vector.load %arg3[%c9_55, %c0_56, %c0_57] : memref<11x28x64xbf16, #tpu.memory_space<vmem>>, vector<1x28x64xbf16>
    %64 = vector.shape_cast %63 : vector<1x28x64xbf16> to vector<28x64xbf16>
    %cst_58 = arith.constant dense<0.000000e+00> : vector<81x64xf32>
    %65 = tpu.matmul %62, %64, %cst_58 {dimension_numbers = #tpu.dot_dimension_numbers<[1], [0], [0], [1], [0, 0, 1, 1], [], []>} : vector<81x28xbf16>, vector<28x64xbf16>, vector<81x64xf32> -> vector<81x64xf32>
    %66 = arith.addf %60, %65 : vector<81x64xf32>
    %c10 = arith.constant 10 : index
    %c0_59 = arith.constant 0 : index
    %67 = vector.load %arg28[%c10, %c0_59] : memref<96x128xf32, #tpu.memory_space<vmem>>, vector<81x28xf32>
    %68 = arith.truncf %67 : vector<81x28xf32> to vector<81x28xbf16>
    %c10_60 = arith.constant 10 : index
    %c0_61 = arith.constant 0 : index
    %c0_62 = arith.constant 0 : index
    %69 = vector.load %arg3[%c10_60, %c0_61, %c0_62] : memref<11x28x64xbf16, #tpu.memory_space<vmem>>, vector<1x28x64xbf16>
    %70 = vector.shape_cast %69 : vector<1x28x64xbf16> to vector<28x64xbf16>
    %cst_63 = arith.constant dense<0.000000e+00> : vector<81x64xf32>
    %71 = tpu.matmul %68, %70, %cst_63 {dimension_numbers = #tpu.dot_dimension_numbers<[1], [0], [0], [1], [0, 0, 1, 1], [], []>} : vector<81x28xbf16>, vector<28x64xbf16>, vector<81x64xf32> -> vector<81x64xf32>
    %72 = arith.addf %66, %71 : vector<81x64xf32>
    %c0_64 = arith.constant 0 : index
    %c0_65 = arith.constant 0 : index
    %73 = vector.load %arg15[%c0_64, %c0_65] : memref<2x64xf32, #tpu.memory_space<vmem>>, vector<1x64xf32>
    %c1_66 = arith.constant 1 : index
    %c0_67 = arith.constant 0 : index
    %74 = vector.load %arg15[%c1_66, %c0_67] : memref<2x64xf32, #tpu.memory_space<vmem>>, vector<1x64xf32>
    %75 = vector.broadcast %73 : vector<1x64xf32> to vector<81x64xf32>
    %76 = arith.mulf %72, %75 : vector<81x64xf32>
    %77 = vector.broadcast %74 : vector<1x64xf32> to vector<81x64xf32>
    %78 = arith.addf %76, %77 : vector<81x64xf32>
    %cst_68 = arith.constant 0.000000e+00 : f32
    %79 = vector.broadcast %cst_68 : f32 to vector<81x64xf32>
    %80 = arith.maximumf %78, %79 : vector<81x64xf32>
    %cst_69 = arith.constant 0.000000e+00 : f32
    %81 = vector.broadcast %cst_69 : f32 to vector<3x128xf32>
    %c0_70 = arith.constant 0 : index
    %c0_71 = arith.constant 0 : index
    %82 = vector.load %arg28[%c0_70, %c0_71] : memref<96x128xf32, #tpu.memory_space<vmem>>, vector<3x128xf32>
    tpu.vector_store %arg28[%c0_70, %c0_71], %81 {strides = array<i32>} : memref<96x128xf32, #tpu.memory_space<vmem>>, vector<3x128xf32>,
    %c84 = arith.constant 84 : index
    %c0_72 = arith.constant 0 : index
    %83 = vector.load %arg28[%c84, %c0_72] : memref<96x128xf32, #tpu.memory_space<vmem>>, vector<3x128xf32>
    tpu.vector_store %arg28[%c84, %c0_72], %81 {strides = array<i32>} : memref<96x128xf32, #tpu.memory_space<vmem>>, vector<3x128xf32>,
    %c3_73 = arith.constant 3 : index
    %c0_74 = arith.constant 0 : index
    %84 = vector.load %arg28[%c3_73, %c0_74] : memref<96x128xf32, #tpu.memory_space<vmem>>, vector<81x64xf32>
    tpu.vector_store %arg28[%c3_73, %c0_74], %80 {strides = array<i32>} : memref<96x128xf32, #tpu.memory_space<vmem>>, vector<81x64xf32>,
    %cst_75 = arith.constant 0.000000e+00 : f32
    %85 = vector.broadcast %cst_75 : f32 to vector<81x64xf32>
    %c0_76 = arith.constant 0 : index
    %c0_77 = arith.constant 0 : index
    %86 = vector.load %arg28[%c0_76, %c0_77] : memref<96x128xf32, #tpu.memory_space<vmem>>, vector<81x64xf32>
    %87 = arith.truncf %86 : vector<81x64xf32> to vector<81x64xbf16>
    %c0_78 = arith.constant 0 : index
    %c0_79 = arith.constant 0 : index
    %c0_80 = arith.constant 0 : index
    %88 = vector.load %arg4[%c0_78, %c0_79, %c0_80] : memref<7x64x64xbf16, #tpu.memory_space<vmem>>, vector<1x64x64xbf16>
    %89 = vector.shape_cast %88 : vector<1x64x64xbf16> to vector<64x64xbf16>
    %cst_81 = arith.constant dense<0.000000e+00> : vector<81x64xf32>
    %90 = tpu.matmul %87, %89, %cst_81 {dimension_numbers = #tpu.dot_dimension_numbers<[1], [0], [0], [1], [0, 0, 1, 1], [], []>} : vector<81x64xbf16>, vector<64x64xbf16>, vector<81x64xf32> -> vector<81x64xf32>
    %91 = arith.addf %85, %90 : vector<81x64xf32>
    %c1_82 = arith.constant 1 : index
    %c0_83 = arith.constant 0 : index
    %92 = vector.load %arg28[%c1_82, %c0_83] : memref<96x128xf32, #tpu.memory_space<vmem>>, vector<81x64xf32>
    %93 = arith.truncf %92 : vector<81x64xf32> to vector<81x64xbf16>
    %c1_84 = arith.constant 1 : index
    %c0_85 = arith.constant 0 : index
    %c0_86 = arith.constant 0 : index
    %94 = vector.load %arg4[%c1_84, %c0_85, %c0_86] : memref<7x64x64xbf16, #tpu.memory_space<vmem>>, vector<1x64x64xbf16>
    %95 = vector.shape_cast %94 : vector<1x64x64xbf16> to vector<64x64xbf16>
    %cst_87 = arith.constant dense<0.000000e+00> : vector<81x64xf32>
    %96 = tpu.matmul %93, %95, %cst_87 {dimension_numbers = #tpu.dot_dimension_numbers<[1], [0], [0], [1], [0, 0, 1, 1], [], []>} : vector<81x64xbf16>, vector<64x64xbf16>, vector<81x64xf32> -> vector<81x64xf32>
    %97 = arith.addf %91, %96 : vector<81x64xf32>
    %c2_88 = arith.constant 2 : index
    %c0_89 = arith.constant 0 : index
    %98 = vector.load %arg28[%c2_88, %c0_89] : memref<96x128xf32, #tpu.memory_space<vmem>>, vector<81x64xf32>
    %99 = arith.truncf %98 : vector<81x64xf32> to vector<81x64xbf16>
    %c2_90 = arith.constant 2 : index
    %c0_91 = arith.constant 0 : index
    %c0_92 = arith.constant 0 : index
    %100 = vector.load %arg4[%c2_90, %c0_91, %c0_92] : memref<7x64x64xbf16, #tpu.memory_space<vmem>>, vector<1x64x64xbf16>
    %101 = vector.shape_cast %100 : vector<1x64x64xbf16> to vector<64x64xbf16>
    %cst_93 = arith.constant dense<0.000000e+00> : vector<81x64xf32>
    %102 = tpu.matmul %99, %101, %cst_93 {dimension_numbers = #tpu.dot_dimension_numbers<[1], [0], [0], [1], [0, 0, 1, 1], [], []>} : vector<81x64xbf16>, vector<64x64xbf16>, vector<81x64xf32> -> vector<81x64xf32>
    %103 = arith.addf %97, %102 : vector<81x64xf32>
    %c3_94 = arith.constant 3 : index
    %c0_95 = arith.constant 0 : index
    %104 = vector.load %arg28[%c3_94, %c0_95] : memref<96x128xf32, #tpu.memory_space<vmem>>, vector<81x64xf32>
    %105 = arith.truncf %104 : vector<81x64xf32> to vector<81x64xbf16>
    %c3_96 = arith.constant 3 : index
    %c0_97 = arith.constant 0 : index
    %c0_98 = arith.constant 0 : index
    %106 = vector.load %arg4[%c3_96, %c0_97, %c0_98] : memref<7x64x64xbf16, #tpu.memory_space<vmem>>, vector<1x64x64xbf16>
    %107 = vector.shape_cast %106 : vector<1x64x64xbf16> to vector<64x64xbf16>
    %cst_99 = arith.constant dense<0.000000e+00> : vector<81x64xf32>
    %108 = tpu.matmul %105, %107, %cst_99 {dimension_numbers = #tpu.dot_dimension_numbers<[1], [0], [0], [1], [0, 0, 1, 1], [], []>} : vector<81x64xbf16>, vector<64x64xbf16>, vector<81x64xf32> -> vector<81x64xf32>
    %109 = arith.addf %103, %108 : vector<81x64xf32>
    %c4_100 = arith.constant 4 : index
    %c0_101 = arith.constant 0 : index
    %110 = vector.load %arg28[%c4_100, %c0_101] : memref<96x128xf32, #tpu.memory_space<vmem>>, vector<81x64xf32>
    %111 = arith.truncf %110 : vector<81x64xf32> to vector<81x64xbf16>
    %c4_102 = arith.constant 4 : index
    %c0_103 = arith.constant 0 : index
    %c0_104 = arith.constant 0 : index
    %112 = vector.load %arg4[%c4_102, %c0_103, %c0_104] : memref<7x64x64xbf16, #tpu.memory_space<vmem>>, vector<1x64x64xbf16>
    %113 = vector.shape_cast %112 : vector<1x64x64xbf16> to vector<64x64xbf16>
    %cst_105 = arith.constant dense<0.000000e+00> : vector<81x64xf32>
    %114 = tpu.matmul %111, %113, %cst_105 {dimension_numbers = #tpu.dot_dimension_numbers<[1], [0], [0], [1], [0, 0, 1, 1], [], []>} : vector<81x64xbf16>, vector<64x64xbf16>, vector<81x64xf32> -> vector<81x64xf32>
    %115 = arith.addf %109, %114 : vector<81x64xf32>
    %c5_106 = arith.constant 5 : index
    %c0_107 = arith.constant 0 : index
    %116 = vector.load %arg28[%c5_106, %c0_107] : memref<96x128xf32, #tpu.memory_space<vmem>>, vector<81x64xf32>
    %117 = arith.truncf %116 : vector<81x64xf32> to vector<81x64xbf16>
    %c5_108 = arith.constant 5 : index
    %c0_109 = arith.constant 0 : index
    %c0_110 = arith.constant 0 : index
    %118 = vector.load %arg4[%c5_108, %c0_109, %c0_110] : memref<7x64x64xbf16, #tpu.memory_space<vmem>>, vector<1x64x64xbf16>
    %119 = vector.shape_cast %118 : vector<1x64x64xbf16> to vector<64x64xbf16>
    %cst_111 = arith.constant dense<0.000000e+00> : vector<81x64xf32>
    %120 = tpu.matmul %117, %119, %cst_111 {dimension_numbers = #tpu.dot_dimension_numbers<[1], [0], [0], [1], [0, 0, 1, 1], [], []>} : vector<81x64xbf16>, vector<64x64xbf16>, vector<81x64xf32> -> vector<81x64xf32>
    %121 = arith.addf %115, %120 : vector<81x64xf32>
    %c6_112 = arith.constant 6 : index
    %c0_113 = arith.constant 0 : index
    %122 = vector.load %arg28[%c6_112, %c0_113] : memref<96x128xf32, #tpu.memory_space<vmem>>, vector<81x64xf32>
    %123 = arith.truncf %122 : vector<81x64xf32> to vector<81x64xbf16>
    %c6_114 = arith.constant 6 : index
    %c0_115 = arith.constant 0 : index
    %c0_116 = arith.constant 0 : index
    %124 = vector.load %arg4[%c6_114, %c0_115, %c0_116] : memref<7x64x64xbf16, #tpu.memory_space<vmem>>, vector<1x64x64xbf16>
    %125 = vector.shape_cast %124 : vector<1x64x64xbf16> to vector<64x64xbf16>
    %cst_117 = arith.constant dense<0.000000e+00> : vector<81x64xf32>
    %126 = tpu.matmul %123, %125, %cst_117 {dimension_numbers = #tpu.dot_dimension_numbers<[1], [0], [0], [1], [0, 0, 1, 1], [], []>} : vector<81x64xbf16>, vector<64x64xbf16>, vector<81x64xf32> -> vector<81x64xf32>
    %127 = arith.addf %121, %126 : vector<81x64xf32>
    %c0_118 = arith.constant 0 : index
    %c0_119 = arith.constant 0 : index
    %128 = vector.load %arg16[%c0_118, %c0_119] : memref<2x64xf32, #tpu.memory_space<vmem>>, vector<1x64xf32>
    %c1_120 = arith.constant 1 : index
    %c0_121 = arith.constant 0 : index
    %129 = vector.load %arg16[%c1_120, %c0_121] : memref<2x64xf32, #tpu.memory_space<vmem>>, vector<1x64xf32>
    %130 = vector.broadcast %128 : vector<1x64xf32> to vector<81x64xf32>
    %131 = arith.mulf %127, %130 : vector<81x64xf32>
    %132 = vector.broadcast %129 : vector<1x64xf32> to vector<81x64xf32>
    %133 = arith.addf %131, %132 : vector<81x64xf32>
    %cst_122 = arith.constant 0.000000e+00 : f32
    %134 = vector.broadcast %cst_122 : f32 to vector<81x64xf32>
    %135 = arith.maximumf %133, %134 : vector<81x64xf32>
    %c0_123 = arith.constant 0 : index
    %c0_124 = arith.constant 0 : index
    %136 = vector.load %arg29[%c0_123, %c0_124] : memref<96x128xf32, #tpu.memory_space<vmem>>, vector<81x64xf32>
    tpu.vector_store %arg29[%c0_123, %c0_124], %135 {strides = array<i32>} : memref<96x128xf32, #tpu.memory_space<vmem>>, vector<81x64xf32>,
    %c0_125 = arith.constant 0 : index
    %c0_126 = arith.constant 0 : index
    %137 = tpu.strided_load %arg29[%c0_125, %c0_126] {strides = array<i32: 3, 1>} : memref<96x128xf32, #tpu.memory_space<vmem>>, vector<27x64xf32>
    %c1_127 = arith.constant 1 : index
    %c0_128 = arith.constant 0 : index
    %138 = tpu.strided_load %arg29[%c1_127, %c0_128] {strides = array<i32: 3, 1>} : memref<96x128xf32, #tpu.memory_space<vmem>>, vector<27x64xf32>
    %c2_129 = arith.constant 2 : index
    %c0_130 = arith.constant 0 : index
    %139 = tpu.strided_load %arg29[%c2_129, %c0_130] {strides = array<i32: 3, 1>} : memref<96x128xf32, #tpu.memory_space<vmem>>, vector<27x64xf32>
    %140 = arith.maximumf %137, %138 : vector<27x64xf32>
    %141 = arith.maximumf %140, %139 : vector<27x64xf32>
    %c0_131 = arith.constant 0 : index
    %c0_132 = arith.constant 0 : index
    %c0_133 = arith.constant 0 : index
    %142 = vector.load %arg2[%c0_131, %c0_132, %c0_133] : memref<1x81x20xf32, #tpu.memory_space<vmem>>, vector<1x81x20xf32>
    %143 = vector.shape_cast %142 : vector<1x81x20xf32> to vector<81x20xf32>
    %cst_134 = arith.constant 0.000000e+00 : f32
    %144 = vector.broadcast %cst_134 : f32 to vector<5x128xf32>
    %c0_135 = arith.constant 0 : index
    %c0_136 = arith.constant 0 : index
    %145 = vector.load %arg28[%c0_135, %c0_136] : memref<96x128xf32, #tpu.memory_space<vmem>>, vector<5x128xf32>
    tpu.vector_store %arg28[%c0_135, %c0_136], %144 {strides = array<i32>} : memref<96x128xf32, #tpu.memory_space<vmem>>, vector<5x128xf32>,
    %c86_137 = arith.constant 86 : index
    %c0_138 = arith.constant 0 : index
    %146 = vector.load %arg28[%c86_137, %c0_138] : memref<96x128xf32, #tpu.memory_space<vmem>>, vector<5x128xf32>
    tpu.vector_store %arg28[%c86_137, %c0_138], %144 {strides = array<i32>} : memref<96x128xf32, #tpu.memory_space<vmem>>, vector<5x128xf32>,
    %c5_139 = arith.constant 5 : index
    %c0_140 = arith.constant 0 : index
    %147 = vector.load %arg28[%c5_139, %c0_140] : memref<96x128xf32, #tpu.memory_space<vmem>>, vector<81x20xf32>
    tpu.vector_store %arg28[%c5_139, %c0_140], %143 {strides = array<i32>} : memref<96x128xf32, #tpu.memory_space<vmem>>, vector<81x20xf32>,
    %cst_141 = arith.constant 0.000000e+00 : f32
    %148 = vector.broadcast %cst_141 : f32 to vector<81x64xf32>
    %c0_142 = arith.constant 0 : index
    %c0_143 = arith.constant 0 : index
    %149 = vector.load %arg28[%c0_142, %c0_143] : memref<96x128xf32, #tpu.memory_space<vmem>>, vector<81x20xf32>
    %150 = arith.truncf %149 : vector<81x20xf32> to vector<81x20xbf16>
    %c0_144 = arith.constant 0 : index
    %c0_145 = arith.constant 0 : index
    %c0_146 = arith.constant 0 : index
    %151 = vector.load %arg5[%c0_144, %c0_145, %c0_146] : memref<11x20x64xbf16, #tpu.memory_space<vmem>>, vector<1x20x64xbf16>
    %152 = vector.shape_cast %151 : vector<1x20x64xbf16> to vector<20x64xbf16>
    %cst_147 = arith.constant dense<0.000000e+00> : vector<81x64xf32>
    %153 = tpu.matmul %150, %152, %cst_147 {dimension_numbers = #tpu.dot_dimension_numbers<[1], [0], [0], [1], [0, 0, 1, 1], [], []>} : vector<81x20xbf16>, vector<20x64xbf16>, vector<81x64xf32> -> vector<81x64xf32>
    %154 = arith.addf %148, %153 : vector<81x64xf32>
    %c1_148 = arith.constant 1 : index
    %c0_149 = arith.constant 0 : index
    %155 = vector.load %arg28[%c1_148, %c0_149] : memref<96x128xf32, #tpu.memory_space<vmem>>, vector<81x20xf32>
    %156 = arith.truncf %155 : vector<81x20xf32> to vector<81x20xbf16>
    %c1_150 = arith.constant 1 : index
    %c0_151 = arith.constant 0 : index
    %c0_152 = arith.constant 0 : index
    %157 = vector.load %arg5[%c1_150, %c0_151, %c0_152] : memref<11x20x64xbf16, #tpu.memory_space<vmem>>, vector<1x20x64xbf16>
    %158 = vector.shape_cast %157 : vector<1x20x64xbf16> to vector<20x64xbf16>
    %cst_153 = arith.constant dense<0.000000e+00> : vector<81x64xf32>
    %159 = tpu.matmul %156, %158, %cst_153 {dimension_numbers = #tpu.dot_dimension_numbers<[1], [0], [0], [1], [0, 0, 1, 1], [], []>} : vector<81x20xbf16>, vector<20x64xbf16>, vector<81x64xf32> -> vector<81x64xf32>
    %160 = arith.addf %154, %159 : vector<81x64xf32>
    %c2_154 = arith.constant 2 : index
    %c0_155 = arith.constant 0 : index
    %161 = vector.load %arg28[%c2_154, %c0_155] : memref<96x128xf32, #tpu.memory_space<vmem>>, vector<81x20xf32>
    %162 = arith.truncf %161 : vector<81x20xf32> to vector<81x20xbf16>
    %c2_156 = arith.constant 2 : index
    %c0_157 = arith.constant 0 : index
    %c0_158 = arith.constant 0 : index
    %163 = vector.load %arg5[%c2_156, %c0_157, %c0_158] : memref<11x20x64xbf16, #tpu.memory_space<vmem>>, vector<1x20x64xbf16>
    %164 = vector.shape_cast %163 : vector<1x20x64xbf16> to vector<20x64xbf16>
    %cst_159 = arith.constant dense<0.000000e+00> : vector<81x64xf32>
    %165 = tpu.matmul %162, %164, %cst_159 {dimension_numbers = #tpu.dot_dimension_numbers<[1], [0], [0], [1], [0, 0, 1, 1], [], []>} : vector<81x20xbf16>, vector<20x64xbf16>, vector<81x64xf32> -> vector<81x64xf32>
    %166 = arith.addf %160, %165 : vector<81x64xf32>
    %c3_160 = arith.constant 3 : index
    %c0_161 = arith.constant 0 : index
    %167 = vector.load %arg28[%c3_160, %c0_161] : memref<96x128xf32, #tpu.memory_space<vmem>>, vector<81x20xf32>
    %168 = arith.truncf %167 : vector<81x20xf32> to vector<81x20xbf16>
    %c3_162 = arith.constant 3 : index
    %c0_163 = arith.constant 0 : index
    %c0_164 = arith.constant 0 : index
    %169 = vector.load %arg5[%c3_162, %c0_163, %c0_164] : memref<11x20x64xbf16, #tpu.memory_space<vmem>>, vector<1x20x64xbf16>
    %170 = vector.shape_cast %169 : vector<1x20x64xbf16> to vector<20x64xbf16>
    %cst_165 = arith.constant dense<0.000000e+00> : vector<81x64xf32>
    %171 = tpu.matmul %168, %170, %cst_165 {dimension_numbers = #tpu.dot_dimension_numbers<[1], [0], [0], [1], [0, 0, 1, 1], [], []>} : vector<81x20xbf16>, vector<20x64xbf16>, vector<81x64xf32> -> vector<81x64xf32>
    %172 = arith.addf %166, %171 : vector<81x64xf32>
    %c4_166 = arith.constant 4 : index
    %c0_167 = arith.constant 0 : index
    %173 = vector.load %arg28[%c4_166, %c0_167] : memref<96x128xf32, #tpu.memory_space<vmem>>, vector<81x20xf32>
    %174 = arith.truncf %173 : vector<81x20xf32> to vector<81x20xbf16>
    %c4_168 = arith.constant 4 : index
    %c0_169 = arith.constant 0 : index
    %c0_170 = arith.constant 0 : index
    %175 = vector.load %arg5[%c4_168, %c0_169, %c0_170] : memref<11x20x64xbf16, #tpu.memory_space<vmem>>, vector<1x20x64xbf16>
    %176 = vector.shape_cast %175 : vector<1x20x64xbf16> to vector<20x64xbf16>
    %cst_171 = arith.constant dense<0.000000e+00> : vector<81x64xf32>
    %177 = tpu.matmul %174, %176, %cst_171 {dimension_numbers = #tpu.dot_dimension_numbers<[1], [0], [0], [1], [0, 0, 1, 1], [], []>} : vector<81x20xbf16>, vector<20x64xbf16>, vector<81x64xf32> -> vector<81x64xf32>
    %178 = arith.addf %172, %177 : vector<81x64xf32>
    %c5_172 = arith.constant 5 : index
    %c0_173 = arith.constant 0 : index
    %179 = vector.load %arg28[%c5_172, %c0_173] : memref<96x128xf32, #tpu.memory_space<vmem>>, vector<81x20xf32>
    %180 = arith.truncf %179 : vector<81x20xf32> to vector<81x20xbf16>
    %c5_174 = arith.constant 5 : index
    %c0_175 = arith.constant 0 : index
    %c0_176 = arith.constant 0 : index
    %181 = vector.load %arg5[%c5_174, %c0_175, %c0_176] : memref<11x20x64xbf16, #tpu.memory_space<vmem>>, vector<1x20x64xbf16>
    %182 = vector.shape_cast %181 : vector<1x20x64xbf16> to vector<20x64xbf16>
    %cst_177 = arith.constant dense<0.000000e+00> : vector<81x64xf32>
    %183 = tpu.matmul %180, %182, %cst_177 {dimension_numbers = #tpu.dot_dimension_numbers<[1], [0], [0], [1], [0, 0, 1, 1], [], []>} : vector<81x20xbf16>, vector<20x64xbf16>, vector<81x64xf32> -> vector<81x64xf32>
    %184 = arith.addf %178, %183 : vector<81x64xf32>
    %c6_178 = arith.constant 6 : index
    %c0_179 = arith.constant 0 : index
    %185 = vector.load %arg28[%c6_178, %c0_179] : memref<96x128xf32, #tpu.memory_space<vmem>>, vector<81x20xf32>
    %186 = arith.truncf %185 : vector<81x20xf32> to vector<81x20xbf16>
    %c6_180 = arith.constant 6 : index
    %c0_181 = arith.constant 0 : index
    %c0_182 = arith.constant 0 : index
    %187 = vector.load %arg5[%c6_180, %c0_181, %c0_182] : memref<11x20x64xbf16, #tpu.memory_space<vmem>>, vector<1x20x64xbf16>
    %188 = vector.shape_cast %187 : vector<1x20x64xbf16> to vector<20x64xbf16>
    %cst_183 = arith.constant dense<0.000000e+00> : vector<81x64xf32>
    %189 = tpu.matmul %186, %188, %cst_183 {dimension_numbers = #tpu.dot_dimension_numbers<[1], [0], [0], [1], [0, 0, 1, 1], [], []>} : vector<81x20xbf16>, vector<20x64xbf16>, vector<81x64xf32> -> vector<81x64xf32>
    %190 = arith.addf %184, %189 : vector<81x64xf32>
    %c7_184 = arith.constant 7 : index
    %c0_185 = arith.constant 0 : index
    %191 = vector.load %arg28[%c7_184, %c0_185] : memref<96x128xf32, #tpu.memory_space<vmem>>, vector<81x20xf32>
    %192 = arith.truncf %191 : vector<81x20xf32> to vector<81x20xbf16>
    %c7_186 = arith.constant 7 : index
    %c0_187 = arith.constant 0 : index
    %c0_188 = arith.constant 0 : index
    %193 = vector.load %arg5[%c7_186, %c0_187, %c0_188] : memref<11x20x64xbf16, #tpu.memory_space<vmem>>, vector<1x20x64xbf16>
    %194 = vector.shape_cast %193 : vector<1x20x64xbf16> to vector<20x64xbf16>
    %cst_189 = arith.constant dense<0.000000e+00> : vector<81x64xf32>
    %195 = tpu.matmul %192, %194, %cst_189 {dimension_numbers = #tpu.dot_dimension_numbers<[1], [0], [0], [1], [0, 0, 1, 1], [], []>} : vector<81x20xbf16>, vector<20x64xbf16>, vector<81x64xf32> -> vector<81x64xf32>
    %196 = arith.addf %190, %195 : vector<81x64xf32>
    %c8_190 = arith.constant 8 : index
    %c0_191 = arith.constant 0 : index
    %197 = vector.load %arg28[%c8_190, %c0_191] : memref<96x128xf32, #tpu.memory_space<vmem>>, vector<81x20xf32>
    %198 = arith.truncf %197 : vector<81x20xf32> to vector<81x20xbf16>
    %c8_192 = arith.constant 8 : index
    %c0_193 = arith.constant 0 : index
    %c0_194 = arith.constant 0 : index
    %199 = vector.load %arg5[%c8_192, %c0_193, %c0_194] : memref<11x20x64xbf16, #tpu.memory_space<vmem>>, vector<1x20x64xbf16>
    %200 = vector.shape_cast %199 : vector<1x20x64xbf16> to vector<20x64xbf16>
    %cst_195 = arith.constant dense<0.000000e+00> : vector<81x64xf32>
    %201 = tpu.matmul %198, %200, %cst_195 {dimension_numbers = #tpu.dot_dimension_numbers<[1], [0], [0], [1], [0, 0, 1, 1], [], []>} : vector<81x20xbf16>, vector<20x64xbf16>, vector<81x64xf32> -> vector<81x64xf32>
    %202 = arith.addf %196, %201 : vector<81x64xf32>
    %c9_196 = arith.constant 9 : index
    %c0_197 = arith.constant 0 : index
    %203 = vector.load %arg28[%c9_196, %c0_197] : memref<96x128xf32, #tpu.memory_space<vmem>>, vector<81x20xf32>
    %204 = arith.truncf %203 : vector<81x20xf32> to vector<81x20xbf16>
    %c9_198 = arith.constant 9 : index
    %c0_199 = arith.constant 0 : index
    %c0_200 = arith.constant 0 : index
    %205 = vector.load %arg5[%c9_198, %c0_199, %c0_200] : memref<11x20x64xbf16, #tpu.memory_space<vmem>>, vector<1x20x64xbf16>
    %206 = vector.shape_cast %205 : vector<1x20x64xbf16> to vector<20x64xbf16>
    %cst_201 = arith.constant dense<0.000000e+00> : vector<81x64xf32>
    %207 = tpu.matmul %204, %206, %cst_201 {dimension_numbers = #tpu.dot_dimension_numbers<[1], [0], [0], [1], [0, 0, 1, 1], [], []>} : vector<81x20xbf16>, vector<20x64xbf16>, vector<81x64xf32> -> vector<81x64xf32>
    %208 = arith.addf %202, %207 : vector<81x64xf32>
    %c10_202 = arith.constant 10 : index
    %c0_203 = arith.constant 0 : index
    %209 = vector.load %arg28[%c10_202, %c0_203] : memref<96x128xf32, #tpu.memory_space<vmem>>, vector<81x20xf32>
    %210 = arith.truncf %209 : vector<81x20xf32> to vector<81x20xbf16>
    %c10_204 = arith.constant 10 : index
    %c0_205 = arith.constant 0 : index
    %c0_206 = arith.constant 0 : index
    %211 = vector.load %arg5[%c10_204, %c0_205, %c0_206] : memref<11x20x64xbf16, #tpu.memory_space<vmem>>, vector<1x20x64xbf16>
    %212 = vector.shape_cast %211 : vector<1x20x64xbf16> to vector<20x64xbf16>
    %cst_207 = arith.constant dense<0.000000e+00> : vector<81x64xf32>
    %213 = tpu.matmul %210, %212, %cst_207 {dimension_numbers = #tpu.dot_dimension_numbers<[1], [0], [0], [1], [0, 0, 1, 1], [], []>} : vector<81x20xbf16>, vector<20x64xbf16>, vector<81x64xf32> -> vector<81x64xf32>
    %214 = arith.addf %208, %213 : vector<81x64xf32>
    %c0_208 = arith.constant 0 : index
    %c0_209 = arith.constant 0 : index
    %215 = vector.load %arg17[%c0_208, %c0_209] : memref<2x64xf32, #tpu.memory_space<vmem>>, vector<1x64xf32>
    %c1_210 = arith.constant 1 : index
    %c0_211 = arith.constant 0 : index
    %216 = vector.load %arg17[%c1_210, %c0_211] : memref<2x64xf32, #tpu.memory_space<vmem>>, vector<1x64xf32>
    %217 = vector.broadcast %215 : vector<1x64xf32> to vector<81x64xf32>
    %218 = arith.mulf %214, %217 : vector<81x64xf32>
    %219 = vector.broadcast %216 : vector<1x64xf32> to vector<81x64xf32>
    %220 = arith.addf %218, %219 : vector<81x64xf32>
    %cst_212 = arith.constant 0.000000e+00 : f32
    %221 = vector.broadcast %cst_212 : f32 to vector<81x64xf32>
    %222 = arith.maximumf %220, %221 : vector<81x64xf32>
    %cst_213 = arith.constant 0.000000e+00 : f32
    %223 = vector.broadcast %cst_213 : f32 to vector<3x128xf32>
    %c0_214 = arith.constant 0 : index
    %c0_215 = arith.constant 0 : index
    %224 = vector.load %arg28[%c0_214, %c0_215] : memref<96x128xf32, #tpu.memory_space<vmem>>, vector<3x128xf32>
    tpu.vector_store %arg28[%c0_214, %c0_215], %223 {strides = array<i32>} : memref<96x128xf32, #tpu.memory_space<vmem>>, vector<3x128xf32>,
    %c84_216 = arith.constant 84 : index
    %c0_217 = arith.constant 0 : index
    %225 = vector.load %arg28[%c84_216, %c0_217] : memref<96x128xf32, #tpu.memory_space<vmem>>, vector<3x128xf32>
    tpu.vector_store %arg28[%c84_216, %c0_217], %223 {strides = array<i32>} : memref<96x128xf32, #tpu.memory_space<vmem>>, vector<3x128xf32>,
    %c3_218 = arith.constant 3 : index
    %c0_219 = arith.constant 0 : index
    %226 = vector.load %arg28[%c3_218, %c0_219] : memref<96x128xf32, #tpu.memory_space<vmem>>, vector<81x64xf32>
    tpu.vector_store %arg28[%c3_218, %c0_219], %222 {strides = array<i32>} : memref<96x128xf32, #tpu.memory_space<vmem>>, vector<81x64xf32>,
    %cst_220 = arith.constant 0.000000e+00 : f32
    %227 = vector.broadcast %cst_220 : f32 to vector<81x64xf32>
    %c0_221 = arith.constant 0 : index
    %c0_222 = arith.constant 0 : index
    %228 = vector.load %arg28[%c0_221, %c0_222] : memref<96x128xf32, #tpu.memory_space<vmem>>, vector<81x64xf32>
    %229 = arith.truncf %228 : vector<81x64xf32> to vector<81x64xbf16>
    %c0_223 = arith.constant 0 : index
    %c0_224 = arith.constant 0 : index
    %c0_225 = arith.constant 0 : index
    %230 = vector.load %arg6[%c0_223, %c0_224, %c0_225] : memref<7x64x64xbf16, #tpu.memory_space<vmem>>, vector<1x64x64xbf16>
    %231 = vector.shape_cast %230 : vector<1x64x64xbf16> to vector<64x64xbf16>
    %cst_226 = arith.constant dense<0.000000e+00> : vector<81x64xf32>
    %232 = tpu.matmul %229, %231, %cst_226 {dimension_numbers = #tpu.dot_dimension_numbers<[1], [0], [0], [1], [0, 0, 1, 1], [], []>} : vector<81x64xbf16>, vector<64x64xbf16>, vector<81x64xf32> -> vector<81x64xf32>
    %233 = arith.addf %227, %232 : vector<81x64xf32>
    %c1_227 = arith.constant 1 : index
    %c0_228 = arith.constant 0 : index
    %234 = vector.load %arg28[%c1_227, %c0_228] : memref<96x128xf32, #tpu.memory_space<vmem>>, vector<81x64xf32>
    %235 = arith.truncf %234 : vector<81x64xf32> to vector<81x64xbf16>
    %c1_229 = arith.constant 1 : index
    %c0_230 = arith.constant 0 : index
    %c0_231 = arith.constant 0 : index
    %236 = vector.load %arg6[%c1_229, %c0_230, %c0_231] : memref<7x64x64xbf16, #tpu.memory_space<vmem>>, vector<1x64x64xbf16>
    %237 = vector.shape_cast %236 : vector<1x64x64xbf16> to vector<64x64xbf16>
    %cst_232 = arith.constant dense<0.000000e+00> : vector<81x64xf32>
    %238 = tpu.matmul %235, %237, %cst_232 {dimension_numbers = #tpu.dot_dimension_numbers<[1], [0], [0], [1], [0, 0, 1, 1], [], []>} : vector<81x64xbf16>, vector<64x64xbf16>, vector<81x64xf32> -> vector<81x64xf32>
    %239 = arith.addf %233, %238 : vector<81x64xf32>
    %c2_233 = arith.constant 2 : index
    %c0_234 = arith.constant 0 : index
    %240 = vector.load %arg28[%c2_233, %c0_234] : memref<96x128xf32, #tpu.memory_space<vmem>>, vector<81x64xf32>
    %241 = arith.truncf %240 : vector<81x64xf32> to vector<81x64xbf16>
    %c2_235 = arith.constant 2 : index
    %c0_236 = arith.constant 0 : index
    %c0_237 = arith.constant 0 : index
    %242 = vector.load %arg6[%c2_235, %c0_236, %c0_237] : memref<7x64x64xbf16, #tpu.memory_space<vmem>>, vector<1x64x64xbf16>
    %243 = vector.shape_cast %242 : vector<1x64x64xbf16> to vector<64x64xbf16>
    %cst_238 = arith.constant dense<0.000000e+00> : vector<81x64xf32>
    %244 = tpu.matmul %241, %243, %cst_238 {dimension_numbers = #tpu.dot_dimension_numbers<[1], [0], [0], [1], [0, 0, 1, 1], [], []>} : vector<81x64xbf16>, vector<64x64xbf16>, vector<81x64xf32> -> vector<81x64xf32>
    %245 = arith.addf %239, %244 : vector<81x64xf32>
    %c3_239 = arith.constant 3 : index
    %c0_240 = arith.constant 0 : index
    %246 = vector.load %arg28[%c3_239, %c0_240] : memref<96x128xf32, #tpu.memory_space<vmem>>, vector<81x64xf32>
    %247 = arith.truncf %246 : vector<81x64xf32> to vector<81x64xbf16>
    %c3_241 = arith.constant 3 : index
    %c0_242 = arith.constant 0 : index
    %c0_243 = arith.constant 0 : index
    %248 = vector.load %arg6[%c3_241, %c0_242, %c0_243] : memref<7x64x64xbf16, #tpu.memory_space<vmem>>, vector<1x64x64xbf16>
    %249 = vector.shape_cast %248 : vector<1x64x64xbf16> to vector<64x64xbf16>
    %cst_244 = arith.constant dense<0.000000e+00> : vector<81x64xf32>
    %250 = tpu.matmul %247, %249, %cst_244 {dimension_numbers = #tpu.dot_dimension_numbers<[1], [0], [0], [1], [0, 0, 1, 1], [], []>} : vector<81x64xbf16>, vector<64x64xbf16>, vector<81x64xf32> -> vector<81x64xf32>
    %251 = arith.addf %245, %250 : vector<81x64xf32>
    %c4_245 = arith.constant 4 : index
    %c0_246 = arith.constant 0 : index
    %252 = vector.load %arg28[%c4_245, %c0_246] : memref<96x128xf32, #tpu.memory_space<vmem>>, vector<81x64xf32>
    %253 = arith.truncf %252 : vector<81x64xf32> to vector<81x64xbf16>
    %c4_247 = arith.constant 4 : index
    %c0_248 = arith.constant 0 : index
    %c0_249 = arith.constant 0 : index
    %254 = vector.load %arg6[%c4_247, %c0_248, %c0_249] : memref<7x64x64xbf16, #tpu.memory_space<vmem>>, vector<1x64x64xbf16>
    %255 = vector.shape_cast %254 : vector<1x64x64xbf16> to vector<64x64xbf16>
    %cst_250 = arith.constant dense<0.000000e+00> : vector<81x64xf32>
    %256 = tpu.matmul %253, %255, %cst_250 {dimension_numbers = #tpu.dot_dimension_numbers<[1], [0], [0], [1], [0, 0, 1, 1], [], []>} : vector<81x64xbf16>, vector<64x64xbf16>, vector<81x64xf32> -> vector<81x64xf32>
    %257 = arith.addf %251, %256 : vector<81x64xf32>
    %c5_251 = arith.constant 5 : index
    %c0_252 = arith.constant 0 : index
    %258 = vector.load %arg28[%c5_251, %c0_252] : memref<96x128xf32, #tpu.memory_space<vmem>>, vector<81x64xf32>
    %259 = arith.truncf %258 : vector<81x64xf32> to vector<81x64xbf16>
    %c5_253 = arith.constant 5 : index
    %c0_254 = arith.constant 0 : index
    %c0_255 = arith.constant 0 : index
    %260 = vector.load %arg6[%c5_253, %c0_254, %c0_255] : memref<7x64x64xbf16, #tpu.memory_space<vmem>>, vector<1x64x64xbf16>
    %261 = vector.shape_cast %260 : vector<1x64x64xbf16> to vector<64x64xbf16>
    %cst_256 = arith.constant dense<0.000000e+00> : vector<81x64xf32>
    %262 = tpu.matmul %259, %261, %cst_256 {dimension_numbers = #tpu.dot_dimension_numbers<[1], [0], [0], [1], [0, 0, 1, 1], [], []>} : vector<81x64xbf16>, vector<64x64xbf16>, vector<81x64xf32> -> vector<81x64xf32>
    %263 = arith.addf %257, %262 : vector<81x64xf32>
    %c6_257 = arith.constant 6 : index
    %c0_258 = arith.constant 0 : index
    %264 = vector.load %arg28[%c6_257, %c0_258] : memref<96x128xf32, #tpu.memory_space<vmem>>, vector<81x64xf32>
    %265 = arith.truncf %264 : vector<81x64xf32> to vector<81x64xbf16>
    %c6_259 = arith.constant 6 : index
    %c0_260 = arith.constant 0 : index
    %c0_261 = arith.constant 0 : index
    %266 = vector.load %arg6[%c6_259, %c0_260, %c0_261] : memref<7x64x64xbf16, #tpu.memory_space<vmem>>, vector<1x64x64xbf16>
    %267 = vector.shape_cast %266 : vector<1x64x64xbf16> to vector<64x64xbf16>
    %cst_262 = arith.constant dense<0.000000e+00> : vector<81x64xf32>
    %268 = tpu.matmul %265, %267, %cst_262 {dimension_numbers = #tpu.dot_dimension_numbers<[1], [0], [0], [1], [0, 0, 1, 1], [], []>} : vector<81x64xbf16>, vector<64x64xbf16>, vector<81x64xf32> -> vector<81x64xf32>
    %269 = arith.addf %263, %268 : vector<81x64xf32>
    %c0_263 = arith.constant 0 : index
    %c0_264 = arith.constant 0 : index
    %270 = vector.load %arg18[%c0_263, %c0_264] : memref<2x64xf32, #tpu.memory_space<vmem>>, vector<1x64xf32>
    %c1_265 = arith.constant 1 : index
    %c0_266 = arith.constant 0 : index
    %271 = vector.load %arg18[%c1_265, %c0_266] : memref<2x64xf32, #tpu.memory_space<vmem>>, vector<1x64xf32>
    %272 = vector.broadcast %270 : vector<1x64xf32> to vector<81x64xf32>
    %273 = arith.mulf %269, %272 : vector<81x64xf32>
    %274 = vector.broadcast %271 : vector<1x64xf32> to vector<81x64xf32>
    %275 = arith.addf %273, %274 : vector<81x64xf32>
    %cst_267 = arith.constant 0.000000e+00 : f32
    %276 = vector.broadcast %cst_267 : f32 to vector<81x64xf32>
    %277 = arith.maximumf %275, %276 : vector<81x64xf32>
    %c0_268 = arith.constant 0 : index
    %c0_269 = arith.constant 0 : index
    %278 = vector.load %arg29[%c0_268, %c0_269] : memref<96x128xf32, #tpu.memory_space<vmem>>, vector<81x64xf32>
    tpu.vector_store %arg29[%c0_268, %c0_269], %277 {strides = array<i32>} : memref<96x128xf32, #tpu.memory_space<vmem>>, vector<81x64xf32>,
    %c0_270 = arith.constant 0 : index
    %c0_271 = arith.constant 0 : index
    %279 = tpu.strided_load %arg29[%c0_270, %c0_271] {strides = array<i32: 3, 1>} : memref<96x128xf32, #tpu.memory_space<vmem>>, vector<27x64xf32>
    %c1_272 = arith.constant 1 : index
    %c0_273 = arith.constant 0 : index
    %280 = tpu.strided_load %arg29[%c1_272, %c0_273] {strides = array<i32: 3, 1>} : memref<96x128xf32, #tpu.memory_space<vmem>>, vector<27x64xf32>
    %c2_274 = arith.constant 2 : index
    %c0_275 = arith.constant 0 : index
    %281 = tpu.strided_load %arg29[%c2_274, %c0_275] {strides = array<i32: 3, 1>} : memref<96x128xf32, #tpu.memory_space<vmem>>, vector<27x64xf32>
    %282 = arith.maximumf %279, %280 : vector<27x64xf32>
    %283 = arith.maximumf %282, %281 : vector<27x64xf32>
    %284 = tpu.concatenate %141, %283 in 1 : vector<27x64xf32>, vector<27x64xf32> -> vector<27x128xf32>
    %cst_276 = arith.constant 0.000000e+00 : f32
    %285 = vector.broadcast %cst_276 : f32 to vector<3x128xf32>
    %c0_277 = arith.constant 0 : index
    %c0_278 = arith.constant 0 : index
    %286 = vector.load %arg28[%c0_277, %c0_278] : memref<96x128xf32, #tpu.memory_space<vmem>>, vector<3x128xf32>
    tpu.vector_store %arg28[%c0_277, %c0_278], %285 {strides = array<i32>} : memref<96x128xf32, #tpu.memory_space<vmem>>, vector<3x128xf32>,
    %c30 = arith.constant 30 : index
    %c0_279 = arith.constant 0 : index
    %287 = vector.load %arg28[%c30, %c0_279] : memref<96x128xf32, #tpu.memory_space<vmem>>, vector<3x128xf32>
    tpu.vector_store %arg28[%c30, %c0_279], %285 {strides = array<i32>} : memref<96x128xf32, #tpu.memory_space<vmem>>, vector<3x128xf32>,
    %c3_280 = arith.constant 3 : index
    %c0_281 = arith.constant 0 : index
    %288 = vector.load %arg28[%c3_280, %c0_281] : memref<96x128xf32, #tpu.memory_space<vmem>>, vector<27x128xf32>
    tpu.vector_store %arg28[%c3_280, %c0_281], %284 {strides = array<i32>} : memref<96x128xf32, #tpu.memory_space<vmem>>, vector<27x128xf32>,
    %cst_282 = arith.constant 0.000000e+00 : f32
    %289 = vector.broadcast %cst_282 : f32 to vector<27x128xf32>
    %c0_283 = arith.constant 0 : index
    %c0_284 = arith.constant 0 : index
    %290 = vector.load %arg28[%c0_283, %c0_284] : memref<96x128xf32, #tpu.memory_space<vmem>>, vector<27x128xf32>
    %291 = arith.truncf %290 : vector<27x128xf32> to vector<27x128xbf16>
    %c0_285 = arith.constant 0 : index
    %c0_286 = arith.constant 0 : index
    %c0_287 = arith.constant 0 : index
    %292 = vector.load %arg7[%c0_285, %c0_286, %c0_287] : memref<7x128x128xbf16, #tpu.memory_space<vmem>>, vector<1x128x128xbf16>
    %293 = vector.shape_cast %292 : vector<1x128x128xbf16> to vector<128x128xbf16>
    %cst_288 = arith.constant dense<0.000000e+00> : vector<27x128xf32>
    %294 = tpu.matmul %291, %293, %cst_288 {dimension_numbers = #tpu.dot_dimension_numbers<[1], [0], [0], [1], [0, 0, 1, 1], [], []>} : vector<27x128xbf16>, vector<128x128xbf16>, vector<27x128xf32> -> vector<27x128xf32>
    %295 = arith.addf %289, %294 : vector<27x128xf32>
    %c1_289 = arith.constant 1 : index
    %c0_290 = arith.constant 0 : index
    %296 = vector.load %arg28[%c1_289, %c0_290] : memref<96x128xf32, #tpu.memory_space<vmem>>, vector<27x128xf32>
    %297 = arith.truncf %296 : vector<27x128xf32> to vector<27x128xbf16>
    %c1_291 = arith.constant 1 : index
    %c0_292 = arith.constant 0 : index
    %c0_293 = arith.constant 0 : index
    %298 = vector.load %arg7[%c1_291, %c0_292, %c0_293] : memref<7x128x128xbf16, #tpu.memory_space<vmem>>, vector<1x128x128xbf16>
    %299 = vector.shape_cast %298 : vector<1x128x128xbf16> to vector<128x128xbf16>
    %cst_294 = arith.constant dense<0.000000e+00> : vector<27x128xf32>
    %300 = tpu.matmul %297, %299, %cst_294 {dimension_numbers = #tpu.dot_dimension_numbers<[1], [0], [0], [1], [0, 0, 1, 1], [], []>} : vector<27x128xbf16>, vector<128x128xbf16>, vector<27x128xf32> -> vector<27x128xf32>
    %301 = arith.addf %295, %300 : vector<27x128xf32>
    %c2_295 = arith.constant 2 : index
    %c0_296 = arith.constant 0 : index
    %302 = vector.load %arg28[%c2_295, %c0_296] : memref<96x128xf32, #tpu.memory_space<vmem>>, vector<27x128xf32>
    %303 = arith.truncf %302 : vector<27x128xf32> to vector<27x128xbf16>
    %c2_297 = arith.constant 2 : index
    %c0_298 = arith.constant 0 : index
    %c0_299 = arith.constant 0 : index
    %304 = vector.load %arg7[%c2_297, %c0_298, %c0_299] : memref<7x128x128xbf16, #tpu.memory_space<vmem>>, vector<1x128x128xbf16>
    %305 = vector.shape_cast %304 : vector<1x128x128xbf16> to vector<128x128xbf16>
    %cst_300 = arith.constant dense<0.000000e+00> : vector<27x128xf32>
    %306 = tpu.matmul %303, %305, %cst_300 {dimension_numbers = #tpu.dot_dimension_numbers<[1], [0], [0], [1], [0, 0, 1, 1], [], []>} : vector<27x128xbf16>, vector<128x128xbf16>, vector<27x128xf32> -> vector<27x128xf32>
    %307 = arith.addf %301, %306 : vector<27x128xf32>
    %c3_301 = arith.constant 3 : index
    %c0_302 = arith.constant 0 : index
    %308 = vector.load %arg28[%c3_301, %c0_302] : memref<96x128xf32, #tpu.memory_space<vmem>>, vector<27x128xf32>
    %309 = arith.truncf %308 : vector<27x128xf32> to vector<27x128xbf16>
    %c3_303 = arith.constant 3 : index
    %c0_304 = arith.constant 0 : index
    %c0_305 = arith.constant 0 : index
    %310 = vector.load %arg7[%c3_303, %c0_304, %c0_305] : memref<7x128x128xbf16, #tpu.memory_space<vmem>>, vector<1x128x128xbf16>
    %311 = vector.shape_cast %310 : vector<1x128x128xbf16> to vector<128x128xbf16>
    %cst_306 = arith.constant dense<0.000000e+00> : vector<27x128xf32>
    %312 = tpu.matmul %309, %311, %cst_306 {dimension_numbers = #tpu.dot_dimension_numbers<[1], [0], [0], [1], [0, 0, 1, 1], [], []>} : vector<27x128xbf16>, vector<128x128xbf16>, vector<27x128xf32> -> vector<27x128xf32>
    %313 = arith.addf %307, %312 : vector<27x128xf32>
    %c4_307 = arith.constant 4 : index
    %c0_308 = arith.constant 0 : index
    %314 = vector.load %arg28[%c4_307, %c0_308] : memref<96x128xf32, #tpu.memory_space<vmem>>, vector<27x128xf32>
    %315 = arith.truncf %314 : vector<27x128xf32> to vector<27x128xbf16>
    %c4_309 = arith.constant 4 : index
    %c0_310 = arith.constant 0 : index
    %c0_311 = arith.constant 0 : index
    %316 = vector.load %arg7[%c4_309, %c0_310, %c0_311] : memref<7x128x128xbf16, #tpu.memory_space<vmem>>, vector<1x128x128xbf16>
    %317 = vector.shape_cast %316 : vector<1x128x128xbf16> to vector<128x128xbf16>
    %cst_312 = arith.constant dense<0.000000e+00> : vector<27x128xf32>
    %318 = tpu.matmul %315, %317, %cst_312 {dimension_numbers = #tpu.dot_dimension_numbers<[1], [0], [0], [1], [0, 0, 1, 1], [], []>} : vector<27x128xbf16>, vector<128x128xbf16>, vector<27x128xf32> -> vector<27x128xf32>
    %319 = arith.addf %313, %318 : vector<27x128xf32>
    %c5_313 = arith.constant 5 : index
    %c0_314 = arith.constant 0 : index
    %320 = vector.load %arg28[%c5_313, %c0_314] : memref<96x128xf32, #tpu.memory_space<vmem>>, vector<27x128xf32>
    %321 = arith.truncf %320 : vector<27x128xf32> to vector<27x128xbf16>
    %c5_315 = arith.constant 5 : index
    %c0_316 = arith.constant 0 : index
    %c0_317 = arith.constant 0 : index
    %322 = vector.load %arg7[%c5_315, %c0_316, %c0_317] : memref<7x128x128xbf16, #tpu.memory_space<vmem>>, vector<1x128x128xbf16>
    %323 = vector.shape_cast %322 : vector<1x128x128xbf16> to vector<128x128xbf16>
    %cst_318 = arith.constant dense<0.000000e+00> : vector<27x128xf32>
    %324 = tpu.matmul %321, %323, %cst_318 {dimension_numbers = #tpu.dot_dimension_numbers<[1], [0], [0], [1], [0, 0, 1, 1], [], []>} : vector<27x128xbf16>, vector<128x128xbf16>, vector<27x128xf32> -> vector<27x128xf32>
    %325 = arith.addf %319, %324 : vector<27x128xf32>
    %c6_319 = arith.constant 6 : index
    %c0_320 = arith.constant 0 : index
    %326 = vector.load %arg28[%c6_319, %c0_320] : memref<96x128xf32, #tpu.memory_space<vmem>>, vector<27x128xf32>
    %327 = arith.truncf %326 : vector<27x128xf32> to vector<27x128xbf16>
    %c6_321 = arith.constant 6 : index
    %c0_322 = arith.constant 0 : index
    %c0_323 = arith.constant 0 : index
    %328 = vector.load %arg7[%c6_321, %c0_322, %c0_323] : memref<7x128x128xbf16, #tpu.memory_space<vmem>>, vector<1x128x128xbf16>
    %329 = vector.shape_cast %328 : vector<1x128x128xbf16> to vector<128x128xbf16>
    %cst_324 = arith.constant dense<0.000000e+00> : vector<27x128xf32>
    %330 = tpu.matmul %327, %329, %cst_324 {dimension_numbers = #tpu.dot_dimension_numbers<[1], [0], [0], [1], [0, 0, 1, 1], [], []>} : vector<27x128xbf16>, vector<128x128xbf16>, vector<27x128xf32> -> vector<27x128xf32>
    %331 = arith.addf %325, %330 : vector<27x128xf32>
    %c0_325 = arith.constant 0 : index
    %c0_326 = arith.constant 0 : index
    %332 = vector.load %arg19[%c0_325, %c0_326] : memref<2x128xf32, #tpu.memory_space<vmem>>, vector<1x128xf32>
    %c1_327 = arith.constant 1 : index
    %c0_328 = arith.constant 0 : index
    %333 = vector.load %arg19[%c1_327, %c0_328] : memref<2x128xf32, #tpu.memory_space<vmem>>, vector<1x128xf32>
    %334 = vector.broadcast %332 : vector<1x128xf32> to vector<27x128xf32>
    %335 = arith.mulf %331, %334 : vector<27x128xf32>
    %336 = vector.broadcast %333 : vector<1x128xf32> to vector<27x128xf32>
    %337 = arith.addf %335, %336 : vector<27x128xf32>
    %cst_329 = arith.constant 0.000000e+00 : f32
    %338 = vector.broadcast %cst_329 : f32 to vector<27x128xf32>
    %339 = arith.maximumf %337, %338 : vector<27x128xf32>
    %c0_330 = arith.constant 0 : index
    %c0_331 = arith.constant 0 : index
    %340 = vector.load %arg29[%c0_330, %c0_331] : memref<96x128xf32, #tpu.memory_space<vmem>>, vector<27x128xf32>
    tpu.vector_store %arg29[%c0_330, %c0_331], %339 {strides = array<i32>} : memref<96x128xf32, #tpu.memory_space<vmem>>, vector<27x128xf32>,
    %c0_332 = arith.constant 0 : index
    %c0_333 = arith.constant 0 : index
    %341 = tpu.strided_load %arg29[%c0_332, %c0_333] {strides = array<i32: 3, 1>} : memref<96x128xf32, #tpu.memory_space<vmem>>, vector<9x128xf32>
    %c1_334 = arith.constant 1 : index
    %c0_335 = arith.constant 0 : index
    %342 = tpu.strided_load %arg29[%c1_334, %c0_335] {strides = array<i32: 3, 1>} : memref<96x128xf32, #tpu.memory_space<vmem>>, vector<9x128xf32>
    %c2_336 = arith.constant 2 : index
    %c0_337 = arith.constant 0 : index
    %343 = tpu.strided_load %arg29[%c2_336, %c0_337] {strides = array<i32: 3, 1>} : memref<96x128xf32, #tpu.memory_space<vmem>>, vector<9x128xf32>
    %344 = arith.maximumf %341, %342 : vector<9x128xf32>
    %345 = arith.maximumf %344, %343 : vector<9x128xf32>
    %cst_338 = arith.constant 0.000000e+00 : f32
    %346 = vector.broadcast %cst_338 : f32 to vector<3x128xf32>
    %c0_339 = arith.constant 0 : index
    %c0_340 = arith.constant 0 : index
    %347 = vector.load %arg28[%c0_339, %c0_340] : memref<96x128xf32, #tpu.memory_space<vmem>>, vector<3x128xf32>
    tpu.vector_store %arg28[%c0_339, %c0_340], %346 {strides = array<i32>} : memref<96x128xf32, #tpu.memory_space<vmem>>, vector<3x128xf32>,
    %c12 = arith.constant 12 : index
    %c0_341 = arith.constant 0 : index
    %348 = vector.load %arg28[%c12, %c0_341] : memref<96x128xf32, #tpu.memory_space<vmem>>, vector<3x128xf32>
    tpu.vector_store %arg28[%c12, %c0_341], %346 {strides = array<i32>} : memref<96x128xf32, #tpu.memory_space<vmem>>, vector<3x128xf32>,
    %c3_342 = arith.constant 3 : index
    %c0_343 = arith.constant 0 : index
    %349 = vector.load %arg28[%c3_342, %c0_343] : memref<96x128xf32, #tpu.memory_space<vmem>>, vector<9x128xf32>
    tpu.vector_store %arg28[%c3_342, %c0_343], %345 {strides = array<i32>} : memref<96x128xf32, #tpu.memory_space<vmem>>, vector<9x128xf32>,
    %cst_344 = arith.constant 0.000000e+00 : f32
    %350 = vector.broadcast %cst_344 : f32 to vector<9x128xf32>
    %c0_345 = arith.constant 0 : index
    %c0_346 = arith.constant 0 : index
    %351 = vector.load %arg28[%c0_345, %c0_346] : memref<96x128xf32, #tpu.memory_space<vmem>>, vector<9x128xf32>
    %352 = arith.truncf %351 : vector<9x128xf32> to vector<9x128xbf16>
    %c0_347 = arith.constant 0 : index
    %c0_348 = arith.constant 0 : index
    %c0_349 = arith.constant 0 : index
    %353 = vector.load %arg8[%c0_347, %c0_348, %c0_349] : memref<7x128x128xbf16, #tpu.memory_space<vmem>>, vector<1x128x128xbf16>
    %354 = vector.shape_cast %353 : vector<1x128x128xbf16> to vector<128x128xbf16>
    %cst_350 = arith.constant dense<0.000000e+00> : vector<9x128xf32>
    %355 = tpu.matmul %352, %354, %cst_350 {dimension_numbers = #tpu.dot_dimension_numbers<[1], [0], [0], [1], [0, 0, 1, 1], [], []>} : vector<9x128xbf16>, vector<128x128xbf16>, vector<9x128xf32> -> vector<9x128xf32>
    %356 = arith.addf %350, %355 : vector<9x128xf32>
    %c1_351 = arith.constant 1 : index
    %c0_352 = arith.constant 0 : index
    %357 = vector.load %arg28[%c1_351, %c0_352] : memref<96x128xf32, #tpu.memory_space<vmem>>, vector<9x128xf32>
    %358 = arith.truncf %357 : vector<9x128xf32> to vector<9x128xbf16>
    %c1_353 = arith.constant 1 : index
    %c0_354 = arith.constant 0 : index
    %c0_355 = arith.constant 0 : index
    %359 = vector.load %arg8[%c1_353, %c0_354, %c0_355] : memref<7x128x128xbf16, #tpu.memory_space<vmem>>, vector<1x128x128xbf16>
    %360 = vector.shape_cast %359 : vector<1x128x128xbf16> to vector<128x128xbf16>
    %cst_356 = arith.constant dense<0.000000e+00> : vector<9x128xf32>
    %361 = tpu.matmul %358, %360, %cst_356 {dimension_numbers = #tpu.dot_dimension_numbers<[1], [0], [0], [1], [0, 0, 1, 1], [], []>} : vector<9x128xbf16>, vector<128x128xbf16>, vector<9x128xf32> -> vector<9x128xf32>
    %362 = arith.addf %356, %361 : vector<9x128xf32>
    %c2_357 = arith.constant 2 : index
    %c0_358 = arith.constant 0 : index
    %363 = vector.load %arg28[%c2_357, %c0_358] : memref<96x128xf32, #tpu.memory_space<vmem>>, vector<9x128xf32>
    %364 = arith.truncf %363 : vector<9x128xf32> to vector<9x128xbf16>
    %c2_359 = arith.constant 2 : index
    %c0_360 = arith.constant 0 : index
    %c0_361 = arith.constant 0 : index
    %365 = vector.load %arg8[%c2_359, %c0_360, %c0_361] : memref<7x128x128xbf16, #tpu.memory_space<vmem>>, vector<1x128x128xbf16>
    %366 = vector.shape_cast %365 : vector<1x128x128xbf16> to vector<128x128xbf16>
    %cst_362 = arith.constant dense<0.000000e+00> : vector<9x128xf32>
    %367 = tpu.matmul %364, %366, %cst_362 {dimension_numbers = #tpu.dot_dimension_numbers<[1], [0], [0], [1], [0, 0, 1, 1], [], []>} : vector<9x128xbf16>, vector<128x128xbf16>, vector<9x128xf32> -> vector<9x128xf32>
    %368 = arith.addf %362, %367 : vector<9x128xf32>
    %c3_363 = arith.constant 3 : index
    %c0_364 = arith.constant 0 : index
    %369 = vector.load %arg28[%c3_363, %c0_364] : memref<96x128xf32, #tpu.memory_space<vmem>>, vector<9x128xf32>
    %370 = arith.truncf %369 : vector<9x128xf32> to vector<9x128xbf16>
    %c3_365 = arith.constant 3 : index
    %c0_366 = arith.constant 0 : index
    %c0_367 = arith.constant 0 : index
    %371 = vector.load %arg8[%c3_365, %c0_366, %c0_367] : memref<7x128x128xbf16, #tpu.memory_space<vmem>>, vector<1x128x128xbf16>
    %372 = vector.shape_cast %371 : vector<1x128x128xbf16> to vector<128x128xbf16>
    %cst_368 = arith.constant dense<0.000000e+00> : vector<9x128xf32>
    %373 = tpu.matmul %370, %372, %cst_368 {dimension_numbers = #tpu.dot_dimension_numbers<[1], [0], [0], [1], [0, 0, 1, 1], [], []>} : vector<9x128xbf16>, vector<128x128xbf16>, vector<9x128xf32> -> vector<9x128xf32>
    %374 = arith.addf %368, %373 : vector<9x128xf32>
    %c4_369 = arith.constant 4 : index
    %c0_370 = arith.constant 0 : index
    %375 = vector.load %arg28[%c4_369, %c0_370] : memref<96x128xf32, #tpu.memory_space<vmem>>, vector<9x128xf32>
    %376 = arith.truncf %375 : vector<9x128xf32> to vector<9x128xbf16>
    %c4_371 = arith.constant 4 : index
    %c0_372 = arith.constant 0 : index
    %c0_373 = arith.constant 0 : index
    %377 = vector.load %arg8[%c4_371, %c0_372, %c0_373] : memref<7x128x128xbf16, #tpu.memory_space<vmem>>, vector<1x128x128xbf16>
    %378 = vector.shape_cast %377 : vector<1x128x128xbf16> to vector<128x128xbf16>
    %cst_374 = arith.constant dense<0.000000e+00> : vector<9x128xf32>
    %379 = tpu.matmul %376, %378, %cst_374 {dimension_numbers = #tpu.dot_dimension_numbers<[1], [0], [0], [1], [0, 0, 1, 1], [], []>} : vector<9x128xbf16>, vector<128x128xbf16>, vector<9x128xf32> -> vector<9x128xf32>
    %380 = arith.addf %374, %379 : vector<9x128xf32>
    %c5_375 = arith.constant 5 : index
    %c0_376 = arith.constant 0 : index
    %381 = vector.load %arg28[%c5_375, %c0_376] : memref<96x128xf32, #tpu.memory_space<vmem>>, vector<9x128xf32>
    %382 = arith.truncf %381 : vector<9x128xf32> to vector<9x128xbf16>
    %c5_377 = arith.constant 5 : index
    %c0_378 = arith.constant 0 : index
    %c0_379 = arith.constant 0 : index
    %383 = vector.load %arg8[%c5_377, %c0_378, %c0_379] : memref<7x128x128xbf16, #tpu.memory_space<vmem>>, vector<1x128x128xbf16>
    %384 = vector.shape_cast %383 : vector<1x128x128xbf16> to vector<128x128xbf16>
    %cst_380 = arith.constant dense<0.000000e+00> : vector<9x128xf32>
    %385 = tpu.matmul %382, %384, %cst_380 {dimension_numbers = #tpu.dot_dimension_numbers<[1], [0], [0], [1], [0, 0, 1, 1], [], []>} : vector<9x128xbf16>, vector<128x128xbf16>, vector<9x128xf32> -> vector<9x128xf32>
    %386 = arith.addf %380, %385 : vector<9x128xf32>
    %c6_381 = arith.constant 6 : index
    %c0_382 = arith.constant 0 : index
    %387 = vector.load %arg28[%c6_381, %c0_382] : memref<96x128xf32, #tpu.memory_space<vmem>>, vector<9x128xf32>
    %388 = arith.truncf %387 : vector<9x128xf32> to vector<9x128xbf16>
    %c6_383 = arith.constant 6 : index
    %c0_384 = arith.constant 0 : index
    %c0_385 = arith.constant 0 : index
    %389 = vector.load %arg8[%c6_383, %c0_384, %c0_385] : memref<7x128x128xbf16, #tpu.memory_space<vmem>>, vector<1x128x128xbf16>
    %390 = vector.shape_cast %389 : vector<1x128x128xbf16> to vector<128x128xbf16>
    %cst_386 = arith.constant dense<0.000000e+00> : vector<9x128xf32>
    %391 = tpu.matmul %388, %390, %cst_386 {dimension_numbers = #tpu.dot_dimension_numbers<[1], [0], [0], [1], [0, 0, 1, 1], [], []>} : vector<9x128xbf16>, vector<128x128xbf16>, vector<9x128xf32> -> vector<9x128xf32>
    %392 = arith.addf %386, %391 : vector<9x128xf32>
    %c0_387 = arith.constant 0 : index
    %c0_388 = arith.constant 0 : index
    %393 = vector.load %arg20[%c0_387, %c0_388] : memref<2x128xf32, #tpu.memory_space<vmem>>, vector<1x128xf32>
    %c1_389 = arith.constant 1 : index
    %c0_390 = arith.constant 0 : index
    %394 = vector.load %arg20[%c1_389, %c0_390] : memref<2x128xf32, #tpu.memory_space<vmem>>, vector<1x128xf32>
    %395 = vector.broadcast %393 : vector<1x128xf32> to vector<9x128xf32>
    %396 = arith.mulf %392, %395 : vector<9x128xf32>
    %397 = vector.broadcast %394 : vector<1x128xf32> to vector<9x128xf32>
    %398 = arith.addf %396, %397 : vector<9x128xf32>
    %cst_391 = arith.constant 0.000000e+00 : f32
    %399 = vector.broadcast %cst_391 : f32 to vector<9x128xf32>
    %400 = arith.maximumf %398, %399 : vector<9x128xf32>
    %c0_392 = arith.constant 0 : index
    %c0_393 = arith.constant 0 : index
    %401 = vector.load %arg29[%c0_392, %c0_393] : memref<96x128xf32, #tpu.memory_space<vmem>>, vector<9x128xf32>
    tpu.vector_store %arg29[%c0_392, %c0_393], %400 {strides = array<i32>} : memref<96x128xf32, #tpu.memory_space<vmem>>, vector<9x128xf32>,
    %c0_394 = arith.constant 0 : index
    %c0_395 = arith.constant 0 : index
    %402 = tpu.strided_load %arg29[%c0_394, %c0_395] {strides = array<i32: 3, 1>} : memref<96x128xf32, #tpu.memory_space<vmem>>, vector<3x128xf32>
    %c1_396 = arith.constant 1 : index
    %c0_397 = arith.constant 0 : index
    %403 = tpu.strided_load %arg29[%c1_396, %c0_397] {strides = array<i32: 3, 1>} : memref<96x128xf32, #tpu.memory_space<vmem>>, vector<3x128xf32>
    %c2_398 = arith.constant 2 : index
    %c0_399 = arith.constant 0 : index
    %404 = tpu.strided_load %arg29[%c2_398, %c0_399] {strides = array<i32: 3, 1>} : memref<96x128xf32, #tpu.memory_space<vmem>>, vector<3x128xf32>
    %405 = arith.maximumf %402, %403 : vector<3x128xf32>
    %406 = arith.maximumf %405, %404 : vector<3x128xf32>
    %cst_400 = arith.constant 0.000000e+00 : f32
    %407 = vector.broadcast %cst_400 : f32 to vector<1x128xf32>
    %c0_401 = arith.constant 0 : index
    %c0_402 = arith.constant 0 : index
    %408 = vector.load %arg28[%c0_401, %c0_402] : memref<96x128xf32, #tpu.memory_space<vmem>>, vector<1x128xf32>
    tpu.vector_store %arg28[%c0_401, %c0_402], %407 {strides = array<i32>} : memref<96x128xf32, #tpu.memory_space<vmem>>, vector<1x128xf32>,
    %c4_403 = arith.constant 4 : index
    %c0_404 = arith.constant 0 : index
    %409 = vector.load %arg28[%c4_403, %c0_404] : memref<96x128xf32, #tpu.memory_space<vmem>>, vector<1x128xf32>
    tpu.vector_store %arg28[%c4_403, %c0_404], %407 {strides = array<i32>} : memref<96x128xf32, #tpu.memory_space<vmem>>, vector<1x128xf32>,
    %c1_405 = arith.constant 1 : index
    %c0_406 = arith.constant 0 : index
    %410 = vector.load %arg28[%c1_405, %c0_406] : memref<96x128xf32, #tpu.memory_space<vmem>>, vector<3x128xf32>
    tpu.vector_store %arg28[%c1_405, %c0_406], %406 {strides = array<i32>} : memref<96x128xf32, #tpu.memory_space<vmem>>, vector<3x128xf32>,
    %cst_407 = arith.constant 0.000000e+00 : f32
    %411 = vector.broadcast %cst_407 : f32 to vector<3x128xf32>
    %c0_408 = arith.constant 0 : index
    %c0_409 = arith.constant 0 : index
    %412 = vector.load %arg28[%c0_408, %c0_409] : memref<96x128xf32, #tpu.memory_space<vmem>>, vector<3x128xf32>
    %413 = arith.truncf %412 : vector<3x128xf32> to vector<3x128xbf16>
    %c0_410 = arith.constant 0 : index
    %c0_411 = arith.constant 0 : index
    %c0_412 = arith.constant 0 : index
    %414 = vector.load %arg9[%c0_410, %c0_411, %c0_412] : memref<3x128x128xbf16, #tpu.memory_space<vmem>>, vector<1x128x128xbf16>
    %415 = vector.shape_cast %414 : vector<1x128x128xbf16> to vector<128x128xbf16>
    %cst_413 = arith.constant dense<0.000000e+00> : vector<3x128xf32>
    %416 = tpu.matmul %413, %415, %cst_413 {dimension_numbers = #tpu.dot_dimension_numbers<[1], [0], [0], [1], [0, 0, 1, 1], [], []>} : vector<3x128xbf16>, vector<128x128xbf16>, vector<3x128xf32> -> vector<3x128xf32>
    %417 = arith.addf %411, %416 : vector<3x128xf32>
    %c1_414 = arith.constant 1 : index
    %c0_415 = arith.constant 0 : index
    %418 = vector.load %arg28[%c1_414, %c0_415] : memref<96x128xf32, #tpu.memory_space<vmem>>, vector<3x128xf32>
    %419 = arith.truncf %418 : vector<3x128xf32> to vector<3x128xbf16>
    %c1_416 = arith.constant 1 : index
    %c0_417 = arith.constant 0 : index
    %c0_418 = arith.constant 0 : index
    %420 = vector.load %arg9[%c1_416, %c0_417, %c0_418] : memref<3x128x128xbf16, #tpu.memory_space<vmem>>, vector<1x128x128xbf16>
    %421 = vector.shape_cast %420 : vector<1x128x128xbf16> to vector<128x128xbf16>
    %cst_419 = arith.constant dense<0.000000e+00> : vector<3x128xf32>
    %422 = tpu.matmul %419, %421, %cst_419 {dimension_numbers = #tpu.dot_dimension_numbers<[1], [0], [0], [1], [0, 0, 1, 1], [], []>} : vector<3x128xbf16>, vector<128x128xbf16>, vector<3x128xf32> -> vector<3x128xf32>
    %423 = arith.addf %417, %422 : vector<3x128xf32>
    %c2_420 = arith.constant 2 : index
    %c0_421 = arith.constant 0 : index
    %424 = vector.load %arg28[%c2_420, %c0_421] : memref<96x128xf32, #tpu.memory_space<vmem>>, vector<3x128xf32>
    %425 = arith.truncf %424 : vector<3x128xf32> to vector<3x128xbf16>
    %c2_422 = arith.constant 2 : index
    %c0_423 = arith.constant 0 : index
    %c0_424 = arith.constant 0 : index
    %426 = vector.load %arg9[%c2_422, %c0_423, %c0_424] : memref<3x128x128xbf16, #tpu.memory_space<vmem>>, vector<1x128x128xbf16>
    %427 = vector.shape_cast %426 : vector<1x128x128xbf16> to vector<128x128xbf16>
    %cst_425 = arith.constant dense<0.000000e+00> : vector<3x128xf32>
    %428 = tpu.matmul %425, %427, %cst_425 {dimension_numbers = #tpu.dot_dimension_numbers<[1], [0], [0], [1], [0, 0, 1, 1], [], []>} : vector<3x128xbf16>, vector<128x128xbf16>, vector<3x128xf32> -> vector<3x128xf32>
    %429 = arith.addf %423, %428 : vector<3x128xf32>
    %c0_426 = arith.constant 0 : index
    %c0_427 = arith.constant 0 : index
    %430 = vector.load %arg21[%c0_426, %c0_427] : memref<2x128xf32, #tpu.memory_space<vmem>>, vector<1x128xf32>
    %c1_428 = arith.constant 1 : index
    %c0_429 = arith.constant 0 : index
    %431 = vector.load %arg21[%c1_428, %c0_429] : memref<2x128xf32, #tpu.memory_space<vmem>>, vector<1x128xf32>
    %432 = vector.broadcast %430 : vector<1x128xf32> to vector<3x128xf32>
    %433 = arith.mulf %429, %432 : vector<3x128xf32>
    %434 = vector.broadcast %431 : vector<1x128xf32> to vector<3x128xf32>
    %435 = arith.addf %433, %434 : vector<3x128xf32>
    %cst_430 = arith.constant 0.000000e+00 : f32
    %436 = vector.broadcast %cst_430 : f32 to vector<3x128xf32>
    %437 = arith.maximumf %435, %436 : vector<3x128xf32>
    %cst_431 = arith.constant 0.000000e+00 : f32
    %438 = vector.broadcast %cst_431 : f32 to vector<1x128xf32>
    %c0_432 = arith.constant 0 : index
    %c0_433 = arith.constant 0 : index
    %439 = vector.load %arg28[%c0_432, %c0_433] : memref<96x128xf32, #tpu.memory_space<vmem>>, vector<1x128xf32>
    tpu.vector_store %arg28[%c0_432, %c0_433], %438 {strides = array<i32>} : memref<96x128xf32, #tpu.memory_space<vmem>>, vector<1x128xf32>,
    %c4_434 = arith.constant 4 : index
    %c0_435 = arith.constant 0 : index
    %440 = vector.load %arg28[%c4_434, %c0_435] : memref<96x128xf32, #tpu.memory_space<vmem>>, vector<1x128xf32>
    tpu.vector_store %arg28[%c4_434, %c0_435], %438 {strides = array<i32>} : memref<96x128xf32, #tpu.memory_space<vmem>>, vector<1x128xf32>,
    %c1_436 = arith.constant 1 : index
    %c0_437 = arith.constant 0 : index
    %441 = vector.load %arg28[%c1_436, %c0_437] : memref<96x128xf32, #tpu.memory_space<vmem>>, vector<3x128xf32>
    tpu.vector_store %arg28[%c1_436, %c0_437], %437 {strides = array<i32>} : memref<96x128xf32, #tpu.memory_space<vmem>>, vector<3x128xf32>,
    %cst_438 = arith.constant 0.000000e+00 : f32
    %442 = vector.broadcast %cst_438 : f32 to vector<3x128xf32>
    %c0_439 = arith.constant 0 : index
    %c0_440 = arith.constant 0 : index
    %443 = vector.load %arg28[%c0_439, %c0_440] : memref<96x128xf32, #tpu.memory_space<vmem>>, vector<3x128xf32>
    %444 = arith.truncf %443 : vector<3x128xf32> to vector<3x128xbf16>
    %c0_441 = arith.constant 0 : index
    %c0_442 = arith.constant 0 : index
    %c0_443 = arith.constant 0 : index
    %445 = vector.load %arg10[%c0_441, %c0_442, %c0_443] : memref<3x128x128xbf16, #tpu.memory_space<vmem>>, vector<1x128x128xbf16>
    %446 = vector.shape_cast %445 : vector<1x128x128xbf16> to vector<128x128xbf16>
    %cst_444 = arith.constant dense<0.000000e+00> : vector<3x128xf32>
    %447 = tpu.matmul %444, %446, %cst_444 {dimension_numbers = #tpu.dot_dimension_numbers<[1], [0], [0], [1], [0, 0, 1, 1], [], []>} : vector<3x128xbf16>, vector<128x128xbf16>, vector<3x128xf32> -> vector<3x128xf32>
    %448 = arith.addf %442, %447 : vector<3x128xf32>
    %c1_445 = arith.constant 1 : index
    %c0_446 = arith.constant 0 : index
    %449 = vector.load %arg28[%c1_445, %c0_446] : memref<96x128xf32, #tpu.memory_space<vmem>>, vector<3x128xf32>
    %450 = arith.truncf %449 : vector<3x128xf32> to vector<3x128xbf16>
    %c1_447 = arith.constant 1 : index
    %c0_448 = arith.constant 0 : index
    %c0_449 = arith.constant 0 : index
    %451 = vector.load %arg10[%c1_447, %c0_448, %c0_449] : memref<3x128x128xbf16, #tpu.memory_space<vmem>>, vector<1x128x128xbf16>
    %452 = vector.shape_cast %451 : vector<1x128x128xbf16> to vector<128x128xbf16>
    %cst_450 = arith.constant dense<0.000000e+00> : vector<3x128xf32>
    %453 = tpu.matmul %450, %452, %cst_450 {dimension_numbers = #tpu.dot_dimension_numbers<[1], [0], [0], [1], [0, 0, 1, 1], [], []>} : vector<3x128xbf16>, vector<128x128xbf16>, vector<3x128xf32> -> vector<3x128xf32>
    %454 = arith.addf %448, %453 : vector<3x128xf32>
    %c2_451 = arith.constant 2 : index
    %c0_452 = arith.constant 0 : index
    %455 = vector.load %arg28[%c2_451, %c0_452] : memref<96x128xf32, #tpu.memory_space<vmem>>, vector<3x128xf32>
    %456 = arith.truncf %455 : vector<3x128xf32> to vector<3x128xbf16>
    %c2_453 = arith.constant 2 : index
    %c0_454 = arith.constant 0 : index
    %c0_455 = arith.constant 0 : index
    %457 = vector.load %arg10[%c2_453, %c0_454, %c0_455] : memref<3x128x128xbf16, #tpu.memory_space<vmem>>, vector<1x128x128xbf16>
    %458 = vector.shape_cast %457 : vector<1x128x128xbf16> to vector<128x128xbf16>
    %cst_456 = arith.constant dense<0.000000e+00> : vector<3x128xf32>
    %459 = tpu.matmul %456, %458, %cst_456 {dimension_numbers = #tpu.dot_dimension_numbers<[1], [0], [0], [1], [0, 0, 1, 1], [], []>} : vector<3x128xbf16>, vector<128x128xbf16>, vector<3x128xf32> -> vector<3x128xf32>
    %460 = arith.addf %454, %459 : vector<3x128xf32>
    %c0_457 = arith.constant 0 : index
    %c0_458 = arith.constant 0 : index
    %461 = vector.load %arg22[%c0_457, %c0_458] : memref<2x128xf32, #tpu.memory_space<vmem>>, vector<1x128xf32>
    %c1_459 = arith.constant 1 : index
    %c0_460 = arith.constant 0 : index
    %462 = vector.load %arg22[%c1_459, %c0_460] : memref<2x128xf32, #tpu.memory_space<vmem>>, vector<1x128xf32>
    %463 = vector.broadcast %461 : vector<1x128xf32> to vector<3x128xf32>
    %464 = arith.mulf %460, %463 : vector<3x128xf32>
    %465 = vector.broadcast %462 : vector<1x128xf32> to vector<3x128xf32>
    %466 = arith.addf %464, %465 : vector<3x128xf32>
    %cst_461 = arith.constant 0.000000e+00 : f32
    %467 = vector.broadcast %cst_461 : f32 to vector<3x128xf32>
    %468 = arith.maximumf %466, %467 : vector<3x128xf32>
    %cst_462 = arith.constant 0.000000e+00 : f32
    %469 = vector.broadcast %cst_462 : f32 to vector<1x128xf32>
    %c0_463 = arith.constant 0 : index
    %c0_464 = arith.constant 0 : index
    %470 = vector.load %arg28[%c0_463, %c0_464] : memref<96x128xf32, #tpu.memory_space<vmem>>, vector<1x128xf32>
    tpu.vector_store %arg28[%c0_463, %c0_464], %469 {strides = array<i32>} : memref<96x128xf32, #tpu.memory_space<vmem>>, vector<1x128xf32>,
    %c4_465 = arith.constant 4 : index
    %c0_466 = arith.constant 0 : index
    %471 = vector.load %arg28[%c4_465, %c0_466] : memref<96x128xf32, #tpu.memory_space<vmem>>, vector<1x128xf32>
    tpu.vector_store %arg28[%c4_465, %c0_466], %469 {strides = array<i32>} : memref<96x128xf32, #tpu.memory_space<vmem>>, vector<1x128xf32>,
    %c1_467 = arith.constant 1 : index
    %c0_468 = arith.constant 0 : index
    %472 = vector.load %arg28[%c1_467, %c0_468] : memref<96x128xf32, #tpu.memory_space<vmem>>, vector<3x128xf32>
    tpu.vector_store %arg28[%c1_467, %c0_468], %468 {strides = array<i32>} : memref<96x128xf32, #tpu.memory_space<vmem>>, vector<3x128xf32>,
    %cst_469 = arith.constant 0.000000e+00 : f32
    %473 = vector.broadcast %cst_469 : f32 to vector<3x128xf32>
    %c0_470 = arith.constant 0 : index
    %c0_471 = arith.constant 0 : index
    %474 = vector.load %arg28[%c0_470, %c0_471] : memref<96x128xf32, #tpu.memory_space<vmem>>, vector<3x128xf32>
    %475 = arith.truncf %474 : vector<3x128xf32> to vector<3x128xbf16>
    %c0_472 = arith.constant 0 : index
    %c0_473 = arith.constant 0 : index
    %c0_474 = arith.constant 0 : index
    %476 = vector.load %arg11[%c0_472, %c0_473, %c0_474] : memref<3x128x128xbf16, #tpu.memory_space<vmem>>, vector<1x128x128xbf16>
    %477 = vector.shape_cast %476 : vector<1x128x128xbf16> to vector<128x128xbf16>
    %cst_475 = arith.constant dense<0.000000e+00> : vector<3x128xf32>
    %478 = tpu.matmul %475, %477, %cst_475 {dimension_numbers = #tpu.dot_dimension_numbers<[1], [0], [0], [1], [0, 0, 1, 1], [], []>} : vector<3x128xbf16>, vector<128x128xbf16>, vector<3x128xf32> -> vector<3x128xf32>
    %479 = arith.addf %473, %478 : vector<3x128xf32>
    %c1_476 = arith.constant 1 : index
    %c0_477 = arith.constant 0 : index
    %480 = vector.load %arg28[%c1_476, %c0_477] : memref<96x128xf32, #tpu.memory_space<vmem>>, vector<3x128xf32>
    %481 = arith.truncf %480 : vector<3x128xf32> to vector<3x128xbf16>
    %c1_478 = arith.constant 1 : index
    %c0_479 = arith.constant 0 : index
    %c0_480 = arith.constant 0 : index
    %482 = vector.load %arg11[%c1_478, %c0_479, %c0_480] : memref<3x128x128xbf16, #tpu.memory_space<vmem>>, vector<1x128x128xbf16>
    %483 = vector.shape_cast %482 : vector<1x128x128xbf16> to vector<128x128xbf16>
    %cst_481 = arith.constant dense<0.000000e+00> : vector<3x128xf32>
    %484 = tpu.matmul %481, %483, %cst_481 {dimension_numbers = #tpu.dot_dimension_numbers<[1], [0], [0], [1], [0, 0, 1, 1], [], []>} : vector<3x128xbf16>, vector<128x128xbf16>, vector<3x128xf32> -> vector<3x128xf32>
    %485 = arith.addf %479, %484 : vector<3x128xf32>
    %c2_482 = arith.constant 2 : index
    %c0_483 = arith.constant 0 : index
    %486 = vector.load %arg28[%c2_482, %c0_483] : memref<96x128xf32, #tpu.memory_space<vmem>>, vector<3x128xf32>
    %487 = arith.truncf %486 : vector<3x128xf32> to vector<3x128xbf16>
    %c2_484 = arith.constant 2 : index
    %c0_485 = arith.constant 0 : index
    %c0_486 = arith.constant 0 : index
    %488 = vector.load %arg11[%c2_484, %c0_485, %c0_486] : memref<3x128x128xbf16, #tpu.memory_space<vmem>>, vector<1x128x128xbf16>
    %489 = vector.shape_cast %488 : vector<1x128x128xbf16> to vector<128x128xbf16>
    %cst_487 = arith.constant dense<0.000000e+00> : vector<3x128xf32>
    %490 = tpu.matmul %487, %489, %cst_487 {dimension_numbers = #tpu.dot_dimension_numbers<[1], [0], [0], [1], [0, 0, 1, 1], [], []>} : vector<3x128xbf16>, vector<128x128xbf16>, vector<3x128xf32> -> vector<3x128xf32>
    %491 = arith.addf %485, %490 : vector<3x128xf32>
    %c0_488 = arith.constant 0 : index
    %c0_489 = arith.constant 0 : index
    %492 = vector.load %arg23[%c0_488, %c0_489] : memref<2x128xf32, #tpu.memory_space<vmem>>, vector<1x128xf32>
    %c1_490 = arith.constant 1 : index
    %c0_491 = arith.constant 0 : index
    %493 = vector.load %arg23[%c1_490, %c0_491] : memref<2x128xf32, #tpu.memory_space<vmem>>, vector<1x128xf32>
    %494 = vector.broadcast %492 : vector<1x128xf32> to vector<3x128xf32>
    %495 = arith.mulf %491, %494 : vector<3x128xf32>
    %496 = vector.broadcast %493 : vector<1x128xf32> to vector<3x128xf32>
    %497 = arith.addf %495, %496 : vector<3x128xf32>
    %cst_492 = arith.constant 0.000000e+00 : f32
    %498 = vector.broadcast %cst_492 : f32 to vector<3x128xf32>
    %499 = arith.maximumf %497, %498 : vector<3x128xf32>
    %cst_493 = arith.constant 0.000000e+00 : f32
    %500 = vector.broadcast %cst_493 : f32 to vector<1x128xf32>
    %c0_494 = arith.constant 0 : index
    %c0_495 = arith.constant 0 : index
    %501 = vector.load %arg28[%c0_494, %c0_495] : memref<96x128xf32, #tpu.memory_space<vmem>>, vector<1x128xf32>
    tpu.vector_store %arg28[%c0_494, %c0_495], %500 {strides = array<i32>} : memref<96x128xf32, #tpu.memory_space<vmem>>, vector<1x128xf32>,
    %c4_496 = arith.constant 4 : index
    %c0_497 = arith.constant 0 : index
    %502 = vector.load %arg28[%c4_496, %c0_497] : memref<96x128xf32, #tpu.memory_space<vmem>>, vector<1x128xf32>
    tpu.vector_store %arg28[%c4_496, %c0_497], %500 {strides = array<i32>} : memref<96x128xf32, #tpu.memory_space<vmem>>, vector<1x128xf32>,
    %c1_498 = arith.constant 1 : index
    %c0_499 = arith.constant 0 : index
    %503 = vector.load %arg28[%c1_498, %c0_499] : memref<96x128xf32, #tpu.memory_space<vmem>>, vector<3x128xf32>
    tpu.vector_store %arg28[%c1_498, %c0_499], %499 {strides = array<i32>} : memref<96x128xf32, #tpu.memory_space<vmem>>, vector<3x128xf32>,
    %cst_500 = arith.constant 0.000000e+00 : f32
    %504 = vector.broadcast %cst_500 : f32 to vector<3x128xf32>
    %c0_501 = arith.constant 0 : index
    %c0_502 = arith.constant 0 : index
    %505 = vector.load %arg28[%c0_501, %c0_502] : memref<96x128xf32, #tpu.memory_space<vmem>>, vector<3x128xf32>
    %506 = arith.truncf %505 : vector<3x128xf32> to vector<3x128xbf16>
    %c0_503 = arith.constant 0 : index
    %c0_504 = arith.constant 0 : index
    %c0_505 = arith.constant 0 : index
    %507 = vector.load %arg12[%c0_503, %c0_504, %c0_505] : memref<3x128x128xbf16, #tpu.memory_space<vmem>>, vector<1x128x128xbf16>
    %508 = vector.shape_cast %507 : vector<1x128x128xbf16> to vector<128x128xbf16>
    %cst_506 = arith.constant dense<0.000000e+00> : vector<3x128xf32>
    %509 = tpu.matmul %506, %508, %cst_506 {dimension_numbers = #tpu.dot_dimension_numbers<[1], [0], [0], [1], [0, 0, 1, 1], [], []>} : vector<3x128xbf16>, vector<128x128xbf16>, vector<3x128xf32> -> vector<3x128xf32>
    %510 = arith.addf %504, %509 : vector<3x128xf32>
    %c1_507 = arith.constant 1 : index
    %c0_508 = arith.constant 0 : index
    %511 = vector.load %arg28[%c1_507, %c0_508] : memref<96x128xf32, #tpu.memory_space<vmem>>, vector<3x128xf32>
    %512 = arith.truncf %511 : vector<3x128xf32> to vector<3x128xbf16>
    %c1_509 = arith.constant 1 : index
    %c0_510 = arith.constant 0 : index
    %c0_511 = arith.constant 0 : index
    %513 = vector.load %arg12[%c1_509, %c0_510, %c0_511] : memref<3x128x128xbf16, #tpu.memory_space<vmem>>, vector<1x128x128xbf16>
    %514 = vector.shape_cast %513 : vector<1x128x128xbf16> to vector<128x128xbf16>
    %cst_512 = arith.constant dense<0.000000e+00> : vector<3x128xf32>
    %515 = tpu.matmul %512, %514, %cst_512 {dimension_numbers = #tpu.dot_dimension_numbers<[1], [0], [0], [1], [0, 0, 1, 1], [], []>} : vector<3x128xbf16>, vector<128x128xbf16>, vector<3x128xf32> -> vector<3x128xf32>
    %516 = arith.addf %510, %515 : vector<3x128xf32>
    %c2_513 = arith.constant 2 : index
    %c0_514 = arith.constant 0 : index
    %517 = vector.load %arg28[%c2_513, %c0_514] : memref<96x128xf32, #tpu.memory_space<vmem>>, vector<3x128xf32>
    %518 = arith.truncf %517 : vector<3x128xf32> to vector<3x128xbf16>
    %c2_515 = arith.constant 2 : index
    %c0_516 = arith.constant 0 : index
    %c0_517 = arith.constant 0 : index
    %519 = vector.load %arg12[%c2_515, %c0_516, %c0_517] : memref<3x128x128xbf16, #tpu.memory_space<vmem>>, vector<1x128x128xbf16>
    %520 = vector.shape_cast %519 : vector<1x128x128xbf16> to vector<128x128xbf16>
    %cst_518 = arith.constant dense<0.000000e+00> : vector<3x128xf32>
    %521 = tpu.matmul %518, %520, %cst_518 {dimension_numbers = #tpu.dot_dimension_numbers<[1], [0], [0], [1], [0, 0, 1, 1], [], []>} : vector<3x128xbf16>, vector<128x128xbf16>, vector<3x128xf32> -> vector<3x128xf32>
    %522 = arith.addf %516, %521 : vector<3x128xf32>
    %c0_519 = arith.constant 0 : index
    %c0_520 = arith.constant 0 : index
    %523 = vector.load %arg24[%c0_519, %c0_520] : memref<2x128xf32, #tpu.memory_space<vmem>>, vector<1x128xf32>
    %c1_521 = arith.constant 1 : index
    %c0_522 = arith.constant 0 : index
    %524 = vector.load %arg24[%c1_521, %c0_522] : memref<2x128xf32, #tpu.memory_space<vmem>>, vector<1x128xf32>
    %525 = vector.broadcast %523 : vector<1x128xf32> to vector<3x128xf32>
    %526 = arith.mulf %522, %525 : vector<3x128xf32>
    %527 = vector.broadcast %524 : vector<1x128xf32> to vector<3x128xf32>
    %528 = arith.addf %526, %527 : vector<3x128xf32>
    %cst_523 = arith.constant 0.000000e+00 : f32
    %529 = vector.broadcast %cst_523 : f32 to vector<3x128xf32>
    %530 = arith.maximumf %528, %529 : vector<3x128xf32>
    %cst_524 = arith.constant 0.000000e+00 : f32
    %531 = vector.broadcast %cst_524 : f32 to vector<1x128xf32>
    %c0_525 = arith.constant 0 : index
    %c0_526 = arith.constant 0 : index
    %532 = vector.load %arg28[%c0_525, %c0_526] : memref<96x128xf32, #tpu.memory_space<vmem>>, vector<1x128xf32>
    tpu.vector_store %arg28[%c0_525, %c0_526], %531 {strides = array<i32>} : memref<96x128xf32, #tpu.memory_space<vmem>>, vector<1x128xf32>,
    %c4_527 = arith.constant 4 : index
    %c0_528 = arith.constant 0 : index
    %533 = vector.load %arg28[%c4_527, %c0_528] : memref<96x128xf32, #tpu.memory_space<vmem>>, vector<1x128xf32>
    tpu.vector_store %arg28[%c4_527, %c0_528], %531 {strides = array<i32>} : memref<96x128xf32, #tpu.memory_space<vmem>>, vector<1x128xf32>,
    %c1_529 = arith.constant 1 : index
    %c0_530 = arith.constant 0 : index
    %534 = vector.load %arg28[%c1_529, %c0_530] : memref<96x128xf32, #tpu.memory_space<vmem>>, vector<3x128xf32>
    tpu.vector_store %arg28[%c1_529, %c0_530], %530 {strides = array<i32>} : memref<96x128xf32, #tpu.memory_space<vmem>>, vector<3x128xf32>,
    %cst_531 = arith.constant 0.000000e+00 : f32
    %535 = vector.broadcast %cst_531 : f32 to vector<3x128xf32>
    %c0_532 = arith.constant 0 : index
    %c0_533 = arith.constant 0 : index
    %536 = vector.load %arg28[%c0_532, %c0_533] : memref<96x128xf32, #tpu.memory_space<vmem>>, vector<3x128xf32>
    %537 = arith.truncf %536 : vector<3x128xf32> to vector<3x128xbf16>
    %c0_534 = arith.constant 0 : index
    %c0_535 = arith.constant 0 : index
    %c0_536 = arith.constant 0 : index
    %538 = vector.load %arg13[%c0_534, %c0_535, %c0_536] : memref<3x128x128xbf16, #tpu.memory_space<vmem>>, vector<1x128x128xbf16>
    %539 = vector.shape_cast %538 : vector<1x128x128xbf16> to vector<128x128xbf16>
    %cst_537 = arith.constant dense<0.000000e+00> : vector<3x128xf32>
    %540 = tpu.matmul %537, %539, %cst_537 {dimension_numbers = #tpu.dot_dimension_numbers<[1], [0], [0], [1], [0, 0, 1, 1], [], []>} : vector<3x128xbf16>, vector<128x128xbf16>, vector<3x128xf32> -> vector<3x128xf32>
    %541 = arith.addf %535, %540 : vector<3x128xf32>
    %c1_538 = arith.constant 1 : index
    %c0_539 = arith.constant 0 : index
    %542 = vector.load %arg28[%c1_538, %c0_539] : memref<96x128xf32, #tpu.memory_space<vmem>>, vector<3x128xf32>
    %543 = arith.truncf %542 : vector<3x128xf32> to vector<3x128xbf16>
    %c1_540 = arith.constant 1 : index
    %c0_541 = arith.constant 0 : index
    %c0_542 = arith.constant 0 : index
    %544 = vector.load %arg13[%c1_540, %c0_541, %c0_542] : memref<3x128x128xbf16, #tpu.memory_space<vmem>>, vector<1x128x128xbf16>
    %545 = vector.shape_cast %544 : vector<1x128x128xbf16> to vector<128x128xbf16>
    %cst_543 = arith.constant dense<0.000000e+00> : vector<3x128xf32>
    %546 = tpu.matmul %543, %545, %cst_543 {dimension_numbers = #tpu.dot_dimension_numbers<[1], [0], [0], [1], [0, 0, 1, 1], [], []>} : vector<3x128xbf16>, vector<128x128xbf16>, vector<3x128xf32> -> vector<3x128xf32>
    %547 = arith.addf %541, %546 : vector<3x128xf32>
    %c2_544 = arith.constant 2 : index
    %c0_545 = arith.constant 0 : index
    %548 = vector.load %arg28[%c2_544, %c0_545] : memref<96x128xf32, #tpu.memory_space<vmem>>, vector<3x128xf32>
    %549 = arith.truncf %548 : vector<3x128xf32> to vector<3x128xbf16>
    %c2_546 = arith.constant 2 : index
    %c0_547 = arith.constant 0 : index
    %c0_548 = arith.constant 0 : index
    %550 = vector.load %arg13[%c2_546, %c0_547, %c0_548] : memref<3x128x128xbf16, #tpu.memory_space<vmem>>, vector<1x128x128xbf16>
    %551 = vector.shape_cast %550 : vector<1x128x128xbf16> to vector<128x128xbf16>
    %cst_549 = arith.constant dense<0.000000e+00> : vector<3x128xf32>
    %552 = tpu.matmul %549, %551, %cst_549 {dimension_numbers = #tpu.dot_dimension_numbers<[1], [0], [0], [1], [0, 0, 1, 1], [], []>} : vector<3x128xbf16>, vector<128x128xbf16>, vector<3x128xf32> -> vector<3x128xf32>
    %553 = arith.addf %547, %552 : vector<3x128xf32>
    %c0_550 = arith.constant 0 : index
    %c0_551 = arith.constant 0 : index
    %554 = vector.load %arg25[%c0_550, %c0_551] : memref<2x128xf32, #tpu.memory_space<vmem>>, vector<1x128xf32>
    %c1_552 = arith.constant 1 : index
    %c0_553 = arith.constant 0 : index
    %555 = vector.load %arg25[%c1_552, %c0_553] : memref<2x128xf32, #tpu.memory_space<vmem>>, vector<1x128xf32>
    %556 = vector.broadcast %554 : vector<1x128xf32> to vector<3x128xf32>
    %557 = arith.mulf %553, %556 : vector<3x128xf32>
    %558 = vector.broadcast %555 : vector<1x128xf32> to vector<3x128xf32>
    %559 = arith.addf %557, %558 : vector<3x128xf32>
    %cst_554 = arith.constant 0.000000e+00 : f32
    %560 = vector.broadcast %cst_554 : f32 to vector<3x128xf32>
    %561 = arith.maximumf %559, %560 : vector<3x128xf32>
    %cst_555 = arith.constant 0.000000e+00 : f32
    %562 = vector.broadcast %cst_555 : f32 to vector<1x128xf32>
    %c0_556 = arith.constant 0 : index
    %c0_557 = arith.constant 0 : index
    %563 = vector.load %arg28[%c0_556, %c0_557] : memref<96x128xf32, #tpu.memory_space<vmem>>, vector<1x128xf32>
    tpu.vector_store %arg28[%c0_556, %c0_557], %562 {strides = array<i32>} : memref<96x128xf32, #tpu.memory_space<vmem>>, vector<1x128xf32>,
    %c4_558 = arith.constant 4 : index
    %c0_559 = arith.constant 0 : index
    %564 = vector.load %arg28[%c4_558, %c0_559] : memref<96x128xf32, #tpu.memory_space<vmem>>, vector<1x128xf32>
    tpu.vector_store %arg28[%c4_558, %c0_559], %562 {strides = array<i32>} : memref<96x128xf32, #tpu.memory_space<vmem>>, vector<1x128xf32>,
    %c1_560 = arith.constant 1 : index
    %c0_561 = arith.constant 0 : index
    %565 = vector.load %arg28[%c1_560, %c0_561] : memref<96x128xf32, #tpu.memory_space<vmem>>, vector<3x128xf32>
    tpu.vector_store %arg28[%c1_560, %c0_561], %561 {strides = array<i32>} : memref<96x128xf32, #tpu.memory_space<vmem>>, vector<3x128xf32>,
    %cst_562 = arith.constant 0.000000e+00 : f32
    %566 = vector.broadcast %cst_562 : f32 to vector<3x128xf32>
    %c0_563 = arith.constant 0 : index
    %c0_564 = arith.constant 0 : index
    %567 = vector.load %arg28[%c0_563, %c0_564] : memref<96x128xf32, #tpu.memory_space<vmem>>, vector<3x128xf32>
    %568 = arith.truncf %567 : vector<3x128xf32> to vector<3x128xbf16>
    %c0_565 = arith.constant 0 : index
    %c0_566 = arith.constant 0 : index
    %c0_567 = arith.constant 0 : index
    %569 = vector.load %arg14[%c0_565, %c0_566, %c0_567] : memref<3x128x128xbf16, #tpu.memory_space<vmem>>, vector<1x128x128xbf16>
    %570 = vector.shape_cast %569 : vector<1x128x128xbf16> to vector<128x128xbf16>
    %cst_568 = arith.constant dense<0.000000e+00> : vector<3x128xf32>
    %571 = tpu.matmul %568, %570, %cst_568 {dimension_numbers = #tpu.dot_dimension_numbers<[1], [0], [0], [1], [0, 0, 1, 1], [], []>} : vector<3x128xbf16>, vector<128x128xbf16>, vector<3x128xf32> -> vector<3x128xf32>
    %572 = arith.addf %566, %571 : vector<3x128xf32>
    %c1_569 = arith.constant 1 : index
    %c0_570 = arith.constant 0 : index
    %573 = vector.load %arg28[%c1_569, %c0_570] : memref<96x128xf32, #tpu.memory_space<vmem>>, vector<3x128xf32>
    %574 = arith.truncf %573 : vector<3x128xf32> to vector<3x128xbf16>
    %c1_571 = arith.constant 1 : index
    %c0_572 = arith.constant 0 : index
    %c0_573 = arith.constant 0 : index
    %575 = vector.load %arg14[%c1_571, %c0_572, %c0_573] : memref<3x128x128xbf16, #tpu.memory_space<vmem>>, vector<1x128x128xbf16>
    %576 = vector.shape_cast %575 : vector<1x128x128xbf16> to vector<128x128xbf16>
    %cst_574 = arith.constant dense<0.000000e+00> : vector<3x128xf32>
    %577 = tpu.matmul %574, %576, %cst_574 {dimension_numbers = #tpu.dot_dimension_numbers<[1], [0], [0], [1], [0, 0, 1, 1], [], []>} : vector<3x128xbf16>, vector<128x128xbf16>, vector<3x128xf32> -> vector<3x128xf32>
    %578 = arith.addf %572, %577 : vector<3x128xf32>
    %c2_575 = arith.constant 2 : index
    %c0_576 = arith.constant 0 : index
    %579 = vector.load %arg28[%c2_575, %c0_576] : memref<96x128xf32, #tpu.memory_space<vmem>>, vector<3x128xf32>
    %580 = arith.truncf %579 : vector<3x128xf32> to vector<3x128xbf16>
    %c2_577 = arith.constant 2 : index
    %c0_578 = arith.constant 0 : index
    %c0_579 = arith.constant 0 : index
    %581 = vector.load %arg14[%c2_577, %c0_578, %c0_579] : memref<3x128x128xbf16, #tpu.memory_space<vmem>>, vector<1x128x128xbf16>
    %582 = vector.shape_cast %581 : vector<1x128x128xbf16> to vector<128x128xbf16>
    %cst_580 = arith.constant dense<0.000000e+00> : vector<3x128xf32>
    %583 = tpu.matmul %580, %582, %cst_580 {dimension_numbers = #tpu.dot_dimension_numbers<[1], [0], [0], [1], [0, 0, 1, 1], [], []>} : vector<3x128xbf16>, vector<128x128xbf16>, vector<3x128xf32> -> vector<3x128xf32>
    %584 = arith.addf %578, %583 : vector<3x128xf32>
    %c0_581 = arith.constant 0 : index
    %c0_582 = arith.constant 0 : index
    %585 = vector.load %arg26[%c0_581, %c0_582] : memref<2x128xf32, #tpu.memory_space<vmem>>, vector<1x128xf32>
    %c1_583 = arith.constant 1 : index
    %c0_584 = arith.constant 0 : index
    %586 = vector.load %arg26[%c1_583, %c0_584] : memref<2x128xf32, #tpu.memory_space<vmem>>, vector<1x128xf32>
    %587 = vector.broadcast %585 : vector<1x128xf32> to vector<3x128xf32>
    %588 = arith.mulf %584, %587 : vector<3x128xf32>
    %589 = vector.broadcast %586 : vector<1x128xf32> to vector<3x128xf32>
    %590 = arith.addf %588, %589 : vector<3x128xf32>
    %cst_585 = arith.constant 0.000000e+00 : f32
    %591 = vector.broadcast %cst_585 : f32 to vector<3x128xf32>
    %592 = arith.maximumf %590, %591 : vector<3x128xf32>
    %c0_586 = arith.constant 0 : index
    %c0_587 = arith.constant 0 : index
    %593 = vector.load %arg29[%c0_586, %c0_587] : memref<96x128xf32, #tpu.memory_space<vmem>>, vector<3x128xf32>
    tpu.vector_store %arg29[%c0_586, %c0_587], %592 {strides = array<i32>} : memref<96x128xf32, #tpu.memory_space<vmem>>, vector<3x128xf32>,
    %c0_588 = arith.constant 0 : index
    %c0_589 = arith.constant 0 : index
    %594 = tpu.strided_load %arg29[%c0_588, %c0_589] {strides = array<i32: 3, 1>} : memref<96x128xf32, #tpu.memory_space<vmem>>, vector<1x128xf32>
    %c1_590 = arith.constant 1 : index
    %c0_591 = arith.constant 0 : index
    %595 = tpu.strided_load %arg29[%c1_590, %c0_591] {strides = array<i32: 3, 1>} : memref<96x128xf32, #tpu.memory_space<vmem>>, vector<1x128xf32>
    %c2_592 = arith.constant 2 : index
    %c0_593 = arith.constant 0 : index
    %596 = tpu.strided_load %arg29[%c2_592, %c0_593] {strides = array<i32: 3, 1>} : memref<96x128xf32, #tpu.memory_space<vmem>>, vector<1x128xf32>
    %597 = arith.maximumf %594, %595 : vector<1x128xf32>
    %598 = arith.maximumf %597, %596 : vector<1x128xf32>
    %c0_594 = arith.constant 0 : index
    %c0_595 = arith.constant 0 : index
    %c0_596 = arith.constant 0 : index
    %599 = vector.load %arg27[%c0_594, %c0_595, %c0_596] : memref<1x1x128xf32, #tpu.memory_space<vmem>>, vector<1x1x128xf32>
    %600 = vector.shape_cast %599 : vector<1x1x128xf32> to vector<1x128xf32>
    %601 = vector.shape_cast %598 : vector<1x128xf32> to vector<1x1x128xf32>
    tpu.vector_store %arg27[%c0_594, %c0_595, %c0_596], %601 {strides = array<i32>} : memref<1x1x128xf32, #tpu.memory_space<vmem>>, vector<1x1x128xf32>,
    return
  }
  func.func @transform_0(%arg0: i32) -> (i32, i32, i32) {
    %c0_i32 = arith.constant 0 : i32
    %c0_i32_0 = arith.constant 0 : i32
    %c0_i32_1 = arith.constant 0 : i32
    return %arg0, %c0_i32, %c0_i32_0 : i32, i32, i32
  }
  func.func @transform_1(%arg0: i32) -> (i32, i32, i32) {
    %c0_i32 = arith.constant 0 : i32
    %c0_i32_0 = arith.constant 0 : i32
    %c0_i32_1 = arith.constant 0 : i32
    return %arg0, %c0_i32, %c0_i32_0 : i32, i32, i32
  }
  func.func @transform_2(%arg0: i32) -> (i32, i32, i32) {
    %c0_i32 = arith.constant 0 : i32
    %c0_i32_0 = arith.constant 0 : i32
    %c0_i32_1 = arith.constant 0 : i32
    %c0_i32_2 = arith.constant 0 : i32
    return %c0_i32, %c0_i32_0, %c0_i32_1 : i32, i32, i32
  }
  func.func @transform_3(%arg0: i32) -> (i32, i32, i32) {
    %c0_i32 = arith.constant 0 : i32
    %c0_i32_0 = arith.constant 0 : i32
    %c0_i32_1 = arith.constant 0 : i32
    %c0_i32_2 = arith.constant 0 : i32
    return %c0_i32, %c0_i32_0, %c0_i32_1 : i32, i32, i32
  }
  func.func @transform_4(%arg0: i32) -> (i32, i32, i32) {
    %c0_i32 = arith.constant 0 : i32
    %c0_i32_0 = arith.constant 0 : i32
    %c0_i32_1 = arith.constant 0 : i32
    %c0_i32_2 = arith.constant 0 : i32
    return %c0_i32, %c0_i32_0, %c0_i32_1 : i32, i32, i32
  }
  func.func @transform_5(%arg0: i32) -> (i32, i32, i32) {
    %c0_i32 = arith.constant 0 : i32
    %c0_i32_0 = arith.constant 0 : i32
    %c0_i32_1 = arith.constant 0 : i32
    %c0_i32_2 = arith.constant 0 : i32
    return %c0_i32, %c0_i32_0, %c0_i32_1 : i32, i32, i32
  }
  func.func @transform_6(%arg0: i32) -> (i32, i32, i32) {
    %c0_i32 = arith.constant 0 : i32
    %c0_i32_0 = arith.constant 0 : i32
    %c0_i32_1 = arith.constant 0 : i32
    %c0_i32_2 = arith.constant 0 : i32
    return %c0_i32, %c0_i32_0, %c0_i32_1 : i32, i32, i32
  }
  func.func @transform_7(%arg0: i32) -> (i32, i32, i32) {
    %c0_i32 = arith.constant 0 : i32
    %c0_i32_0 = arith.constant 0 : i32
    %c0_i32_1 = arith.constant 0 : i32
    %c0_i32_2 = arith.constant 0 : i32
    return %c0_i32, %c0_i32_0, %c0_i32_1 : i32, i32, i32
  }
  func.func @transform_8(%arg0: i32) -> (i32, i32, i32) {
    %c0_i32 = arith.constant 0 : i32
    %c0_i32_0 = arith.constant 0 : i32
    %c0_i32_1 = arith.constant 0 : i32
    %c0_i32_2 = arith.constant 0 : i32
    return %c0_i32, %c0_i32_0, %c0_i32_1 : i32, i32, i32
  }
  func.func @transform_9(%arg0: i32) -> (i32, i32, i32) {
    %c0_i32 = arith.constant 0 : i32
    %c0_i32_0 = arith.constant 0 : i32
    %c0_i32_1 = arith.constant 0 : i32
    %c0_i32_2 = arith.constant 0 : i32
    return %c0_i32, %c0_i32_0, %c0_i32_1 : i32, i32, i32
  }
  func.func @transform_10(%arg0: i32) -> (i32, i32, i32) {
    %c0_i32 = arith.constant 0 : i32
    %c0_i32_0 = arith.constant 0 : i32
    %c0_i32_1 = arith.constant 0 : i32
    %c0_i32_2 = arith.constant 0 : i32
    return %c0_i32, %c0_i32_0, %c0_i32_1 : i32, i32, i32
  }
  func.func @transform_11(%arg0: i32) -> (i32, i32, i32) {
    %c0_i32 = arith.constant 0 : i32
    %c0_i32_0 = arith.constant 0 : i32
    %c0_i32_1 = arith.constant 0 : i32
    %c0_i32_2 = arith.constant 0 : i32
    return %c0_i32, %c0_i32_0, %c0_i32_1 : i32, i32, i32
  }
  func.func @transform_12(%arg0: i32) -> (i32, i32, i32) {
    %c0_i32 = arith.constant 0 : i32
    %c0_i32_0 = arith.constant 0 : i32
    %c0_i32_1 = arith.constant 0 : i32
    %c0_i32_2 = arith.constant 0 : i32
    return %c0_i32, %c0_i32_0, %c0_i32_1 : i32, i32, i32
  }
  func.func @transform_13(%arg0: i32) -> (i32, i32, i32) {
    %c0_i32 = arith.constant 0 : i32
    %c0_i32_0 = arith.constant 0 : i32
    %c0_i32_1 = arith.constant 0 : i32
    %c0_i32_2 = arith.constant 0 : i32
    return %c0_i32, %c0_i32_0, %c0_i32_1 : i32, i32, i32
  }
  func.func @transform_14(%arg0: i32) -> (i32, i32) {
    %c0_i32 = arith.constant 0 : i32
    %c0_i32_0 = arith.constant 0 : i32
    %c0_i32_1 = arith.constant 0 : i32
    return %c0_i32, %c0_i32_0 : i32, i32
  }
  func.func @transform_15(%arg0: i32) -> (i32, i32) {
    %c0_i32 = arith.constant 0 : i32
    %c0_i32_0 = arith.constant 0 : i32
    %c0_i32_1 = arith.constant 0 : i32
    return %c0_i32, %c0_i32_0 : i32, i32
  }
  func.func @transform_16(%arg0: i32) -> (i32, i32) {
    %c0_i32 = arith.constant 0 : i32
    %c0_i32_0 = arith.constant 0 : i32
    %c0_i32_1 = arith.constant 0 : i32
    return %c0_i32, %c0_i32_0 : i32, i32
  }
  func.func @transform_17(%arg0: i32) -> (i32, i32) {
    %c0_i32 = arith.constant 0 : i32
    %c0_i32_0 = arith.constant 0 : i32
    %c0_i32_1 = arith.constant 0 : i32
    return %c0_i32, %c0_i32_0 : i32, i32
  }
  func.func @transform_18(%arg0: i32) -> (i32, i32) {
    %c0_i32 = arith.constant 0 : i32
    %c0_i32_0 = arith.constant 0 : i32
    %c0_i32_1 = arith.constant 0 : i32
    return %c0_i32, %c0_i32_0 : i32, i32
  }
  func.func @transform_19(%arg0: i32) -> (i32, i32) {
    %c0_i32 = arith.constant 0 : i32
    %c0_i32_0 = arith.constant 0 : i32
    %c0_i32_1 = arith.constant 0 : i32
    return %c0_i32, %c0_i32_0 : i32, i32
  }
  func.func @transform_20(%arg0: i32) -> (i32, i32) {
    %c0_i32 = arith.constant 0 : i32
    %c0_i32_0 = arith.constant 0 : i32
    %c0_i32_1 = arith.constant 0 : i32
    return %c0_i32, %c0_i32_0 : i32, i32
  }
  func.func @transform_21(%arg0: i32) -> (i32, i32) {
    %c0_i32 = arith.constant 0 : i32
    %c0_i32_0 = arith.constant 0 : i32
    %c0_i32_1 = arith.constant 0 : i32
    return %c0_i32, %c0_i32_0 : i32, i32
  }
  func.func @transform_22(%arg0: i32) -> (i32, i32) {
    %c0_i32 = arith.constant 0 : i32
    %c0_i32_0 = arith.constant 0 : i32
    %c0_i32_1 = arith.constant 0 : i32
    return %c0_i32, %c0_i32_0 : i32, i32
  }
  func.func @transform_23(%arg0: i32) -> (i32, i32) {
    %c0_i32 = arith.constant 0 : i32
    %c0_i32_0 = arith.constant 0 : i32
    %c0_i32_1 = arith.constant 0 : i32
    return %c0_i32, %c0_i32_0 : i32, i32
  }
  func.func @transform_24(%arg0: i32) -> (i32, i32) {
    %c0_i32 = arith.constant 0 : i32
    %c0_i32_0 = arith.constant 0 : i32
    %c0_i32_1 = arith.constant 0 : i32
    return %c0_i32, %c0_i32_0 : i32, i32
  }
  func.func @transform_25(%arg0: i32) -> (i32, i32) {
    %c0_i32 = arith.constant 0 : i32
    %c0_i32_0 = arith.constant 0 : i32
    %c0_i32_1 = arith.constant 0 : i32
    return %c0_i32, %c0_i32_0 : i32, i32
  }
  func.func @transform_26(%arg0: i32) -> (i32, i32, i32) {
    %c0_i32 = arith.constant 0 : i32
    %c0_i32_0 = arith.constant 0 : i32
    %c0_i32_1 = arith.constant 0 : i32
    return %arg0, %c0_i32, %c0_i32_0 : i32, i32, i32
  }
}

</mosaic_0001>

<llo_original>
// kernel: tpu_custom_call.1
$region0: #{tpu_custom_call.1}
  #allocation0 [shape = 'u32[]', space=smem, size = 0x4, offset = 0x4, fixed_abs, tag = 'smem constant byte address 0x4 - core index']
  #allocation1 [shape = 'u32[72,128]{1,0:T(1,128)}', space=vmem, size = 0x9000, scoped, tag = 'internal scratch']
  #allocation2 [shape = 'f32[96,128]{1,0:T(8,128)}', space=vmem, size = 0xc000, scoped, tag = 'scratch operand']
  #allocation3 [shape = 'f32[96,128]{1,0:T(8,128)}', space=vmem, size = 0xc000, scoped, tag = 'scratch operand']
  %s0 = inlined_call_operand.vmem [shape: f32[2,81,28], index: 0, kind: input, shape index: {}]
  %s1 = inlined_call_operand.vmem [shape: f32[2,81,20], index: 1, kind: input, shape index: {}]
  %s2 = inlined_call_operand.hbm [shape: bf16[11,28,64], index: 2, kind: input, shape index: {}]
  %s3 = inlined_call_operand.hbm [shape: bf16[7,64,64], index: 3, kind: input, shape index: {}]
  %s4 = inlined_call_operand.hbm [shape: bf16[11,20,64], index: 4, kind: input, shape index: {}]
  %s5 = inlined_call_operand.hbm [shape: bf16[7,64,64], index: 5, kind: input, shape index: {}]
  %s6 = inlined_call_operand.vmem [shape: bf16[7,128,128], index: 6, kind: input, shape index: {}]
  %s7 = inlined_call_operand.hbm [shape: bf16[7,128,128], index: 7, kind: input, shape index: {}]
  %s8 = inlined_call_operand.hbm [shape: bf16[3,128,128], index: 8, kind: input, shape index: {}]
  %s9 = inlined_call_operand.hbm [shape: bf16[3,128,128], index: 9, kind: input, shape index: {}]
  %s10 = inlined_call_operand.hbm [shape: bf16[3,128,128], index: 10, kind: input, shape index: {}]
  %s11 = inlined_call_operand.hbm [shape: bf16[3,128,128], index: 11, kind: input, shape index: {}]
  %s12 = inlined_call_operand.hbm [shape: bf16[3,128,128], index: 12, kind: input, shape index: {}]
  %s13 = inlined_call_operand.hbm [shape: bf16[3,128,128], index: 13, kind: input, shape index: {}]
  %s14 = inlined_call_operand.vmem [shape: f32[2,64], index: 14, kind: input, shape index: {}]
  %s15 = inlined_call_operand.vmem [shape: f32[2,64], index: 15, kind: input, shape index: {}]
  %s16 = inlined_call_operand.vmem [shape: f32[2,64], index: 16, kind: input, shape index: {}]
  %s17 = inlined_call_operand.vmem [shape: f32[2,64], index: 17, kind: input, shape index: {}]
  %s18 = inlined_call_operand.vmem [shape: f32[2,128], index: 18, kind: input, shape index: {}]
  %s19 = inlined_call_operand.vmem [shape: f32[2,128], index: 19, kind: input, shape index: {}]
  %s20 = inlined_call_operand.vmem [shape: f32[2,128], index: 20, kind: input, shape index: {}]
  %s21 = inlined_call_operand.vmem [shape: f32[2,128], index: 21, kind: input, shape index: {}]
  %s22 = inlined_call_operand.vmem [shape: f32[2,128], index: 22, kind: input, shape index: {}]
  %s23 = inlined_call_operand.hbm [shape: f32[2,128], index: 23, kind: input, shape index: {}]
  %s24 = inlined_call_operand.hbm [shape: f32[2,128], index: 24, kind: input, shape index: {}]
  %s25 = inlined_call_operand.vmem [shape: f32[2,128], index: 25, kind: input, shape index: {}]
  %s26 = inlined_call_operand.hbm [shape: f32[2,1,128], index: 26, kind: output, shape index: {}]
  %s27 = sld [smem:[#allocation0]]
  $region189: #{tpu_custom_call.1} parent=0
    _
  %s29 = ssub.s32 1, %s27
  %s30 = scalar_select 0, %s29, %s27
  $region1: #{tpu_custom_call.1} parent=0
    #allocation4 [shape = 'u8[90112]{0}', space=vmem, size = 0x16000, scoped, tag = 'input window, operand 2, single buffered']
    #allocation5 [shape = 's32[2]{0}', space=sflag, size = 0x8, scoped, tag = 'scoped memory for tpu_custom_call.1']
    #allocation6 [shape = 's32[2]{0}', space=sflag, size = 0x8, scoped, tag = 'scoped memory for tpu_custom_call.1']
    #allocation7 [shape = 'u8[114688]{0}', space=vmem, size = 0x1c000, scoped, tag = 'input window, operand 3, single buffered']
    #allocation8 [shape = 's32[1]{0}', space=sflag, size = 0x4, scoped, tag = 'scoped memory for tpu_custom_call.1']
    #allocation9 [shape = 'u8[67584]{0}', space=vmem, size = 0x10800, scoped, tag = 'input window, operand 4, single buffered']
    #allocation10 [shape = 'u8[114688]{0}', space=vmem, size = 0x1c000, scoped, tag = 'input window, operand 5, single buffered']
    #allocation11 [shape = 's32[1]{0}', space=sflag, size = 0x4, scoped, tag = 'scoped memory for tpu_custom_call.1']
    #allocation12 [shape = 'u8[229376]{0}', space=vmem, size = 0x38000, scoped, tag = 'input window, operand 7, single buffered']
    #allocation13 [shape = 'u8[98304]{0}', space=vmem, size = 0x18000, scoped, tag = 'input window, operand 8, single buffered']
    #allocation14 [shape = 's32[1]{0}', space=sflag, size = 0x4, scoped, tag = 'scoped memory for tpu_custom_call.1']
    #allocation15 [shape = 'u8[98304]{0}', space=vmem, size = 0x18000, scoped, tag = 'input window, operand 9, single buffered']
    #allocation16 [shape = 'u8[98304]{0}', space=vmem, size = 0x18000, scoped, tag = 'input window, operand 10, single buffered']
    #allocation17 [shape = 's32[1]{0}', space=sflag, size = 0x4, scoped, tag = 'scoped memory for tpu_custom_call.1']
    #allocation18 [shape = 'u8[98304]{0}', space=vmem, size = 0x18000, scoped, tag = 'input window, operand 11, single buffered']
    #allocation19 [shape = 'u8[98304]{0}', space=vmem, size = 0x18000, scoped, tag = 'input window, operand 12, single buffered']
    #allocation20 [shape = 's32[1]{0}', space=sflag, size = 0x4, scoped, tag = 'scoped memory for tpu_custom_call.1']
    #allocation21 [shape = 'u8[98304]{0}', space=vmem, size = 0x18000, scoped, tag = 'input window, operand 13, single buffered']
    #allocation22 [shape = 'u8[1024]{0}', space=vmem, size = 0x400, scoped, tag = 'input window, operand 23, single buffered']
    #allocation23 [shape = 's32[1]{0}', space=sflag, size = 0x4, scoped, tag = 'scoped memory for tpu_custom_call.1']
    #allocation24 [shape = 'u8[1024]{0}', space=vmem, size = 0x400, scoped, tag = 'input window, operand 24, single buffered']
    #allocation25 [shape = 'u8[1024]{0}', space=vmem, size = 0x400, scoped, tag = 'output window, operand 0']
    %31 = vsyncpa [#allocation5], 0
    %32 = vsyncpa [#allocation8], 0
    %33 = vsyncpa [#allocation11], 0
    %34 = vsyncpa [#allocation14], 0
    %35 = vsyncpa [#allocation17], 0
    %36 = vsyncpa [#allocation20], 0
    %37 = vsyncpa [#allocation23], 0
    %38 = vsyncpa [#allocation6], 0
    %s39 = scalar_lea.sflag [#allocation6], 1
    %40 = vsyncpa %s39, 0
    loop: start=0, step=1, limit=4
    $region2: #{tpu_custom_call.1} parent=1 // loop_pre_header
      _
    $region3: #{tpu_custom_call.1} parent=1 // loop_header
      %s42 = sphi 0, %s46
      %p43 = scmp.ge.s32.totalorder %s42, 4
      %s52 = sphi 0, %s54
      %s55 = sphi 0, %s52
      %s56 = sphi 0, %s55
      %s72 = sphi 0, %s56
      %s78 = sphi 0, %s80
      %s81 = sphi 0, %s78
      %s82 = sphi 0, %s81
      %s98 = sphi 0, %s82
      %s102 = sphi 0, %s102
      %s104 = sphi 0, %s102
      %s105 = sphi 0, %s104
      %s119 = sphi 0, %s105
      %s123 = sphi 0, %s123
      %s125 = sphi 0, %s123
      %s126 = sphi 0, %s125
      %s140 = sphi 0, %s126
      %s144 = sphi 0, %s144
      %s146 = sphi 0, %s144
      %s147 = sphi 0, %s146
      %s161 = sphi 0, %s147
      %s165 = sphi 0, %s165
      %s167 = sphi 0, %s165
      %s168 = sphi 0, %s167
      %s182 = sphi 0, %s168
      %s186 = sphi 0, %s186
      %s188 = sphi 0, %s186
      %s189 = sphi 0, %s188
      %s203 = sphi 0, %s189
      %s207 = sphi 0, %s207
      %s209 = sphi 0, %s207
      %s210 = sphi 0, %s209
      %s224 = sphi 0, %s210
      %s228 = sphi 0, %s228
      %s230 = sphi 0, %s228
      %s231 = sphi 0, %s230
      %s245 = sphi 0, %s231
      %s249 = sphi 0, %s249
      %s251 = sphi 0, %s249
      %s252 = sphi 0, %s251
      %s266 = sphi 0, %s252
      %s270 = sphi 0, %s270
      %s272 = sphi 0, %s270
      %s273 = sphi 0, %s272
      %s287 = sphi 0, %s273
      %s291 = sphi 0, %s291
      %s293 = sphi 0, %s291
      %s294 = sphi 0, %s293
      %s308 = sphi 0, %s294
      %s312 = sphi 0, %s312
      %s314 = sphi 0, %s312
      %s315 = sphi 0, %s314
      %s329 = sphi 0, %s315
      %s333 = sphi 0, %s333
      %s335 = sphi 0, %s333
      %s336 = sphi 0, %s335
      %s350 = sphi 0, %s336
      %s354 = sphi 0, %s354
      %s356 = sphi 0, %s354
      %s357 = sphi 0, %s356
      %s371 = sphi 0, %s357
      %s375 = sphi 0, %s375
      %s377 = sphi 0, %s375
      %s378 = sphi 0, %s377
      %s392 = sphi 0, %s378
      %s396 = sphi 0, %s396
      %s398 = sphi 0, %s396
      %s399 = sphi 0, %s398
      %s413 = sphi 0, %s399
      %s417 = sphi 0, %s417
      %s419 = sphi 0, %s417
      %s420 = sphi 0, %s419
      %s434 = sphi 0, %s420
      %s438 = sphi 0, %s438
      %s440 = sphi 0, %s438
      %s441 = sphi 0, %s440
      %s455 = sphi 0, %s441
      %s459 = sphi 0, %s459
      %s461 = sphi 0, %s459
      %s462 = sphi 0, %s461
      %s476 = sphi 0, %s462
      %s480 = sphi 0, %s480
      %s482 = sphi 0, %s480
      %s483 = sphi 0, %s482
      %s497 = sphi 0, %s483
      %s501 = sphi 0, %s501
      %s503 = sphi 0, %s501
      %s504 = sphi 0, %s503
      %s518 = sphi 0, %s504
      %s522 = sphi 0, %s522
      %s524 = sphi 0, %s522
      %s525 = sphi 0, %s524
      %s539 = sphi 0, %s525
      %s543 = sphi 0, %s543
      %s545 = sphi 0, %s543
      %s546 = sphi 0, %s545
      %s560 = sphi 0, %s546
      %s564 = sphi 0, %s564
      %s566 = sphi 0, %s564
      %s567 = sphi 0, %s566
      %s581 = sphi 0, %s567
      %s585 = sphi 0, %s585
      %s587 = sphi 0, %s585
      %s588 = sphi 0, %s587
      %s602 = sphi 0, %s588
      %s608 = sphi 0, %s610
      %s611 = sphi 0, %s608
      %s612 = sphi 0, %s611
      %s628 = sphi 0, %s612
    $region4: #{tpu_custom_call.1} parent=1 // loop_header_branch
      %45 = sbr.rel (%p43) target = $region8
    $region5: #{tpu_custom_call.1} parent=1 // loop_body
      %s47 = ssub.s32 %s42, 1
      %s48 = ssub.s32 %s42, 2
      %s49 = sadd.s32 %s42, 1
      %s50 = ssub.s32 %s42, %s49
      %p51 = scmp.eq.s32.totalorder %s50, 0
      %s53 = sadd.s32 %s52, 1
      %s54 = scalar_select %p51, %s52, %s53
      %p57 = pneg %p51
      %p58 = scmp.eq.s32.totalorder %s42, 1
      %p59 = por %p57, %p58
      %p60 = scmp.ne.s32.totalorder %s52, %s55
      %p61 = scmp.eq.s32.totalorder %s42, 0
      %p62 = por %p60, %p61
      %p63 = scmp.ne.s32.totalorder %s52, %s55
      %p64 = scmp.eq.s32.totalorder %s47, 1
      %p65 = por %p63, %p64
      %p66 = scmp.ne.s32.totalorder %s55, %s56
      %p67 = scmp.eq.s32.totalorder %s47, 0
      %p68 = por %p66, %p67
      %p69 = scmp.ne.s32.totalorder %s55, %s56
      %p70 = scmp.eq.s32.totalorder %s48, 1
      %p71 = por %p69, %p70
      %p73 = scmp.ne.s32.totalorder %s56, %s72
      %p74 = scmp.eq.s32.totalorder %s48, 0
      %p75 = por %p73, %p74
      %s76 = ssub.s32 %s42, %s49
      %p77 = scmp.eq.s32.totalorder %s76, 0
      %s79 = sadd.s32 %s78, 1
      %s80 = scalar_select %p77, %s78, %s79
      %p83 = pneg %p77
      %p84 = scmp.eq.s32.totalorder %s42, 1
      %p85 = por %p83, %p84
      %p86 = scmp.ne.s32.totalorder %s78, %s81
      %p87 = scmp.eq.s32.totalorder %s42, 0
      %p88 = por %p86, %p87
      %p89 = scmp.ne.s32.totalorder %s78, %s81
      %p90 = scmp.eq.s32.totalorder %s47, 1
      %p91 = por %p89, %p90
      %p92 = scmp.ne.s32.totalorder %s81, %s82
      %p93 = scmp.eq.s32.totalorder %s47, 0
      %p94 = por %p92, %p93
      %p95 = scmp.ne.s32.totalorder %s81, %s82
      %p96 = scmp.eq.s32.totalorder %s48, 1
      %p97 = por %p95, %p96
      %p99 = scmp.ne.s32.totalorder %s82, %s98
      %p100 = scmp.eq.s32.totalorder %s48, 0
      %p101 = por %p99, %p100
      %s103 = sadd.s32 %s102, 1
      %p106 = scmp.eq.s32.totalorder %s42, 1
      %p107 = scmp.ne.s32.totalorder %s102, %s104
      %p108 = scmp.eq.s32.totalorder %s42, 0
      %p109 = por %p107, %p108
      %p110 = scmp.ne.s32.totalorder %s102, %s104
      %p111 = scmp.eq.s32.totalorder %s47, 1
      %p112 = por %p110, %p111
      %p113 = scmp.ne.s32.totalorder %s104, %s105
      %p114 = scmp.eq.s32.totalorder %s47, 0
      %p115 = por %p113, %p114
      %p116 = scmp.ne.s32.totalorder %s104, %s105
      %p117 = scmp.eq.s32.totalorder %s48, 1
      %p118 = por %p116, %p117
      %p120 = scmp.ne.s32.totalorder %s105, %s119
      %p121 = scmp.eq.s32.totalorder %s48, 0
      %p122 = por %p120, %p121
      %s124 = sadd.s32 %s123, 1
      %p127 = scmp.eq.s32.totalorder %s42, 1
      %p128 = scmp.ne.s32.totalorder %s123, %s125
      %p129 = scmp.eq.s32.totalorder %s42, 0
      %p130 = por %p128, %p129
      %p131 = scmp.ne.s32.totalorder %s123, %s125
      %p132 = scmp.eq.s32.totalorder %s47, 1
      %p133 = por %p131, %p132
      %p134 = scmp.ne.s32.totalorder %s125, %s126
      %p135 = scmp.eq.s32.totalorder %s47, 0
      %p136 = por %p134, %p135
      %p137 = scmp.ne.s32.totalorder %s125, %s126
      %p138 = scmp.eq.s32.totalorder %s48, 1
      %p139 = por %p137, %p138
      %p141 = scmp.ne.s32.totalorder %s126, %s140
      %p142 = scmp.eq.s32.totalorder %s48, 0
      %p143 = por %p141, %p142
      %s145 = sadd.s32 %s144, 1
      %p148 = scmp.eq.s32.totalorder %s42, 1
      %p149 = scmp.ne.s32.totalorder %s144, %s146
      %p150 = scmp.eq.s32.totalorder %s42, 0
      %p151 = por %p149, %p150
      %p152 = scmp.ne.s32.totalorder %s144, %s146
      %p153 = scmp.eq.s32.totalorder %s47, 1
      %p154 = por %p152, %p153
      %p155 = scmp.ne.s32.totalorder %s146, %s147
      %p156 = scmp.eq.s32.totalorder %s47, 0
      %p157 = por %p155, %p156
      %p158 = scmp.ne.s32.totalorder %s146, %s147
      %p159 = scmp.eq.s32.totalorder %s48, 1
      %p160 = por %p158, %p159
      %p162 = scmp.ne.s32.totalorder %s147, %s161
      %p163 = scmp.eq.s32.totalorder %s48, 0
      %p164 = por %p162, %p163
      %s166 = sadd.s32 %s165, 1
      %p169 = scmp.eq.s32.totalorder %s42, 1
      %p170 = scmp.ne.s32.totalorder %s165, %s167
      %p171 = scmp.eq.s32.totalorder %s42, 0
      %p172 = por %p170, %p171
      %p173 = scmp.ne.s32.totalorder %s165, %s167
      %p174 = scmp.eq.s32.totalorder %s47, 1
      %p175 = por %p173, %p174
      %p176 = scmp.ne.s32.totalorder %s167, %s168
      %p177 = scmp.eq.s32.totalorder %s47, 0
      %p178 = por %p176, %p177
      %p179 = scmp.ne.s32.totalorder %s167, %s168
      %p180 = scmp.eq.s32.totalorder %s48, 1
      %p181 = por %p179, %p180
      %p183 = scmp.ne.s32.totalorder %s168, %s182
      %p184 = scmp.eq.s32.totalorder %s48, 0
      %p185 = por %p183, %p184
      %s187 = sadd.s32 %s186, 1
      %p190 = scmp.eq.s32.totalorder %s42, 1
      %p191 = scmp.ne.s32.totalorder %s186, %s188
      %p192 = scmp.eq.s32.totalorder %s42, 0
      %p193 = por %p191, %p192
      %p194 = scmp.ne.s32.totalorder %s186, %s188
      %p195 = scmp.eq.s32.totalorder %s47, 1
      %p196 = por %p194, %p195
      %p197 = scmp.ne.s32.totalorder %s188, %s189
      %p198 = scmp.eq.s32.totalorder %s47, 0
      %p199 = por %p197, %p198
      %p200 = scmp.ne.s32.totalorder %s188, %s189
      %p201 = scmp.eq.s32.totalorder %s48, 1
      %p202 = por %p200, %p201
      %p204 = scmp.ne.s32.totalorder %s189, %s203
      %p205 = scmp.eq.s32.totalorder %s48, 0
      %p206 = por %p204, %p205
      %s208 = sadd.s32 %s207, 1
      %p211 = scmp.eq.s32.totalorder %s42, 1
      %p212 = scmp.ne.s32.totalorder %s207, %s209
      %p213 = scmp.eq.s32.totalorder %s42, 0
      %p214 = por %p212, %p213
      %p215 = scmp.ne.s32.totalorder %s207, %s209
      %p216 = scmp.eq.s32.totalorder %s47, 1
      %p217 = por %p215, %p216
      %p218 = scmp.ne.s32.totalorder %s209, %s210
      %p219 = scmp.eq.s32.totalorder %s47, 0
      %p220 = por %p218, %p219
      %p221 = scmp.ne.s32.totalorder %s209, %s210
      %p222 = scmp.eq.s32.totalorder %s48, 1
      %p223 = por %p221, %p222
      %p225 = scmp.ne.s32.totalorder %s210, %s224
      %p226 = scmp.eq.s32.totalorder %s48, 0
      %p227 = por %p225, %p226
      %s229 = sadd.s32 %s228, 1
      %p232 = scmp.eq.s32.totalorder %s42, 1
      %p233 = scmp.ne.s32.totalorder %s228, %s230
      %p234 = scmp.eq.s32.totalorder %s42, 0
      %p235 = por %p233, %p234
      %p236 = scmp.ne.s32.totalorder %s228, %s230
      %p237 = scmp.eq.s32.totalorder %s47, 1
      %p238 = por %p236, %p237
      %p239 = scmp.ne.s32.totalorder %s230, %s231
      %p240 = scmp.eq.s32.totalorder %s47, 0
      %p241 = por %p239, %p240
      %p242 = scmp.ne.s32.totalorder %s230, %s231
      %p243 = scmp.eq.s32.totalorder %s48, 1
      %p244 = por %p242, %p243
      %p246 = scmp.ne.s32.totalorder %s231, %s245
      %p247 = scmp.eq.s32.totalorder %s48, 0
      %p248 = por %p246, %p247
      %s250 = sadd.s32 %s249, 1
      %p253 = scmp.eq.s32.totalorder %s42, 1
      %p254 = scmp.ne.s32.totalorder %s249, %s251
      %p255 = scmp.eq.s32.totalorder %s42, 0
      %p256 = por %p254, %p255
      %p257 = scmp.ne.s32.totalorder %s249, %s251
      %p258 = scmp.eq.s32.totalorder %s47, 1
      %p259 = por %p257, %p258
      %p260 = scmp.ne.s32.totalorder %s251, %s252
      %p261 = scmp.eq.s32.totalorder %s47, 0
      %p262 = por %p260, %p261
      %p263 = scmp.ne.s32.totalorder %s251, %s252
      %p264 = scmp.eq.s32.totalorder %s48, 1
      %p265 = por %p263, %p264
      %p267 = scmp.ne.s32.totalorder %s252, %s266
      %p268 = scmp.eq.s32.totalorder %s48, 0
      %p269 = por %p267, %p268
      %s271 = sadd.s32 %s270, 1
      %p274 = scmp.eq.s32.totalorder %s42, 1
      %p275 = scmp.ne.s32.totalorder %s270, %s272
      %p276 = scmp.eq.s32.totalorder %s42, 0
      %p277 = por %p275, %p276
      %p278 = scmp.ne.s32.totalorder %s270, %s272
      %p279 = scmp.eq.s32.totalorder %s47, 1
      %p280 = por %p278, %p279
      %p281 = scmp.ne.s32.totalorder %s272, %s273
      %p282 = scmp.eq.s32.totalorder %s47, 0
      %p283 = por %p281, %p282
      %p284 = scmp.ne.s32.totalorder %s272, %s273
      %p285 = scmp.eq.s32.totalorder %s48, 1
      %p286 = por %p284, %p285
      %p288 = scmp.ne.s32.totalorder %s273, %s287
      %p289 = scmp.eq.s32.totalorder %s48, 0
      %p290 = por %p288, %p289
      %s292 = sadd.s32 %s291, 1
      %p295 = scmp.eq.s32.totalorder %s42, 1
      %p296 = scmp.ne.s32.totalorder %s291, %s293
      %p297 = scmp.eq.s32.totalorder %s42, 0
      %p298 = por %p296, %p297
      %p299 = scmp.ne.s32.totalorder %s291, %s293
      %p300 = scmp.eq.s32.totalorder %s47, 1
      %p301 = por %p299, %p300
      %p302 = scmp.ne.s32.totalorder %s293, %s294
      %p303 = scmp.eq.s32.totalorder %s47, 0
      %p304 = por %p302, %p303
      %p305 = scmp.ne.s32.totalorder %s293, %s294
      %p306 = scmp.eq.s32.totalorder %s48, 1
      %p307 = por %p305, %p306
      %p309 = scmp.ne.s32.totalorder %s294, %s308
      %p310 = scmp.eq.s32.totalorder %s48, 0
      %p311 = por %p309, %p310
      %s313 = sadd.s32 %s312, 1
      %p316 = scmp.eq.s32.totalorder %s42, 1
      %p317 = scmp.ne.s32.totalorder %s312, %s314
      %p318 = scmp.eq.s32.totalorder %s42, 0
      %p319 = por %p317, %p318
      %p320 = scmp.ne.s32.totalorder %s312, %s314
      %p321 = scmp.eq.s32.totalorder %s47, 1
      %p322 = por %p320, %p321
      %p323 = scmp.ne.s32.totalorder %s314, %s315
      %p324 = scmp.eq.s32.totalorder %s47, 0
      %p325 = por %p323, %p324
      %p326 = scmp.ne.s32.totalorder %s314, %s315
      %p327 = scmp.eq.s32.totalorder %s48, 1
      %p328 = por %p326, %p327
      %p330 = scmp.ne.s32.totalorder %s315, %s329
      %p331 = scmp.eq.s32.totalorder %s48, 0
      %p332 = por %p330, %p331
      %s334 = sadd.s32 %s333, 1
      %p337 = scmp.eq.s32.totalorder %s42, 1
      %p338 = scmp.ne.s32.totalorder %s333, %s335
      %p339 = scmp.eq.s32.totalorder %s42, 0
      %p340 = por %p338, %p339
      %p341 = scmp.ne.s32.totalorder %s333, %s335
      %p342 = scmp.eq.s32.totalorder %s47, 1
      %p343 = por %p341, %p342
      %p344 = scmp.ne.s32.totalorder %s335, %s336
      %p345 = scmp.eq.s32.totalorder %s47, 0
      %p346 = por %p344, %p345
      %p347 = scmp.ne.s32.totalorder %s335, %s336
      %p348 = scmp.eq.s32.totalorder %s48, 1
      %p349 = por %p347, %p348
      %p351 = scmp.ne.s32.totalorder %s336, %s350
      %p352 = scmp.eq.s32.totalorder %s48, 0
      %p353 = por %p351, %p352
      %s355 = sadd.s32 %s354, 1
      %p358 = scmp.eq.s32.totalorder %s42, 1
      %p359 = scmp.ne.s32.totalorder %s354, %s356
      %p360 = scmp.eq.s32.totalorder %s42, 0
      %p361 = por %p359, %p360
      %p362 = scmp.ne.s32.totalorder %s354, %s356
      %p363 = scmp.eq.s32.totalorder %s47, 1
      %p364 = por %p362, %p363
      %p365 = scmp.ne.s32.totalorder %s356, %s357
      %p366 = scmp.eq.s32.totalorder %s47, 0
      %p367 = por %p365, %p366
      %p368 = scmp.ne.s32.totalorder %s356, %s357
      %p369 = scmp.eq.s32.totalorder %s48, 1
      %p370 = por %p368, %p369
      %p372 = scmp.ne.s32.totalorder %s357, %s371
      %p373 = scmp.eq.s32.totalorder %s48, 0
      %p374 = por %p372, %p373
      %s376 = sadd.s32 %s375, 1
      %p379 = scmp.eq.s32.totalorder %s42, 1
      %p380 = scmp.ne.s32.totalorder %s375, %s377
      %p381 = scmp.eq.s32.totalorder %s42, 0
      %p382 = por %p380, %p381
      %p383 = scmp.ne.s32.totalorder %s375, %s377
      %p384 = scmp.eq.s32.totalorder %s47, 1
      %p385 = por %p383, %p384
      %p386 = scmp.ne.s32.totalorder %s377, %s378
      %p387 = scmp.eq.s32.totalorder %s47, 0
      %p388 = por %p386, %p387
      %p389 = scmp.ne.s32.totalorder %s377, %s378
      %p390 = scmp.eq.s32.totalorder %s48, 1
      %p391 = por %p389, %p390
      %p393 = scmp.ne.s32.totalorder %s378, %s392
      %p394 = scmp.eq.s32.totalorder %s48, 0
      %p395 = por %p393, %p394
      %s397 = sadd.s32 %s396, 1
      %p400 = scmp.eq.s32.totalorder %s42, 1
      %p401 = scmp.ne.s32.totalorder %s396, %s398
      %p402 = scmp.eq.s32.totalorder %s42, 0
      %p403 = por %p401, %p402
      %p404 = scmp.ne.s32.totalorder %s396, %s398
      %p405 = scmp.eq.s32.totalorder %s47, 1
      %p406 = por %p404, %p405
      %p407 = scmp.ne.s32.totalorder %s398, %s399
      %p408 = scmp.eq.s32.totalorder %s47, 0
      %p409 = por %p407, %p408
      %p410 = scmp.ne.s32.totalorder %s398, %s399
      %p411 = scmp.eq.s32.totalorder %s48, 1
      %p412 = por %p410, %p411
      %p414 = scmp.ne.s32.totalorder %s399, %s413
      %p415 = scmp.eq.s32.totalorder %s48, 0
      %p416 = por %p414, %p415
      %s418 = sadd.s32 %s417, 1
      %p421 = scmp.eq.s32.totalorder %s42, 1
      %p422 = scmp.ne.s32.totalorder %s417, %s419
      %p423 = scmp.eq.s32.totalorder %s42, 0
      %p424 = por %p422, %p423
      %p425 = scmp.ne.s32.totalorder %s417, %s419
      %p426 = scmp.eq.s32.totalorder %s47, 1
      %p427 = por %p425, %p426
      %p428 = scmp.ne.s32.totalorder %s419, %s420
      %p429 = scmp.eq.s32.totalorder %s47, 0
      %p430 = por %p428, %p429
      %p431 = scmp.ne.s32.totalorder %s419, %s420
      %p432 = scmp.eq.s32.totalorder %s48, 1
      %p433 = por %p431, %p432
      %p435 = scmp.ne.s32.totalorder %s420, %s434
      %p436 = scmp.eq.s32.totalorder %s48, 0
      %p437 = por %p435, %p436
      %s439 = sadd.s32 %s438, 1
      %p442 = scmp.eq.s32.totalorder %s42, 1
      %p443 = scmp.ne.s32.totalorder %s438, %s440
      %p444 = scmp.eq.s32.totalorder %s42, 0
      %p445 = por %p443, %p444
      %p446 = scmp.ne.s32.totalorder %s438, %s440
      %p447 = scmp.eq.s32.totalorder %s47, 1
      %p448 = por %p446, %p447
      %p449 = scmp.ne.s32.totalorder %s440, %s441
      %p450 = scmp.eq.s32.totalorder %s47, 0
      %p451 = por %p449, %p450
      %p452 = scmp.ne.s32.totalorder %s440, %s441
      %p453 = scmp.eq.s32.totalorder %s48, 1
      %p454 = por %p452, %p453
      %p456 = scmp.ne.s32.totalorder %s441, %s455
      %p457 = scmp.eq.s32.totalorder %s48, 0
      %p458 = por %p456, %p457
      %s460 = sadd.s32 %s459, 1
      %p463 = scmp.eq.s32.totalorder %s42, 1
      %p464 = scmp.ne.s32.totalorder %s459, %s461
      %p465 = scmp.eq.s32.totalorder %s42, 0
      %p466 = por %p464, %p465
      %p467 = scmp.ne.s32.totalorder %s459, %s461
      %p468 = scmp.eq.s32.totalorder %s47, 1
      %p469 = por %p467, %p468
      %p470 = scmp.ne.s32.totalorder %s461, %s462
      %p471 = scmp.eq.s32.totalorder %s47, 0
      %p472 = por %p470, %p471
      %p473 = scmp.ne.s32.totalorder %s461, %s462
      %p474 = scmp.eq.s32.totalorder %s48, 1
      %p475 = por %p473, %p474
      %p477 = scmp.ne.s32.totalorder %s462, %s476
      %p478 = scmp.eq.s32.totalorder %s48, 0
      %p479 = por %p477, %p478
      %s481 = sadd.s32 %s480, 1
      %p484 = scmp.eq.s32.totalorder %s42, 1
      %p485 = scmp.ne.s32.totalorder %s480, %s482
      %p486 = scmp.eq.s32.totalorder %s42, 0
      %p487 = por %p485, %p486
      %p488 = scmp.ne.s32.totalorder %s480, %s482
      %p489 = scmp.eq.s32.totalorder %s47, 1
      %p490 = por %p488, %p489
      %p491 = scmp.ne.s32.totalorder %s482, %s483
      %p492 = scmp.eq.s32.totalorder %s47, 0
      %p493 = por %p491, %p492
      %p494 = scmp.ne.s32.totalorder %s482, %s483
      %p495 = scmp.eq.s32.totalorder %s48, 1
      %p496 = por %p494, %p495
      %p498 = scmp.ne.s32.totalorder %s483, %s497
      %p499 = scmp.eq.s32.totalorder %s48, 0
      %p500 = por %p498, %p499
      %s502 = sadd.s32 %s501, 1
      %p505 = scmp.eq.s32.totalorder %s42, 1
      %p506 = scmp.ne.s32.totalorder %s501, %s503
      %p507 = scmp.eq.s32.totalorder %s42, 0
      %p508 = por %p506, %p507
      %p509 = scmp.ne.s32.totalorder %s501, %s503
      %p510 = scmp.eq.s32.totalorder %s47, 1
      %p511 = por %p509, %p510
      %p512 = scmp.ne.s32.totalorder %s503, %s504
      %p513 = scmp.eq.s32.totalorder %s47, 0
      %p514 = por %p512, %p513
      %p515 = scmp.ne.s32.totalorder %s503, %s504
      %p516 = scmp.eq.s32.totalorder %s48, 1
      %p517 = por %p515, %p516
      %p519 = scmp.ne.s32.totalorder %s504, %s518
      %p520 = scmp.eq.s32.totalorder %s48, 0
      %p521 = por %p519, %p520
      %s523 = sadd.s32 %s522, 1
      %p526 = scmp.eq.s32.totalorder %s42, 1
      %p527 = scmp.ne.s32.totalorder %s522, %s524
      %p528 = scmp.eq.s32.totalorder %s42, 0
      %p529 = por %p527, %p528
      %p530 = scmp.ne.s32.totalorder %s522, %s524
      %p531 = scmp.eq.s32.totalorder %s47, 1
      %p532 = por %p530, %p531
      %p533 = scmp.ne.s32.totalorder %s524, %s525
      %p534 = scmp.eq.s32.totalorder %s47, 0
      %p535 = por %p533, %p534
      %p536 = scmp.ne.s32.totalorder %s524, %s525
      %p537 = scmp.eq.s32.totalorder %s48, 1
      %p538 = por %p536, %p537
      %p540 = scmp.ne.s32.totalorder %s525, %s539
      %p541 = scmp.eq.s32.totalorder %s48, 0
      %p542 = por %p540, %p541
      %s544 = sadd.s32 %s543, 1
      %p547 = scmp.eq.s32.totalorder %s42, 1
      %p548 = scmp.ne.s32.totalorder %s543, %s545
      %p549 = scmp.eq.s32.totalorder %s42, 0
      %p550 = por %p548, %p549
      %p551 = scmp.ne.s32.totalorder %s543, %s545
      %p552 = scmp.eq.s32.totalorder %s47, 1
      %p553 = por %p551, %p552
      %p554 = scmp.ne.s32.totalorder %s545, %s546
      %p555 = scmp.eq.s32.totalorder %s47, 0
      %p556 = por %p554, %p555
      %p557 = scmp.ne.s32.totalorder %s545, %s546
      %p558 = scmp.eq.s32.totalorder %s48, 1
      %p559 = por %p557, %p558
      %p561 = scmp.ne.s32.totalorder %s546, %s560
      %p562 = scmp.eq.s32.totalorder %s48, 0
      %p563 = por %p561, %p562
      %s565 = sadd.s32 %s564, 1
      %p568 = scmp.eq.s32.totalorder %s42, 1
      %p569 = scmp.ne.s32.totalorder %s564, %s566
      %p570 = scmp.eq.s32.totalorder %s42, 0
      %p571 = por %p569, %p570
      %p572 = scmp.ne.s32.totalorder %s564, %s566
      %p573 = scmp.eq.s32.totalorder %s47, 1
      %p574 = por %p572, %p573
      %p575 = scmp.ne.s32.totalorder %s566, %s567
      %p576 = scmp.eq.s32.totalorder %s47, 0
      %p577 = por %p575, %p576
      %p578 = scmp.ne.s32.totalorder %s566, %s567
      %p579 = scmp.eq.s32.totalorder %s48, 1
      %p580 = por %p578, %p579
      %p582 = scmp.ne.s32.totalorder %s567, %s581
      %p583 = scmp.eq.s32.totalorder %s48, 0
      %p584 = por %p582, %p583
      %s586 = sadd.s32 %s585, 1
      %p589 = scmp.eq.s32.totalorder %s42, 1
      %p590 = scmp.ne.s32.totalorder %s585, %s587
      %p591 = scmp.eq.s32.totalorder %s42, 0
      %p592 = por %p590, %p591
      %p593 = scmp.ne.s32.totalorder %s585, %s587
      %p594 = scmp.eq.s32.totalorder %s47, 1
      %p595 = por %p593, %p594
      %p596 = scmp.ne.s32.totalorder %s587, %s588
      %p597 = scmp.eq.s32.totalorder %s47, 0
      %p598 = por %p596, %p597
      %p599 = scmp.ne.s32.totalorder %s587, %s588
      %p600 = scmp.eq.s32.totalorder %s48, 1
      %p601 = por %p599, %p600
      %p603 = scmp.ne.s32.totalorder %s588, %s602
      %p604 = scmp.eq.s32.totalorder %s48, 0
      %p605 = por %p603, %p604
      %s606 = ssub.s32 %s42, %s49
      %p607 = scmp.eq.s32.totalorder %s606, 0
      %s609 = sadd.s32 %s608, 1
      %s610 = scalar_select %p607, %s608, %s609
      %p613 = pneg %p607
      %p614 = scmp.eq.s32.totalorder %s42, 1
      %p615 = por %p613, %p614
      %p616 = scmp.ne.s32.totalorder %s608, %s611
      %p617 = scmp.eq.s32.totalorder %s42, 0
      %p618 = por %p616, %p617
      %p619 = scmp.ne.s32.totalorder %s608, %s611
      %p620 = scmp.eq.s32.totalorder %s47, 1
      %p621 = por %p619, %p620
      %p622 = scmp.ne.s32.totalorder %s611, %s612
      %p623 = scmp.eq.s32.totalorder %s47, 0
      %p624 = por %p622, %p623
      %p625 = scmp.ne.s32.totalorder %s611, %s612
      %p626 = scmp.eq.s32.totalorder %s48, 1
      %p627 = por %p625, %p626
      %p629 = scmp.ne.s32.totalorder %s612, %s628
      %p630 = scmp.eq.s32.totalorder %s48, 0
      %p631 = por %p629, %p630
      %p632 = scmp.le.s32.totalorder 1, %s42
      %p633 = scmp.lt.s32.totalorder %s42, 3
      %p634 = pnand %p632, %p633
      %p635 = pneg %p634
      // Predicated region
      $region9: #{tpu_custom_call.1} parent=5 // pred_check
        _
      $region10: #{tpu_custom_call.1} parent=5 // pred_check_branch
        %637 = sbr.rel (%p634) target = $region12
      $region11: #{tpu_custom_call.1} parent=5 // pred_region
        %s638 = ssub.s32 %s42, 1
        // Predicated region
        $region13: #{tpu_custom_call.1} parent=11 // pred_check
          %p639 = pneg %p115
        $region14: #{tpu_custom_call.1} parent=11 // pred_check_branch
          %641 = sbr.rel (%p639) target = $region16
        $region15: #{tpu_custom_call.1} parent=11 // pred_region
          %643 = vsyncadd [#allocation5], 0
          %s644 = sshll.u32 %s2, 4
          %s645 = int_to_ptr.hbm [resolvable:$true] %s644
          %s646 = sshll.u32 [#allocation4], 4
          %s647 = int_to_ptr.vmem [resolvable:$true] %s646
          %652 = dma.hbm_to_vmem [thread:$0]  %s645, 2816, %s647, [#allocation5], 64, 64, 4
        $region16: #{tpu_custom_call.1} parent=11 // pred_fallthru
          _
        // Predicated region
        $region17: #{tpu_custom_call.1} parent=11 // pred_check
          %p653 = pneg %p136
        $region18: #{tpu_custom_call.1} parent=11 // pred_check_branch
          %655 = sbr.rel (%p653) target = $region20
        $region19: #{tpu_custom_call.1} parent=11 // pred_region
          %657 = vsyncadd [#allocation8], 0
          %s658 = sshll.u32 %s3, 4
          %s659 = int_to_ptr.hbm [resolvable:$true] %s658
          %s660 = sshll.u32 [#allocation7], 4
          %s661 = int_to_ptr.vmem [resolvable:$true] %s660
          %666 = dma.hbm_to_vmem [thread:$0]  %s659, 3584, %s661, [#allocation8], 64, 64, 4
        $region20: #{tpu_custom_call.1} parent=11 // pred_fallthru
          _
        // Predicated region
        $region21: #{tpu_custom_call.1} parent=11 // pred_check
          %p667 = pneg %p157
        $region22: #{tpu_custom_call.1} parent=11 // pred_check_branch
          %669 = sbr.rel (%p667) target = $region24
        $region23: #{tpu_custom_call.1} parent=11 // pred_region
          %671 = vsyncadd [#allocation8], 0
          %s672 = sshll.u32 %s4, 4
          %s673 = int_to_ptr.hbm [resolvable:$true] %s672
          %s674 = sshll.u32 [#allocation9], 4
          %s675 = int_to_ptr.vmem [resolvable:$true] %s674
          %680 = dma.hbm_to_vmem [thread:$0]  %s673, 2112, %s675, [#allocation8], 64, 64, 4
        $region24: #{tpu_custom_call.1} parent=11 // pred_fallthru
          _
        // Predicated region
        $region25: #{tpu_custom_call.1} parent=11 // pred_check
          %p681 = pneg %p178
        $region26: #{tpu_custom_call.1} parent=11 // pred_check_branch
          %683 = sbr.rel (%p681) target = $region28
        $region27: #{tpu_custom_call.1} parent=11 // pred_region
          %685 = vsyncadd [#allocation11], 0
          %s686 = sshll.u32 %s5, 4
          %s687 = int_to_ptr.hbm [resolvable:$true] %s686
          %s688 = sshll.u32 [#allocation10], 4
          %s689 = int_to_ptr.vmem [resolvable:$true] %s688
          %694 = dma.hbm_to_vmem [thread:$0]  %s687, 3584, %s689, [#allocation11], 64, 64, 4
        $region28: #{tpu_custom_call.1} parent=11 // pred_fallthru
          _
        // Predicated region
        $region29: #{tpu_custom_call.1} parent=11 // pred_check
          %p695 = pneg %p199
        $region30: #{tpu_custom_call.1} parent=11 // pred_check_branch
          %697 = sbr.rel (%p695) target = $region32
        $region31: #{tpu_custom_call.1} parent=11 // pred_region
          _
        $region32: #{tpu_custom_call.1} parent=11 // pred_fallthru
          _
        // Predicated region
        $region33: #{tpu_custom_call.1} parent=11 // pred_check
          %p698 = pneg %p220
        $region34: #{tpu_custom_call.1} parent=11 // pred_check_branch
          %700 = sbr.rel (%p698) target = $region36
        $region35: #{tpu_custom_call.1} parent=11 // pred_region
          %702 = vsyncadd [#allocation11], 0
          %s703 = sshll.u32 %s7, 4
          %s704 = int_to_ptr.hbm [resolvable:$true] %s703
          %s705 = sshll.u32 [#allocation12], 4
          %s706 = int_to_ptr.vmem [resolvable:$true] %s705
          %711 = dma.hbm_to_vmem [thread:$0]  %s704, 7168, %s706, [#allocation11], 64, 64, 4
        $region36: #{tpu_custom_call.1} parent=11 // pred_fallthru
          _
        // Predicated region
        $region37: #{tpu_custom_call.1} parent=11 // pred_check
          %p712 = pneg %p241
        $region38: #{tpu_custom_call.1} parent=11 // pred_check_branch
          %714 = sbr.rel (%p712) target = $region40
        $region39: #{tpu_custom_call.1} parent=11 // pred_region
          %716 = vsyncadd [#allocation14], 0
          %s717 = sshll.u32 %s8, 4
          %s718 = int_to_ptr.hbm [resolvable:$true] %s717
          %s719 = sshll.u32 [#allocation13], 4
          %s720 = int_to_ptr.vmem [resolvable:$true] %s719
          %725 = dma.hbm_to_vmem [thread:$0]  %s718, 3072, %s720, [#allocation14], 64, 64, 4
        $region40: #{tpu_custom_call.1} parent=11 // pred_fallthru
          _
        // Predicated region
        $region41: #{tpu_custom_call.1} parent=11 // pred_check
          %p726 = pneg %p262
        $region42: #{tpu_custom_call.1} parent=11 // pred_check_branch
          %728 = sbr.rel (%p726) target = $region44
        $region43: #{tpu_custom_call.1} parent=11 // pred_region
          %730 = vsyncadd [#allocation14], 0
          %s731 = sshll.u32 %s9, 4
          %s732 = int_to_ptr.hbm [resolvable:$true] %s731
          %s733 = sshll.u32 [#allocation15], 4
          %s734 = int_to_ptr.vmem [resolvable:$true] %s733
          %739 = dma.hbm_to_vmem [thread:$0]  %s732, 3072, %s734, [#allocation14], 64, 64, 4
        $region44: #{tpu_custom_call.1} parent=11 // pred_fallthru
          _
        // Predicated region
        $region45: #{tpu_custom_call.1} parent=11 // pred_check
          %p740 = pneg %p283
        $region46: #{tpu_custom_call.1} parent=11 // pred_check_branch
          %742 = sbr.rel (%p740) target = $region48
        $region47: #{tpu_custom_call.1} parent=11 // pred_region
          %744 = vsyncadd [#allocation17], 0
          %s745 = sshll.u32 %s10, 4
          %s746 = int_to_ptr.hbm [resolvable:$true] %s745
          %s747 = sshll.u32 [#allocation16], 4
          %s748 = int_to_ptr.vmem [resolvable:$true] %s747
          %753 = dma.hbm_to_vmem [thread:$0]  %s746, 3072, %s748, [#allocation17], 64, 64, 4
        $region48: #{tpu_custom_call.1} parent=11 // pred_fallthru
          _
        // Predicated region
        $region49: #{tpu_custom_call.1} parent=11 // pred_check
          %p754 = pneg %p304
        $region50: #{tpu_custom_call.1} parent=11 // pred_check_branch
          %756 = sbr.rel (%p754) target = $region52
        $region51: #{tpu_custom_call.1} parent=11 // pred_region
          %758 = vsyncadd [#allocation17], 0
          %s759 = sshll.u32 %s11, 4
          %s760 = int_to_ptr.hbm [resolvable:$true] %s759
          %s761 = sshll.u32 [#allocation18], 4
          %s762 = int_to_ptr.vmem [resolvable:$true] %s761
          %767 = dma.hbm_to_vmem [thread:$0]  %s760, 3072, %s762, [#allocation17], 64, 64, 4
        $region52: #{tpu_custom_call.1} parent=11 // pred_fallthru
          _
        // Predicated region
        $region53: #{tpu_custom_call.1} parent=11 // pred_check
          %p768 = pneg %p325
        $region54: #{tpu_custom_call.1} parent=11 // pred_check_branch
          %770 = sbr.rel (%p768) target = $region56
        $region55: #{tpu_custom_call.1} parent=11 // pred_region
          %772 = vsyncadd [#allocation20], 0
          %s773 = sshll.u32 %s12, 4
          %s774 = int_to_ptr.hbm [resolvable:$true] %s773
          %s775 = sshll.u32 [#allocation19], 4
          %s776 = int_to_ptr.vmem [resolvable:$true] %s775
          %781 = dma.hbm_to_vmem [thread:$0]  %s774, 3072, %s776, [#allocation20], 64, 64, 4
        $region56: #{tpu_custom_call.1} parent=11 // pred_fallthru
          _
        // Predicated region
        $region57: #{tpu_custom_call.1} parent=11 // pred_check
          %p782 = pneg %p346
        $region58: #{tpu_custom_call.1} parent=11 // pred_check_branch
          %784 = sbr.rel (%p782) target = $region60
        $region59: #{tpu_custom_call.1} parent=11 // pred_region
          %786 = vsyncadd [#allocation20], 0
          %s787 = sshll.u32 %s13, 4
          %s788 = int_to_ptr.hbm [resolvable:$true] %s787
          %s789 = sshll.u32 [#allocation21], 4
          %s790 = int_to_ptr.vmem [resolvable:$true] %s789
          %795 = dma.hbm_to_vmem [thread:$0]  %s788, 3072, %s790, [#allocation20], 64, 64, 4
        $region60: #{tpu_custom_call.1} parent=11 // pred_fallthru
          _
        // Predicated region
        $region61: #{tpu_custom_call.1} parent=11 // pred_check
          %p796 = pneg %p367
        $region62: #{tpu_custom_call.1} parent=11 // pred_check_branch
          %798 = sbr.rel (%p796) target = $region64
        $region63: #{tpu_custom_call.1} parent=11 // pred_region
          _
        $region64: #{tpu_custom_call.1} parent=11 // pred_fallthru
          _
        // Predicated region
        $region65: #{tpu_custom_call.1} parent=11 // pred_check
          %p799 = pneg %p388
        $region66: #{tpu_custom_call.1} parent=11 // pred_check_branch
          %801 = sbr.rel (%p799) target = $region68
        $region67: #{tpu_custom_call.1} parent=11 // pred_region
          _
        $region68: #{tpu_custom_call.1} parent=11 // pred_fallthru
          _
        // Predicated region
        $region69: #{tpu_custom_call.1} parent=11 // pred_check
          %p802 = pneg %p409
        $region70: #{tpu_custom_call.1} parent=11 // pred_check_branch
          %804 = sbr.rel (%p802) target = $region72
        $region71: #{tpu_custom_call.1} parent=11 // pred_region
          _
        $region72: #{tpu_custom_call.1} parent=11 // pred_fallthru
          _
        // Predicated region
        $region73: #{tpu_custom_call.1} parent=11 // pred_check
          %p805 = pneg %p430
        $region74: #{tpu_custom_call.1} parent=11 // pred_check_branch
          %807 = sbr.rel (%p805) target = $region76
        $region75: #{tpu_custom_call.1} parent=11 // pred_region
          _
        $region76: #{tpu_custom_call.1} parent=11 // pred_fallthru
          _
        // Predicated region
        $region77: #{tpu_custom_call.1} parent=11 // pred_check
          %p808 = pneg %p451
        $region78: #{tpu_custom_call.1} parent=11 // pred_check_branch
          %810 = sbr.rel (%p808) target = $region80
        $region79: #{tpu_custom_call.1} parent=11 // pred_region
          _
        $region80: #{tpu_custom_call.1} parent=11 // pred_fallthru
          _
        // Predicated region
        $region81: #{tpu_custom_call.1} parent=11 // pred_check
          %p811 = pneg %p472
        $region82: #{tpu_custom_call.1} parent=11 // pred_check_branch
          %813 = sbr.rel (%p811) target = $region84
        $region83: #{tpu_custom_call.1} parent=11 // pred_region
          _
        $region84: #{tpu_custom_call.1} parent=11 // pred_fallthru
          _
        // Predicated region
        $region85: #{tpu_custom_call.1} parent=11 // pred_check
          %p814 = pneg %p493
        $region86: #{tpu_custom_call.1} parent=11 // pred_check_branch
          %816 = sbr.rel (%p814) target = $region88
        $region87: #{tpu_custom_call.1} parent=11 // pred_region
          _
        $region88: #{tpu_custom_call.1} parent=11 // pred_fallthru
          _
        // Predicated region
        $region89: #{tpu_custom_call.1} parent=11 // pred_check
          %p817 = pneg %p514
        $region90: #{tpu_custom_call.1} parent=11 // pred_check_branch
          %819 = sbr.rel (%p817) target = $region92
        $region91: #{tpu_custom_call.1} parent=11 // pred_region
          _
        $region92: #{tpu_custom_call.1} parent=11 // pred_fallthru
          _
        // Predicated region
        $region93: #{tpu_custom_call.1} parent=11 // pred_check
          %p820 = pneg %p535
        $region94: #{tpu_custom_call.1} parent=11 // pred_check_branch
          %822 = sbr.rel (%p820) target = $region96
        $region95: #{tpu_custom_call.1} parent=11 // pred_region
          _
        $region96: #{tpu_custom_call.1} parent=11 // pred_fallthru
          _
        // Predicated region
        $region97: #{tpu_custom_call.1} parent=11 // pred_check
          %p823 = pneg %p556
        $region98: #{tpu_custom_call.1} parent=11 // pred_check_branch
          %825 = sbr.rel (%p823) target = $region100
        $region99: #{tpu_custom_call.1} parent=11 // pred_region
          %827 = vsyncadd [#allocation23], 0
          %s829 = sshll.u32 %s23, 4
          %s830 = int_to_ptr.hbm [resolvable:$true] %s829
          %s831 = sshll.u32 [#allocation22], 4
          %s832 = int_to_ptr.vmem [resolvable:$true] %s831
          %834 = dma.hbm_to_vmem [thread:$0]  %s830, 32, %s832, [#allocation23]
        $region100: #{tpu_custom_call.1} parent=11 // pred_fallthru
          _
        // Predicated region
        $region101: #{tpu_custom_call.1} parent=11 // pred_check
          %p835 = pneg %p577
        $region102: #{tpu_custom_call.1} parent=11 // pred_check_branch
          %837 = sbr.rel (%p835) target = $region104
        $region103: #{tpu_custom_call.1} parent=11 // pred_region
          %839 = vsyncadd [#allocation23], 0
          %s841 = sshll.u32 %s24, 4
          %s842 = int_to_ptr.hbm [resolvable:$true] %s841
          %s843 = sshll.u32 [#allocation24], 4
          %s844 = int_to_ptr.vmem [resolvable:$true] %s843
          %846 = dma.hbm_to_vmem [thread:$0]  %s842, 32, %s844, [#allocation23]
        $region104: #{tpu_custom_call.1} parent=11 // pred_fallthru
          _
        // Predicated region
        $region105: #{tpu_custom_call.1} parent=11 // pred_check
          %p847 = pneg %p598
        $region106: #{tpu_custom_call.1} parent=11 // pred_check_branch
          %849 = sbr.rel (%p847) target = $region108
        $region107: #{tpu_custom_call.1} parent=11 // pred_region
          _
        $region108: #{tpu_custom_call.1} parent=11 // pred_fallthru
          _
      $region12: #{tpu_custom_call.1} parent=5 // pred_fallthru
        _
      %p850 = scmp.lt.s32.totalorder %s42, 2
      // Predicated region
      $region109: #{tpu_custom_call.1} parent=5 // pred_check
        %p851 = pneg %p850
      $region110: #{tpu_custom_call.1} parent=5 // pred_check_branch
        %853 = sbr.rel (%p851) target = $region112
      $region111: #{tpu_custom_call.1} parent=5 // pred_region
        // Predicated region
        $region113: #{tpu_custom_call.1} parent=111 // pred_check
          %p854 = pneg %p62
        $region114: #{tpu_custom_call.1} parent=111 // pred_check_branch
          %856 = sbr.rel (%p854) target = $region116
        $region115: #{tpu_custom_call.1} parent=111 // pred_region
          %p857 = scmp.lt.s32.totalorder %s42, 1
          %s858 = scalar_select %p857, %s42, 1
          %s859 = smul.addr %s858, 11
          %s860 = smul.addr %s859, 8
          %s861 = scalar_lea.vmem %s0, %s860
        $region116: #{tpu_custom_call.1} parent=111 // pred_fallthru
          _
        // Predicated region
        $region117: #{tpu_custom_call.1} parent=111 // pred_check
          %p862 = pneg %p88
        $region118: #{tpu_custom_call.1} parent=111 // pred_check_branch
          %864 = sbr.rel (%p862) target = $region120
        $region119: #{tpu_custom_call.1} parent=111 // pred_region
          %p865 = scmp.lt.s32.totalorder %s42, 1
          %s866 = scalar_select %p865, %s42, 1
          %s867 = smul.addr %s866, 11
          %s868 = smul.addr %s867, 8
          %s869 = scalar_lea.vmem %s1, %s868
        $region120: #{tpu_custom_call.1} parent=111 // pred_fallthru
          _
      $region112: #{tpu_custom_call.1} parent=5 // pred_fallthru
        _
      %p870 = scmp.le.s32.totalorder 1, %s42
      %p871 = scmp.lt.s32.totalorder %s42, 3
      %p872 = pnand %p870, %p871
      %p873 = pneg %p872
      // Predicated region
      $region121: #{tpu_custom_call.1} parent=5 // pred_check
        _
      $region122: #{tpu_custom_call.1} parent=5 // pred_check_branch
        %875 = sbr.rel (%p872) target = $region124
      $region123: #{tpu_custom_call.1} parent=5 // pred_region
        %s876 = ssub.s32 %s42, 1
        // Predicated region
        $region125: #{tpu_custom_call.1} parent=123 // pred_check
          %p877 = pneg %p115
        $region126: #{tpu_custom_call.1} parent=123 // pred_check_branch
          %879 = sbr.rel (%p877) target = $region128
        $region127: #{tpu_custom_call.1} parent=123 // pred_region
          %881 = dma.done [#allocation5], 2816
        $region128: #{tpu_custom_call.1} parent=123 // pred_fallthru
          _
        // Predicated region
        $region129: #{tpu_custom_call.1} parent=123 // pred_check
          %p882 = pneg %p136
        $region130: #{tpu_custom_call.1} parent=123 // pred_check_branch
          %884 = sbr.rel (%p882) target = $region132
        $region131: #{tpu_custom_call.1} parent=123 // pred_region
          %886 = dma.done [#allocation8], 3584
        $region132: #{tpu_custom_call.1} parent=123 // pred_fallthru
          _
        // Predicated region
        $region133: #{tpu_custom_call.1} parent=123 // pred_check
          %p887 = pneg %p157
        $region134: #{tpu_custom_call.1} parent=123 // pred_check_branch
          %889 = sbr.rel (%p887) target = $region136
        $region135: #{tpu_custom_call.1} parent=123 // pred_region
          %891 = dma.done [#allocation8], 2112
        $region136: #{tpu_custom_call.1} parent=123 // pred_fallthru
          _
        // Predicated region
        $region137: #{tpu_custom_call.1} parent=123 // pred_check
          %p892 = pneg %p178
        $region138: #{tpu_custom_call.1} parent=123 // pred_check_branch
          %894 = sbr.rel (%p892) target = $region140
        $region139: #{tpu_custom_call.1} parent=123 // pred_region
          %896 = dma.done [#allocation11], 3584
        $region140: #{tpu_custom_call.1} parent=123 // pred_fallthru
          _
        // Predicated region
        $region141: #{tpu_custom_call.1} parent=123 // pred_check
          %p897 = pneg %p220
        $region142: #{tpu_custom_call.1} parent=123 // pred_check_branch
          %899 = sbr.rel (%p897) target = $region144
        $region143: #{tpu_custom_call.1} parent=123 // pred_region
          %901 = dma.done [#allocation11], 7168
        $region144: #{tpu_custom_call.1} parent=123 // pred_fallthru
          _
        // Predicated region
        $region145: #{tpu_custom_call.1} parent=123 // pred_check
          %p902 = pneg %p241
        $region146: #{tpu_custom_call.1} parent=123 // pred_check_branch
          %904 = sbr.rel (%p902) target = $region148
        $region147: #{tpu_custom_call.1} parent=123 // pred_region
          %906 = dma.done [#allocation14], 3072
        $region148: #{tpu_custom_call.1} parent=123 // pred_fallthru
          _
        // Predicated region
        $region149: #{tpu_custom_call.1} parent=123 // pred_check
          %p907 = pneg %p262
        $region150: #{tpu_custom_call.1} parent=123 // pred_check_branch
          %909 = sbr.rel (%p907) target = $region152
        $region151: #{tpu_custom_call.1} parent=123 // pred_region
          %911 = dma.done [#allocation14], 3072
        $region152: #{tpu_custom_call.1} parent=123 // pred_fallthru
          _
        // Predicated region
        $region153: #{tpu_custom_call.1} parent=123 // pred_check
          %p912 = pneg %p283
        $region154: #{tpu_custom_call.1} parent=123 // pred_check_branch
          %914 = sbr.rel (%p912) target = $region156
        $region155: #{tpu_custom_call.1} parent=123 // pred_region
          %916 = dma.done [#allocation17], 3072
        $region156: #{tpu_custom_call.1} parent=123 // pred_fallthru
          _
        // Predicated region
        $region157: #{tpu_custom_call.1} parent=123 // pred_check
          %p917 = pneg %p304
        $region158: #{tpu_custom_call.1} parent=123 // pred_check_branch
          %919 = sbr.rel (%p917) target = $region160
        $region159: #{tpu_custom_call.1} parent=123 // pred_region
          %921 = dma.done [#allocation17], 3072
        $region160: #{tpu_custom_call.1} parent=123 // pred_fallthru
          _
        // Predicated region
        $region161: #{tpu_custom_call.1} parent=123 // pred_check
          %p922 = pneg %p325
        $region162: #{tpu_custom_call.1} parent=123 // pred_check_branch
          %924 = sbr.rel (%p922) target = $region164
        $region163: #{tpu_custom_call.1} parent=123 // pred_region
          %926 = dma.done [#allocation20], 3072
        $region164: #{tpu_custom_call.1} parent=123 // pred_fallthru
          _
        // Predicated region
        $region165: #{tpu_custom_call.1} parent=123 // pred_check
          %p927 = pneg %p346
        $region166: #{tpu_custom_call.1} parent=123 // pred_check_branch
          %929 = sbr.rel (%p927) target = $region168
        $region167: #{tpu_custom_call.1} parent=123 // pred_region
          %931 = dma.done [#allocation20], 3072
        $region168: #{tpu_custom_call.1} parent=123 // pred_fallthru
          _
        // Predicated region
        $region169: #{tpu_custom_call.1} parent=123 // pred_check
          %p932 = pneg %p556
        $region170: #{tpu_custom_call.1} parent=123 // pred_check_branch
          %934 = sbr.rel (%p932) target = $region172
        $region171: #{tpu_custom_call.1} parent=123 // pred_region
          %936 = dma.done [#allocation23], 32
        $region172: #{tpu_custom_call.1} parent=123 // pred_fallthru
          _
        // Predicated region
        $region173: #{tpu_custom_call.1} parent=123 // pred_check
          %p937 = pneg %p577
        $region174: #{tpu_custom_call.1} parent=123 // pred_check_branch
          %939 = sbr.rel (%p937) target = $region176
        $region175: #{tpu_custom_call.1} parent=123 // pred_region
          %941 = dma.done [#allocation23], 32
        $region176: #{tpu_custom_call.1} parent=123 // pred_fallthru
          _
        %p942 = scmp.lt.s32.totalorder %s47, 1
        %s943 = scalar_select %p942, %s47, 1
        %s944 = smul.addr %s943, 11
        %s945 = smul.addr %s944, 8
        %s946 = scalar_lea.vmem %s0, %s945
        %p947 = pneg %p68
        %p948 = pneg %p65
        %p949 = scmp.lt.s32.totalorder %s47, 1
        %s950 = scalar_select %p949, %s47, 1
        %s951 = smul.addr %s950, 11
        %s952 = smul.addr %s951, 8
        %s953 = scalar_lea.vmem %s1, %s952
        %p954 = pneg %p94
        %p955 = pneg %p91
        %p956 = pneg %p115
        %p957 = pneg %p112
        %p958 = pneg %p136
        %p959 = pneg %p133
        %p960 = pneg %p157
        %p961 = pneg %p154
        %p962 = pneg %p178
        %p963 = pneg %p175
        %p964 = pneg %p199
        %p965 = pneg %p196
        %p966 = pneg %p220
        %p967 = pneg %p217
        %p968 = pneg %p241
        %p969 = pneg %p238
        %p970 = pneg %p262
        %p971 = pneg %p259
        %p972 = pneg %p283
        %p973 = pneg %p280
        %p974 = pneg %p304
        %p975 = pneg %p301
        %p976 = pneg %p325
        %p977 = pneg %p322
        %p978 = pneg %p346
        %p979 = pneg %p343
        %p980 = pneg %p367
        %p981 = pneg %p364
        %p982 = pneg %p388
        %p983 = pneg %p385
        %p984 = pneg %p409
        %p985 = pneg %p406
        %p986 = pneg %p430
        %p987 = pneg %p427
        %p988 = pneg %p451
        %p989 = pneg %p448
        %p990 = pneg %p472
        %p991 = pneg %p469
        %p992 = pneg %p493
        %p993 = pneg %p490
        %p994 = pneg %p514
        %p995 = pneg %p511
        %p996 = pneg %p535
        %p997 = pneg %p532
        %p998 = pneg %p556
        %p999 = pneg %p553
        %p1000 = pneg %p577
        %p1001 = pneg %p574
        %p1002 = pneg %p598
        %p1003 = pneg %p595
        %p1004 = pneg %p624
        %p1005 = pneg %p621
        %s1006 = sand.u32 %s611, 1
        %s1007 = scalar_lea.sflag [#allocation6], %s1006
        %s1008 = sand.u32 %s611, 1
        %s1009 = scalar_lea.vmem [#allocation25], %s1008
        %p1010 = scmp.lt.s32.totalorder %s47, 1
        %s1011 = scalar_select %p1010, %s47, 1
        %s1012 = smul.addr %s1011, 11
        %s1013 = smul.addr %s1012, 8
        %s1014 = scalar_lea.vmem %s0, %s1013
        %p1015 = scmp.lt.s32.totalorder %s47, 1
        %s1016 = scalar_select %p1015, %s47, 1
        %s1017 = smul.addr %s1016, 11
        %s1018 = smul.addr %s1017, 8
        %s1019 = scalar_lea.vmem %s1, %s1018
        %v1021 = vld [vmem:[%s1014] sm:$0xff]
        %v1022 = vld [vmem:[%s1014 + $0x8] sm:$0xff]
        %v1023 = vld [vmem:[%s1014 + $0x10] sm:$0xff]
        %v1024 = vld [vmem:[%s1014 + $0x18] sm:$0xff]
        %v1025 = vld [vmem:[%s1014 + $0x20] sm:$0xff]
        %v1026 = vld [vmem:[%s1014 + $0x28] sm:$0xff]
        %v1027 = vld [vmem:[%s1014 + $0x30] sm:$0xff]
        %v1028 = vld [vmem:[%s1014 + $0x38] sm:$0xff]
        %v1029 = vld [vmem:[%s1014 + $0x40] sm:$0xff]
        %v1030 = vld [vmem:[%s1014 + $0x48] sm:$0xff]
        %v1031 = vld [vmem:[%s1014 + $0x50] sm:$0x1]
        %1032 = vst [vmem:[#allocation2] sm:$0x1f] 0.0
        %1033 = vst [vmem:[#allocation2 + $0x56] sm:$0x1f] 0.0
        %vm1034 = vcmask 228352
        %1035 = vst.msk [vmem:[#allocation2 + $0x5] sm:$0xff] %vm1034, %v1021
        %1036 = vst.msk [vmem:[#allocation2 + $0xd] sm:$0xff] %vm1034, %v1022
        %1037 = vst.msk [vmem:[#allocation2 + $0x15] sm:$0xff] %vm1034, %v1023
        %1038 = vst.msk [vmem:[#allocation2 + $0x1d] sm:$0xff] %vm1034, %v1024
        %1039 = vst.msk [vmem:[#allocation2 + $0x25] sm:$0xff] %vm1034, %v1025
        %1040 = vst.msk [vmem:[#allocation2 + $0x2d] sm:$0xff] %vm1034, %v1026
        %1041 = vst.msk [vmem:[#allocation2 + $0x35] sm:$0xff] %vm1034, %v1027
        %1042 = vst.msk [vmem:[#allocation2 + $0x3d] sm:$0xff] %vm1034, %v1028
        %1043 = vst.msk [vmem:[#allocation2 + $0x45] sm:$0xff] %vm1034, %v1029
        %1044 = vst.msk [vmem:[#allocation2 + $0x4d] sm:$0xff] %vm1034, %v1030
        %vm1045 = vcmask 221184
        %1046 = vst.msk [vmem:[#allocation2 + $0x55] sm:$0x1] %vm1045, %v1031
        %v1047 = vld [vmem:[#allocation2] sm:$0xff]
        %v1048 = vld [vmem:[#allocation2 + $0x8] sm:$0xff]
        %v1049 = vld [vmem:[#allocation2 + $0x10] sm:$0xff]
        %v1050 = vld [vmem:[#allocation2 + $0x18] sm:$0xff]
        %v1051 = vld [vmem:[#allocation2 + $0x20] sm:$0xff]
        %v1052 = vld [vmem:[#allocation2 + $0x28] sm:$0xff]
        %v1053 = vld [vmem:[#allocation2 + $0x30] sm:$0xff]
        %v1054 = vld [vmem:[#allocation2 + $0x38] sm:$0xff]
        %v1055 = vld [vmem:[#allocation2 + $0x40] sm:$0xff]
        %v1056 = vld [vmem:[#allocation2 + $0x48] sm:$0xff]
        %v1057 = vld [vmem:[#allocation2 + $0x50] sm:$0x1]
        %v1058 = vpack.c.bf16 %v1048, %v1047
        %v1059 = vpack.c.bf16 %v1050, %v1049
        %v1060 = vpack.c.bf16 %v1052, %v1051
        %v1061 = vpack.c.bf16 %v1054, %v1053
        %v1062 = vpack.c.bf16 %v1056, %v1055
        %v1063 = vpack.c.bf16 %v1057, %v1057
        %v1064 = vld [vmem:[#allocation4] sm:$0xf]
        %v1065 = vld [vmem:[#allocation4 + $0x4] sm:$0xf]
        %v1066 = vld [vmem:[#allocation4 + $0x8] sm:$0xf]
        %v1067 = vld [vmem:[#allocation4 + $0xc] sm:$0x3]
        %v1068 = vld [vmem:[#allocation2 + $0x1] sm:$0xff]
        %v1069 = vld [vmem:[#allocation2 + $0x9] sm:$0xff]
        %v1070 = vld [vmem:[#allocation2 + $0x11] sm:$0xff]
        %v1071 = vld [vmem:[#allocation2 + $0x19] sm:$0xff]
        %v1072 = vld [vmem:[#allocation2 + $0x21] sm:$0xff]
        %v1073 = vld [vmem:[#allocation2 + $0x29] sm:$0xff]
        %v1074 = vld [vmem:[#allocation2 + $0x31] sm:$0xff]
        %v1075 = vld [vmem:[#allocation2 + $0x39] sm:$0xff]
        %v1076 = vld [vmem:[#allocation2 + $0x41] sm:$0xff]
        %v1077 = vld [vmem:[#allocation2 + $0x49] sm:$0xff]
        %v1078 = vld [vmem:[#allocation2 + $0x51] sm:$0x1]
        %v1079 = vpack.c.bf16 %v1069, %v1068
        %v1080 = vpack.c.bf16 %v1071, %v1070
        %v1081 = vpack.c.bf16 %v1073, %v1072
        %v1082 = vpack.c.bf16 %v1075, %v1074
        %v1083 = vpack.c.bf16 %v1077, %v1076
        %v1084 = vpack.c.bf16 %v1078, %v1078
        %s1085 = scalar_lea.vmem [#allocation4], 16
        %v1086 = vld [vmem:[%s1085] sm:$0xf]
        %v1087 = vld [vmem:[%s1085 + $0x4] sm:$0xf]
        %v1088 = vld [vmem:[%s1085 + $0x8] sm:$0xf]
        %v1089 = vld [vmem:[%s1085 + $0xc] sm:$0x3]
        %v1094 = vunpack.c.l.b16 %v1086
        %v1095 = vunpack.c.l.b16 %v1087
        %v1096 = vunpack.c.l.b16 %v1088
        %v1097 = vunpack.c.l.b16 %v1089
        %v1098 = vpack.c.b16 %v1095, %v1094
        %v1099 = vpack.c.b16 %v1097, %v1096
        %v1102 = vsel %vm1034, %v1079, 0
        %v1105 = vsel %vm1034, %v1080, 0
        %v1108 = vsel %vm1034, %v1081, 0
        %v1111 = vsel %vm1034, %v1082, 0
        %v1114 = vsel %vm1034, %v1083, 0
        %v1117 = vsel %vm1034, %v1084, 0
        %vm1119 = vcmask 1045504
        %v1121 = vsel %vm1119, %v1099, 0
        %1123 = vmatpush.bf16.msra.mxu0 0
        %1124 = vmatpush.bf16.msra.mxu0 0
        %1125 = vmatpush.bf16.msra.mxu0 0
        %1126 = vmatpush.bf16.msra.mxu0 0
        %1127 = vmatpush.bf16.msra.mxu0 0
        %1128 = vmatpush.bf16.msra.mxu0 0
        %1129 = vmatpush.bf16.msra.mxu0 %v1121
        %1130 = vmatpush.bf16.msra.mxu0 %v1098
        %1131 = vmatmul.bf16.gmra.mxu0 %v1102
        %v1132 = vpop.f32.mrf.mxu0
        %v1133 = vadd.f32 0.0, %v1132
        %v1134 = vpop.f32.mrf.mxu0
        %v1135 = vadd.f32 0.0, %v1134
        %1136 = vmatmul.bf16.gmra.mxu0 %v1105
        %v1137 = vpop.f32.mrf.mxu0
        %v1138 = vadd.f32 0.0, %v1137
        %v1139 = vpop.f32.mrf.mxu0
        %v1140 = vadd.f32 0.0, %v1139
        %1141 = vmatmul.bf16.gmra.mxu0 %v1108
        %v1142 = vpop.f32.mrf.mxu0
        %v1143 = vadd.f32 0.0, %v1142
        %v1144 = vpop.f32.mrf.mxu0
        %v1145 = vadd.f32 0.0, %v1144
        %1146 = vmatmul.bf16.gmra.mxu0 %v1111
        %v1147 = vpop.f32.mrf.mxu0
        %v1148 = vadd.f32 0.0, %v1147
        %v1149 = vpop.f32.mrf.mxu0
        %v1150 = vadd.f32 0.0, %v1149
        %1151 = vmatmul.bf16.gmra.mxu0 %v1114
        %v1152 = vpop.f32.mrf.mxu0
        %v1153 = vadd.f32 0.0, %v1152
        %v1154 = vpop.f32.mrf.mxu0
        %v1155 = vadd.f32 0.0, %v1154
        %1156 = vmatmul.bf16.gmra.mxu0 %v1117
        %v1157 = vpop.f32.mrf.mxu0
        %v1158 = vadd.f32 0.0, %v1157
        %v1159 = vpop.f32.mrf.mxu0
        %1160 = vdwg.mxu0
        %v1165 = vunpack.c.l.b16 %v1064
        %v1166 = vunpack.c.l.b16 %v1065
        %v1167 = vunpack.c.l.b16 %v1066
        %v1168 = vunpack.c.l.b16 %v1067
        %v1169 = vpack.c.b16 %v1166, %v1165
        %v1170 = vpack.c.b16 %v1168, %v1167
        %v1173 = vsel %vm1034, %v1058, 0
        %v1176 = vsel %vm1034, %v1059, 0
        %v1179 = vsel %vm1034, %v1060, 0
        %v1182 = vsel %vm1034, %v1061, 0
        %v1185 = vsel %vm1034, %v1062, 0
        %v1188 = vsel %vm1034, %v1063, 0
        %v1191 = vsel %vm1119, %v1170, 0
        %1193 = vmatpush.bf16.msra.mxu0 0
        %1194 = vmatpush.bf16.msra.mxu0 0
        %1195 = vmatpush.bf16.msra.mxu0 0
        %1196 = vmatpush.bf16.msra.mxu0 0
        %1197 = vmatpush.bf16.msra.mxu0 0
        %1198 = vmatpush.bf16.msra.mxu0 0
        %1199 = vmatpush.bf16.msra.mxu0 %v1191
        %1200 = vmatpush.bf16.msra.mxu0 %v1169
        %1201 = vmatmul.bf16.gmra.mxu0 %v1173
        %v1202 = vpop.f32.mrf.mxu0
        %v1203 = vadd.f32 %v1133, %v1202
        %v1204 = vpop.f32.mrf.mxu0
        %v1205 = vadd.f32 %v1135, %v1204
        %1206 = vmatmul.bf16.gmra.mxu0 %v1176
        %v1207 = vpop.f32.mrf.mxu0
        %v1208 = vadd.f32 %v1138, %v1207
        %v1209 = vpop.f32.mrf.mxu0
        %v1210 = vadd.f32 %v1140, %v1209
        %1211 = vmatmul.bf16.gmra.mxu0 %v1179
        %v1212 = vpop.f32.mrf.mxu0
        %v1213 = vadd.f32 %v1143, %v1212
        %v1214 = vpop.f32.mrf.mxu0
        %v1215 = vadd.f32 %v1145, %v1214
        %1216 = vmatmul.bf16.gmra.mxu0 %v1182
        %v1217 = vpop.f32.mrf.mxu0
        %v1218 = vadd.f32 %v1148, %v1217
        %v1219 = vpop.f32.mrf.mxu0
        %v1220 = vadd.f32 %v1150, %v1219
        %1221 = vmatmul.bf16.gmra.mxu0 %v1185
        %v1222 = vpop.f32.mrf.mxu0
        %v1223 = vadd.f32 %v1153, %v1222
        %v1224 = vpop.f32.mrf.mxu0
        %v1225 = vadd.f32 %v1155, %v1224
        %1226 = vmatmul.bf16.gmra.mxu0 %v1188
        %v1227 = vpop.f32.mrf.mxu0
        %v1228 = vadd.f32 %v1158, %v1227
        %v1229 = vpop.f32.mrf.mxu0
        %1230 = vdwg.mxu0
        %v1231 = vld [vmem:[#allocation2 + $0x2] sm:$0xff]
        %v1232 = vld [vmem:[#allocation2 + $0xa] sm:$0xff]
        %v1233 = vld [vmem:[#allocation2 + $0x12] sm:$0xff]
        %v1234 = vld [vmem:[#allocation2 + $0x1a] sm:$0xff]
        %v1235 = vld [vmem:[#allocation2 + $0x22] sm:$0xff]
        %v1236 = vld [vmem:[#allocation2 + $0x2a] sm:$0xff]
        %v1237 = vld [vmem:[#allocation2 + $0x32] sm:$0xff]
        %v1238 = vld [vmem:[#allocation2 + $0x3a] sm:$0xff]
        %v1239 = vld [vmem:[#allocation2 + $0x42] sm:$0xff]
        %v1240 = vld [vmem:[#allocation2 + $0x4a] sm:$0xff]
        %v1241 = vld [vmem:[#allocation2 + $0x52] sm:$0x1]
        %v1242 = vpack.c.bf16 %v1232, %v1231
        %v1243 = vpack.c.bf16 %v1234, %v1233
        %v1244 = vpack.c.bf16 %v1236, %v1235
        %v1245 = vpack.c.bf16 %v1238, %v1237
        %v1246 = vpack.c.bf16 %v1240, %v1239
        %v1247 = vpack.c.bf16 %v1241, %v1241
        %s1248 = scalar_lea.vmem [#allocation4], 32
        %v1249 = vld [vmem:[%s1248] sm:$0xf]
        %v1250 = vld [vmem:[%s1248 + $0x4] sm:$0xf]
        %v1251 = vld [vmem:[%s1248 + $0x8] sm:$0xf]
        %v1252 = vld [vmem:[%s1248 + $0xc] sm:$0x3]
        %v1257 = vunpack.c.l.b16 %v1249
        %v1258 = vunpack.c.l.b16 %v1250
        %v1259 = vunpack.c.l.b16 %v1251
        %v1260 = vunpack.c.l.b16 %v1252
        %v1261 = vpack.c.b16 %v1258, %v1257
        %v1262 = vpack.c.b16 %v1260, %v1259
        %v1265 = vsel %vm1034, %v1242, 0
        %v1268 = vsel %vm1034, %v1243, 0
        %v1271 = vsel %vm1034, %v1244, 0
        %v1274 = vsel %vm1034, %v1245, 0
        %v1277 = vsel %vm1034, %v1246, 0
        %v1280 = vsel %vm1034, %v1247, 0
        %v1283 = vsel %vm1119, %v1262, 0
        %1285 = vmatpush.bf16.msra.mxu0 0
        %1286 = vmatpush.bf16.msra.mxu0 0
        %1287 = vmatpush.bf16.msra.mxu0 0
        %1288 = vmatpush.bf16.msra.mxu0 0
        %1289 = vmatpush.bf16.msra.mxu0 0
        %1290 = vmatpush.bf16.msra.mxu0 0
        %1291 = vmatpush.bf16.msra.mxu0 %v1283
        %1292 = vmatpush.bf16.msra.mxu0 %v1261
        %1293 = vmatmul.bf16.gmra.mxu0 %v1265
        %v1294 = vpop.f32.mrf.mxu0
        %v1295 = vadd.f32 0.0, %v1294
        %v1296 = vpop.f32.mrf.mxu0
        %v1297 = vadd.f32 0.0, %v1296
        %1298 = vmatmul.bf16.gmra.mxu0 %v1268
        %v1299 = vpop.f32.mrf.mxu0
        %v1300 = vadd.f32 0.0, %v1299
        %v1301 = vpop.f32.mrf.mxu0
        %v1302 = vadd.f32 0.0, %v1301
        %1303 = vmatmul.bf16.gmra.mxu0 %v1271
        %v1304 = vpop.f32.mrf.mxu0
        %v1305 = vadd.f32 0.0, %v1304
        %v1306 = vpop.f32.mrf.mxu0
        %v1307 = vadd.f32 0.0, %v1306
        %1308 = vmatmul.bf16.gmra.mxu0 %v1274
        %v1309 = vpop.f32.mrf.mxu0
        %v1310 = vadd.f32 0.0, %v1309
        %v1311 = vpop.f32.mrf.mxu0
        %v1312 = vadd.f32 0.0, %v1311
        %1313 = vmatmul.bf16.gmra.mxu0 %v1277
        %v1314 = vpop.f32.mrf.mxu0
        %v1315 = vadd.f32 0.0, %v1314
        %v1316 = vpop.f32.mrf.mxu0
        %v1317 = vadd.f32 0.0, %v1316
        %1318 = vmatmul.bf16.gmra.mxu0 %v1280
        %v1319 = vpop.f32.mrf.mxu0
        %v1320 = vadd.f32 0.0, %v1319
        %v1321 = vpop.f32.mrf.mxu0
        %1322 = vdwg.mxu0
        %v1323 = vadd.f32 %v1203, %v1295
        %v1324 = vadd.f32 %v1205, %v1297
        %v1325 = vadd.f32 %v1208, %v1300
        %v1326 = vadd.f32 %v1210, %v1302
        %v1327 = vadd.f32 %v1213, %v1305
        %v1328 = vadd.f32 %v1215, %v1307
        %v1329 = vadd.f32 %v1218, %v1310
        %v1330 = vadd.f32 %v1220, %v1312
        %v1331 = vadd.f32 %v1223, %v1315
        %v1332 = vadd.f32 %v1225, %v1317
        %v1333 = vadd.f32 %v1228, %v1320
        %v1334 = vld [vmem:[#allocation2 + $0x3] sm:$0xff]
        %v1335 = vld [vmem:[#allocation2 + $0xb] sm:$0xff]
        %v1336 = vld [vmem:[#allocation2 + $0x13] sm:$0xff]
        %v1337 = vld [vmem:[#allocation2 + $0x1b] sm:$0xff]
        %v1338 = vld [vmem:[#allocation2 + $0x23] sm:$0xff]
        %v1339 = vld [vmem:[#allocation2 + $0x2b] sm:$0xff]
        %v1340 = vld [vmem:[#allocation2 + $0x33] sm:$0xff]
        %v1341 = vld [vmem:[#allocation2 + $0x3b] sm:$0xff]
        %v1342 = vld [vmem:[#allocation2 + $0x43] sm:$0xff]
        %v1343 = vld [vmem:[#allocation2 + $0x4b] sm:$0xff]
        %v1344 = vld [vmem:[#allocation2 + $0x53] sm:$0x1]
        %v1345 = vpack.c.bf16 %v1335, %v1334
        %v1346 = vpack.c.bf16 %v1337, %v1336
        %v1347 = vpack.c.bf16 %v1339, %v1338
        %v1348 = vpack.c.bf16 %v1341, %v1340
        %v1349 = vpack.c.bf16 %v1343, %v1342
        %v1350 = vpack.c.bf16 %v1344, %v1344
        %s1351 = scalar_lea.vmem [#allocation4], 48
        %v1352 = vld [vmem:[%s1351] sm:$0xf]
        %v1353 = vld [vmem:[%s1351 + $0x4] sm:$0xf]
        %v1354 = vld [vmem:[%s1351 + $0x8] sm:$0xf]
        %v1355 = vld [vmem:[%s1351 + $0xc] sm:$0x3]
        %v1360 = vunpack.c.l.b16 %v1352
        %v1361 = vunpack.c.l.b16 %v1353
        %v1362 = vunpack.c.l.b16 %v1354
        %v1363 = vunpack.c.l.b16 %v1355
        %v1364 = vpack.c.b16 %v1361, %v1360
        %v1365 = vpack.c.b16 %v1363, %v1362
        %v1368 = vsel %vm1034, %v1345, 0
        %v1371 = vsel %vm1034, %v1346, 0
        %v1374 = vsel %vm1034, %v1347, 0
        %v1377 = vsel %vm1034, %v1348, 0
        %v1380 = vsel %vm1034, %v1349, 0
        %v1383 = vsel %vm1034, %v1350, 0
        %v1386 = vsel %vm1119, %v1365, 0
        %1388 = vmatpush.bf16.msra.mxu0 0
        %1389 = vmatpush.bf16.msra.mxu0 0
        %1390 = vmatpush.bf16.msra.mxu0 0
        %1391 = vmatpush.bf16.msra.mxu0 0
        %1392 = vmatpush.bf16.msra.mxu0 0
        %1393 = vmatpush.bf16.msra.mxu0 0
        %1394 = vmatpush.bf16.msra.mxu0 %v1386
        %1395 = vmatpush.bf16.msra.mxu0 %v1364
        %1396 = vmatmul.bf16.gmra.mxu0 %v1368
        %v1397 = vpop.f32.mrf.mxu0
        %v1398 = vadd.f32 0.0, %v1397
        %v1399 = vpop.f32.mrf.mxu0
        %v1400 = vadd.f32 0.0, %v1399
        %1401 = vmatmul.bf16.gmra.mxu0 %v1371
        %v1402 = vpop.f32.mrf.mxu0
        %v1403 = vadd.f32 0.0, %v1402
        %v1404 = vpop.f32.mrf.mxu0
        %v1405 = vadd.f32 0.0, %v1404
        %1406 = vmatmul.bf16.gmra.mxu0 %v1374
        %v1407 = vpop.f32.mrf.mxu0
        %v1408 = vadd.f32 0.0, %v1407
        %v1409 = vpop.f32.mrf.mxu0
        %v1410 = vadd.f32 0.0, %v1409
        %1411 = vmatmul.bf16.gmra.mxu0 %v1377
        %v1412 = vpop.f32.mrf.mxu0
        %v1413 = vadd.f32 0.0, %v1412
        %v1414 = vpop.f32.mrf.mxu0
        %v1415 = vadd.f32 0.0, %v1414
        %1416 = vmatmul.bf16.gmra.mxu0 %v1380
        %v1417 = vpop.f32.mrf.mxu0
        %v1418 = vadd.f32 0.0, %v1417
        %v1419 = vpop.f32.mrf.mxu0
        %v1420 = vadd.f32 0.0, %v1419
        %1421 = vmatmul.bf16.gmra.mxu0 %v1383
        %v1422 = vpop.f32.mrf.mxu0
        %v1423 = vadd.f32 0.0, %v1422
        %v1424 = vpop.f32.mrf.mxu0
        %1425 = vdwg.mxu0
        %v1426 = vadd.f32 %v1323, %v1398
        %v1427 = vadd.f32 %v1324, %v1400
        %v1428 = vadd.f32 %v1325, %v1403
        %v1429 = vadd.f32 %v1326, %v1405
        %v1430 = vadd.f32 %v1327, %v1408
        %v1431 = vadd.f32 %v1328, %v1410
        %v1432 = vadd.f32 %v1329, %v1413
        %v1433 = vadd.f32 %v1330, %v1415
        %v1434 = vadd.f32 %v1331, %v1418
        %v1435 = vadd.f32 %v1332, %v1420
        %v1436 = vadd.f32 %v1333, %v1423
        %v1437 = vld [vmem:[#allocation2 + $0x4] sm:$0xff]
        %v1438 = vld [vmem:[#allocation2 + $0xc] sm:$0xff]
        %v1439 = vld [vmem:[#allocation2 + $0x14] sm:$0xff]
        %v1440 = vld [vmem:[#allocation2 + $0x1c] sm:$0xff]
        %v1441 = vld [vmem:[#allocation2 + $0x24] sm:$0xff]
        %v1442 = vld [vmem:[#allocation2 + $0x2c] sm:$0xff]
        %v1443 = vld [vmem:[#allocation2 + $0x34] sm:$0xff]
        %v1444 = vld [vmem:[#allocation2 + $0x3c] sm:$0xff]
        %v1445 = vld [vmem:[#allocation2 + $0x44] sm:$0xff]
        %v1446 = vld [vmem:[#allocation2 + $0x4c] sm:$0xff]
        %v1447 = vld [vmem:[#allocation2 + $0x54] sm:$0x1]
        %v1448 = vpack.c.bf16 %v1438, %v1437
        %v1449 = vpack.c.bf16 %v1440, %v1439
        %v1450 = vpack.c.bf16 %v1442, %v1441
        %v1451 = vpack.c.bf16 %v1444, %v1443
        %v1452 = vpack.c.bf16 %v1446, %v1445
        %v1453 = vpack.c.bf16 %v1447, %v1447
        %s1454 = scalar_lea.vmem [#allocation4], 64
        %v1455 = vld [vmem:[%s1454] sm:$0xf]
        %v1456 = vld [vmem:[%s1454 + $0x4] sm:$0xf]
        %v1457 = vld [vmem:[%s1454 + $0x8] sm:$0xf]
        %v1458 = vld [vmem:[%s1454 + $0xc] sm:$0x3]
        %v1463 = vunpack.c.l.b16 %v1455
        %v1464 = vunpack.c.l.b16 %v1456
        %v1465 = vunpack.c.l.b16 %v1457
        %v1466 = vunpack.c.l.b16 %v1458
        %v1467 = vpack.c.b16 %v1464, %v1463
        %v1468 = vpack.c.b16 %v1466, %v1465
        %v1471 = vsel %vm1034, %v1448, 0
        %v1474 = vsel %vm1034, %v1449, 0
        %v1477 = vsel %vm1034, %v1450, 0
        %v1480 = vsel %vm1034, %v1451, 0
        %v1483 = vsel %vm1034, %v1452, 0
        %v1486 = vsel %vm1034, %v1453, 0
        %v1489 = vsel %vm1119, %v1468, 0
        %1491 = vmatpush.bf16.msra.mxu0 0
        %1492 = vmatpush.bf16.msra.mxu0 0
        %1493 = vmatpush.bf16.msra.mxu0 0
        %1494 = vmatpush.bf16.msra.mxu0 0
        %1495 = vmatpush.bf16.msra.mxu0 0
        %1496 = vmatpush.bf16.msra.mxu0 0
        %1497 = vmatpush.bf16.msra.mxu0 %v1489
        %1498 = vmatpush.bf16.msra.mxu0 %v1467
        %1499 = vmatmul.bf16.gmra.mxu0 %v1471
        %v1500 = vpop.f32.mrf.mxu0
        %v1501 = vadd.f32 0.0, %v1500
        %v1502 = vpop.f32.mrf.mxu0
        %v1503 = vadd.f32 0.0, %v1502
        %1504 = vmatmul.bf16.gmra.mxu0 %v1474
        %v1505 = vpop.f32.mrf.mxu0
        %v1506 = vadd.f32 0.0, %v1505
        %v1507 = vpop.f32.mrf.mxu0
        %v1508 = vadd.f32 0.0, %v1507
        %1509 = vmatmul.bf16.gmra.mxu0 %v1477
        %v1510 = vpop.f32.mrf.mxu0
        %v1511 = vadd.f32 0.0, %v1510
        %v1512 = vpop.f32.mrf.mxu0
        %v1513 = vadd.f32 0.0, %v1512
        %1514 = vmatmul.bf16.gmra.mxu0 %v1480
        %v1515 = vpop.f32.mrf.mxu0
        %v1516 = vadd.f32 0.0, %v1515
        %v1517 = vpop.f32.mrf.mxu0
        %v1518 = vadd.f32 0.0, %v1517
        %1519 = vmatmul.bf16.gmra.mxu0 %v1483
        %v1520 = vpop.f32.mrf.mxu0
        %v1521 = vadd.f32 0.0, %v1520
        %v1522 = vpop.f32.mrf.mxu0
        %v1523 = vadd.f32 0.0, %v1522
        %1524 = vmatmul.bf16.gmra.mxu0 %v1486
        %v1525 = vpop.f32.mrf.mxu0
        %v1526 = vadd.f32 0.0, %v1525
        %v1527 = vpop.f32.mrf.mxu0
        %1528 = vdwg.mxu0
        %v1529 = vadd.f32 %v1426, %v1501
        %v1530 = vadd.f32 %v1427, %v1503
        %v1531 = vadd.f32 %v1428, %v1506
        %v1532 = vadd.f32 %v1429, %v1508
        %v1533 = vadd.f32 %v1430, %v1511
        %v1534 = vadd.f32 %v1431, %v1513
        %v1535 = vadd.f32 %v1432, %v1516
        %v1536 = vadd.f32 %v1433, %v1518
        %v1537 = vadd.f32 %v1434, %v1521
        %v1538 = vadd.f32 %v1435, %v1523
        %v1539 = vadd.f32 %v1436, %v1526
        %v1540 = vld [vmem:[#allocation2 + $0x5] sm:$0xff]
        %v1541 = vld [vmem:[#allocation2 + $0xd] sm:$0xff]
        %v1542 = vld [vmem:[#allocation2 + $0x15] sm:$0xff]
        %v1543 = vld [vmem:[#allocation2 + $0x1d] sm:$0xff]
        %v1544 = vld [vmem:[#allocation2 + $0x25] sm:$0xff]
        %v1545 = vld [vmem:[#allocation2 + $0x2d] sm:$0xff]
        %v1546 = vld [vmem:[#allocation2 + $0x35] sm:$0xff]
        %v1547 = vld [vmem:[#allocation2 + $0x3d] sm:$0xff]
        %v1548 = vld [vmem:[#allocation2 + $0x45] sm:$0xff]
        %v1549 = vld [vmem:[#allocation2 + $0x4d] sm:$0xff]
        %v1550 = vld [vmem:[#allocation2 + $0x55] sm:$0x1]
        %v1551 = vpack.c.bf16 %v1541, %v1540
        %v1552 = vpack.c.bf16 %v1543, %v1542
        %v1553 = vpack.c.bf16 %v1545, %v1544
        %v1554 = vpack.c.bf16 %v1547, %v1546
        %v1555 = vpack.c.bf16 %v1549, %v1548
        %v1556 = vpack.c.bf16 %v1550, %v1550
        %s1557 = scalar_lea.vmem [#allocation4], 80
        %v1558 = vld [vmem:[%s1557] sm:$0xf]
        %v1559 = vld [vmem:[%s1557 + $0x4] sm:$0xf]
        %v1560 = vld [vmem:[%s1557 + $0x8] sm:$0xf]
        %v1561 = vld [vmem:[%s1557 + $0xc] sm:$0x3]
        %v1566 = vunpack.c.l.b16 %v1558
        %v1567 = vunpack.c.l.b16 %v1559
        %v1568 = vunpack.c.l.b16 %v1560
        %v1569 = vunpack.c.l.b16 %v1561
        %v1570 = vpack.c.b16 %v1567, %v1566
        %v1571 = vpack.c.b16 %v1569, %v1568
        %v1574 = vsel %vm1034, %v1551, 0
        %v1577 = vsel %vm1034, %v1552, 0
        %v1580 = vsel %vm1034, %v1553, 0
        %v1583 = vsel %vm1034, %v1554, 0
        %v1586 = vsel %vm1034, %v1555, 0
        %v1589 = vsel %vm1034, %v1556, 0
        %v1592 = vsel %vm1119, %v1571, 0
        %1594 = vmatpush.bf16.msra.mxu0 0
        %1595 = vmatpush.bf16.msra.mxu0 0
        %1596 = vmatpush.bf16.msra.mxu0 0
        %1597 = vmatpush.bf16.msra.mxu0 0
        %1598 = vmatpush.bf16.msra.mxu0 0
        %1599 = vmatpush.bf16.msra.mxu0 0
        %1600 = vmatpush.bf16.msra.mxu0 %v1592
        %1601 = vmatpush.bf16.msra.mxu0 %v1570
        %1602 = vmatmul.bf16.gmra.mxu0 %v1574
        %v1603 = vpop.f32.mrf.mxu0
        %v1604 = vadd.f32 0.0, %v1603
        %v1605 = vpop.f32.mrf.mxu0
        %v1606 = vadd.f32 0.0, %v1605
        %1607 = vmatmul.bf16.gmra.mxu0 %v1577
        %v1608 = vpop.f32.mrf.mxu0
        %v1609 = vadd.f32 0.0, %v1608
        %v1610 = vpop.f32.mrf.mxu0
        %v1611 = vadd.f32 0.0, %v1610
        %1612 = vmatmul.bf16.gmra.mxu0 %v1580
        %v1613 = vpop.f32.mrf.mxu0
        %v1614 = vadd.f32 0.0, %v1613
        %v1615 = vpop.f32.mrf.mxu0
        %v1616 = vadd.f32 0.0, %v1615
        %1617 = vmatmul.bf16.gmra.mxu0 %v1583
        %v1618 = vpop.f32.mrf.mxu0
        %v1619 = vadd.f32 0.0, %v1618
        %v1620 = vpop.f32.mrf.mxu0
        %v1621 = vadd.f32 0.0, %v1620
        %1622 = vmatmul.bf16.gmra.mxu0 %v1586
        %v1623 = vpop.f32.mrf.mxu0
        %v1624 = vadd.f32 0.0, %v1623
        %v1625 = vpop.f32.mrf.mxu0
        %v1626 = vadd.f32 0.0, %v1625
        %1627 = vmatmul.bf16.gmra.mxu0 %v1589
        %v1628 = vpop.f32.mrf.mxu0
        %v1629 = vadd.f32 0.0, %v1628
        %v1630 = vpop.f32.mrf.mxu0
        %1631 = vdwg.mxu0
        %v1632 = vadd.f32 %v1529, %v1604
        %v1633 = vadd.f32 %v1530, %v1606
        %v1634 = vadd.f32 %v1531, %v1609
        %v1635 = vadd.f32 %v1532, %v1611
        %v1636 = vadd.f32 %v1533, %v1614
        %v1637 = vadd.f32 %v1534, %v1616
        %v1638 = vadd.f32 %v1535, %v1619
        %v1639 = vadd.f32 %v1536, %v1621
        %v1640 = vadd.f32 %v1537, %v1624
        %v1641 = vadd.f32 %v1538, %v1626
        %v1642 = vadd.f32 %v1539, %v1629
        %v1643 = vld [vmem:[#allocation2 + $0x6] sm:$0xff]
        %v1644 = vld [vmem:[#allocation2 + $0xe] sm:$0xff]
        %v1645 = vld [vmem:[#allocation2 + $0x16] sm:$0xff]
        %v1646 = vld [vmem:[#allocation2 + $0x1e] sm:$0xff]
        %v1647 = vld [vmem:[#allocation2 + $0x26] sm:$0xff]
        %v1648 = vld [vmem:[#allocation2 + $0x2e] sm:$0xff]
        %v1649 = vld [vmem:[#allocation2 + $0x36] sm:$0xff]
        %v1650 = vld [vmem:[#allocation2 + $0x3e] sm:$0xff]
        %v1651 = vld [vmem:[#allocation2 + $0x46] sm:$0xff]
        %v1652 = vld [vmem:[#allocation2 + $0x4e] sm:$0xff]
        %v1653 = vld [vmem:[#allocation2 + $0x56] sm:$0x1]
        %v1654 = vpack.c.bf16 %v1644, %v1643
        %v1655 = vpack.c.bf16 %v1646, %v1645
        %v1656 = vpack.c.bf16 %v1648, %v1647
        %v1657 = vpack.c.bf16 %v1650, %v1649
        %v1658 = vpack.c.bf16 %v1652, %v1651
        %v1659 = vpack.c.bf16 %v1653, %v1653
        %s1660 = scalar_lea.vmem [#allocation4], 96
        %v1661 = vld [vmem:[%s1660] sm:$0xf]
        %v1662 = vld [vmem:[%s1660 + $0x4] sm:$0xf]
        %v1663 = vld [vmem:[%s1660 + $0x8] sm:$0xf]
        %v1664 = vld [vmem:[%s1660 + $0xc] sm:$0x3]
        %v1669 = vunpack.c.l.b16 %v1661
        %v1670 = vunpack.c.l.b16 %v1662
        %v1671 = vunpack.c.l.b16 %v1663
        %v1672 = vunpack.c.l.b16 %v1664
        %v1673 = vpack.c.b16 %v1670, %v1669
        %v1674 = vpack.c.b16 %v1672, %v1671
        %v1677 = vsel %vm1034, %v1654, 0
        %v1680 = vsel %vm1034, %v1655, 0
        %v1683 = vsel %vm1034, %v1656, 0
        %v1686 = vsel %vm1034, %v1657, 0
        %v1689 = vsel %vm1034, %v1658, 0
        %v1692 = vsel %vm1034, %v1659, 0
        %v1695 = vsel %vm1119, %v1674, 0
        %1697 = vmatpush.bf16.msra.mxu0 0
        %1698 = vmatpush.bf16.msra.mxu0 0
        %1699 = vmatpush.bf16.msra.mxu0 0
        %1700 = vmatpush.bf16.msra.mxu0 0
        %1701 = vmatpush.bf16.msra.mxu0 0
        %1702 = vmatpush.bf16.msra.mxu0 0
        %1703 = vmatpush.bf16.msra.mxu0 %v1695
        %1704 = vmatpush.bf16.msra.mxu0 %v1673
        %1705 = vmatmul.bf16.gmra.mxu0 %v1677
        %v1706 = vpop.f32.mrf.mxu0
        %v1707 = vadd.f32 0.0, %v1706
        %v1708 = vpop.f32.mrf.mxu0
        %v1709 = vadd.f32 0.0, %v1708
        %1710 = vmatmul.bf16.gmra.mxu0 %v1680
        %v1711 = vpop.f32.mrf.mxu0
        %v1712 = vadd.f32 0.0, %v1711
        %v1713 = vpop.f32.mrf.mxu0
        %v1714 = vadd.f32 0.0, %v1713
        %1715 = vmatmul.bf16.gmra.mxu0 %v1683
        %v1716 = vpop.f32.mrf.mxu0
        %v1717 = vadd.f32 0.0, %v1716
        %v1718 = vpop.f32.mrf.mxu0
        %v1719 = vadd.f32 0.0, %v1718
        %1720 = vmatmul.bf16.gmra.mxu0 %v1686
        %v1721 = vpop.f32.mrf.mxu0
        %v1722 = vadd.f32 0.0, %v1721
        %v1723 = vpop.f32.mrf.mxu0
        %v1724 = vadd.f32 0.0, %v1723
        %1725 = vmatmul.bf16.gmra.mxu0 %v1689
        %v1726 = vpop.f32.mrf.mxu0
        %v1727 = vadd.f32 0.0, %v1726
        %v1728 = vpop.f32.mrf.mxu0
        %v1729 = vadd.f32 0.0, %v1728
        %1730 = vmatmul.bf16.gmra.mxu0 %v1692
        %v1731 = vpop.f32.mrf.mxu0
        %v1732 = vadd.f32 0.0, %v1731
        %v1733 = vpop.f32.mrf.mxu0
        %1734 = vdwg.mxu0
        %v1735 = vadd.f32 %v1632, %v1707
        %v1736 = vadd.f32 %v1633, %v1709
        %v1737 = vadd.f32 %v1634, %v1712
        %v1738 = vadd.f32 %v1635, %v1714
        %v1739 = vadd.f32 %v1636, %v1717
        %v1740 = vadd.f32 %v1637, %v1719
        %v1741 = vadd.f32 %v1638, %v1722
        %v1742 = vadd.f32 %v1639, %v1724
        %v1743 = vadd.f32 %v1640, %v1727
        %v1744 = vadd.f32 %v1641, %v1729
        %v1745 = vadd.f32 %v1642, %v1732
        %v1746 = vld [vmem:[#allocation2 + $0x7] sm:$0xff]
        %v1747 = vld [vmem:[#allocation2 + $0xf] sm:$0xff]
        %v1748 = vld [vmem:[#allocation2 + $0x17] sm:$0xff]
        %v1749 = vld [vmem:[#allocation2 + $0x1f] sm:$0xff]
        %v1750 = vld [vmem:[#allocation2 + $0x27] sm:$0xff]
        %v1751 = vld [vmem:[#allocation2 + $0x2f] sm:$0xff]
        %v1752 = vld [vmem:[#allocation2 + $0x37] sm:$0xff]
        %v1753 = vld [vmem:[#allocation2 + $0x3f] sm:$0xff]
        %v1754 = vld [vmem:[#allocation2 + $0x47] sm:$0xff]
        %v1755 = vld [vmem:[#allocation2 + $0x4f] sm:$0xff]
        %v1756 = vld [vmem:[#allocation2 + $0x57] sm:$0x1]
        %v1757 = vpack.c.bf16 %v1747, %v1746
        %v1758 = vpack.c.bf16 %v1749, %v1748
        %v1759 = vpack.c.bf16 %v1751, %v1750
        %v1760 = vpack.c.bf16 %v1753, %v1752
        %v1761 = vpack.c.bf16 %v1755, %v1754
        %v1762 = vpack.c.bf16 %v1756, %v1756
        %s1763 = scalar_lea.vmem [#allocation4], 112
        %v1764 = vld [vmem:[%s1763] sm:$0xf]
        %v1765 = vld [vmem:[%s1763 + $0x4] sm:$0xf]
        %v1766 = vld [vmem:[%s1763 + $0x8] sm:$0xf]
        %v1767 = vld [vmem:[%s1763 + $0xc] sm:$0x3]
        %v1772 = vunpack.c.l.b16 %v1764
        %v1773 = vunpack.c.l.b16 %v1765
        %v1774 = vunpack.c.l.b16 %v1766
        %v1775 = vunpack.c.l.b16 %v1767
        %v1776 = vpack.c.b16 %v1773, %v1772
        %v1777 = vpack.c.b16 %v1775, %v1774
        %v1780 = vsel %vm1034, %v1757, 0
        %v1783 = vsel %vm1034, %v1758, 0
        %v1786 = vsel %vm1034, %v1759, 0
        %v1789 = vsel %vm1034, %v1760, 0
        %v1792 = vsel %vm1034, %v1761, 0
        %v1795 = vsel %vm1034, %v1762, 0
        %v1798 = vsel %vm1119, %v1777, 0
        %1800 = vmatpush.bf16.msra.mxu0 0
        %1801 = vmatpush.bf16.msra.mxu0 0
        %1802 = vmatpush.bf16.msra.mxu0 0
        %1803 = vmatpush.bf16.msra.mxu0 0
        %1804 = vmatpush.bf16.msra.mxu0 0
        %1805 = vmatpush.bf16.msra.mxu0 0
        %1806 = vmatpush.bf16.msra.mxu0 %v1798
        %1807 = vmatpush.bf16.msra.mxu0 %v1776
        %1808 = vmatmul.bf16.gmra.mxu0 %v1780
        %v1809 = vpop.f32.mrf.mxu0
        %v1810 = vadd.f32 0.0, %v1809
        %v1811 = vpop.f32.mrf.mxu0
        %v1812 = vadd.f32 0.0, %v1811
        %1813 = vmatmul.bf16.gmra.mxu0 %v1783
        %v1814 = vpop.f32.mrf.mxu0
        %v1815 = vadd.f32 0.0, %v1814
        %v1816 = vpop.f32.mrf.mxu0
        %v1817 = vadd.f32 0.0, %v1816
        %1818 = vmatmul.bf16.gmra.mxu0 %v1786
        %v1819 = vpop.f32.mrf.mxu0
        %v1820 = vadd.f32 0.0, %v1819
        %v1821 = vpop.f32.mrf.mxu0
        %v1822 = vadd.f32 0.0, %v1821
        %1823 = vmatmul.bf16.gmra.mxu0 %v1789
        %v1824 = vpop.f32.mrf.mxu0
        %v1825 = vadd.f32 0.0, %v1824
        %v1826 = vpop.f32.mrf.mxu0
        %v1827 = vadd.f32 0.0, %v1826
        %1828 = vmatmul.bf16.gmra.mxu0 %v1792
        %v1829 = vpop.f32.mrf.mxu0
        %v1830 = vadd.f32 0.0, %v1829
        %v1831 = vpop.f32.mrf.mxu0
        %v1832 = vadd.f32 0.0, %v1831
        %1833 = vmatmul.bf16.gmra.mxu0 %v1795
        %v1834 = vpop.f32.mrf.mxu0
        %v1835 = vadd.f32 0.0, %v1834
        %v1836 = vpop.f32.mrf.mxu0
        %1837 = vdwg.mxu0
        %v1838 = vadd.f32 %v1735, %v1810
        %v1839 = vadd.f32 %v1736, %v1812
        %v1840 = vadd.f32 %v1737, %v1815
        %v1841 = vadd.f32 %v1738, %v1817
        %v1842 = vadd.f32 %v1739, %v1820
        %v1843 = vadd.f32 %v1740, %v1822
        %v1844 = vadd.f32 %v1741, %v1825
        %v1845 = vadd.f32 %v1742, %v1827
        %v1846 = vadd.f32 %v1743, %v1830
        %v1847 = vadd.f32 %v1744, %v1832
        %v1848 = vadd.f32 %v1745, %v1835
        %v1849 = vld [vmem:[#allocation2 + $0x8] sm:$0xff]
        %v1850 = vld [vmem:[#allocation2 + $0x10] sm:$0xff]
        %v1851 = vld [vmem:[#allocation2 + $0x18] sm:$0xff]
        %v1852 = vld [vmem:[#allocation2 + $0x20] sm:$0xff]
        %v1853 = vld [vmem:[#allocation2 + $0x28] sm:$0xff]
        %v1854 = vld [vmem:[#allocation2 + $0x30] sm:$0xff]
        %v1855 = vld [vmem:[#allocation2 + $0x38] sm:$0xff]
        %v1856 = vld [vmem:[#allocation2 + $0x40] sm:$0xff]
        %v1857 = vld [vmem:[#allocation2 + $0x48] sm:$0xff]
        %v1858 = vld [vmem:[#allocation2 + $0x50] sm:$0xff]
        %v1859 = vld [vmem:[#allocation2 + $0x58] sm:$0x1]
        %v1860 = vpack.c.bf16 %v1850, %v1849
        %v1861 = vpack.c.bf16 %v1852, %v1851
        %v1862 = vpack.c.bf16 %v1854, %v1853
        %v1863 = vpack.c.bf16 %v1856, %v1855
        %v1864 = vpack.c.bf16 %v1858, %v1857
        %v1865 = vpack.c.bf16 %v1859, %v1859
        %s1866 = scalar_lea.vmem [#allocation4], 128
        %v1867 = vld [vmem:[%s1866] sm:$0xf]
        %v1868 = vld [vmem:[%s1866 + $0x4] sm:$0xf]
        %v1869 = vld [vmem:[%s1866 + $0x8] sm:$0xf]
        %v1870 = vld [vmem:[%s1866 + $0xc] sm:$0x3]
        %v1875 = vunpack.c.l.b16 %v1867
        %v1876 = vunpack.c.l.b16 %v1868
        %v1877 = vunpack.c.l.b16 %v1869
        %v1878 = vunpack.c.l.b16 %v1870
        %v1879 = vpack.c.b16 %v1876, %v1875
        %v1880 = vpack.c.b16 %v1878, %v1877
        %v1883 = vsel %vm1034, %v1860, 0
        %v1886 = vsel %vm1034, %v1861, 0
        %v1889 = vsel %vm1034, %v1862, 0
        %v1892 = vsel %vm1034, %v1863, 0
        %v1895 = vsel %vm1034, %v1864, 0
        %v1898 = vsel %vm1034, %v1865, 0
        %v1901 = vsel %vm1119, %v1880, 0
        %1903 = vmatpush.bf16.msra.mxu0 0
        %1904 = vmatpush.bf16.msra.mxu0 0
        %1905 = vmatpush.bf16.msra.mxu0 0
        %1906 = vmatpush.bf16.msra.mxu0 0
        %1907 = vmatpush.bf16.msra.mxu0 0
        %1908 = vmatpush.bf16.msra.mxu0 0
        %1909 = vmatpush.bf16.msra.mxu0 %v1901
        %1910 = vmatpush.bf16.msra.mxu0 %v1879
        %1911 = vmatmul.bf16.gmra.mxu0 %v1883
        %v1912 = vpop.f32.mrf.mxu0
        %v1913 = vadd.f32 0.0, %v1912
        %v1914 = vpop.f32.mrf.mxu0
        %v1915 = vadd.f32 0.0, %v1914
        %1916 = vmatmul.bf16.gmra.mxu0 %v1886
        %v1917 = vpop.f32.mrf.mxu0
        %v1918 = vadd.f32 0.0, %v1917
        %v1919 = vpop.f32.mrf.mxu0
        %v1920 = vadd.f32 0.0, %v1919
        %1921 = vmatmul.bf16.gmra.mxu0 %v1889
        %v1922 = vpop.f32.mrf.mxu0
        %v1923 = vadd.f32 0.0, %v1922
        %v1924 = vpop.f32.mrf.mxu0
        %v1925 = vadd.f32 0.0, %v1924
        %1926 = vmatmul.bf16.gmra.mxu0 %v1892
        %v1927 = vpop.f32.mrf.mxu0
        %v1928 = vadd.f32 0.0, %v1927
        %v1929 = vpop.f32.mrf.mxu0
        %v1930 = vadd.f32 0.0, %v1929
        %1931 = vmatmul.bf16.gmra.mxu0 %v1895
        %v1932 = vpop.f32.mrf.mxu0
        %v1933 = vadd.f32 0.0, %v1932
        %v1934 = vpop.f32.mrf.mxu0
        %v1935 = vadd.f32 0.0, %v1934
        %1936 = vmatmul.bf16.gmra.mxu0 %v1898
        %v1937 = vpop.f32.mrf.mxu0
        %v1938 = vadd.f32 0.0, %v1937
        %v1939 = vpop.f32.mrf.mxu0
        %1940 = vdwg.mxu0
        %v1941 = vadd.f32 %v1838, %v1913
        %v1942 = vadd.f32 %v1839, %v1915
        %v1943 = vadd.f32 %v1840, %v1918
        %v1944 = vadd.f32 %v1841, %v1920
        %v1945 = vadd.f32 %v1842, %v1923
        %v1946 = vadd.f32 %v1843, %v1925
        %v1947 = vadd.f32 %v1844, %v1928
        %v1948 = vadd.f32 %v1845, %v1930
        %v1949 = vadd.f32 %v1846, %v1933
        %v1950 = vadd.f32 %v1847, %v1935
        %v1951 = vadd.f32 %v1848, %v1938
        %v1952 = vld [vmem:[#allocation2 + $0x9] sm:$0xff]
        %v1953 = vld [vmem:[#allocation2 + $0x11] sm:$0xff]
        %v1954 = vld [vmem:[#allocation2 + $0x19] sm:$0xff]
        %v1955 = vld [vmem:[#allocation2 + $0x21] sm:$0xff]
        %v1956 = vld [vmem:[#allocation2 + $0x29] sm:$0xff]
        %v1957 = vld [vmem:[#allocation2 + $0x31] sm:$0xff]
        %v1958 = vld [vmem:[#allocation2 + $0x39] sm:$0xff]
        %v1959 = vld [vmem:[#allocation2 + $0x41] sm:$0xff]
        %v1960 = vld [vmem:[#allocation2 + $0x49] sm:$0xff]
        %v1961 = vld [vmem:[#allocation2 + $0x51] sm:$0xff]
        %v1962 = vld [vmem:[#allocation2 + $0x59] sm:$0x1]
        %v1963 = vpack.c.bf16 %v1953, %v1952
        %v1964 = vpack.c.bf16 %v1955, %v1954
        %v1965 = vpack.c.bf16 %v1957, %v1956
        %v1966 = vpack.c.bf16 %v1959, %v1958
        %v1967 = vpack.c.bf16 %v1961, %v1960
        %v1968 = vpack.c.bf16 %v1962, %v1962
        %s1969 = scalar_lea.vmem [#allocation4], 144
        %v1970 = vld [vmem:[%s1969] sm:$0xf]
        %v1971 = vld [vmem:[%s1969 + $0x4] sm:$0xf]
        %v1972 = vld [vmem:[%s1969 + $0x8] sm:$0xf]
        %v1973 = vld [vmem:[%s1969 + $0xc] sm:$0x3]
        %v1978 = vunpack.c.l.b16 %v1970
        %v1979 = vunpack.c.l.b16 %v1971
        %v1980 = vunpack.c.l.b16 %v1972
        %v1981 = vunpack.c.l.b16 %v1973
        %v1982 = vpack.c.b16 %v1979, %v1978
        %v1983 = vpack.c.b16 %v1981, %v1980
        %v1986 = vsel %vm1034, %v1963, 0
        %v1989 = vsel %vm1034, %v1964, 0
        %v1992 = vsel %vm1034, %v1965, 0
        %v1995 = vsel %vm1034, %v1966, 0
        %v1998 = vsel %vm1034, %v1967, 0
        %v2001 = vsel %vm1034, %v1968, 0
        %v2004 = vsel %vm1119, %v1983, 0
        %2006 = vmatpush.bf16.msra.mxu0 0
        %2007 = vmatpush.bf16.msra.mxu0 0
        %2008 = vmatpush.bf16.msra.mxu0 0
        %2009 = vmatpush.bf16.msra.mxu0 0
        %2010 = vmatpush.bf16.msra.mxu0 0
        %2011 = vmatpush.bf16.msra.mxu0 0
        %2012 = vmatpush.bf16.msra.mxu0 %v2004
        %2013 = vmatpush.bf16.msra.mxu0 %v1982
        %2014 = vmatmul.bf16.gmra.mxu0 %v1986
        %v2015 = vpop.f32.mrf.mxu0
        %v2016 = vadd.f32 0.0, %v2015
        %v2017 = vpop.f32.mrf.mxu0
        %v2018 = vadd.f32 0.0, %v2017
        %2019 = vmatmul.bf16.gmra.mxu0 %v1989
        %v2020 = vpop.f32.mrf.mxu0
        %v2021 = vadd.f32 0.0, %v2020
        %v2022 = vpop.f32.mrf.mxu0
        %v2023 = vadd.f32 0.0, %v2022
        %2024 = vmatmul.bf16.gmra.mxu0 %v1992
        %v2025 = vpop.f32.mrf.mxu0
        %v2026 = vadd.f32 0.0, %v2025
        %v2027 = vpop.f32.mrf.mxu0
        %v2028 = vadd.f32 0.0, %v2027
        %2029 = vmatmul.bf16.gmra.mxu0 %v1995
        %v2030 = vpop.f32.mrf.mxu0
        %v2031 = vadd.f32 0.0, %v2030
        %v2032 = vpop.f32.mrf.mxu0
        %v2033 = vadd.f32 0.0, %v2032
        %2034 = vmatmul.bf16.gmra.mxu0 %v1998
        %v2035 = vpop.f32.mrf.mxu0
        %v2036 = vadd.f32 0.0, %v2035
        %v2037 = vpop.f32.mrf.mxu0
        %v2038 = vadd.f32 0.0, %v2037
        %2039 = vmatmul.bf16.gmra.mxu0 %v2001
        %v2040 = vpop.f32.mrf.mxu0
        %v2041 = vadd.f32 0.0, %v2040
        %v2042 = vpop.f32.mrf.mxu0
        %2043 = vdwg.mxu0
        %v2044 = vadd.f32 %v1941, %v2016
        %v2045 = vadd.f32 %v1942, %v2018
        %v2046 = vadd.f32 %v1943, %v2021
        %v2047 = vadd.f32 %v1944, %v2023
        %v2048 = vadd.f32 %v1945, %v2026
        %v2049 = vadd.f32 %v1946, %v2028
        %v2050 = vadd.f32 %v1947, %v2031
        %v2051 = vadd.f32 %v1948, %v2033
        %v2052 = vadd.f32 %v1949, %v2036
        %v2053 = vadd.f32 %v1950, %v2038
        %v2054 = vadd.f32 %v1951, %v2041
        %v2055 = vld [vmem:[#allocation2 + $0xa] sm:$0xff]
        %v2056 = vld [vmem:[#allocation2 + $0x12] sm:$0xff]
        %v2057 = vld [vmem:[#allocation2 + $0x1a] sm:$0xff]
        %v2058 = vld [vmem:[#allocation2 + $0x22] sm:$0xff]
        %v2059 = vld [vmem:[#allocation2 + $0x2a] sm:$0xff]
        %v2060 = vld [vmem:[#allocation2 + $0x32] sm:$0xff]
        %v2061 = vld [vmem:[#allocation2 + $0x3a] sm:$0xff]
        %v2062 = vld [vmem:[#allocation2 + $0x42] sm:$0xff]
        %v2063 = vld [vmem:[#allocation2 + $0x4a] sm:$0xff]
        %v2064 = vld [vmem:[#allocation2 + $0x52] sm:$0xff]
        %v2065 = vld [vmem:[#allocation2 + $0x5a] sm:$0x1]
        %v2066 = vpack.c.bf16 %v2056, %v2055
        %v2067 = vpack.c.bf16 %v2058, %v2057
        %v2068 = vpack.c.bf16 %v2060, %v2059
        %v2069 = vpack.c.bf16 %v2062, %v2061
        %v2070 = vpack.c.bf16 %v2064, %v2063
        %v2071 = vpack.c.bf16 %v2065, %v2065
        %s2072 = scalar_lea.vmem [#allocation4], 160
        %v2073 = vld [vmem:[%s2072] sm:$0xf]
        %v2074 = vld [vmem:[%s2072 + $0x4] sm:$0xf]
        %v2075 = vld [vmem:[%s2072 + $0x8] sm:$0xf]
        %v2076 = vld [vmem:[%s2072 + $0xc] sm:$0x3]
        %v2081 = vunpack.c.l.b16 %v2073
        %v2082 = vunpack.c.l.b16 %v2074
        %v2083 = vunpack.c.l.b16 %v2075
        %v2084 = vunpack.c.l.b16 %v2076
        %v2085 = vpack.c.b16 %v2082, %v2081
        %v2086 = vpack.c.b16 %v2084, %v2083
        %v2089 = vsel %vm1034, %v2066, 0
        %v2092 = vsel %vm1034, %v2067, 0
        %v2095 = vsel %vm1034, %v2068, 0
        %v2098 = vsel %vm1034, %v2069, 0
        %v2101 = vsel %vm1034, %v2070, 0
        %v2104 = vsel %vm1034, %v2071, 0
        %v2107 = vsel %vm1119, %v2086, 0
        %2109 = vmatpush.bf16.msra.mxu0 0
        %2110 = vmatpush.bf16.msra.mxu0 0
        %2111 = vmatpush.bf16.msra.mxu0 0
        %2112 = vmatpush.bf16.msra.mxu0 0
        %2113 = vmatpush.bf16.msra.mxu0 0
        %2114 = vmatpush.bf16.msra.mxu0 0
        %2115 = vmatpush.bf16.msra.mxu0 %v2107
        %2116 = vmatpush.bf16.msra.mxu0 %v2085
        %2117 = vmatmul.bf16.gmra.mxu0 %v2089
        %v2118 = vpop.f32.mrf.mxu0
        %v2119 = vadd.f32 0.0, %v2118
        %v2120 = vpop.f32.mrf.mxu0
        %v2121 = vadd.f32 0.0, %v2120
        %2122 = vmatmul.bf16.gmra.mxu0 %v2092
        %v2123 = vpop.f32.mrf.mxu0
        %v2124 = vadd.f32 0.0, %v2123
        %v2125 = vpop.f32.mrf.mxu0
        %v2126 = vadd.f32 0.0, %v2125
        %2127 = vmatmul.bf16.gmra.mxu0 %v2095
        %v2128 = vpop.f32.mrf.mxu0
        %v2129 = vadd.f32 0.0, %v2128
        %v2130 = vpop.f32.mrf.mxu0
        %v2131 = vadd.f32 0.0, %v2130
        %2132 = vmatmul.bf16.gmra.mxu0 %v2098
        %v2133 = vpop.f32.mrf.mxu0
        %v2134 = vadd.f32 0.0, %v2133
        %v2135 = vpop.f32.mrf.mxu0
        %v2136 = vadd.f32 0.0, %v2135
        %2137 = vmatmul.bf16.gmra.mxu0 %v2101
        %v2138 = vpop.f32.mrf.mxu0
        %v2139 = vadd.f32 0.0, %v2138
        %v2140 = vpop.f32.mrf.mxu0
        %v2141 = vadd.f32 0.0, %v2140
        %2142 = vmatmul.bf16.gmra.mxu0 %v2104
        %v2143 = vpop.f32.mrf.mxu0
        %v2144 = vadd.f32 0.0, %v2143
        %v2145 = vpop.f32.mrf.mxu0
        %2146 = vdwg.mxu0
        %v2147 = vadd.f32 %v2044, %v2119
        %v2148 = vadd.f32 %v2045, %v2121
        %v2149 = vadd.f32 %v2046, %v2124
        %v2150 = vadd.f32 %v2047, %v2126
        %v2151 = vadd.f32 %v2048, %v2129
        %v2152 = vadd.f32 %v2049, %v2131
        %v2153 = vadd.f32 %v2050, %v2134
        %v2154 = vadd.f32 %v2051, %v2136
        %v2155 = vadd.f32 %v2052, %v2139
        %v2156 = vadd.f32 %v2053, %v2141
        %v2157 = vadd.f32 %v2054, %v2144
        %v2158 = vld [vmem:[%s14] sm:$0x1]
        %v2159 = vld [vmem:[%s14 + $0x1] sm:$0x1]
        %v2160 = vperm.slane %v2158, 0
        %v2161 = vmul.f32 %v2147, %v2160
        %v2162 = vmul.f32 %v2148, %v2160
        %v2163 = vmul.f32 %v2149, %v2160
        %v2164 = vmul.f32 %v2150, %v2160
        %v2165 = vmul.f32 %v2151, %v2160
        %v2166 = vmul.f32 %v2152, %v2160
        %v2167 = vmul.f32 %v2153, %v2160
        %v2168 = vmul.f32 %v2154, %v2160
        %v2169 = vmul.f32 %v2155, %v2160
        %v2170 = vmul.f32 %v2156, %v2160
        %v2171 = vmul.f32 %v2157, %v2160
        %v2172 = vperm.slane %v2159, 0
        %v2173 = vadd.f32 %v2161, %v2172
        %v2174 = vadd.f32 %v2162, %v2172
        %v2175 = vadd.f32 %v2163, %v2172
        %v2176 = vadd.f32 %v2164, %v2172
        %v2177 = vadd.f32 %v2165, %v2172
        %v2178 = vadd.f32 %v2166, %v2172
        %v2179 = vadd.f32 %v2167, %v2172
        %v2180 = vadd.f32 %v2168, %v2172
        %v2181 = vadd.f32 %v2169, %v2172
        %v2182 = vadd.f32 %v2170, %v2172
        %v2183 = vadd.f32 %v2171, %v2172
        %v2184 = vmax.f32 %v2173, 0.0
        %v2185 = vmax.f32 %v2174, 0.0
        %v2186 = vmax.f32 %v2175, 0.0
        %v2187 = vmax.f32 %v2176, 0.0
        %v2188 = vmax.f32 %v2177, 0.0
        %v2189 = vmax.f32 %v2178, 0.0
        %v2190 = vmax.f32 %v2179, 0.0
        %v2191 = vmax.f32 %v2180, 0.0
        %v2192 = vmax.f32 %v2181, 0.0
        %v2193 = vmax.f32 %v2182, 0.0
        %v2194 = vmax.f32 %v2183, 0.0
        %2195 = vst [vmem:[#allocation2] sm:$0x7] 0.0
        %2196 = vst [vmem:[#allocation2 + $0x54] sm:$0x7] 0.0
        %vm2197 = vcmask 523264
        %2198 = vst.msk [vmem:[#allocation2 + $0x3] sm:$0xff] %vm2197, %v2184
        %2199 = vst.msk [vmem:[#allocation2 + $0xb] sm:$0xff] %vm2197, %v2185
        %2200 = vst.msk [vmem:[#allocation2 + $0x13] sm:$0xff] %vm2197, %v2186
        %2201 = vst.msk [vmem:[#allocation2 + $0x1b] sm:$0xff] %vm2197, %v2187
        %2202 = vst.msk [vmem:[#allocation2 + $0x23] sm:$0xff] %vm2197, %v2188
        %2203 = vst.msk [vmem:[#allocation2 + $0x2b] sm:$0xff] %vm2197, %v2189
        %2204 = vst.msk [vmem:[#allocation2 + $0x33] sm:$0xff] %vm2197, %v2190
        %2205 = vst.msk [vmem:[#allocation2 + $0x3b] sm:$0xff] %vm2197, %v2191
        %2206 = vst.msk [vmem:[#allocation2 + $0x43] sm:$0xff] %vm2197, %v2192
        %2207 = vst.msk [vmem:[#allocation2 + $0x4b] sm:$0xff] %vm2197, %v2193
        %vm2208 = vcmask 516096
        %2209 = vst.msk [vmem:[#allocation2 + $0x53] sm:$0x1] %vm2208, %v2194
        %v2210 = vld [vmem:[#allocation2] sm:$0xff]
        %v2211 = vld [vmem:[#allocation2 + $0x8] sm:$0xff]
        %v2212 = vld [vmem:[#allocation2 + $0x10] sm:$0xff]
        %v2213 = vld [vmem:[#allocation2 + $0x18] sm:$0xff]
        %v2214 = vld [vmem:[#allocation2 + $0x20] sm:$0xff]
        %v2215 = vld [vmem:[#allocation2 + $0x28] sm:$0xff]
        %v2216 = vld [vmem:[#allocation2 + $0x30] sm:$0xff]
        %v2217 = vld [vmem:[#allocation2 + $0x38] sm:$0xff]
        %v2218 = vld [vmem:[#allocation2 + $0x40] sm:$0xff]
        %v2219 = vld [vmem:[#allocation2 + $0x48] sm:$0xff]
        %v2220 = vld [vmem:[#allocation2 + $0x50] sm:$0x1]
        %v2221 = vpack.c.bf16 %v2211, %v2210
        %v2222 = vpack.c.bf16 %v2213, %v2212
        %v2223 = vpack.c.bf16 %v2215, %v2214
        %v2224 = vpack.c.bf16 %v2217, %v2216
        %v2225 = vpack.c.bf16 %v2219, %v2218
        %v2226 = vpack.c.bf16 %v2220, %v2220
        %v2227 = vld [vmem:[#allocation7] sm:$0xf]
        %v2228 = vld [vmem:[#allocation7 + $0x4] sm:$0xf]
        %v2229 = vld [vmem:[#allocation7 + $0x8] sm:$0xf]
        %v2230 = vld [vmem:[#allocation7 + $0xc] sm:$0xf]
        %v2231 = vld [vmem:[#allocation7 + $0x10] sm:$0xf]
        %v2232 = vld [vmem:[#allocation7 + $0x14] sm:$0xf]
        %v2233 = vld [vmem:[#allocation7 + $0x18] sm:$0xf]
        %v2234 = vld [vmem:[#allocation7 + $0x1c] sm:$0xf]
        %v2235 = vld [vmem:[#allocation2 + $0x1] sm:$0xff]
        %v2236 = vld [vmem:[#allocation2 + $0x9] sm:$0xff]
        %v2237 = vld [vmem:[#allocation2 + $0x11] sm:$0xff]
        %v2238 = vld [vmem:[#allocation2 + $0x19] sm:$0xff]
        %v2239 = vld [vmem:[#allocation2 + $0x21] sm:$0xff]
        %v2240 = vld [vmem:[#allocation2 + $0x29] sm:$0xff]
        %v2241 = vld [vmem:[#allocation2 + $0x31] sm:$0xff]
        %v2242 = vld [vmem:[#allocation2 + $0x39] sm:$0xff]
        %v2243 = vld [vmem:[#allocation2 + $0x41] sm:$0xff]
        %v2244 = vld [vmem:[#allocation2 + $0x49] sm:$0xff]
        %v2245 = vld [vmem:[#allocation2 + $0x51] sm:$0x1]
        %v2246 = vpack.c.bf16 %v2236, %v2235
        %v2247 = vpack.c.bf16 %v2238, %v2237
        %v2248 = vpack.c.bf16 %v2240, %v2239
        %v2249 = vpack.c.bf16 %v2242, %v2241
        %v2250 = vpack.c.bf16 %v2244, %v2243
        %v2251 = vpack.c.bf16 %v2245, %v2245
        %s2252 = scalar_lea.vmem [#allocation7], 32
        %v2253 = vld [vmem:[%s2252] sm:$0xf]
        %v2254 = vld [vmem:[%s2252 + $0x4] sm:$0xf]
        %v2255 = vld [vmem:[%s2252 + $0x8] sm:$0xf]
        %v2256 = vld [vmem:[%s2252 + $0xc] sm:$0xf]
        %v2257 = vld [vmem:[%s2252 + $0x10] sm:$0xf]
        %v2258 = vld [vmem:[%s2252 + $0x14] sm:$0xf]
        %v2259 = vld [vmem:[%s2252 + $0x18] sm:$0xf]
        %v2260 = vld [vmem:[%s2252 + $0x1c] sm:$0xf]
        %v2269 = vunpack.c.l.b16 %v2253
        %v2270 = vunpack.c.l.b16 %v2254
        %v2271 = vunpack.c.l.b16 %v2255
        %v2272 = vunpack.c.l.b16 %v2256
        %v2273 = vunpack.c.l.b16 %v2257
        %v2274 = vunpack.c.l.b16 %v2258
        %v2275 = vunpack.c.l.b16 %v2259
        %v2276 = vunpack.c.l.b16 %v2260
        %v2277 = vpack.c.b16 %v2270, %v2269
        %v2278 = vpack.c.b16 %v2272, %v2271
        %v2279 = vpack.c.b16 %v2274, %v2273
        %v2280 = vpack.c.b16 %v2276, %v2275
        %v2286 = vsel %vm2197, %v2246, 0
        %v2289 = vsel %vm2197, %v2247, 0
        %v2292 = vsel %vm2197, %v2248, 0
        %v2295 = vsel %vm2197, %v2249, 0
        %v2298 = vsel %vm2197, %v2250, 0
        %v2301 = vsel %vm2197, %v2251, 0
        %2303 = vmatpush.bf16.msra.mxu0 0
        %2304 = vmatpush.bf16.msra.mxu0 0
        %2305 = vmatpush.bf16.msra.mxu0 0
        %2306 = vmatpush.bf16.msra.mxu0 0
        %2307 = vmatpush.bf16.msra.mxu0 %v2280
        %2308 = vmatpush.bf16.msra.mxu0 %v2279
        %2309 = vmatpush.bf16.msra.mxu0 %v2278
        %2310 = vmatpush.bf16.msra.mxu0 %v2277
        %2311 = vmatmul.bf16.gmra.mxu0 %v2286
        %v2312 = vpop.f32.mrf.mxu0
        %v2313 = vadd.f32 0.0, %v2312
        %v2314 = vpop.f32.mrf.mxu0
        %v2315 = vadd.f32 0.0, %v2314
        %2316 = vmatmul.bf16.gmra.mxu0 %v2289
        %v2317 = vpop.f32.mrf.mxu0
        %v2318 = vadd.f32 0.0, %v2317
        %v2319 = vpop.f32.mrf.mxu0
        %v2320 = vadd.f32 0.0, %v2319
        %2321 = vmatmul.bf16.gmra.mxu0 %v2292
        %v2322 = vpop.f32.mrf.mxu0
        %v2323 = vadd.f32 0.0, %v2322
        %v2324 = vpop.f32.mrf.mxu0
        %v2325 = vadd.f32 0.0, %v2324
        %2326 = vmatmul.bf16.gmra.mxu0 %v2295
        %v2327 = vpop.f32.mrf.mxu0
        %v2328 = vadd.f32 0.0, %v2327
        %v2329 = vpop.f32.mrf.mxu0
        %v2330 = vadd.f32 0.0, %v2329
        %2331 = vmatmul.bf16.gmra.mxu0 %v2298
        %v2332 = vpop.f32.mrf.mxu0
        %v2333 = vadd.f32 0.0, %v2332
        %v2334 = vpop.f32.mrf.mxu0
        %v2335 = vadd.f32 0.0, %v2334
        %2336 = vmatmul.bf16.gmra.mxu0 %v2301
        %v2337 = vpop.f32.mrf.mxu0
        %v2338 = vadd.f32 0.0, %v2337
        %v2339 = vpop.f32.mrf.mxu0
        %2340 = vdwg.mxu0
        %v2349 = vunpack.c.l.b16 %v2227
        %v2350 = vunpack.c.l.b16 %v2228
        %v2351 = vunpack.c.l.b16 %v2229
        %v2352 = vunpack.c.l.b16 %v2230
        %v2353 = vunpack.c.l.b16 %v2231
        %v2354 = vunpack.c.l.b16 %v2232
        %v2355 = vunpack.c.l.b16 %v2233
        %v2356 = vunpack.c.l.b16 %v2234
        %v2357 = vpack.c.b16 %v2350, %v2349
        %v2358 = vpack.c.b16 %v2352, %v2351
        %v2359 = vpack.c.b16 %v2354, %v2353
        %v2360 = vpack.c.b16 %v2356, %v2355
        %v2366 = vsel %vm2197, %v2221, 0
        %v2369 = vsel %vm2197, %v2222, 0
        %v2372 = vsel %vm2197, %v2223, 0
        %v2375 = vsel %vm2197, %v2224, 0
        %v2378 = vsel %vm2197, %v2225, 0
        %v2381 = vsel %vm2197, %v2226, 0
        %2383 = vmatpush.bf16.msra.mxu0 0
        %2384 = vmatpush.bf16.msra.mxu0 0
        %2385 = vmatpush.bf16.msra.mxu0 0
        %2386 = vmatpush.bf16.msra.mxu0 0
        %2387 = vmatpush.bf16.msra.mxu0 %v2360
        %2388 = vmatpush.bf16.msra.mxu0 %v2359
        %2389 = vmatpush.bf16.msra.mxu0 %v2358
        %2390 = vmatpush.bf16.msra.mxu0 %v2357
        %2391 = vmatmul.bf16.gmra.mxu0 %v2366
        %v2392 = vpop.f32.mrf.mxu0
        %v2393 = vadd.f32 %v2313, %v2392
        %v2394 = vpop.f32.mrf.mxu0
        %v2395 = vadd.f32 %v2315, %v2394
        %2396 = vmatmul.bf16.gmra.mxu0 %v2369
        %v2397 = vpop.f32.mrf.mxu0
        %v2398 = vadd.f32 %v2318, %v2397
        %v2399 = vpop.f32.mrf.mxu0
        %v2400 = vadd.f32 %v2320, %v2399
        %2401 = vmatmul.bf16.gmra.mxu0 %v2372
        %v2402 = vpop.f32.mrf.mxu0
        %v2403 = vadd.f32 %v2323, %v2402
        %v2404 = vpop.f32.mrf.mxu0
        %v2405 = vadd.f32 %v2325, %v2404
        %2406 = vmatmul.bf16.gmra.mxu0 %v2375
        %v2407 = vpop.f32.mrf.mxu0
        %v2408 = vadd.f32 %v2328, %v2407
        %v2409 = vpop.f32.mrf.mxu0
        %v2410 = vadd.f32 %v2330, %v2409
        %2411 = vmatmul.bf16.gmra.mxu0 %v2378
        %v2412 = vpop.f32.mrf.mxu0
        %v2413 = vadd.f32 %v2333, %v2412
        %v2414 = vpop.f32.mrf.mxu0
        %v2415 = vadd.f32 %v2335, %v2414
        %2416 = vmatmul.bf16.gmra.mxu0 %v2381
        %v2417 = vpop.f32.mrf.mxu0
        %v2418 = vadd.f32 %v2338, %v2417
        %v2419 = vpop.f32.mrf.mxu0
        %2420 = vdwg.mxu0
        %v2421 = vld [vmem:[#allocation2 + $0x2] sm:$0xff]
        %v2422 = vld [vmem:[#allocation2 + $0xa] sm:$0xff]
        %v2423 = vld [vmem:[#allocation2 + $0x12] sm:$0xff]
        %v2424 = vld [vmem:[#allocation2 + $0x1a] sm:$0xff]
        %v2425 = vld [vmem:[#allocation2 + $0x22] sm:$0xff]
        %v2426 = vld [vmem:[#allocation2 + $0x2a] sm:$0xff]
        %v2427 = vld [vmem:[#allocation2 + $0x32] sm:$0xff]
        %v2428 = vld [vmem:[#allocation2 + $0x3a] sm:$0xff]
        %v2429 = vld [vmem:[#allocation2 + $0x42] sm:$0xff]
        %v2430 = vld [vmem:[#allocation2 + $0x4a] sm:$0xff]
        %v2431 = vld [vmem:[#allocation2 + $0x52] sm:$0x1]
        %v2432 = vpack.c.bf16 %v2422, %v2421
        %v2433 = vpack.c.bf16 %v2424, %v2423
        %v2434 = vpack.c.bf16 %v2426, %v2425
        %v2435 = vpack.c.bf16 %v2428, %v2427
        %v2436 = vpack.c.bf16 %v2430, %v2429
        %v2437 = vpack.c.bf16 %v2431, %v2431
        %s2438 = scalar_lea.vmem [#allocation7], 64
        %v2439 = vld [vmem:[%s2438] sm:$0xf]
        %v2440 = vld [vmem:[%s2438 + $0x4] sm:$0xf]
        %v2441 = vld [vmem:[%s2438 + $0x8] sm:$0xf]
        %v2442 = vld [vmem:[%s2438 + $0xc] sm:$0xf]
        %v2443 = vld [vmem:[%s2438 + $0x10] sm:$0xf]
        %v2444 = vld [vmem:[%s2438 + $0x14] sm:$0xf]
        %v2445 = vld [vmem:[%s2438 + $0x18] sm:$0xf]
        %v2446 = vld [vmem:[%s2438 + $0x1c] sm:$0xf]
        %v2455 = vunpack.c.l.b16 %v2439
        %v2456 = vunpack.c.l.b16 %v2440
        %v2457 = vunpack.c.l.b16 %v2441
        %v2458 = vunpack.c.l.b16 %v2442
        %v2459 = vunpack.c.l.b16 %v2443
        %v2460 = vunpack.c.l.b16 %v2444
        %v2461 = vunpack.c.l.b16 %v2445
        %v2462 = vunpack.c.l.b16 %v2446
        %v2463 = vpack.c.b16 %v2456, %v2455
        %v2464 = vpack.c.b16 %v2458, %v2457
        %v2465 = vpack.c.b16 %v2460, %v2459
        %v2466 = vpack.c.b16 %v2462, %v2461
        %v2472 = vsel %vm2197, %v2432, 0
        %v2475 = vsel %vm2197, %v2433, 0
        %v2478 = vsel %vm2197, %v2434, 0
        %v2481 = vsel %vm2197, %v2435, 0
        %v2484 = vsel %vm2197, %v2436, 0
        %v2487 = vsel %vm2197, %v2437, 0
        %2489 = vmatpush.bf16.msra.mxu0 0
        %2490 = vmatpush.bf16.msra.mxu0 0
        %2491 = vmatpush.bf16.msra.mxu0 0
        %2492 = vmatpush.bf16.msra.mxu0 0
        %2493 = vmatpush.bf16.msra.mxu0 %v2466
        %2494 = vmatpush.bf16.msra.mxu0 %v2465
        %2495 = vmatpush.bf16.msra.mxu0 %v2464
        %2496 = vmatpush.bf16.msra.mxu0 %v2463
        %2497 = vmatmul.bf16.gmra.mxu0 %v2472
        %v2498 = vpop.f32.mrf.mxu0
        %v2499 = vadd.f32 0.0, %v2498
        %v2500 = vpop.f32.mrf.mxu0
        %v2501 = vadd.f32 0.0, %v2500
        %2502 = vmatmul.bf16.gmra.mxu0 %v2475
        %v2503 = vpop.f32.mrf.mxu0
        %v2504 = vadd.f32 0.0, %v2503
        %v2505 = vpop.f32.mrf.mxu0
        %v2506 = vadd.f32 0.0, %v2505
        %2507 = vmatmul.bf16.gmra.mxu0 %v2478
        %v2508 = vpop.f32.mrf.mxu0
        %v2509 = vadd.f32 0.0, %v2508
        %v2510 = vpop.f32.mrf.mxu0
        %v2511 = vadd.f32 0.0, %v2510
        %2512 = vmatmul.bf16.gmra.mxu0 %v2481
        %v2513 = vpop.f32.mrf.mxu0
        %v2514 = vadd.f32 0.0, %v2513
        %v2515 = vpop.f32.mrf.mxu0
        %v2516 = vadd.f32 0.0, %v2515
        %2517 = vmatmul.bf16.gmra.mxu0 %v2484
        %v2518 = vpop.f32.mrf.mxu0
        %v2519 = vadd.f32 0.0, %v2518
        %v2520 = vpop.f32.mrf.mxu0
        %v2521 = vadd.f32 0.0, %v2520
        %2522 = vmatmul.bf16.gmra.mxu0 %v2487
        %v2523 = vpop.f32.mrf.mxu0
        %v2524 = vadd.f32 0.0, %v2523
        %v2525 = vpop.f32.mrf.mxu0
        %2526 = vdwg.mxu0
        %v2527 = vadd.f32 %v2393, %v2499
        %v2528 = vadd.f32 %v2395, %v2501
        %v2529 = vadd.f32 %v2398, %v2504
        %v2530 = vadd.f32 %v2400, %v2506
        %v2531 = vadd.f32 %v2403, %v2509
        %v2532 = vadd.f32 %v2405, %v2511
        %v2533 = vadd.f32 %v2408, %v2514
        %v2534 = vadd.f32 %v2410, %v2516
        %v2535 = vadd.f32 %v2413, %v2519
        %v2536 = vadd.f32 %v2415, %v2521
        %v2537 = vadd.f32 %v2418, %v2524
        %v2538 = vld [vmem:[#allocation2 + $0x3] sm:$0xff]
        %v2539 = vld [vmem:[#allocation2 + $0xb] sm:$0xff]
        %v2540 = vld [vmem:[#allocation2 + $0x13] sm:$0xff]
        %v2541 = vld [vmem:[#allocation2 + $0x1b] sm:$0xff]
        %v2542 = vld [vmem:[#allocation2 + $0x23] sm:$0xff]
        %v2543 = vld [vmem:[#allocation2 + $0x2b] sm:$0xff]
        %v2544 = vld [vmem:[#allocation2 + $0x33] sm:$0xff]
        %v2545 = vld [vmem:[#allocation2 + $0x3b] sm:$0xff]
        %v2546 = vld [vmem:[#allocation2 + $0x43] sm:$0xff]
        %v2547 = vld [vmem:[#allocation2 + $0x4b] sm:$0xff]
        %v2548 = vld [vmem:[#allocation2 + $0x53] sm:$0x1]
        %v2549 = vpack.c.bf16 %v2539, %v2538
        %v2550 = vpack.c.bf16 %v2541, %v2540
        %v2551 = vpack.c.bf16 %v2543, %v2542
        %v2552 = vpack.c.bf16 %v2545, %v2544
        %v2553 = vpack.c.bf16 %v2547, %v2546
        %v2554 = vpack.c.bf16 %v2548, %v2548
        %s2555 = scalar_lea.vmem [#allocation7], 96
        %v2556 = vld [vmem:[%s2555] sm:$0xf]
        %v2557 = vld [vmem:[%s2555 + $0x4] sm:$0xf]
        %v2558 = vld [vmem:[%s2555 + $0x8] sm:$0xf]
        %v2559 = vld [vmem:[%s2555 + $0xc] sm:$0xf]
        %v2560 = vld [vmem:[%s2555 + $0x10] sm:$0xf]
        %v2561 = vld [vmem:[%s2555 + $0x14] sm:$0xf]
        %v2562 = vld [vmem:[%s2555 + $0x18] sm:$0xf]
        %v2563 = vld [vmem:[%s2555 + $0x1c] sm:$0xf]
        %v2572 = vunpack.c.l.b16 %v2556
        %v2573 = vunpack.c.l.b16 %v2557
        %v2574 = vunpack.c.l.b16 %v2558
        %v2575 = vunpack.c.l.b16 %v2559
        %v2576 = vunpack.c.l.b16 %v2560
        %v2577 = vunpack.c.l.b16 %v2561
        %v2578 = vunpack.c.l.b16 %v2562
        %v2579 = vunpack.c.l.b16 %v2563
        %v2580 = vpack.c.b16 %v2573, %v2572
        %v2581 = vpack.c.b16 %v2575, %v2574
        %v2582 = vpack.c.b16 %v2577, %v2576
        %v2583 = vpack.c.b16 %v2579, %v2578
        %v2589 = vsel %vm2197, %v2549, 0
        %v2592 = vsel %vm2197, %v2550, 0
        %v2595 = vsel %vm2197, %v2551, 0
        %v2598 = vsel %vm2197, %v2552, 0
        %v2601 = vsel %vm2197, %v2553, 0
        %v2604 = vsel %vm2197, %v2554, 0
        %2606 = vmatpush.bf16.msra.mxu0 0
        %2607 = vmatpush.bf16.msra.mxu0 0
        %2608 = vmatpush.bf16.msra.mxu0 0
        %2609 = vmatpush.bf16.msra.mxu0 0
        %2610 = vmatpush.bf16.msra.mxu0 %v2583
        %2611 = vmatpush.bf16.msra.mxu0 %v2582
        %2612 = vmatpush.bf16.msra.mxu0 %v2581
        %2613 = vmatpush.bf16.msra.mxu0 %v2580
        %2614 = vmatmul.bf16.gmra.mxu0 %v2589
        %v2615 = vpop.f32.mrf.mxu0
        %v2616 = vadd.f32 0.0, %v2615
        %v2617 = vpop.f32.mrf.mxu0
        %v2618 = vadd.f32 0.0, %v2617
        %2619 = vmatmul.bf16.gmra.mxu0 %v2592
        %v2620 = vpop.f32.mrf.mxu0
        %v2621 = vadd.f32 0.0, %v2620
        %v2622 = vpop.f32.mrf.mxu0
        %v2623 = vadd.f32 0.0, %v2622
        %2624 = vmatmul.bf16.gmra.mxu0 %v2595
        %v2625 = vpop.f32.mrf.mxu0
        %v2626 = vadd.f32 0.0, %v2625
        %v2627 = vpop.f32.mrf.mxu0
        %v2628 = vadd.f32 0.0, %v2627
        %2629 = vmatmul.bf16.gmra.mxu0 %v2598
        %v2630 = vpop.f32.mrf.mxu0
        %v2631 = vadd.f32 0.0, %v2630
        %v2632 = vpop.f32.mrf.mxu0
        %v2633 = vadd.f32 0.0, %v2632
        %2634 = vmatmul.bf16.gmra.mxu0 %v2601
        %v2635 = vpop.f32.mrf.mxu0
        %v2636 = vadd.f32 0.0, %v2635
        %v2637 = vpop.f32.mrf.mxu0
        %v2638 = vadd.f32 0.0, %v2637
        %2639 = vmatmul.bf16.gmra.mxu0 %v2604
        %v2640 = vpop.f32.mrf.mxu0
        %v2641 = vadd.f32 0.0, %v2640
        %v2642 = vpop.f32.mrf.mxu0
        %2643 = vdwg.mxu0
        %v2644 = vadd.f32 %v2527, %v2616
        %v2645 = vadd.f32 %v2528, %v2618
        %v2646 = vadd.f32 %v2529, %v2621
        %v2647 = vadd.f32 %v2530, %v2623
        %v2648 = vadd.f32 %v2531, %v2626
        %v2649 = vadd.f32 %v2532, %v2628
        %v2650 = vadd.f32 %v2533, %v2631
        %v2651 = vadd.f32 %v2534, %v2633
        %v2652 = vadd.f32 %v2535, %v2636
        %v2653 = vadd.f32 %v2536, %v2638
        %v2654 = vadd.f32 %v2537, %v2641
        %v2655 = vld [vmem:[#allocation2 + $0x4] sm:$0xff]
        %v2656 = vld [vmem:[#allocation2 + $0xc] sm:$0xff]
        %v2657 = vld [vmem:[#allocation2 + $0x14] sm:$0xff]
        %v2658 = vld [vmem:[#allocation2 + $0x1c] sm:$0xff]
        %v2659 = vld [vmem:[#allocation2 + $0x24] sm:$0xff]
        %v2660 = vld [vmem:[#allocation2 + $0x2c] sm:$0xff]
        %v2661 = vld [vmem:[#allocation2 + $0x34] sm:$0xff]
        %v2662 = vld [vmem:[#allocation2 + $0x3c] sm:$0xff]
        %v2663 = vld [vmem:[#allocation2 + $0x44] sm:$0xff]
        %v2664 = vld [vmem:[#allocation2 + $0x4c] sm:$0xff]
        %v2665 = vld [vmem:[#allocation2 + $0x54] sm:$0x1]
        %v2666 = vpack.c.bf16 %v2656, %v2655
        %v2667 = vpack.c.bf16 %v2658, %v2657
        %v2668 = vpack.c.bf16 %v2660, %v2659
        %v2669 = vpack.c.bf16 %v2662, %v2661
        %v2670 = vpack.c.bf16 %v2664, %v2663
        %v2671 = vpack.c.bf16 %v2665, %v2665
        %s2672 = scalar_lea.vmem [#allocation7], 128
        %v2673 = vld [vmem:[%s2672] sm:$0xf]
        %v2674 = vld [vmem:[%s2672 + $0x4] sm:$0xf]
        %v2675 = vld [vmem:[%s2672 + $0x8] sm:$0xf]
        %v2676 = vld [vmem:[%s2672 + $0xc] sm:$0xf]
        %v2677 = vld [vmem:[%s2672 + $0x10] sm:$0xf]
        %v2678 = vld [vmem:[%s2672 + $0x14] sm:$0xf]
        %v2679 = vld [vmem:[%s2672 + $0x18] sm:$0xf]
        %v2680 = vld [vmem:[%s2672 + $0x1c] sm:$0xf]
        %v2689 = vunpack.c.l.b16 %v2673
        %v2690 = vunpack.c.l.b16 %v2674
        %v2691 = vunpack.c.l.b16 %v2675
        %v2692 = vunpack.c.l.b16 %v2676
        %v2693 = vunpack.c.l.b16 %v2677
        %v2694 = vunpack.c.l.b16 %v2678
        %v2695 = vunpack.c.l.b16 %v2679
        %v2696 = vunpack.c.l.b16 %v2680
        %v2697 = vpack.c.b16 %v2690, %v2689
        %v2698 = vpack.c.b16 %v2692, %v2691
        %v2699 = vpack.c.b16 %v2694, %v2693
        %v2700 = vpack.c.b16 %v2696, %v2695
        %v2706 = vsel %vm2197, %v2666, 0
        %v2709 = vsel %vm2197, %v2667, 0
        %v2712 = vsel %vm2197, %v2668, 0
        %v2715 = vsel %vm2197, %v2669, 0
        %v2718 = vsel %vm2197, %v2670, 0
        %v2721 = vsel %vm2197, %v2671, 0
        %2723 = vmatpush.bf16.msra.mxu0 0
        %2724 = vmatpush.bf16.msra.mxu0 0
        %2725 = vmatpush.bf16.msra.mxu0 0
        %2726 = vmatpush.bf16.msra.mxu0 0
        %2727 = vmatpush.bf16.msra.mxu0 %v2700
        %2728 = vmatpush.bf16.msra.mxu0 %v2699
        %2729 = vmatpush.bf16.msra.mxu0 %v2698
        %2730 = vmatpush.bf16.msra.mxu0 %v2697
        %2731 = vmatmul.bf16.gmra.mxu0 %v2706
        %v2732 = vpop.f32.mrf.mxu0
        %v2733 = vadd.f32 0.0, %v2732
        %v2734 = vpop.f32.mrf.mxu0
        %v2735 = vadd.f32 0.0, %v2734
        %2736 = vmatmul.bf16.gmra.mxu0 %v2709
        %v2737 = vpop.f32.mrf.mxu0
        %v2738 = vadd.f32 0.0, %v2737
        %v2739 = vpop.f32.mrf.mxu0
        %v2740 = vadd.f32 0.0, %v2739
        %2741 = vmatmul.bf16.gmra.mxu0 %v2712
        %v2742 = vpop.f32.mrf.mxu0
        %v2743 = vadd.f32 0.0, %v2742
        %v2744 = vpop.f32.mrf.mxu0
        %v2745 = vadd.f32 0.0, %v2744
        %2746 = vmatmul.bf16.gmra.mxu0 %v2715
        %v2747 = vpop.f32.mrf.mxu0
        %v2748 = vadd.f32 0.0, %v2747
        %v2749 = vpop.f32.mrf.mxu0
        %v2750 = vadd.f32 0.0, %v2749
        %2751 = vmatmul.bf16.gmra.mxu0 %v2718
        %v2752 = vpop.f32.mrf.mxu0
        %v2753 = vadd.f32 0.0, %v2752
        %v2754 = vpop.f32.mrf.mxu0
        %v2755 = vadd.f32 0.0, %v2754
        %2756 = vmatmul.bf16.gmra.mxu0 %v2721
        %v2757 = vpop.f32.mrf.mxu0
        %v2758 = vadd.f32 0.0, %v2757
        %v2759 = vpop.f32.mrf.mxu0
        %2760 = vdwg.mxu0
        %v2761 = vadd.f32 %v2644, %v2733
        %v2762 = vadd.f32 %v2645, %v2735
        %v2763 = vadd.f32 %v2646, %v2738
        %v2764 = vadd.f32 %v2647, %v2740
        %v2765 = vadd.f32 %v2648, %v2743
        %v2766 = vadd.f32 %v2649, %v2745
        %v2767 = vadd.f32 %v2650, %v2748
        %v2768 = vadd.f32 %v2651, %v2750
        %v2769 = vadd.f32 %v2652, %v2753
        %v2770 = vadd.f32 %v2653, %v2755
        %v2771 = vadd.f32 %v2654, %v2758
        %v2772 = vld [vmem:[#allocation2 + $0x5] sm:$0xff]
        %v2773 = vld [vmem:[#allocation2 + $0xd] sm:$0xff]
        %v2774 = vld [vmem:[#allocation2 + $0x15] sm:$0xff]
        %v2775 = vld [vmem:[#allocation2 + $0x1d] sm:$0xff]
        %v2776 = vld [vmem:[#allocation2 + $0x25] sm:$0xff]
        %v2777 = vld [vmem:[#allocation2 + $0x2d] sm:$0xff]
        %v2778 = vld [vmem:[#allocation2 + $0x35] sm:$0xff]
        %v2779 = vld [vmem:[#allocation2 + $0x3d] sm:$0xff]
        %v2780 = vld [vmem:[#allocation2 + $0x45] sm:$0xff]
        %v2781 = vld [vmem:[#allocation2 + $0x4d] sm:$0xff]
        %v2782 = vld [vmem:[#allocation2 + $0x55] sm:$0x1]
        %v2783 = vpack.c.bf16 %v2773, %v2772
        %v2784 = vpack.c.bf16 %v2775, %v2774
        %v2785 = vpack.c.bf16 %v2777, %v2776
        %v2786 = vpack.c.bf16 %v2779, %v2778
        %v2787 = vpack.c.bf16 %v2781, %v2780
        %v2788 = vpack.c.bf16 %v2782, %v2782
        %s2789 = scalar_lea.vmem [#allocation7], 160
        %v2790 = vld [vmem:[%s2789] sm:$0xf]
        %v2791 = vld [vmem:[%s2789 + $0x4] sm:$0xf]
        %v2792 = vld [vmem:[%s2789 + $0x8] sm:$0xf]
        %v2793 = vld [vmem:[%s2789 + $0xc] sm:$0xf]
        %v2794 = vld [vmem:[%s2789 + $0x10] sm:$0xf]
        %v2795 = vld [vmem:[%s2789 + $0x14] sm:$0xf]
        %v2796 = vld [vmem:[%s2789 + $0x18] sm:$0xf]
        %v2797 = vld [vmem:[%s2789 + $0x1c] sm:$0xf]
        %v2806 = vunpack.c.l.b16 %v2790
        %v2807 = vunpack.c.l.b16 %v2791
        %v2808 = vunpack.c.l.b16 %v2792
        %v2809 = vunpack.c.l.b16 %v2793
        %v2810 = vunpack.c.l.b16 %v2794
        %v2811 = vunpack.c.l.b16 %v2795
        %v2812 = vunpack.c.l.b16 %v2796
        %v2813 = vunpack.c.l.b16 %v2797
        %v2814 = vpack.c.b16 %v2807, %v2806
        %v2815 = vpack.c.b16 %v2809, %v2808
        %v2816 = vpack.c.b16 %v2811, %v2810
        %v2817 = vpack.c.b16 %v2813, %v2812
        %v2823 = vsel %vm2197, %v2783, 0
        %v2826 = vsel %vm2197, %v2784, 0
        %v2829 = vsel %vm2197, %v2785, 0
        %v2832 = vsel %vm2197, %v2786, 0
        %v2835 = vsel %vm2197, %v2787, 0
        %v2838 = vsel %vm2197, %v2788, 0
        %2840 = vmatpush.bf16.msra.mxu0 0
        %2841 = vmatpush.bf16.msra.mxu0 0
        %2842 = vmatpush.bf16.msra.mxu0 0
        %2843 = vmatpush.bf16.msra.mxu0 0
        %2844 = vmatpush.bf16.msra.mxu0 %v2817
        %2845 = vmatpush.bf16.msra.mxu0 %v2816
        %2846 = vmatpush.bf16.msra.mxu0 %v2815
        %2847 = vmatpush.bf16.msra.mxu0 %v2814
        %2848 = vmatmul.bf16.gmra.mxu0 %v2823
        %v2849 = vpop.f32.mrf.mxu0
        %v2850 = vadd.f32 0.0, %v2849
        %v2851 = vpop.f32.mrf.mxu0
        %v2852 = vadd.f32 0.0, %v2851
        %2853 = vmatmul.bf16.gmra.mxu0 %v2826
        %v2854 = vpop.f32.mrf.mxu0
        %v2855 = vadd.f32 0.0, %v2854
        %v2856 = vpop.f32.mrf.mxu0
        %v2857 = vadd.f32 0.0, %v2856
        %2858 = vmatmul.bf16.gmra.mxu0 %v2829
        %v2859 = vpop.f32.mrf.mxu0
        %v2860 = vadd.f32 0.0, %v2859
        %v2861 = vpop.f32.mrf.mxu0
        %v2862 = vadd.f32 0.0, %v2861
        %2863 = vmatmul.bf16.gmra.mxu0 %v2832
        %v2864 = vpop.f32.mrf.mxu0
        %v2865 = vadd.f32 0.0, %v2864
        %v2866 = vpop.f32.mrf.mxu0
        %v2867 = vadd.f32 0.0, %v2866
        %2868 = vmatmul.bf16.gmra.mxu0 %v2835
        %v2869 = vpop.f32.mrf.mxu0
        %v2870 = vadd.f32 0.0, %v2869
        %v2871 = vpop.f32.mrf.mxu0
        %v2872 = vadd.f32 0.0, %v2871
        %2873 = vmatmul.bf16.gmra.mxu0 %v2838
        %v2874 = vpop.f32.mrf.mxu0
        %v2875 = vadd.f32 0.0, %v2874
        %v2876 = vpop.f32.mrf.mxu0
        %2877 = vdwg.mxu0
        %v2878 = vadd.f32 %v2761, %v2850
        %v2879 = vadd.f32 %v2762, %v2852
        %v2880 = vadd.f32 %v2763, %v2855
        %v2881 = vadd.f32 %v2764, %v2857
        %v2882 = vadd.f32 %v2765, %v2860
        %v2883 = vadd.f32 %v2766, %v2862
        %v2884 = vadd.f32 %v2767, %v2865
        %v2885 = vadd.f32 %v2768, %v2867
        %v2886 = vadd.f32 %v2769, %v2870
        %v2887 = vadd.f32 %v2770, %v2872
        %v2888 = vadd.f32 %v2771, %v2875
        %v2889 = vld [vmem:[#allocation2 + $0x6] sm:$0xff]
        %v2890 = vld [vmem:[#allocation2 + $0xe] sm:$0xff]
        %v2891 = vld [vmem:[#allocation2 + $0x16] sm:$0xff]
        %v2892 = vld [vmem:[#allocation2 + $0x1e] sm:$0xff]
        %v2893 = vld [vmem:[#allocation2 + $0x26] sm:$0xff]
        %v2894 = vld [vmem:[#allocation2 + $0x2e] sm:$0xff]
        %v2895 = vld [vmem:[#allocation2 + $0x36] sm:$0xff]
        %v2896 = vld [vmem:[#allocation2 + $0x3e] sm:$0xff]
        %v2897 = vld [vmem:[#allocation2 + $0x46] sm:$0xff]
        %v2898 = vld [vmem:[#allocation2 + $0x4e] sm:$0xff]
        %v2899 = vld [vmem:[#allocation2 + $0x56] sm:$0x1]
        %v2900 = vpack.c.bf16 %v2890, %v2889
        %v2901 = vpack.c.bf16 %v2892, %v2891
        %v2902 = vpack.c.bf16 %v2894, %v2893
        %v2903 = vpack.c.bf16 %v2896, %v2895
        %v2904 = vpack.c.bf16 %v2898, %v2897
        %v2905 = vpack.c.bf16 %v2899, %v2899
        %s2906 = scalar_lea.vmem [#allocation7], 192
        %v2907 = vld [vmem:[%s2906] sm:$0xf]
        %v2908 = vld [vmem:[%s2906 + $0x4] sm:$0xf]
        %v2909 = vld [vmem:[%s2906 + $0x8] sm:$0xf]
        %v2910 = vld [vmem:[%s2906 + $0xc] sm:$0xf]
        %v2911 = vld [vmem:[%s2906 + $0x10] sm:$0xf]
        %v2912 = vld [vmem:[%s2906 + $0x14] sm:$0xf]
        %v2913 = vld [vmem:[%s2906 + $0x18] sm:$0xf]
        %v2914 = vld [vmem:[%s2906 + $0x1c] sm:$0xf]
        %v2923 = vunpack.c.l.b16 %v2907
        %v2924 = vunpack.c.l.b16 %v2908
        %v2925 = vunpack.c.l.b16 %v2909
        %v2926 = vunpack.c.l.b16 %v2910
        %v2927 = vunpack.c.l.b16 %v2911
        %v2928 = vunpack.c.l.b16 %v2912
        %v2929 = vunpack.c.l.b16 %v2913
        %v2930 = vunpack.c.l.b16 %v2914
        %v2931 = vpack.c.b16 %v2924, %v2923
        %v2932 = vpack.c.b16 %v2926, %v2925
        %v2933 = vpack.c.b16 %v2928, %v2927
        %v2934 = vpack.c.b16 %v2930, %v2929
        %v2940 = vsel %vm2197, %v2900, 0
        %v2943 = vsel %vm2197, %v2901, 0
        %v2946 = vsel %vm2197, %v2902, 0
        %v2949 = vsel %vm2197, %v2903, 0
        %v2952 = vsel %vm2197, %v2904, 0
        %v2955 = vsel %vm2197, %v2905, 0
        %2957 = vmatpush.bf16.msra.mxu0 0
        %2958 = vmatpush.bf16.msra.mxu0 0
        %2959 = vmatpush.bf16.msra.mxu0 0
        %2960 = vmatpush.bf16.msra.mxu0 0
        %2961 = vmatpush.bf16.msra.mxu0 %v2934
        %2962 = vmatpush.bf16.msra.mxu0 %v2933
        %2963 = vmatpush.bf16.msra.mxu0 %v2932
        %2964 = vmatpush.bf16.msra.mxu0 %v2931
        %2965 = vmatmul.bf16.gmra.mxu0 %v2940
        %v2966 = vpop.f32.mrf.mxu0
        %v2967 = vadd.f32 0.0, %v2966
        %v2968 = vpop.f32.mrf.mxu0
        %v2969 = vadd.f32 0.0, %v2968
        %2970 = vmatmul.bf16.gmra.mxu0 %v2943
        %v2971 = vpop.f32.mrf.mxu0
        %v2972 = vadd.f32 0.0, %v2971
        %v2973 = vpop.f32.mrf.mxu0
        %v2974 = vadd.f32 0.0, %v2973
        %2975 = vmatmul.bf16.gmra.mxu0 %v2946
        %v2976 = vpop.f32.mrf.mxu0
        %v2977 = vadd.f32 0.0, %v2976
        %v2978 = vpop.f32.mrf.mxu0
        %v2979 = vadd.f32 0.0, %v2978
        %2980 = vmatmul.bf16.gmra.mxu0 %v2949
        %v2981 = vpop.f32.mrf.mxu0
        %v2982 = vadd.f32 0.0, %v2981
        %v2983 = vpop.f32.mrf.mxu0
        %v2984 = vadd.f32 0.0, %v2983
        %2985 = vmatmul.bf16.gmra.mxu0 %v2952
        %v2986 = vpop.f32.mrf.mxu0
        %v2987 = vadd.f32 0.0, %v2986
        %v2988 = vpop.f32.mrf.mxu0
        %v2989 = vadd.f32 0.0, %v2988
        %2990 = vmatmul.bf16.gmra.mxu0 %v2955
        %v2991 = vpop.f32.mrf.mxu0
        %v2992 = vadd.f32 0.0, %v2991
        %v2993 = vpop.f32.mrf.mxu0
        %2994 = vdwg.mxu0
        %v2995 = vadd.f32 %v2878, %v2967
        %v2996 = vadd.f32 %v2879, %v2969
        %v2997 = vadd.f32 %v2880, %v2972
        %v2998 = vadd.f32 %v2881, %v2974
        %v2999 = vadd.f32 %v2882, %v2977
        %v3000 = vadd.f32 %v2883, %v2979
        %v3001 = vadd.f32 %v2884, %v2982
        %v3002 = vadd.f32 %v2885, %v2984
        %v3003 = vadd.f32 %v2886, %v2987
        %v3004 = vadd.f32 %v2887, %v2989
        %v3005 = vadd.f32 %v2888, %v2992
        %v3006 = vld [vmem:[%s15] sm:$0x1]
        %v3007 = vld [vmem:[%s15 + $0x1] sm:$0x1]
        %v3008 = vperm.slane %v3006, 0
        %v3009 = vmul.f32 %v2995, %v3008
        %v3010 = vmul.f32 %v2996, %v3008
        %v3011 = vmul.f32 %v2997, %v3008
        %v3012 = vmul.f32 %v2998, %v3008
        %v3013 = vmul.f32 %v2999, %v3008
        %v3014 = vmul.f32 %v3000, %v3008
        %v3015 = vmul.f32 %v3001, %v3008
        %v3016 = vmul.f32 %v3002, %v3008
        %v3017 = vmul.f32 %v3003, %v3008
        %v3018 = vmul.f32 %v3004, %v3008
        %v3019 = vmul.f32 %v3005, %v3008
        %v3020 = vperm.slane %v3007, 0
        %v3021 = vadd.f32 %v3009, %v3020
        %v3022 = vadd.f32 %v3010, %v3020
        %v3023 = vadd.f32 %v3011, %v3020
        %v3024 = vadd.f32 %v3012, %v3020
        %v3025 = vadd.f32 %v3013, %v3020
        %v3026 = vadd.f32 %v3014, %v3020
        %v3027 = vadd.f32 %v3015, %v3020
        %v3028 = vadd.f32 %v3016, %v3020
        %v3029 = vadd.f32 %v3017, %v3020
        %v3030 = vadd.f32 %v3018, %v3020
        %v3031 = vadd.f32 %v3019, %v3020
        %v3032 = vmax.f32 %v3021, 0.0
        %v3033 = vmax.f32 %v3022, 0.0
        %v3034 = vmax.f32 %v3023, 0.0
        %v3035 = vmax.f32 %v3024, 0.0
        %v3036 = vmax.f32 %v3025, 0.0
        %v3037 = vmax.f32 %v3026, 0.0
        %v3038 = vmax.f32 %v3027, 0.0
        %v3039 = vmax.f32 %v3028, 0.0
        %v3040 = vmax.f32 %v3029, 0.0
        %v3041 = vmax.f32 %v3030, 0.0
        %v3042 = vmax.f32 %v3031, 0.0
        %3043 = vst.msk [vmem:[#allocation3] sm:$0xff] %vm2197, %v3032
        %3044 = vst.msk [vmem:[#allocation3 + $0x8] sm:$0xff] %vm2197, %v3033
        %3045 = vst.msk [vmem:[#allocation3 + $0x10] sm:$0xff] %vm2197, %v3034
        %3046 = vst.msk [vmem:[#allocation3 + $0x18] sm:$0xff] %vm2197, %v3035
        %3047 = vst.msk [vmem:[#allocation3 + $0x20] sm:$0xff] %vm2197, %v3036
        %3048 = vst.msk [vmem:[#allocation3 + $0x28] sm:$0xff] %vm2197, %v3037
        %3049 = vst.msk [vmem:[#allocation3 + $0x30] sm:$0xff] %vm2197, %v3038
        %3050 = vst.msk [vmem:[#allocation3 + $0x38] sm:$0xff] %vm2197, %v3039
        %3051 = vst.msk [vmem:[#allocation3 + $0x40] sm:$0xff] %vm2197, %v3040
        %3052 = vst.msk [vmem:[#allocation3 + $0x48] sm:$0xff] %vm2197, %v3041
        %3053 = vst.msk [vmem:[#allocation3 + $0x50] sm:$0x1] %vm2208, %v3042
        %v3054 = vld [vmem:[#allocation3] ss:$3 sm:$0xff]
        %s3055 = scalar_lea.vmem [#allocation3], 24
        %v3056 = vld [vmem:[%s3055] ss:$3 sm:$0xff]
        %s3057 = scalar_lea.vmem [#allocation3], 48
        %v3058 = vld [vmem:[%s3057] ss:$3 sm:$0xff]
        %s3059 = scalar_lea.vmem [#allocation3], 72
        %v3060 = vld [vmem:[%s3059] ss:$3 sm:$0x7]
        %s3061 = scalar_lea.vmem [#allocation3], 1
        %v3062 = vld [vmem:[%s3061] ss:$3 sm:$0xff]
        %s3063 = scalar_lea.vmem [#allocation3], 25
        %v3064 = vld [vmem:[%s3063] ss:$3 sm:$0xff]
        %s3065 = scalar_lea.vmem [#allocation3], 49
        %v3066 = vld [vmem:[%s3065] ss:$3 sm:$0xff]
        %s3067 = scalar_lea.vmem [#allocation3], 73
        %v3068 = vld [vmem:[%s3067] ss:$3 sm:$0x7]
        %s3069 = scalar_lea.vmem [#allocation3], 2
        %v3070 = vld [vmem:[%s3069] ss:$3 sm:$0xff]
        %s3071 = scalar_lea.vmem [#allocation3], 26
        %v3072 = vld [vmem:[%s3071] ss:$3 sm:$0xff]
        %s3073 = scalar_lea.vmem [#allocation3], 50
        %v3074 = vld [vmem:[%s3073] ss:$3 sm:$0xff]
        %s3075 = scalar_lea.vmem [#allocation3], 74
        %v3076 = vld [vmem:[%s3075] ss:$3 sm:$0x7]
        %v3077 = vmax.f32 %v3054, %v3062
        %v3078 = vmax.f32 %v3056, %v3064
        %v3079 = vmax.f32 %v3058, %v3066
        %v3080 = vmax.f32 %v3060, %v3068
        %v3081 = vmax.f32 %v3077, %v3070
        %v3082 = vmax.f32 %v3078, %v3072
        %v3083 = vmax.f32 %v3079, %v3074
        %v3084 = vmax.f32 %v3080, %v3076
        %v3085 = vld [vmem:[%s1019] sm:$0xff]
        %v3086 = vld [vmem:[%s1019 + $0x8] sm:$0xff]
        %v3087 = vld [vmem:[%s1019 + $0x10] sm:$0xff]
        %v3088 = vld [vmem:[%s1019 + $0x18] sm:$0xff]
        %v3089 = vld [vmem:[%s1019 + $0x20] sm:$0xff]
        %v3090 = vld [vmem:[%s1019 + $0x28] sm:$0xff]
        %v3091 = vld [vmem:[%s1019 + $0x30] sm:$0xff]
        %v3092 = vld [vmem:[%s1019 + $0x38] sm:$0xff]
        %v3093 = vld [vmem:[%s1019 + $0x40] sm:$0xff]
        %v3094 = vld [vmem:[%s1019 + $0x48] sm:$0xff]
        %v3095 = vld [vmem:[%s1019 + $0x50] sm:$0x1]
        %3096 = vst [vmem:[#allocation2] sm:$0x1f] 0.0
        %3097 = vst [vmem:[#allocation2 + $0x56] sm:$0x1f] 0.0
        %vm3098 = vcmask 162816
        %3099 = vst.msk [vmem:[#allocation2 + $0x5] sm:$0xff] %vm3098, %v3085
        %3100 = vst.msk [vmem:[#allocation2 + $0xd] sm:$0xff] %vm3098, %v3086
        %3101 = vst.msk [vmem:[#allocation2 + $0x15] sm:$0xff] %vm3098, %v3087
        %3102 = vst.msk [vmem:[#allocation2 + $0x1d] sm:$0xff] %vm3098, %v3088
        %3103 = vst.msk [vmem:[#allocation2 + $0x25] sm:$0xff] %vm3098, %v3089
        %3104 = vst.msk [vmem:[#allocation2 + $0x2d] sm:$0xff] %vm3098, %v3090
        %3105 = vst.msk [vmem:[#allocation2 + $0x35] sm:$0xff] %vm3098, %v3091
        %3106 = vst.msk [vmem:[#allocation2 + $0x3d] sm:$0xff] %vm3098, %v3092
        %3107 = vst.msk [vmem:[#allocation2 + $0x45] sm:$0xff] %vm3098, %v3093
        %3108 = vst.msk [vmem:[#allocation2 + $0x4d] sm:$0xff] %vm3098, %v3094
        %vm3109 = vcmask 155648
        %3110 = vst.msk [vmem:[#allocation2 + $0x55] sm:$0x1] %vm3109, %v3095
        %v3111 = vld [vmem:[#allocation2] sm:$0xff]
        %v3112 = vld [vmem:[#allocation2 + $0x8] sm:$0xff]
        %v3113 = vld [vmem:[#allocation2 + $0x10] sm:$0xff]
        %v3114 = vld [vmem:[#allocation2 + $0x18] sm:$0xff]
        %v3115 = vld [vmem:[#allocation2 + $0x20] sm:$0xff]
        %v3116 = vld [vmem:[#allocation2 + $0x28] sm:$0xff]
        %v3117 = vld [vmem:[#allocation2 + $0x30] sm:$0xff]
        %v3118 = vld [vmem:[#allocation2 + $0x38] sm:$0xff]
        %v3119 = vld [vmem:[#allocation2 + $0x40] sm:$0xff]
        %v3120 = vld [vmem:[#allocation2 + $0x48] sm:$0xff]
        %v3121 = vld [vmem:[#allocation2 + $0x50] sm:$0x1]
        %v3122 = vpack.c.bf16 %v3112, %v3111
        %v3123 = vpack.c.bf16 %v3114, %v3113
        %v3124 = vpack.c.bf16 %v3116, %v3115
        %v3125 = vpack.c.bf16 %v3118, %v3117
        %v3126 = vpack.c.bf16 %v3120, %v3119
        %v3127 = vpack.c.bf16 %v3121, %v3121
        %v3128 = vld [vmem:[#allocation9] sm:$0xf]
        %v3129 = vld [vmem:[#allocation9 + $0x4] sm:$0xf]
        %v3130 = vld [vmem:[#allocation9 + $0x8] sm:$0x3]
        %v3131 = vld [vmem:[#allocation2 + $0x1] sm:$0xff]
        %v3132 = vld [vmem:[#allocation2 + $0x9] sm:$0xff]
        %v3133 = vld [vmem:[#allocation2 + $0x11] sm:$0xff]
        %v3134 = vld [vmem:[#allocation2 + $0x19] sm:$0xff]
        %v3135 = vld [vmem:[#allocation2 + $0x21] sm:$0xff]
        %v3136 = vld [vmem:[#allocation2 + $0x29] sm:$0xff]
        %v3137 = vld [vmem:[#allocation2 + $0x31] sm:$0xff]
        %v3138 = vld [vmem:[#allocation2 + $0x39] sm:$0xff]
        %v3139 = vld [vmem:[#allocation2 + $0x41] sm:$0xff]
        %v3140 = vld [vmem:[#allocation2 + $0x49] sm:$0xff]
        %v3141 = vld [vmem:[#allocation2 + $0x51] sm:$0x1]
        %v3142 = vpack.c.bf16 %v3132, %v3131
        %v3143 = vpack.c.bf16 %v3134, %v3133
        %v3144 = vpack.c.bf16 %v3136, %v3135
        %v3145 = vpack.c.bf16 %v3138, %v3137
        %v3146 = vpack.c.bf16 %v3140, %v3139
        %v3147 = vpack.c.bf16 %v3141, %v3141
        %s3148 = scalar_lea.vmem [#allocation9], 12
        %v3149 = vld [vmem:[%s3148] sm:$0xf]
        %v3150 = vld [vmem:[%s3148 + $0x4] sm:$0xf]
        %v3151 = vld [vmem:[%s3148 + $0x8] sm:$0x3]
        %v3155 = vunpack.c.l.b16 %v3149
        %v3156 = vunpack.c.l.b16 %v3150
        %v3157 = vunpack.c.l.b16 %v3151
        %v3158 = vpack.c.b16 %v3156, %v3155
        %v3159 = vpack.c.b16 %v3157, %v3157
        %v3162 = vsel %vm3098, %v3142, 0
        %v3165 = vsel %vm3098, %v3143, 0
        %v3168 = vsel %vm3098, %v3144, 0
        %v3171 = vsel %vm3098, %v3145, 0
        %v3174 = vsel %vm3098, %v3146, 0
        %v3177 = vsel %vm3098, %v3147, 0
        %vm3179 = vcmask 1041408
        %v3181 = vsel %vm3179, %v3159, 0
        %3183 = vmatpush.bf16.msra.mxu0 0
        %3184 = vmatpush.bf16.msra.mxu0 0
        %3185 = vmatpush.bf16.msra.mxu0 0
        %3186 = vmatpush.bf16.msra.mxu0 0
        %3187 = vmatpush.bf16.msra.mxu0 0
        %3188 = vmatpush.bf16.msra.mxu0 0
        %3189 = vmatpush.bf16.msra.mxu0 %v3181
        %3190 = vmatpush.bf16.msra.mxu0 %v3158
        %3191 = vmatmul.bf16.gmra.mxu0 %v3162
        %v3192 = vpop.f32.mrf.mxu0
        %v3193 = vadd.f32 0.0, %v3192
        %v3194 = vpop.f32.mrf.mxu0
        %v3195 = vadd.f32 0.0, %v3194
        %3196 = vmatmul.bf16.gmra.mxu0 %v3165
        %v3197 = vpop.f32.mrf.mxu0
        %v3198 = vadd.f32 0.0, %v3197
        %v3199 = vpop.f32.mrf.mxu0
        %v3200 = vadd.f32 0.0, %v3199
        %3201 = vmatmul.bf16.gmra.mxu0 %v3168
        %v3202 = vpop.f32.mrf.mxu0
        %v3203 = vadd.f32 0.0, %v3202
        %v3204 = vpop.f32.mrf.mxu0
        %v3205 = vadd.f32 0.0, %v3204
        %3206 = vmatmul.bf16.gmra.mxu0 %v3171
        %v3207 = vpop.f32.mrf.mxu0
        %v3208 = vadd.f32 0.0, %v3207
        %v3209 = vpop.f32.mrf.mxu0
        %v3210 = vadd.f32 0.0, %v3209
        %3211 = vmatmul.bf16.gmra.mxu0 %v3174
        %v3212 = vpop.f32.mrf.mxu0
        %v3213 = vadd.f32 0.0, %v3212
        %v3214 = vpop.f32.mrf.mxu0
        %v3215 = vadd.f32 0.0, %v3214
        %3216 = vmatmul.bf16.gmra.mxu0 %v3177
        %v3217 = vpop.f32.mrf.mxu0
        %v3218 = vadd.f32 0.0, %v3217
        %v3219 = vpop.f32.mrf.mxu0
        %3220 = vdwg.mxu0
        %v3224 = vunpack.c.l.b16 %v3128
        %v3225 = vunpack.c.l.b16 %v3129
        %v3226 = vunpack.c.l.b16 %v3130
        %v3227 = vpack.c.b16 %v3225, %v3224
        %v3228 = vpack.c.b16 %v3226, %v3226
        %v3231 = vsel %vm3098, %v3122, 0
        %v3234 = vsel %vm3098, %v3123, 0
        %v3237 = vsel %vm3098, %v3124, 0
        %v3240 = vsel %vm3098, %v3125, 0
        %v3243 = vsel %vm3098, %v3126, 0
        %v3246 = vsel %vm3098, %v3127, 0
        %v3249 = vsel %vm3179, %v3228, 0
        %3251 = vmatpush.bf16.msra.mxu0 0
        %3252 = vmatpush.bf16.msra.mxu0 0
        %3253 = vmatpush.bf16.msra.mxu0 0
        %3254 = vmatpush.bf16.msra.mxu0 0
        %3255 = vmatpush.bf16.msra.mxu0 0
        %3256 = vmatpush.bf16.msra.mxu0 0
        %3257 = vmatpush.bf16.msra.mxu0 %v3249
        %3258 = vmatpush.bf16.msra.mxu0 %v3227
        %3259 = vmatmul.bf16.gmra.mxu0 %v3231
        %v3260 = vpop.f32.mrf.mxu0
        %v3261 = vadd.f32 %v3193, %v3260
        %v3262 = vpop.f32.mrf.mxu0
        %v3263 = vadd.f32 %v3195, %v3262
        %3264 = vmatmul.bf16.gmra.mxu0 %v3234
        %v3265 = vpop.f32.mrf.mxu0
        %v3266 = vadd.f32 %v3198, %v3265
        %v3267 = vpop.f32.mrf.mxu0
        %v3268 = vadd.f32 %v3200, %v3267
        %3269 = vmatmul.bf16.gmra.mxu0 %v3237
        %v3270 = vpop.f32.mrf.mxu0
        %v3271 = vadd.f32 %v3203, %v3270
        %v3272 = vpop.f32.mrf.mxu0
        %v3273 = vadd.f32 %v3205, %v3272
        %3274 = vmatmul.bf16.gmra.mxu0 %v3240
        %v3275 = vpop.f32.mrf.mxu0
        %v3276 = vadd.f32 %v3208, %v3275
        %v3277 = vpop.f32.mrf.mxu0
        %v3278 = vadd.f32 %v3210, %v3277
        %3279 = vmatmul.bf16.gmra.mxu0 %v3243
        %v3280 = vpop.f32.mrf.mxu0
        %v3281 = vadd.f32 %v3213, %v3280
        %v3282 = vpop.f32.mrf.mxu0
        %v3283 = vadd.f32 %v3215, %v3282
        %3284 = vmatmul.bf16.gmra.mxu0 %v3246
        %v3285 = vpop.f32.mrf.mxu0
        %v3286 = vadd.f32 %v3218, %v3285
        %v3287 = vpop.f32.mrf.mxu0
        %3288 = vdwg.mxu0
        %v3289 = vld [vmem:[#allocation2 + $0x2] sm:$0xff]
        %v3290 = vld [vmem:[#allocation2 + $0xa] sm:$0xff]
        %v3291 = vld [vmem:[#allocation2 + $0x12] sm:$0xff]
        %v3292 = vld [vmem:[#allocation2 + $0x1a] sm:$0xff]
        %v3293 = vld [vmem:[#allocation2 + $0x22] sm:$0xff]
        %v3294 = vld [vmem:[#allocation2 + $0x2a] sm:$0xff]
        %v3295 = vld [vmem:[#allocation2 + $0x32] sm:$0xff]
        %v3296 = vld [vmem:[#allocation2 + $0x3a] sm:$0xff]
        %v3297 = vld [vmem:[#allocation2 + $0x42] sm:$0xff]
        %v3298 = vld [vmem:[#allocation2 + $0x4a] sm:$0xff]
        %v3299 = vld [vmem:[#allocation2 + $0x52] sm:$0x1]
        %v3300 = vpack.c.bf16 %v3290, %v3289
        %v3301 = vpack.c.bf16 %v3292, %v3291
        %v3302 = vpack.c.bf16 %v3294, %v3293
        %v3303 = vpack.c.bf16 %v3296, %v3295
        %v3304 = vpack.c.bf16 %v3298, %v3297
        %v3305 = vpack.c.bf16 %v3299, %v3299
        %s3306 = scalar_lea.vmem [#allocation9], 24
        %v3307 = vld [vmem:[%s3306] sm:$0xf]
        %v3308 = vld [vmem:[%s3306 + $0x4] sm:$0xf]
        %v3309 = vld [vmem:[%s3306 + $0x8] sm:$0x3]
        %v3313 = vunpack.c.l.b16 %v3307
        %v3314 = vunpack.c.l.b16 %v3308
        %v3315 = vunpack.c.l.b16 %v3309
        %v3316 = vpack.c.b16 %v3314, %v3313
        %v3317 = vpack.c.b16 %v3315, %v3315
        %v3320 = vsel %vm3098, %v3300, 0
        %v3323 = vsel %vm3098, %v3301, 0
        %v3326 = vsel %vm3098, %v3302, 0
        %v3329 = vsel %vm3098, %v3303, 0
        %v3332 = vsel %vm3098, %v3304, 0
        %v3335 = vsel %vm3098, %v3305, 0
        %v3338 = vsel %vm3179, %v3317, 0
        %3340 = vmatpush.bf16.msra.mxu0 0
        %3341 = vmatpush.bf16.msra.mxu0 0
        %3342 = vmatpush.bf16.msra.mxu0 0
        %3343 = vmatpush.bf16.msra.mxu0 0
        %3344 = vmatpush.bf16.msra.mxu0 0
        %3345 = vmatpush.bf16.msra.mxu0 0
        %3346 = vmatpush.bf16.msra.mxu0 %v3338
        %3347 = vmatpush.bf16.msra.mxu0 %v3316
        %3348 = vmatmul.bf16.gmra.mxu0 %v3320
        %v3349 = vpop.f32.mrf.mxu0
        %v3350 = vadd.f32 0.0, %v3349
        %v3351 = vpop.f32.mrf.mxu0
        %v3352 = vadd.f32 0.0, %v3351
        %3353 = vmatmul.bf16.gmra.mxu0 %v3323
        %v3354 = vpop.f32.mrf.mxu0
        %v3355 = vadd.f32 0.0, %v3354
        %v3356 = vpop.f32.mrf.mxu0
        %v3357 = vadd.f32 0.0, %v3356
        %3358 = vmatmul.bf16.gmra.mxu0 %v3326
        %v3359 = vpop.f32.mrf.mxu0
        %v3360 = vadd.f32 0.0, %v3359
        %v3361 = vpop.f32.mrf.mxu0
        %v3362 = vadd.f32 0.0, %v3361
        %3363 = vmatmul.bf16.gmra.mxu0 %v3329
        %v3364 = vpop.f32.mrf.mxu0
        %v3365 = vadd.f32 0.0, %v3364
        %v3366 = vpop.f32.mrf.mxu0
        %v3367 = vadd.f32 0.0, %v3366
        %3368 = vmatmul.bf16.gmra.mxu0 %v3332
        %v3369 = vpop.f32.mrf.mxu0
        %v3370 = vadd.f32 0.0, %v3369
        %v3371 = vpop.f32.mrf.mxu0
        %v3372 = vadd.f32 0.0, %v3371
        %3373 = vmatmul.bf16.gmra.mxu0 %v3335
        %v3374 = vpop.f32.mrf.mxu0
        %v3375 = vadd.f32 0.0, %v3374
        %v3376 = vpop.f32.mrf.mxu0
        %3377 = vdwg.mxu0
        %v3378 = vadd.f32 %v3261, %v3350
        %v3379 = vadd.f32 %v3263, %v3352
        %v3380 = vadd.f32 %v3266, %v3355
        %v3381 = vadd.f32 %v3268, %v3357
        %v3382 = vadd.f32 %v3271, %v3360
        %v3383 = vadd.f32 %v3273, %v3362
        %v3384 = vadd.f32 %v3276, %v3365
        %v3385 = vadd.f32 %v3278, %v3367
        %v3386 = vadd.f32 %v3281, %v3370
        %v3387 = vadd.f32 %v3283, %v3372
        %v3388 = vadd.f32 %v3286, %v3375
        %v3389 = vld [vmem:[#allocation2 + $0x3] sm:$0xff]
        %v3390 = vld [vmem:[#allocation2 + $0xb] sm:$0xff]
        %v3391 = vld [vmem:[#allocation2 + $0x13] sm:$0xff]
        %v3392 = vld [vmem:[#allocation2 + $0x1b] sm:$0xff]
        %v3393 = vld [vmem:[#allocation2 + $0x23] sm:$0xff]
        %v3394 = vld [vmem:[#allocation2 + $0x2b] sm:$0xff]
        %v3395 = vld [vmem:[#allocation2 + $0x33] sm:$0xff]
        %v3396 = vld [vmem:[#allocation2 + $0x3b] sm:$0xff]
        %v3397 = vld [vmem:[#allocation2 + $0x43] sm:$0xff]
        %v3398 = vld [vmem:[#allocation2 + $0x4b] sm:$0xff]
        %v3399 = vld [vmem:[#allocation2 + $0x53] sm:$0x1]
        %v3400 = vpack.c.bf16 %v3390, %v3389
        %v3401 = vpack.c.bf16 %v3392, %v3391
        %v3402 = vpack.c.bf16 %v3394, %v3393
        %v3403 = vpack.c.bf16 %v3396, %v3395
        %v3404 = vpack.c.bf16 %v3398, %v3397
        %v3405 = vpack.c.bf16 %v3399, %v3399
        %s3406 = scalar_lea.vmem [#allocation9], 36
        %v3407 = vld [vmem:[%s3406] sm:$0xf]
        %v3408 = vld [vmem:[%s3406 + $0x4] sm:$0xf]
        %v3409 = vld [vmem:[%s3406 + $0x8] sm:$0x3]
        %v3413 = vunpack.c.l.b16 %v3407
        %v3414 = vunpack.c.l.b16 %v3408
        %v3415 = vunpack.c.l.b16 %v3409
        %v3416 = vpack.c.b16 %v3414, %v3413
        %v3417 = vpack.c.b16 %v3415, %v3415
        %v3420 = vsel %vm3098, %v3400, 0
        %v3423 = vsel %vm3098, %v3401, 0
        %v3426 = vsel %vm3098, %v3402, 0
        %v3429 = vsel %vm3098, %v3403, 0
        %v3432 = vsel %vm3098, %v3404, 0
        %v3435 = vsel %vm3098, %v3405, 0
        %v3438 = vsel %vm3179, %v3417, 0
        %3440 = vmatpush.bf16.msra.mxu0 0
        %3441 = vmatpush.bf16.msra.mxu0 0
        %3442 = vmatpush.bf16.msra.mxu0 0
        %3443 = vmatpush.bf16.msra.mxu0 0
        %3444 = vmatpush.bf16.msra.mxu0 0
        %3445 = vmatpush.bf16.msra.mxu0 0
        %3446 = vmatpush.bf16.msra.mxu0 %v3438
        %3447 = vmatpush.bf16.msra.mxu0 %v3416
        %3448 = vmatmul.bf16.gmra.mxu0 %v3420
        %v3449 = vpop.f32.mrf.mxu0
        %v3450 = vadd.f32 0.0, %v3449
        %v3451 = vpop.f32.mrf.mxu0
        %v3452 = vadd.f32 0.0, %v3451
        %3453 = vmatmul.bf16.gmra.mxu0 %v3423
        %v3454 = vpop.f32.mrf.mxu0
        %v3455 = vadd.f32 0.0, %v3454
        %v3456 = vpop.f32.mrf.mxu0
        %v3457 = vadd.f32 0.0, %v3456
        %3458 = vmatmul.bf16.gmra.mxu0 %v3426
        %v3459 = vpop.f32.mrf.mxu0
        %v3460 = vadd.f32 0.0, %v3459
        %v3461 = vpop.f32.mrf.mxu0
        %v3462 = vadd.f32 0.0, %v3461
        %3463 = vmatmul.bf16.gmra.mxu0 %v3429
        %v3464 = vpop.f32.mrf.mxu0
        %v3465 = vadd.f32 0.0, %v3464
        %v3466 = vpop.f32.mrf.mxu0
        %v3467 = vadd.f32 0.0, %v3466
        %3468 = vmatmul.bf16.gmra.mxu0 %v3432
        %v3469 = vpop.f32.mrf.mxu0
        %v3470 = vadd.f32 0.0, %v3469
        %v3471 = vpop.f32.mrf.mxu0
        %v3472 = vadd.f32 0.0, %v3471
        %3473 = vmatmul.bf16.gmra.mxu0 %v3435
        %v3474 = vpop.f32.mrf.mxu0
        %v3475 = vadd.f32 0.0, %v3474
        %v3476 = vpop.f32.mrf.mxu0
        %3477 = vdwg.mxu0
        %v3478 = vadd.f32 %v3378, %v3450
        %v3479 = vadd.f32 %v3379, %v3452
        %v3480 = vadd.f32 %v3380, %v3455
        %v3481 = vadd.f32 %v3381, %v3457
        %v3482 = vadd.f32 %v3382, %v3460
        %v3483 = vadd.f32 %v3383, %v3462
        %v3484 = vadd.f32 %v3384, %v3465
        %v3485 = vadd.f32 %v3385, %v3467
        %v3486 = vadd.f32 %v3386, %v3470
        %v3487 = vadd.f32 %v3387, %v3472
        %v3488 = vadd.f32 %v3388, %v3475
        %v3489 = vld [vmem:[#allocation2 + $0x4] sm:$0xff]
        %v3490 = vld [vmem:[#allocation2 + $0xc] sm:$0xff]
        %v3491 = vld [vmem:[#allocation2 + $0x14] sm:$0xff]
        %v3492 = vld [vmem:[#allocation2 + $0x1c] sm:$0xff]
        %v3493 = vld [vmem:[#allocation2 + $0x24] sm:$0xff]
        %v3494 = vld [vmem:[#allocation2 + $0x2c] sm:$0xff]
        %v3495 = vld [vmem:[#allocation2 + $0x34] sm:$0xff]
        %v3496 = vld [vmem:[#allocation2 + $0x3c] sm:$0xff]
        %v3497 = vld [vmem:[#allocation2 + $0x44] sm:$0xff]
        %v3498 = vld [vmem:[#allocation2 + $0x4c] sm:$0xff]
        %v3499 = vld [vmem:[#allocation2 + $0x54] sm:$0x1]
        %v3500 = vpack.c.bf16 %v3490, %v3489
        %v3501 = vpack.c.bf16 %v3492, %v3491
        %v3502 = vpack.c.bf16 %v3494, %v3493
        %v3503 = vpack.c.bf16 %v3496, %v3495
        %v3504 = vpack.c.bf16 %v3498, %v3497
        %v3505 = vpack.c.bf16 %v3499, %v3499
        %s3506 = scalar_lea.vmem [#allocation9], 48
        %v3507 = vld [vmem:[%s3506] sm:$0xf]
        %v3508 = vld [vmem:[%s3506 + $0x4] sm:$0xf]
        %v3509 = vld [vmem:[%s3506 + $0x8] sm:$0x3]
        %v3513 = vunpack.c.l.b16 %v3507
        %v3514 = vunpack.c.l.b16 %v3508
        %v3515 = vunpack.c.l.b16 %v3509
        %v3516 = vpack.c.b16 %v3514, %v3513
        %v3517 = vpack.c.b16 %v3515, %v3515
        %v3520 = vsel %vm3098, %v3500, 0
        %v3523 = vsel %vm3098, %v3501, 0
        %v3526 = vsel %vm3098, %v3502, 0
        %v3529 = vsel %vm3098, %v3503, 0
        %v3532 = vsel %vm3098, %v3504, 0
        %v3535 = vsel %vm3098, %v3505, 0
        %v3538 = vsel %vm3179, %v3517, 0
        %3540 = vmatpush.bf16.msra.mxu0 0
        %3541 = vmatpush.bf16.msra.mxu0 0
        %3542 = vmatpush.bf16.msra.mxu0 0
        %3543 = vmatpush.bf16.msra.mxu0 0
        %3544 = vmatpush.bf16.msra.mxu0 0
        %3545 = vmatpush.bf16.msra.mxu0 0
        %3546 = vmatpush.bf16.msra.mxu0 %v3538
        %3547 = vmatpush.bf16.msra.mxu0 %v3516
        %3548 = vmatmul.bf16.gmra.mxu0 %v3520
        %v3549 = vpop.f32.mrf.mxu0
        %v3550 = vadd.f32 0.0, %v3549
        %v3551 = vpop.f32.mrf.mxu0
        %v3552 = vadd.f32 0.0, %v3551
        %3553 = vmatmul.bf16.gmra.mxu0 %v3523
        %v3554 = vpop.f32.mrf.mxu0
        %v3555 = vadd.f32 0.0, %v3554
        %v3556 = vpop.f32.mrf.mxu0
        %v3557 = vadd.f32 0.0, %v3556
        %3558 = vmatmul.bf16.gmra.mxu0 %v3526
        %v3559 = vpop.f32.mrf.mxu0
        %v3560 = vadd.f32 0.0, %v3559
        %v3561 = vpop.f32.mrf.mxu0
        %v3562 = vadd.f32 0.0, %v3561
        %3563 = vmatmul.bf16.gmra.mxu0 %v3529
        %v3564 = vpop.f32.mrf.mxu0
        %v3565 = vadd.f32 0.0, %v3564
        %v3566 = vpop.f32.mrf.mxu0
        %v3567 = vadd.f32 0.0, %v3566
        %3568 = vmatmul.bf16.gmra.mxu0 %v3532
        %v3569 = vpop.f32.mrf.mxu0
        %v3570 = vadd.f32 0.0, %v3569
        %v3571 = vpop.f32.mrf.mxu0
        %v3572 = vadd.f32 0.0, %v3571
        %3573 = vmatmul.bf16.gmra.mxu0 %v3535
        %v3574 = vpop.f32.mrf.mxu0
        %v3575 = vadd.f32 0.0, %v3574
        %v3576 = vpop.f32.mrf.mxu0
        %3577 = vdwg.mxu0
        %v3578 = vadd.f32 %v3478, %v3550
        %v3579 = vadd.f32 %v3479, %v3552
        %v3580 = vadd.f32 %v3480, %v3555
        %v3581 = vadd.f32 %v3481, %v3557
        %v3582 = vadd.f32 %v3482, %v3560
        %v3583 = vadd.f32 %v3483, %v3562
        %v3584 = vadd.f32 %v3484, %v3565
        %v3585 = vadd.f32 %v3485, %v3567
        %v3586 = vadd.f32 %v3486, %v3570
        %v3587 = vadd.f32 %v3487, %v3572
        %v3588 = vadd.f32 %v3488, %v3575
        %v3589 = vld [vmem:[#allocation2 + $0x5] sm:$0xff]
        %v3590 = vld [vmem:[#allocation2 + $0xd] sm:$0xff]
        %v3591 = vld [vmem:[#allocation2 + $0x15] sm:$0xff]
        %v3592 = vld [vmem:[#allocation2 + $0x1d] sm:$0xff]
        %v3593 = vld [vmem:[#allocation2 + $0x25] sm:$0xff]
        %v3594 = vld [vmem:[#allocation2 + $0x2d] sm:$0xff]
        %v3595 = vld [vmem:[#allocation2 + $0x35] sm:$0xff]
        %v3596 = vld [vmem:[#allocation2 + $0x3d] sm:$0xff]
        %v3597 = vld [vmem:[#allocation2 + $0x45] sm:$0xff]
        %v3598 = vld [vmem:[#allocation2 + $0x4d] sm:$0xff]
        %v3599 = vld [vmem:[#allocation2 + $0x55] sm:$0x1]
        %v3600 = vpack.c.bf16 %v3590, %v3589
        %v3601 = vpack.c.bf16 %v3592, %v3591
        %v3602 = vpack.c.bf16 %v3594, %v3593
        %v3603 = vpack.c.bf16 %v3596, %v3595
        %v3604 = vpack.c.bf16 %v3598, %v3597
        %v3605 = vpack.c.bf16 %v3599, %v3599
        %s3606 = scalar_lea.vmem [#allocation9], 60
        %v3607 = vld [vmem:[%s3606] sm:$0xf]
        %v3608 = vld [vmem:[%s3606 + $0x4] sm:$0xf]
        %v3609 = vld [vmem:[%s3606 + $0x8] sm:$0x3]
        %v3613 = vunpack.c.l.b16 %v3607
        %v3614 = vunpack.c.l.b16 %v3608
        %v3615 = vunpack.c.l.b16 %v3609
        %v3616 = vpack.c.b16 %v3614, %v3613
        %v3617 = vpack.c.b16 %v3615, %v3615
        %v3620 = vsel %vm3098, %v3600, 0
        %v3623 = vsel %vm3098, %v3601, 0
        %v3626 = vsel %vm3098, %v3602, 0
        %v3629 = vsel %vm3098, %v3603, 0
        %v3632 = vsel %vm3098, %v3604, 0
        %v3635 = vsel %vm3098, %v3605, 0
        %v3638 = vsel %vm3179, %v3617, 0
        %3640 = vmatpush.bf16.msra.mxu0 0
        %3641 = vmatpush.bf16.msra.mxu0 0
        %3642 = vmatpush.bf16.msra.mxu0 0
        %3643 = vmatpush.bf16.msra.mxu0 0
        %3644 = vmatpush.bf16.msra.mxu0 0
        %3645 = vmatpush.bf16.msra.mxu0 0
        %3646 = vmatpush.bf16.msra.mxu0 %v3638
        %3647 = vmatpush.bf16.msra.mxu0 %v3616
        %3648 = vmatmul.bf16.gmra.mxu0 %v3620
        %v3649 = vpop.f32.mrf.mxu0
        %v3650 = vadd.f32 0.0, %v3649
        %v3651 = vpop.f32.mrf.mxu0
        %v3652 = vadd.f32 0.0, %v3651
        %3653 = vmatmul.bf16.gmra.mxu0 %v3623
        %v3654 = vpop.f32.mrf.mxu0
        %v3655 = vadd.f32 0.0, %v3654
        %v3656 = vpop.f32.mrf.mxu0
        %v3657 = vadd.f32 0.0, %v3656
        %3658 = vmatmul.bf16.gmra.mxu0 %v3626
        %v3659 = vpop.f32.mrf.mxu0
        %v3660 = vadd.f32 0.0, %v3659
        %v3661 = vpop.f32.mrf.mxu0
        %v3662 = vadd.f32 0.0, %v3661
        %3663 = vmatmul.bf16.gmra.mxu0 %v3629
        %v3664 = vpop.f32.mrf.mxu0
        %v3665 = vadd.f32 0.0, %v3664
        %v3666 = vpop.f32.mrf.mxu0
        %v3667 = vadd.f32 0.0, %v3666
        %3668 = vmatmul.bf16.gmra.mxu0 %v3632
        %v3669 = vpop.f32.mrf.mxu0
        %v3670 = vadd.f32 0.0, %v3669
        %v3671 = vpop.f32.mrf.mxu0
        %v3672 = vadd.f32 0.0, %v3671
        %3673 = vmatmul.bf16.gmra.mxu0 %v3635
        %v3674 = vpop.f32.mrf.mxu0
        %v3675 = vadd.f32 0.0, %v3674
        %v3676 = vpop.f32.mrf.mxu0
        %3677 = vdwg.mxu0
        %v3678 = vadd.f32 %v3578, %v3650
        %v3679 = vadd.f32 %v3579, %v3652
        %v3680 = vadd.f32 %v3580, %v3655
        %v3681 = vadd.f32 %v3581, %v3657
        %v3682 = vadd.f32 %v3582, %v3660
        %v3683 = vadd.f32 %v3583, %v3662
        %v3684 = vadd.f32 %v3584, %v3665
        %v3685 = vadd.f32 %v3585, %v3667
        %v3686 = vadd.f32 %v3586, %v3670
        %v3687 = vadd.f32 %v3587, %v3672
        %v3688 = vadd.f32 %v3588, %v3675
        %v3689 = vld [vmem:[#allocation2 + $0x6] sm:$0xff]
        %v3690 = vld [vmem:[#allocation2 + $0xe] sm:$0xff]
        %v3691 = vld [vmem:[#allocation2 + $0x16] sm:$0xff]
        %v3692 = vld [vmem:[#allocation2 + $0x1e] sm:$0xff]
        %v3693 = vld [vmem:[#allocation2 + $0x26] sm:$0xff]
        %v3694 = vld [vmem:[#allocation2 + $0x2e] sm:$0xff]
        %v3695 = vld [vmem:[#allocation2 + $0x36] sm:$0xff]
        %v3696 = vld [vmem:[#allocation2 + $0x3e] sm:$0xff]
        %v3697 = vld [vmem:[#allocation2 + $0x46] sm:$0xff]
        %v3698 = vld [vmem:[#allocation2 + $0x4e] sm:$0xff]
        %v3699 = vld [vmem:[#allocation2 + $0x56] sm:$0x1]
        %v3700 = vpack.c.bf16 %v3690, %v3689
        %v3701 = vpack.c.bf16 %v3692, %v3691
        %v3702 = vpack.c.bf16 %v3694, %v3693
        %v3703 = vpack.c.bf16 %v3696, %v3695
        %v3704 = vpack.c.bf16 %v3698, %v3697
        %v3705 = vpack.c.bf16 %v3699, %v3699
        %s3706 = scalar_lea.vmem [#allocation9], 72
        %v3707 = vld [vmem:[%s3706] sm:$0xf]
        %v3708 = vld [vmem:[%s3706 + $0x4] sm:$0xf]
        %v3709 = vld [vmem:[%s3706 + $0x8] sm:$0x3]
        %v3713 = vunpack.c.l.b16 %v3707
        %v3714 = vunpack.c.l.b16 %v3708
        %v3715 = vunpack.c.l.b16 %v3709
        %v3716 = vpack.c.b16 %v3714, %v3713
        %v3717 = vpack.c.b16 %v3715, %v3715
        %v3720 = vsel %vm3098, %v3700, 0
        %v3723 = vsel %vm3098, %v3701, 0
        %v3726 = vsel %vm3098, %v3702, 0
        %v3729 = vsel %vm3098, %v3703, 0
        %v3732 = vsel %vm3098, %v3704, 0
        %v3735 = vsel %vm3098, %v3705, 0
        %v3738 = vsel %vm3179, %v3717, 0
        %3740 = vmatpush.bf16.msra.mxu0 0
        %3741 = vmatpush.bf16.msra.mxu0 0
        %3742 = vmatpush.bf16.msra.mxu0 0
        %3743 = vmatpush.bf16.msra.mxu0 0
        %3744 = vmatpush.bf16.msra.mxu0 0
        %3745 = vmatpush.bf16.msra.mxu0 0
        %3746 = vmatpush.bf16.msra.mxu0 %v3738
        %3747 = vmatpush.bf16.msra.mxu0 %v3716
        %3748 = vmatmul.bf16.gmra.mxu0 %v3720
        %v3749 = vpop.f32.mrf.mxu0
        %v3750 = vadd.f32 0.0, %v3749
        %v3751 = vpop.f32.mrf.mxu0
        %v3752 = vadd.f32 0.0, %v3751
        %3753 = vmatmul.bf16.gmra.mxu0 %v3723
        %v3754 = vpop.f32.mrf.mxu0
        %v3755 = vadd.f32 0.0, %v3754
        %v3756 = vpop.f32.mrf.mxu0
        %v3757 = vadd.f32 0.0, %v3756
        %3758 = vmatmul.bf16.gmra.mxu0 %v3726
        %v3759 = vpop.f32.mrf.mxu0
        %v3760 = vadd.f32 0.0, %v3759
        %v3761 = vpop.f32.mrf.mxu0
        %v3762 = vadd.f32 0.0, %v3761
        %3763 = vmatmul.bf16.gmra.mxu0 %v3729
        %v3764 = vpop.f32.mrf.mxu0
        %v3765 = vadd.f32 0.0, %v3764
        %v3766 = vpop.f32.mrf.mxu0
        %v3767 = vadd.f32 0.0, %v3766
        %3768 = vmatmul.bf16.gmra.mxu0 %v3732
        %v3769 = vpop.f32.mrf.mxu0
        %v3770 = vadd.f32 0.0, %v3769
        %v3771 = vpop.f32.mrf.mxu0
        %v3772 = vadd.f32 0.0, %v3771
        %3773 = vmatmul.bf16.gmra.mxu0 %v3735
        %v3774 = vpop.f32.mrf.mxu0
        %v3775 = vadd.f32 0.0, %v3774
        %v3776 = vpop.f32.mrf.mxu0
        %3777 = vdwg.mxu0
        %v3778 = vadd.f32 %v3678, %v3750
        %v3779 = vadd.f32 %v3679, %v3752
        %v3780 = vadd.f32 %v3680, %v3755
        %v3781 = vadd.f32 %v3681, %v3757
        %v3782 = vadd.f32 %v3682, %v3760
        %v3783 = vadd.f32 %v3683, %v3762
        %v3784 = vadd.f32 %v3684, %v3765
        %v3785 = vadd.f32 %v3685, %v3767
        %v3786 = vadd.f32 %v3686, %v3770
        %v3787 = vadd.f32 %v3687, %v3772
        %v3788 = vadd.f32 %v3688, %v3775
        %v3789 = vld [vmem:[#allocation2 + $0x7] sm:$0xff]
        %v3790 = vld [vmem:[#allocation2 + $0xf] sm:$0xff]
        %v3791 = vld [vmem:[#allocation2 + $0x17] sm:$0xff]
        %v3792 = vld [vmem:[#allocation2 + $0x1f] sm:$0xff]
        %v3793 = vld [vmem:[#allocation2 + $0x27] sm:$0xff]
        %v3794 = vld [vmem:[#allocation2 + $0x2f] sm:$0xff]
        %v3795 = vld [vmem:[#allocation2 + $0x37] sm:$0xff]
        %v3796 = vld [vmem:[#allocation2 + $0x3f] sm:$0xff]
        %v3797 = vld [vmem:[#allocation2 + $0x47] sm:$0xff]
        %v3798 = vld [vmem:[#allocation2 + $0x4f] sm:$0xff]
        %v3799 = vld [vmem:[#allocation2 + $0x57] sm:$0x1]
        %v3800 = vpack.c.bf16 %v3790, %v3789
        %v3801 = vpack.c.bf16 %v3792, %v3791
        %v3802 = vpack.c.bf16 %v3794, %v3793
        %v3803 = vpack.c.bf16 %v3796, %v3795
        %v3804 = vpack.c.bf16 %v3798, %v3797
        %v3805 = vpack.c.bf16 %v3799, %v3799
        %s3806 = scalar_lea.vmem [#allocation9], 84
        %v3807 = vld [vmem:[%s3806] sm:$0xf]
        %v3808 = vld [vmem:[%s3806 + $0x4] sm:$0xf]
        %v3809 = vld [vmem:[%s3806 + $0x8] sm:$0x3]
        %v3813 = vunpack.c.l.b16 %v3807
        %v3814 = vunpack.c.l.b16 %v3808
        %v3815 = vunpack.c.l.b16 %v3809
        %v3816 = vpack.c.b16 %v3814, %v3813
        %v3817 = vpack.c.b16 %v3815, %v3815
        %v3820 = vsel %vm3098, %v3800, 0
        %v3823 = vsel %vm3098, %v3801, 0
        %v3826 = vsel %vm3098, %v3802, 0
        %v3829 = vsel %vm3098, %v3803, 0
        %v3832 = vsel %vm3098, %v3804, 0
        %v3835 = vsel %vm3098, %v3805, 0
        %v3838 = vsel %vm3179, %v3817, 0
        %3840 = vmatpush.bf16.msra.mxu0 0
        %3841 = vmatpush.bf16.msra.mxu0 0
        %3842 = vmatpush.bf16.msra.mxu0 0
        %3843 = vmatpush.bf16.msra.mxu0 0
        %3844 = vmatpush.bf16.msra.mxu0 0
        %3845 = vmatpush.bf16.msra.mxu0 0
        %3846 = vmatpush.bf16.msra.mxu0 %v3838
        %3847 = vmatpush.bf16.msra.mxu0 %v3816
        %3848 = vmatmul.bf16.gmra.mxu0 %v3820
        %v3849 = vpop.f32.mrf.mxu0
        %v3850 = vadd.f32 0.0, %v3849
        %v3851 = vpop.f32.mrf.mxu0
        %v3852 = vadd.f32 0.0, %v3851
        %3853 = vmatmul.bf16.gmra.mxu0 %v3823
        %v3854 = vpop.f32.mrf.mxu0
        %v3855 = vadd.f32 0.0, %v3854
        %v3856 = vpop.f32.mrf.mxu0
        %v3857 = vadd.f32 0.0, %v3856
        %3858 = vmatmul.bf16.gmra.mxu0 %v3826
        %v3859 = vpop.f32.mrf.mxu0
        %v3860 = vadd.f32 0.0, %v3859
        %v3861 = vpop.f32.mrf.mxu0
        %v3862 = vadd.f32 0.0, %v3861
        %3863 = vmatmul.bf16.gmra.mxu0 %v3829
        %v3864 = vpop.f32.mrf.mxu0
        %v3865 = vadd.f32 0.0, %v3864
        %v3866 = vpop.f32.mrf.mxu0
        %v3867 = vadd.f32 0.0, %v3866
        %3868 = vmatmul.bf16.gmra.mxu0 %v3832
        %v3869 = vpop.f32.mrf.mxu0
        %v3870 = vadd.f32 0.0, %v3869
        %v3871 = vpop.f32.mrf.mxu0
        %v3872 = vadd.f32 0.0, %v3871
        %3873 = vmatmul.bf16.gmra.mxu0 %v3835
        %v3874 = vpop.f32.mrf.mxu0
        %v3875 = vadd.f32 0.0, %v3874
        %v3876 = vpop.f32.mrf.mxu0
        %3877 = vdwg.mxu0
        %v3878 = vadd.f32 %v3778, %v3850
        %v3879 = vadd.f32 %v3779, %v3852
        %v3880 = vadd.f32 %v3780, %v3855
        %v3881 = vadd.f32 %v3781, %v3857
        %v3882 = vadd.f32 %v3782, %v3860
        %v3883 = vadd.f32 %v3783, %v3862
        %v3884 = vadd.f32 %v3784, %v3865
        %v3885 = vadd.f32 %v3785, %v3867
        %v3886 = vadd.f32 %v3786, %v3870
        %v3887 = vadd.f32 %v3787, %v3872
        %v3888 = vadd.f32 %v3788, %v3875
        %v3889 = vld [vmem:[#allocation2 + $0x8] sm:$0xff]
        %v3890 = vld [vmem:[#allocation2 + $0x10] sm:$0xff]
        %v3891 = vld [vmem:[#allocation2 + $0x18] sm:$0xff]
        %v3892 = vld [vmem:[#allocation2 + $0x20] sm:$0xff]
        %v3893 = vld [vmem:[#allocation2 + $0x28] sm:$0xff]
        %v3894 = vld [vmem:[#allocation2 + $0x30] sm:$0xff]
        %v3895 = vld [vmem:[#allocation2 + $0x38] sm:$0xff]
        %v3896 = vld [vmem:[#allocation2 + $0x40] sm:$0xff]
        %v3897 = vld [vmem:[#allocation2 + $0x48] sm:$0xff]
        %v3898 = vld [vmem:[#allocation2 + $0x50] sm:$0xff]
        %v3899 = vld [vmem:[#allocation2 + $0x58] sm:$0x1]
        %v3900 = vpack.c.bf16 %v3890, %v3889
        %v3901 = vpack.c.bf16 %v3892, %v3891
        %v3902 = vpack.c.bf16 %v3894, %v3893
        %v3903 = vpack.c.bf16 %v3896, %v3895
        %v3904 = vpack.c.bf16 %v3898, %v3897
        %v3905 = vpack.c.bf16 %v3899, %v3899
        %s3906 = scalar_lea.vmem [#allocation9], 96
        %v3907 = vld [vmem:[%s3906] sm:$0xf]
        %v3908 = vld [vmem:[%s3906 + $0x4] sm:$0xf]
        %v3909 = vld [vmem:[%s3906 + $0x8] sm:$0x3]
        %v3913 = vunpack.c.l.b16 %v3907
        %v3914 = vunpack.c.l.b16 %v3908
        %v3915 = vunpack.c.l.b16 %v3909
        %v3916 = vpack.c.b16 %v3914, %v3913
        %v3917 = vpack.c.b16 %v3915, %v3915
        %v3920 = vsel %vm3098, %v3900, 0
        %v3923 = vsel %vm3098, %v3901, 0
        %v3926 = vsel %vm3098, %v3902, 0
        %v3929 = vsel %vm3098, %v3903, 0
        %v3932 = vsel %vm3098, %v3904, 0
        %v3935 = vsel %vm3098, %v3905, 0
        %v3938 = vsel %vm3179, %v3917, 0
        %3940 = vmatpush.bf16.msra.mxu0 0
        %3941 = vmatpush.bf16.msra.mxu0 0
        %3942 = vmatpush.bf16.msra.mxu0 0
        %3943 = vmatpush.bf16.msra.mxu0 0
        %3944 = vmatpush.bf16.msra.mxu0 0
        %3945 = vmatpush.bf16.msra.mxu0 0
        %3946 = vmatpush.bf16.msra.mxu0 %v3938
        %3947 = vmatpush.bf16.msra.mxu0 %v3916
        %3948 = vmatmul.bf16.gmra.mxu0 %v3920
        %v3949 = vpop.f32.mrf.mxu0
        %v3950 = vadd.f32 0.0, %v3949
        %v3951 = vpop.f32.mrf.mxu0
        %v3952 = vadd.f32 0.0, %v3951
        %3953 = vmatmul.bf16.gmra.mxu0 %v3923
        %v3954 = vpop.f32.mrf.mxu0
        %v3955 = vadd.f32 0.0, %v3954
        %v3956 = vpop.f32.mrf.mxu0
        %v3957 = vadd.f32 0.0, %v3956
        %3958 = vmatmul.bf16.gmra.mxu0 %v3926
        %v3959 = vpop.f32.mrf.mxu0
        %v3960 = vadd.f32 0.0, %v3959
        %v3961 = vpop.f32.mrf.mxu0
        %v3962 = vadd.f32 0.0, %v3961
        %3963 = vmatmul.bf16.gmra.mxu0 %v3929
        %v3964 = vpop.f32.mrf.mxu0
        %v3965 = vadd.f32 0.0, %v3964
        %v3966 = vpop.f32.mrf.mxu0
        %v3967 = vadd.f32 0.0, %v3966
        %3968 = vmatmul.bf16.gmra.mxu0 %v3932
        %v3969 = vpop.f32.mrf.mxu0
        %v3970 = vadd.f32 0.0, %v3969
        %v3971 = vpop.f32.mrf.mxu0
        %v3972 = vadd.f32 0.0, %v3971
        %3973 = vmatmul.bf16.gmra.mxu0 %v3935
        %v3974 = vpop.f32.mrf.mxu0
        %v3975 = vadd.f32 0.0, %v3974
        %v3976 = vpop.f32.mrf.mxu0
        %3977 = vdwg.mxu0
        %v3978 = vadd.f32 %v3878, %v3950
        %v3979 = vadd.f32 %v3879, %v3952
        %v3980 = vadd.f32 %v3880, %v3955
        %v3981 = vadd.f32 %v3881, %v3957
        %v3982 = vadd.f32 %v3882, %v3960
        %v3983 = vadd.f32 %v3883, %v3962
        %v3984 = vadd.f32 %v3884, %v3965
        %v3985 = vadd.f32 %v3885, %v3967
        %v3986 = vadd.f32 %v3886, %v3970
        %v3987 = vadd.f32 %v3887, %v3972
        %v3988 = vadd.f32 %v3888, %v3975
        %v3989 = vld [vmem:[#allocation2 + $0x9] sm:$0xff]
        %v3990 = vld [vmem:[#allocation2 + $0x11] sm:$0xff]
        %v3991 = vld [vmem:[#allocation2 + $0x19] sm:$0xff]
        %v3992 = vld [vmem:[#allocation2 + $0x21] sm:$0xff]
        %v3993 = vld [vmem:[#allocation2 + $0x29] sm:$0xff]
        %v3994 = vld [vmem:[#allocation2 + $0x31] sm:$0xff]
        %v3995 = vld [vmem:[#allocation2 + $0x39] sm:$0xff]
        %v3996 = vld [vmem:[#allocation2 + $0x41] sm:$0xff]
        %v3997 = vld [vmem:[#allocation2 + $0x49] sm:$0xff]
        %v3998 = vld [vmem:[#allocation2 + $0x51] sm:$0xff]
        %v3999 = vld [vmem:[#allocation2 + $0x59] sm:$0x1]
        %v4000 = vpack.c.bf16 %v3990, %v3989
        %v4001 = vpack.c.bf16 %v3992, %v3991
        %v4002 = vpack.c.bf16 %v3994, %v3993
        %v4003 = vpack.c.bf16 %v3996, %v3995
        %v4004 = vpack.c.bf16 %v3998, %v3997
        %v4005 = vpack.c.bf16 %v3999, %v3999
        %s4006 = scalar_lea.vmem [#allocation9], 108
        %v4007 = vld [vmem:[%s4006] sm:$0xf]
        %v4008 = vld [vmem:[%s4006 + $0x4] sm:$0xf]
        %v4009 = vld [vmem:[%s4006 + $0x8] sm:$0x3]
        %v4013 = vunpack.c.l.b16 %v4007
        %v4014 = vunpack.c.l.b16 %v4008
        %v4015 = vunpack.c.l.b16 %v4009
        %v4016 = vpack.c.b16 %v4014, %v4013
        %v4017 = vpack.c.b16 %v4015, %v4015
        %v4020 = vsel %vm3098, %v4000, 0
        %v4023 = vsel %vm3098, %v4001, 0
        %v4026 = vsel %vm3098, %v4002, 0
        %v4029 = vsel %vm3098, %v4003, 0
        %v4032 = vsel %vm3098, %v4004, 0
        %v4035 = vsel %vm3098, %v4005, 0
        %v4038 = vsel %vm3179, %v4017, 0
        %4040 = vmatpush.bf16.msra.mxu0 0
        %4041 = vmatpush.bf16.msra.mxu0 0
        %4042 = vmatpush.bf16.msra.mxu0 0
        %4043 = vmatpush.bf16.msra.mxu0 0
        %4044 = vmatpush.bf16.msra.mxu0 0
        %4045 = vmatpush.bf16.msra.mxu0 0
        %4046 = vmatpush.bf16.msra.mxu0 %v4038
        %4047 = vmatpush.bf16.msra.mxu0 %v4016
        %4048 = vmatmul.bf16.gmra.mxu0 %v4020
        %v4049 = vpop.f32.mrf.mxu0
        %v4050 = vadd.f32 0.0, %v4049
        %v4051 = vpop.f32.mrf.mxu0
        %v4052 = vadd.f32 0.0, %v4051
        %4053 = vmatmul.bf16.gmra.mxu0 %v4023
        %v4054 = vpop.f32.mrf.mxu0
        %v4055 = vadd.f32 0.0, %v4054
        %v4056 = vpop.f32.mrf.mxu0
        %v4057 = vadd.f32 0.0, %v4056
        %4058 = vmatmul.bf16.gmra.mxu0 %v4026
        %v4059 = vpop.f32.mrf.mxu0
        %v4060 = vadd.f32 0.0, %v4059
        %v4061 = vpop.f32.mrf.mxu0
        %v4062 = vadd.f32 0.0, %v4061
        %4063 = vmatmul.bf16.gmra.mxu0 %v4029
        %v4064 = vpop.f32.mrf.mxu0
        %v4065 = vadd.f32 0.0, %v4064
        %v4066 = vpop.f32.mrf.mxu0
        %v4067 = vadd.f32 0.0, %v4066
        %4068 = vmatmul.bf16.gmra.mxu0 %v4032
        %v4069 = vpop.f32.mrf.mxu0
        %v4070 = vadd.f32 0.0, %v4069
        %v4071 = vpop.f32.mrf.mxu0
        %v4072 = vadd.f32 0.0, %v4071
        %4073 = vmatmul.bf16.gmra.mxu0 %v4035
        %v4074 = vpop.f32.mrf.mxu0
        %v4075 = vadd.f32 0.0, %v4074
        %v4076 = vpop.f32.mrf.mxu0
        %4077 = vdwg.mxu0
        %v4078 = vadd.f32 %v3978, %v4050
        %v4079 = vadd.f32 %v3979, %v4052
        %v4080 = vadd.f32 %v3980, %v4055
        %v4081 = vadd.f32 %v3981, %v4057
        %v4082 = vadd.f32 %v3982, %v4060
        %v4083 = vadd.f32 %v3983, %v4062
        %v4084 = vadd.f32 %v3984, %v4065
        %v4085 = vadd.f32 %v3985, %v4067
        %v4086 = vadd.f32 %v3986, %v4070
        %v4087 = vadd.f32 %v3987, %v4072
        %v4088 = vadd.f32 %v3988, %v4075
        %v4089 = vld [vmem:[#allocation2 + $0xa] sm:$0xff]
        %v4090 = vld [vmem:[#allocation2 + $0x12] sm:$0xff]
        %v4091 = vld [vmem:[#allocation2 + $0x1a] sm:$0xff]
        %v4092 = vld [vmem:[#allocation2 + $0x22] sm:$0xff]
        %v4093 = vld [vmem:[#allocation2 + $0x2a] sm:$0xff]
        %v4094 = vld [vmem:[#allocation2 + $0x32] sm:$0xff]
        %v4095 = vld [vmem:[#allocation2 + $0x3a] sm:$0xff]
        %v4096 = vld [vmem:[#allocation2 + $0x42] sm:$0xff]
        %v4097 = vld [vmem:[#allocation2 + $0x4a] sm:$0xff]
        %v4098 = vld [vmem:[#allocation2 + $0x52] sm:$0xff]
        %v4099 = vld [vmem:[#allocation2 + $0x5a] sm:$0x1]
        %v4100 = vpack.c.bf16 %v4090, %v4089
        %v4101 = vpack.c.bf16 %v4092, %v4091
        %v4102 = vpack.c.bf16 %v4094, %v4093
        %v4103 = vpack.c.bf16 %v4096, %v4095
        %v4104 = vpack.c.bf16 %v4098, %v4097
        %v4105 = vpack.c.bf16 %v4099, %v4099
        %s4106 = scalar_lea.vmem [#allocation9], 120
        %v4107 = vld [vmem:[%s4106] sm:$0xf]
        %v4108 = vld [vmem:[%s4106 + $0x4] sm:$0xf]
        %v4109 = vld [vmem:[%s4106 + $0x8] sm:$0x3]
        %v4113 = vunpack.c.l.b16 %v4107
        %v4114 = vunpack.c.l.b16 %v4108
        %v4115 = vunpack.c.l.b16 %v4109
        %v4116 = vpack.c.b16 %v4114, %v4113
        %v4117 = vpack.c.b16 %v4115, %v4115
        %v4120 = vsel %vm3098, %v4100, 0
        %v4123 = vsel %vm3098, %v4101, 0
        %v4126 = vsel %vm3098, %v4102, 0
        %v4129 = vsel %vm3098, %v4103, 0
        %v4132 = vsel %vm3098, %v4104, 0
        %v4135 = vsel %vm3098, %v4105, 0
        %v4138 = vsel %vm3179, %v4117, 0
        %4140 = vmatpush.bf16.msra.mxu0 0
        %4141 = vmatpush.bf16.msra.mxu0 0
        %4142 = vmatpush.bf16.msra.mxu0 0
        %4143 = vmatpush.bf16.msra.mxu0 0
        %4144 = vmatpush.bf16.msra.mxu0 0
        %4145 = vmatpush.bf16.msra.mxu0 0
        %4146 = vmatpush.bf16.msra.mxu0 %v4138
        %4147 = vmatpush.bf16.msra.mxu0 %v4116
        %4148 = vmatmul.bf16.gmra.mxu0 %v4120
        %v4149 = vpop.f32.mrf.mxu0
        %v4150 = vadd.f32 0.0, %v4149
        %v4151 = vpop.f32.mrf.mxu0
        %v4152 = vadd.f32 0.0, %v4151
        %4153 = vmatmul.bf16.gmra.mxu0 %v4123
        %v4154 = vpop.f32.mrf.mxu0
        %v4155 = vadd.f32 0.0, %v4154
        %v4156 = vpop.f32.mrf.mxu0
        %v4157 = vadd.f32 0.0, %v4156
        %4158 = vmatmul.bf16.gmra.mxu0 %v4126
        %v4159 = vpop.f32.mrf.mxu0
        %v4160 = vadd.f32 0.0, %v4159
        %v4161 = vpop.f32.mrf.mxu0
        %v4162 = vadd.f32 0.0, %v4161
        %4163 = vmatmul.bf16.gmra.mxu0 %v4129
        %v4164 = vpop.f32.mrf.mxu0
        %v4165 = vadd.f32 0.0, %v4164
        %v4166 = vpop.f32.mrf.mxu0
        %v4167 = vadd.f32 0.0, %v4166
        %4168 = vmatmul.bf16.gmra.mxu0 %v4132
        %v4169 = vpop.f32.mrf.mxu0
        %v4170 = vadd.f32 0.0, %v4169
        %v4171 = vpop.f32.mrf.mxu0
        %v4172 = vadd.f32 0.0, %v4171
        %4173 = vmatmul.bf16.gmra.mxu0 %v4135
        %v4174 = vpop.f32.mrf.mxu0
        %v4175 = vadd.f32 0.0, %v4174
        %v4176 = vpop.f32.mrf.mxu0
        %4177 = vdwg.mxu0
        %v4178 = vadd.f32 %v4078, %v4150
        %v4179 = vadd.f32 %v4079, %v4152
        %v4180 = vadd.f32 %v4080, %v4155
        %v4181 = vadd.f32 %v4081, %v4157
        %v4182 = vadd.f32 %v4082, %v4160
        %v4183 = vadd.f32 %v4083, %v4162
        %v4184 = vadd.f32 %v4084, %v4165
        %v4185 = vadd.f32 %v4085, %v4167
        %v4186 = vadd.f32 %v4086, %v4170
        %v4187 = vadd.f32 %v4087, %v4172
        %v4188 = vadd.f32 %v4088, %v4175
        %v4189 = vld [vmem:[%s16] sm:$0x1]
        %v4190 = vld [vmem:[%s16 + $0x1] sm:$0x1]
        %v4191 = vperm.slane %v4189, 0
        %v4192 = vmul.f32 %v4178, %v4191
        %v4193 = vmul.f32 %v4179, %v4191
        %v4194 = vmul.f32 %v4180, %v4191
        %v4195 = vmul.f32 %v4181, %v4191
        %v4196 = vmul.f32 %v4182, %v4191
        %v4197 = vmul.f32 %v4183, %v4191
        %v4198 = vmul.f32 %v4184, %v4191
        %v4199 = vmul.f32 %v4185, %v4191
        %v4200 = vmul.f32 %v4186, %v4191
        %v4201 = vmul.f32 %v4187, %v4191
        %v4202 = vmul.f32 %v4188, %v4191
        %v4203 = vperm.slane %v4190, 0
        %v4204 = vadd.f32 %v4192, %v4203
        %v4205 = vadd.f32 %v4193, %v4203
        %v4206 = vadd.f32 %v4194, %v4203
        %v4207 = vadd.f32 %v4195, %v4203
        %v4208 = vadd.f32 %v4196, %v4203
        %v4209 = vadd.f32 %v4197, %v4203
        %v4210 = vadd.f32 %v4198, %v4203
        %v4211 = vadd.f32 %v4199, %v4203
        %v4212 = vadd.f32 %v4200, %v4203
        %v4213 = vadd.f32 %v4201, %v4203
        %v4214 = vadd.f32 %v4202, %v4203
        %v4215 = vmax.f32 %v4204, 0.0
        %v4216 = vmax.f32 %v4205, 0.0
        %v4217 = vmax.f32 %v4206, 0.0
        %v4218 = vmax.f32 %v4207, 0.0
        %v4219 = vmax.f32 %v4208, 0.0
        %v4220 = vmax.f32 %v4209, 0.0
        %v4221 = vmax.f32 %v4210, 0.0
        %v4222 = vmax.f32 %v4211, 0.0
        %v4223 = vmax.f32 %v4212, 0.0
        %v4224 = vmax.f32 %v4213, 0.0
        %v4225 = vmax.f32 %v4214, 0.0
        %4226 = vst [vmem:[#allocation2] sm:$0x7] 0.0
        %4227 = vst [vmem:[#allocation2 + $0x54] sm:$0x7] 0.0
        %4228 = vst.msk [vmem:[#allocation2 + $0x3] sm:$0xff] %vm2197, %v4215
        %4229 = vst.msk [vmem:[#allocation2 + $0xb] sm:$0xff] %vm2197, %v4216
        %4230 = vst.msk [vmem:[#allocation2 + $0x13] sm:$0xff] %vm2197, %v4217
        %4231 = vst.msk [vmem:[#allocation2 + $0x1b] sm:$0xff] %vm2197, %v4218
        %4232 = vst.msk [vmem:[#allocation2 + $0x23] sm:$0xff] %vm2197, %v4219
        %4233 = vst.msk [vmem:[#allocation2 + $0x2b] sm:$0xff] %vm2197, %v4220
        %4234 = vst.msk [vmem:[#allocation2 + $0x33] sm:$0xff] %vm2197, %v4221
        %4235 = vst.msk [vmem:[#allocation2 + $0x3b] sm:$0xff] %vm2197, %v4222
        %4236 = vst.msk [vmem:[#allocation2 + $0x43] sm:$0xff] %vm2197, %v4223
        %4237 = vst.msk [vmem:[#allocation2 + $0x4b] sm:$0xff] %vm2197, %v4224
        %4238 = vst.msk [vmem:[#allocation2 + $0x53] sm:$0x1] %vm2208, %v4225
        %v4239 = vld [vmem:[#allocation2] sm:$0xff]
        %v4240 = vld [vmem:[#allocation2 + $0x8] sm:$0xff]
        %v4241 = vld [vmem:[#allocation2 + $0x10] sm:$0xff]
        %v4242 = vld [vmem:[#allocation2 + $0x18] sm:$0xff]
        %v4243 = vld [vmem:[#allocation2 + $0x20] sm:$0xff]
        %v4244 = vld [vmem:[#allocation2 + $0x28] sm:$0xff]
        %v4245 = vld [vmem:[#allocation2 + $0x30] sm:$0xff]
        %v4246 = vld [vmem:[#allocation2 + $0x38] sm:$0xff]
        %v4247 = vld [vmem:[#allocation2 + $0x40] sm:$0xff]
        %v4248 = vld [vmem:[#allocation2 + $0x48] sm:$0xff]
        %v4249 = vld [vmem:[#allocation2 + $0x50] sm:$0x1]
        %v4250 = vpack.c.bf16 %v4240, %v4239
        %v4251 = vpack.c.bf16 %v4242, %v4241
        %v4252 = vpack.c.bf16 %v4244, %v4243
        %v4253 = vpack.c.bf16 %v4246, %v4245
        %v4254 = vpack.c.bf16 %v4248, %v4247
        %v4255 = vpack.c.bf16 %v4249, %v4249
        %v4256 = vld [vmem:[#allocation10] sm:$0xf]
        %v4257 = vld [vmem:[#allocation10 + $0x4] sm:$0xf]
        %v4258 = vld [vmem:[#allocation10 + $0x8] sm:$0xf]
        %v4259 = vld [vmem:[#allocation10 + $0xc] sm:$0xf]
        %v4260 = vld [vmem:[#allocation10 + $0x10] sm:$0xf]
        %v4261 = vld [vmem:[#allocation10 + $0x14] sm:$0xf]
        %v4262 = vld [vmem:[#allocation10 + $0x18] sm:$0xf]
        %v4263 = vld [vmem:[#allocation10 + $0x1c] sm:$0xf]
        %v4264 = vld [vmem:[#allocation2 + $0x1] sm:$0xff]
        %v4265 = vld [vmem:[#allocation2 + $0x9] sm:$0xff]
        %v4266 = vld [vmem:[#allocation2 + $0x11] sm:$0xff]
        %v4267 = vld [vmem:[#allocation2 + $0x19] sm:$0xff]
        %v4268 = vld [vmem:[#allocation2 + $0x21] sm:$0xff]
        %v4269 = vld [vmem:[#allocation2 + $0x29] sm:$0xff]
        %v4270 = vld [vmem:[#allocation2 + $0x31] sm:$0xff]
        %v4271 = vld [vmem:[#allocation2 + $0x39] sm:$0xff]
        %v4272 = vld [vmem:[#allocation2 + $0x41] sm:$0xff]
        %v4273 = vld [vmem:[#allocation2 + $0x49] sm:$0xff]
        %v4274 = vld [vmem:[#allocation2 + $0x51] sm:$0x1]
        %v4275 = vpack.c.bf16 %v4265, %v4264
        %v4276 = vpack.c.bf16 %v4267, %v4266
        %v4277 = vpack.c.bf16 %v4269, %v4268
        %v4278 = vpack.c.bf16 %v4271, %v4270
        %v4279 = vpack.c.bf16 %v4273, %v4272
        %v4280 = vpack.c.bf16 %v4274, %v4274
        %s4281 = scalar_lea.vmem [#allocation10], 32
        %v4282 = vld [vmem:[%s4281] sm:$0xf]
        %v4283 = vld [vmem:[%s4281 + $0x4] sm:$0xf]
        %v4284 = vld [vmem:[%s4281 + $0x8] sm:$0xf]
        %v4285 = vld [vmem:[%s4281 + $0xc] sm:$0xf]
        %v4286 = vld [vmem:[%s4281 + $0x10] sm:$0xf]
        %v4287 = vld [vmem:[%s4281 + $0x14] sm:$0xf]
        %v4288 = vld [vmem:[%s4281 + $0x18] sm:$0xf]
        %v4289 = vld [vmem:[%s4281 + $0x1c] sm:$0xf]
        %v4298 = vunpack.c.l.b16 %v4282
        %v4299 = vunpack.c.l.b16 %v4283
        %v4300 = vunpack.c.l.b16 %v4284
        %v4301 = vunpack.c.l.b16 %v4285
        %v4302 = vunpack.c.l.b16 %v4286
        %v4303 = vunpack.c.l.b16 %v4287
        %v4304 = vunpack.c.l.b16 %v4288
        %v4305 = vunpack.c.l.b16 %v4289
        %v4306 = vpack.c.b16 %v4299, %v4298
        %v4307 = vpack.c.b16 %v4301, %v4300
        %v4308 = vpack.c.b16 %v4303, %v4302
        %v4309 = vpack.c.b16 %v4305, %v4304
        %v4315 = vsel %vm2197, %v4275, 0
        %v4318 = vsel %vm2197, %v4276, 0
        %v4321 = vsel %vm2197, %v4277, 0
        %v4324 = vsel %vm2197, %v4278, 0
        %v4327 = vsel %vm2197, %v4279, 0
        %v4330 = vsel %vm2197, %v4280, 0
        %4332 = vmatpush.bf16.msra.mxu0 0
        %4333 = vmatpush.bf16.msra.mxu0 0
        %4334 = vmatpush.bf16.msra.mxu0 0
        %4335 = vmatpush.bf16.msra.mxu0 0
        %4336 = vmatpush.bf16.msra.mxu0 %v4309
        %4337 = vmatpush.bf16.msra.mxu0 %v4308
        %4338 = vmatpush.bf16.msra.mxu0 %v4307
        %4339 = vmatpush.bf16.msra.mxu0 %v4306
        %4340 = vmatmul.bf16.gmra.mxu0 %v4315
        %v4341 = vpop.f32.mrf.mxu0
        %v4342 = vadd.f32 0.0, %v4341
        %v4343 = vpop.f32.mrf.mxu0
        %v4344 = vadd.f32 0.0, %v4343
        %4345 = vmatmul.bf16.gmra.mxu0 %v4318
        %v4346 = vpop.f32.mrf.mxu0
        %v4347 = vadd.f32 0.0, %v4346
        %v4348 = vpop.f32.mrf.mxu0
        %v4349 = vadd.f32 0.0, %v4348
        %4350 = vmatmul.bf16.gmra.mxu0 %v4321
        %v4351 = vpop.f32.mrf.mxu0
        %v4352 = vadd.f32 0.0, %v4351
        %v4353 = vpop.f32.mrf.mxu0
        %v4354 = vadd.f32 0.0, %v4353
        %4355 = vmatmul.bf16.gmra.mxu0 %v4324
        %v4356 = vpop.f32.mrf.mxu0
        %v4357 = vadd.f32 0.0, %v4356
        %v4358 = vpop.f32.mrf.mxu0
        %v4359 = vadd.f32 0.0, %v4358
        %4360 = vmatmul.bf16.gmra.mxu0 %v4327
        %v4361 = vpop.f32.mrf.mxu0
        %v4362 = vadd.f32 0.0, %v4361
        %v4363 = vpop.f32.mrf.mxu0
        %v4364 = vadd.f32 0.0, %v4363
        %4365 = vmatmul.bf16.gmra.mxu0 %v4330
        %v4366 = vpop.f32.mrf.mxu0
        %v4367 = vadd.f32 0.0, %v4366
        %v4368 = vpop.f32.mrf.mxu0
        %4369 = vdwg.mxu0
        %v4378 = vunpack.c.l.b16 %v4256
        %v4379 = vunpack.c.l.b16 %v4257
        %v4380 = vunpack.c.l.b16 %v4258
        %v4381 = vunpack.c.l.b16 %v4259
        %v4382 = vunpack.c.l.b16 %v4260
        %v4383 = vunpack.c.l.b16 %v4261
        %v4384 = vunpack.c.l.b16 %v4262
        %v4385 = vunpack.c.l.b16 %v4263
        %v4386 = vpack.c.b16 %v4379, %v4378
        %v4387 = vpack.c.b16 %v4381, %v4380
        %v4388 = vpack.c.b16 %v4383, %v4382
        %v4389 = vpack.c.b16 %v4385, %v4384
        %v4395 = vsel %vm2197, %v4250, 0
        %v4398 = vsel %vm2197, %v4251, 0
        %v4401 = vsel %vm2197, %v4252, 0
        %v4404 = vsel %vm2197, %v4253, 0
        %v4407 = vsel %vm2197, %v4254, 0
        %v4410 = vsel %vm2197, %v4255, 0
        %4412 = vmatpush.bf16.msra.mxu0 0
        %4413 = vmatpush.bf16.msra.mxu0 0
        %4414 = vmatpush.bf16.msra.mxu0 0
        %4415 = vmatpush.bf16.msra.mxu0 0
        %4416 = vmatpush.bf16.msra.mxu0 %v4389
        %4417 = vmatpush.bf16.msra.mxu0 %v4388
        %4418 = vmatpush.bf16.msra.mxu0 %v4387
        %4419 = vmatpush.bf16.msra.mxu0 %v4386
        %4420 = vmatmul.bf16.gmra.mxu0 %v4395
        %v4421 = vpop.f32.mrf.mxu0
        %v4422 = vadd.f32 %v4342, %v4421
        %v4423 = vpop.f32.mrf.mxu0
        %v4424 = vadd.f32 %v4344, %v4423
        %4425 = vmatmul.bf16.gmra.mxu0 %v4398
        %v4426 = vpop.f32.mrf.mxu0
        %v4427 = vadd.f32 %v4347, %v4426
        %v4428 = vpop.f32.mrf.mxu0
        %v4429 = vadd.f32 %v4349, %v4428
        %4430 = vmatmul.bf16.gmra.mxu0 %v4401
        %v4431 = vpop.f32.mrf.mxu0
        %v4432 = vadd.f32 %v4352, %v4431
        %v4433 = vpop.f32.mrf.mxu0
        %v4434 = vadd.f32 %v4354, %v4433
        %4435 = vmatmul.bf16.gmra.mxu0 %v4404
        %v4436 = vpop.f32.mrf.mxu0
        %v4437 = vadd.f32 %v4357, %v4436
        %v4438 = vpop.f32.mrf.mxu0
        %v4439 = vadd.f32 %v4359, %v4438
        %4440 = vmatmul.bf16.gmra.mxu0 %v4407
        %v4441 = vpop.f32.mrf.mxu0
        %v4442 = vadd.f32 %v4362, %v4441
        %v4443 = vpop.f32.mrf.mxu0
        %v4444 = vadd.f32 %v4364, %v4443
        %4445 = vmatmul.bf16.gmra.mxu0 %v4410
        %v4446 = vpop.f32.mrf.mxu0
        %v4447 = vadd.f32 %v4367, %v4446
        %v4448 = vpop.f32.mrf.mxu0
        %4449 = vdwg.mxu0
        %v4450 = vld [vmem:[#allocation2 + $0x2] sm:$0xff]
        %v4451 = vld [vmem:[#allocation2 + $0xa] sm:$0xff]
        %v4452 = vld [vmem:[#allocation2 + $0x12] sm:$0xff]
        %v4453 = vld [vmem:[#allocation2 + $0x1a] sm:$0xff]
        %v4454 = vld [vmem:[#allocation2 + $0x22] sm:$0xff]
        %v4455 = vld [vmem:[#allocation2 + $0x2a] sm:$0xff]
        %v4456 = vld [vmem:[#allocation2 + $0x32] sm:$0xff]
        %v4457 = vld [vmem:[#allocation2 + $0x3a] sm:$0xff]
        %v4458 = vld [vmem:[#allocation2 + $0x42] sm:$0xff]
        %v4459 = vld [vmem:[#allocation2 + $0x4a] sm:$0xff]
        %v4460 = vld [vmem:[#allocation2 + $0x52] sm:$0x1]
        %v4461 = vpack.c.bf16 %v4451, %v4450
        %v4462 = vpack.c.bf16 %v4453, %v4452
        %v4463 = vpack.c.bf16 %v4455, %v4454
        %v4464 = vpack.c.bf16 %v4457, %v4456
        %v4465 = vpack.c.bf16 %v4459, %v4458
        %v4466 = vpack.c.bf16 %v4460, %v4460
        %s4467 = scalar_lea.vmem [#allocation10], 64
        %v4468 = vld [vmem:[%s4467] sm:$0xf]
        %v4469 = vld [vmem:[%s4467 + $0x4] sm:$0xf]
        %v4470 = vld [vmem:[%s4467 + $0x8] sm:$0xf]
        %v4471 = vld [vmem:[%s4467 + $0xc] sm:$0xf]
        %v4472 = vld [vmem:[%s4467 + $0x10] sm:$0xf]
        %v4473 = vld [vmem:[%s4467 + $0x14] sm:$0xf]
        %v4474 = vld [vmem:[%s4467 + $0x18] sm:$0xf]
        %v4475 = vld [vmem:[%s4467 + $0x1c] sm:$0xf]
        %v4484 = vunpack.c.l.b16 %v4468
        %v4485 = vunpack.c.l.b16 %v4469
        %v4486 = vunpack.c.l.b16 %v4470
        %v4487 = vunpack.c.l.b16 %v4471
        %v4488 = vunpack.c.l.b16 %v4472
        %v4489 = vunpack.c.l.b16 %v4473
        %v4490 = vunpack.c.l.b16 %v4474
        %v4491 = vunpack.c.l.b16 %v4475
        %v4492 = vpack.c.b16 %v4485, %v4484
        %v4493 = vpack.c.b16 %v4487, %v4486
        %v4494 = vpack.c.b16 %v4489, %v4488
        %v4495 = vpack.c.b16 %v4491, %v4490
        %v4501 = vsel %vm2197, %v4461, 0
        %v4504 = vsel %vm2197, %v4462, 0
        %v4507 = vsel %vm2197, %v4463, 0
        %v4510 = vsel %vm2197, %v4464, 0
        %v4513 = vsel %vm2197, %v4465, 0
        %v4516 = vsel %vm2197, %v4466, 0
        %4518 = vmatpush.bf16.msra.mxu0 0
        %4519 = vmatpush.bf16.msra.mxu0 0
        %4520 = vmatpush.bf16.msra.mxu0 0
        %4521 = vmatpush.bf16.msra.mxu0 0
        %4522 = vmatpush.bf16.msra.mxu0 %v4495
        %4523 = vmatpush.bf16.msra.mxu0 %v4494
        %4524 = vmatpush.bf16.msra.mxu0 %v4493
        %4525 = vmatpush.bf16.msra.mxu0 %v4492
        %4526 = vmatmul.bf16.gmra.mxu0 %v4501
        %v4527 = vpop.f32.mrf.mxu0
        %v4528 = vadd.f32 0.0, %v4527
        %v4529 = vpop.f32.mrf.mxu0
        %v4530 = vadd.f32 0.0, %v4529
        %4531 = vmatmul.bf16.gmra.mxu0 %v4504
        %v4532 = vpop.f32.mrf.mxu0
        %v4533 = vadd.f32 0.0, %v4532
        %v4534 = vpop.f32.mrf.mxu0
        %v4535 = vadd.f32 0.0, %v4534
        %4536 = vmatmul.bf16.gmra.mxu0 %v4507
        %v4537 = vpop.f32.mrf.mxu0
        %v4538 = vadd.f32 0.0, %v4537
        %v4539 = vpop.f32.mrf.mxu0
        %v4540 = vadd.f32 0.0, %v4539
        %4541 = vmatmul.bf16.gmra.mxu0 %v4510
        %v4542 = vpop.f32.mrf.mxu0
        %v4543 = vadd.f32 0.0, %v4542
        %v4544 = vpop.f32.mrf.mxu0
        %v4545 = vadd.f32 0.0, %v4544
        %4546 = vmatmul.bf16.gmra.mxu0 %v4513
        %v4547 = vpop.f32.mrf.mxu0
        %v4548 = vadd.f32 0.0, %v4547
        %v4549 = vpop.f32.mrf.mxu0
        %v4550 = vadd.f32 0.0, %v4549
        %4551 = vmatmul.bf16.gmra.mxu0 %v4516
        %v4552 = vpop.f32.mrf.mxu0
        %v4553 = vadd.f32 0.0, %v4552
        %v4554 = vpop.f32.mrf.mxu0
        %4555 = vdwg.mxu0
        %v4556 = vadd.f32 %v4422, %v4528
        %v4557 = vadd.f32 %v4424, %v4530
        %v4558 = vadd.f32 %v4427, %v4533
        %v4559 = vadd.f32 %v4429, %v4535
        %v4560 = vadd.f32 %v4432, %v4538
        %v4561 = vadd.f32 %v4434, %v4540
        %v4562 = vadd.f32 %v4437, %v4543
        %v4563 = vadd.f32 %v4439, %v4545
        %v4564 = vadd.f32 %v4442, %v4548
        %v4565 = vadd.f32 %v4444, %v4550
        %v4566 = vadd.f32 %v4447, %v4553
        %v4567 = vld [vmem:[#allocation2 + $0x3] sm:$0xff]
        %v4568 = vld [vmem:[#allocation2 + $0xb] sm:$0xff]
        %v4569 = vld [vmem:[#allocation2 + $0x13] sm:$0xff]
        %v4570 = vld [vmem:[#allocation2 + $0x1b] sm:$0xff]
        %v4571 = vld [vmem:[#allocation2 + $0x23] sm:$0xff]
        %v4572 = vld [vmem:[#allocation2 + $0x2b] sm:$0xff]
        %v4573 = vld [vmem:[#allocation2 + $0x33] sm:$0xff]
        %v4574 = vld [vmem:[#allocation2 + $0x3b] sm:$0xff]
        %v4575 = vld [vmem:[#allocation2 + $0x43] sm:$0xff]
        %v4576 = vld [vmem:[#allocation2 + $0x4b] sm:$0xff]
        %v4577 = vld [vmem:[#allocation2 + $0x53] sm:$0x1]
        %v4578 = vpack.c.bf16 %v4568, %v4567
        %v4579 = vpack.c.bf16 %v4570, %v4569
        %v4580 = vpack.c.bf16 %v4572, %v4571
        %v4581 = vpack.c.bf16 %v4574, %v4573
        %v4582 = vpack.c.bf16 %v4576, %v4575
        %v4583 = vpack.c.bf16 %v4577, %v4577
        %s4584 = scalar_lea.vmem [#allocation10], 96
        %v4585 = vld [vmem:[%s4584] sm:$0xf]
        %v4586 = vld [vmem:[%s4584 + $0x4] sm:$0xf]
        %v4587 = vld [vmem:[%s4584 + $0x8] sm:$0xf]
        %v4588 = vld [vmem:[%s4584 + $0xc] sm:$0xf]
        %v4589 = vld [vmem:[%s4584 + $0x10] sm:$0xf]
        %v4590 = vld [vmem:[%s4584 + $0x14] sm:$0xf]
        %v4591 = vld [vmem:[%s4584 + $0x18] sm:$0xf]
        %v4592 = vld [vmem:[%s4584 + $0x1c] sm:$0xf]
        %v4601 = vunpack.c.l.b16 %v4585
        %v4602 = vunpack.c.l.b16 %v4586
        %v4603 = vunpack.c.l.b16 %v4587
        %v4604 = vunpack.c.l.b16 %v4588
        %v4605 = vunpack.c.l.b16 %v4589
        %v4606 = vunpack.c.l.b16 %v4590
        %v4607 = vunpack.c.l.b16 %v4591
        %v4608 = vunpack.c.l.b16 %v4592
        %v4609 = vpack.c.b16 %v4602, %v4601
        %v4610 = vpack.c.b16 %v4604, %v4603
        %v4611 = vpack.c.b16 %v4606, %v4605
        %v4612 = vpack.c.b16 %v4608, %v4607
        %v4618 = vsel %vm2197, %v4578, 0
        %v4621 = vsel %vm2197, %v4579, 0
        %v4624 = vsel %vm2197, %v4580, 0
        %v4627 = vsel %vm2197, %v4581, 0
        %v4630 = vsel %vm2197, %v4582, 0
        %v4633 = vsel %vm2197, %v4583, 0
        %4635 = vmatpush.bf16.msra.mxu0 0
        %4636 = vmatpush.bf16.msra.mxu0 0
        %4637 = vmatpush.bf16.msra.mxu0 0
        %4638 = vmatpush.bf16.msra.mxu0 0
        %4639 = vmatpush.bf16.msra.mxu0 %v4612
        %4640 = vmatpush.bf16.msra.mxu0 %v4611
        %4641 = vmatpush.bf16.msra.mxu0 %v4610
        %4642 = vmatpush.bf16.msra.mxu0 %v4609
        %4643 = vmatmul.bf16.gmra.mxu0 %v4618
        %v4644 = vpop.f32.mrf.mxu0
        %v4645 = vadd.f32 0.0, %v4644
        %v4646 = vpop.f32.mrf.mxu0
        %v4647 = vadd.f32 0.0, %v4646
        %4648 = vmatmul.bf16.gmra.mxu0 %v4621
        %v4649 = vpop.f32.mrf.mxu0
        %v4650 = vadd.f32 0.0, %v4649
        %v4651 = vpop.f32.mrf.mxu0
        %v4652 = vadd.f32 0.0, %v4651
        %4653 = vmatmul.bf16.gmra.mxu0 %v4624
        %v4654 = vpop.f32.mrf.mxu0
        %v4655 = vadd.f32 0.0, %v4654
        %v4656 = vpop.f32.mrf.mxu0
        %v4657 = vadd.f32 0.0, %v4656
        %4658 = vmatmul.bf16.gmra.mxu0 %v4627
        %v4659 = vpop.f32.mrf.mxu0
        %v4660 = vadd.f32 0.0, %v4659
        %v4661 = vpop.f32.mrf.mxu0
        %v4662 = vadd.f32 0.0, %v4661
        %4663 = vmatmul.bf16.gmra.mxu0 %v4630
        %v4664 = vpop.f32.mrf.mxu0
        %v4665 = vadd.f32 0.0, %v4664
        %v4666 = vpop.f32.mrf.mxu0
        %v4667 = vadd.f32 0.0, %v4666
        %4668 = vmatmul.bf16.gmra.mxu0 %v4633
        %v4669 = vpop.f32.mrf.mxu0
        %v4670 = vadd.f32 0.0, %v4669
        %v4671 = vpop.f32.mrf.mxu0
        %4672 = vdwg.mxu0
        %v4673 = vadd.f32 %v4556, %v4645
        %v4674 = vadd.f32 %v4557, %v4647
        %v4675 = vadd.f32 %v4558, %v4650
        %v4676 = vadd.f32 %v4559, %v4652
        %v4677 = vadd.f32 %v4560, %v4655
        %v4678 = vadd.f32 %v4561, %v4657
        %v4679 = vadd.f32 %v4562, %v4660
        %v4680 = vadd.f32 %v4563, %v4662
        %v4681 = vadd.f32 %v4564, %v4665
        %v4682 = vadd.f32 %v4565, %v4667
        %v4683 = vadd.f32 %v4566, %v4670
        %v4684 = vld [vmem:[#allocation2 + $0x4] sm:$0xff]
        %v4685 = vld [vmem:[#allocation2 + $0xc] sm:$0xff]
        %v4686 = vld [vmem:[#allocation2 + $0x14] sm:$0xff]
        %v4687 = vld [vmem:[#allocation2 + $0x1c] sm:$0xff]
        %v4688 = vld [vmem:[#allocation2 + $0x24] sm:$0xff]
        %v4689 = vld [vmem:[#allocation2 + $0x2c] sm:$0xff]
        %v4690 = vld [vmem:[#allocation2 + $0x34] sm:$0xff]
        %v4691 = vld [vmem:[#allocation2 + $0x3c] sm:$0xff]
        %v4692 = vld [vmem:[#allocation2 + $0x44] sm:$0xff]
        %v4693 = vld [vmem:[#allocation2 + $0x4c] sm:$0xff]
        %v4694 = vld [vmem:[#allocation2 + $0x54] sm:$0x1]
        %v4695 = vpack.c.bf16 %v4685, %v4684
        %v4696 = vpack.c.bf16 %v4687, %v4686
        %v4697 = vpack.c.bf16 %v4689, %v4688
        %v4698 = vpack.c.bf16 %v4691, %v4690
        %v4699 = vpack.c.bf16 %v4693, %v4692
        %v4700 = vpack.c.bf16 %v4694, %v4694
        %s4701 = scalar_lea.vmem [#allocation10], 128
        %v4702 = vld [vmem:[%s4701] sm:$0xf]
        %v4703 = vld [vmem:[%s4701 + $0x4] sm:$0xf]
        %v4704 = vld [vmem:[%s4701 + $0x8] sm:$0xf]
        %v4705 = vld [vmem:[%s4701 + $0xc] sm:$0xf]
        %v4706 = vld [vmem:[%s4701 + $0x10] sm:$0xf]
        %v4707 = vld [vmem:[%s4701 + $0x14] sm:$0xf]
        %v4708 = vld [vmem:[%s4701 + $0x18] sm:$0xf]
        %v4709 = vld [vmem:[%s4701 + $0x1c] sm:$0xf]
        %v4718 = vunpack.c.l.b16 %v4702
        %v4719 = vunpack.c.l.b16 %v4703
        %v4720 = vunpack.c.l.b16 %v4704
        %v4721 = vunpack.c.l.b16 %v4705
        %v4722 = vunpack.c.l.b16 %v4706
        %v4723 = vunpack.c.l.b16 %v4707
        %v4724 = vunpack.c.l.b16 %v4708
        %v4725 = vunpack.c.l.b16 %v4709
        %v4726 = vpack.c.b16 %v4719, %v4718
        %v4727 = vpack.c.b16 %v4721, %v4720
        %v4728 = vpack.c.b16 %v4723, %v4722
        %v4729 = vpack.c.b16 %v4725, %v4724
        %v4735 = vsel %vm2197, %v4695, 0
        %v4738 = vsel %vm2197, %v4696, 0
        %v4741 = vsel %vm2197, %v4697, 0
        %v4744 = vsel %vm2197, %v4698, 0
        %v4747 = vsel %vm2197, %v4699, 0
        %v4750 = vsel %vm2197, %v4700, 0
        %4752 = vmatpush.bf16.msra.mxu0 0
        %4753 = vmatpush.bf16.msra.mxu0 0
        %4754 = vmatpush.bf16.msra.mxu0 0
        %4755 = vmatpush.bf16.msra.mxu0 0
        %4756 = vmatpush.bf16.msra.mxu0 %v4729
        %4757 = vmatpush.bf16.msra.mxu0 %v4728
        %4758 = vmatpush.bf16.msra.mxu0 %v4727
        %4759 = vmatpush.bf16.msra.mxu0 %v4726
        %4760 = vmatmul.bf16.gmra.mxu0 %v4735
        %v4761 = vpop.f32.mrf.mxu0
        %v4762 = vadd.f32 0.0, %v4761
        %v4763 = vpop.f32.mrf.mxu0
        %v4764 = vadd.f32 0.0, %v4763
        %4765 = vmatmul.bf16.gmra.mxu0 %v4738
        %v4766 = vpop.f32.mrf.mxu0
        %v4767 = vadd.f32 0.0, %v4766
        %v4768 = vpop.f32.mrf.mxu0
        %v4769 = vadd.f32 0.0, %v4768
        %4770 = vmatmul.bf16.gmra.mxu0 %v4741
        %v4771 = vpop.f32.mrf.mxu0
        %v4772 = vadd.f32 0.0, %v4771
        %v4773 = vpop.f32.mrf.mxu0
        %v4774 = vadd.f32 0.0, %v4773
        %4775 = vmatmul.bf16.gmra.mxu0 %v4744
        %v4776 = vpop.f32.mrf.mxu0
        %v4777 = vadd.f32 0.0, %v4776
        %v4778 = vpop.f32.mrf.mxu0
        %v4779 = vadd.f32 0.0, %v4778
        %4780 = vmatmul.bf16.gmra.mxu0 %v4747
        %v4781 = vpop.f32.mrf.mxu0
        %v4782 = vadd.f32 0.0, %v4781
        %v4783 = vpop.f32.mrf.mxu0
        %v4784 = vadd.f32 0.0, %v4783
        %4785 = vmatmul.bf16.gmra.mxu0 %v4750
        %v4786 = vpop.f32.mrf.mxu0
        %v4787 = vadd.f32 0.0, %v4786
        %v4788 = vpop.f32.mrf.mxu0
        %4789 = vdwg.mxu0
        %v4790 = vadd.f32 %v4673, %v4762
        %v4791 = vadd.f32 %v4674, %v4764
        %v4792 = vadd.f32 %v4675, %v4767
        %v4793 = vadd.f32 %v4676, %v4769
        %v4794 = vadd.f32 %v4677, %v4772
        %v4795 = vadd.f32 %v4678, %v4774
        %v4796 = vadd.f32 %v4679, %v4777
        %v4797 = vadd.f32 %v4680, %v4779
        %v4798 = vadd.f32 %v4681, %v4782
        %v4799 = vadd.f32 %v4682, %v4784
        %v4800 = vadd.f32 %v4683, %v4787
        %v4801 = vld [vmem:[#allocation2 + $0x5] sm:$0xff]
        %v4802 = vld [vmem:[#allocation2 + $0xd] sm:$0xff]
        %v4803 = vld [vmem:[#allocation2 + $0x15] sm:$0xff]
        %v4804 = vld [vmem:[#allocation2 + $0x1d] sm:$0xff]
        %v4805 = vld [vmem:[#allocation2 + $0x25] sm:$0xff]
        %v4806 = vld [vmem:[#allocation2 + $0x2d] sm:$0xff]
        %v4807 = vld [vmem:[#allocation2 + $0x35] sm:$0xff]
        %v4808 = vld [vmem:[#allocation2 + $0x3d] sm:$0xff]
        %v4809 = vld [vmem:[#allocation2 + $0x45] sm:$0xff]
        %v4810 = vld [vmem:[#allocation2 + $0x4d] sm:$0xff]
        %v4811 = vld [vmem:[#allocation2 + $0x55] sm:$0x1]
        %v4812 = vpack.c.bf16 %v4802, %v4801
        %v4813 = vpack.c.bf16 %v4804, %v4803
        %v4814 = vpack.c.bf16 %v4806, %v4805
        %v4815 = vpack.c.bf16 %v4808, %v4807
        %v4816 = vpack.c.bf16 %v4810, %v4809
        %v4817 = vpack.c.bf16 %v4811, %v4811
        %s4818 = scalar_lea.vmem [#allocation10], 160
        %v4819 = vld [vmem:[%s4818] sm:$0xf]
        %v4820 = vld [vmem:[%s4818 + $0x4] sm:$0xf]
        %v4821 = vld [vmem:[%s4818 + $0x8] sm:$0xf]
        %v4822 = vld [vmem:[%s4818 + $0xc] sm:$0xf]
        %v4823 = vld [vmem:[%s4818 + $0x10] sm:$0xf]
        %v4824 = vld [vmem:[%s4818 + $0x14] sm:$0xf]
        %v4825 = vld [vmem:[%s4818 + $0x18] sm:$0xf]
        %v4826 = vld [vmem:[%s4818 + $0x1c] sm:$0xf]
        %v4835 = vunpack.c.l.b16 %v4819
        %v4836 = vunpack.c.l.b16 %v4820
        %v4837 = vunpack.c.l.b16 %v4821
        %v4838 = vunpack.c.l.b16 %v4822
        %v4839 = vunpack.c.l.b16 %v4823
        %v4840 = vunpack.c.l.b16 %v4824
        %v4841 = vunpack.c.l.b16 %v4825
        %v4842 = vunpack.c.l.b16 %v4826
        %v4843 = vpack.c.b16 %v4836, %v4835
        %v4844 = vpack.c.b16 %v4838, %v4837
        %v4845 = vpack.c.b16 %v4840, %v4839
        %v4846 = vpack.c.b16 %v4842, %v4841
        %v4852 = vsel %vm2197, %v4812, 0
        %v4855 = vsel %vm2197, %v4813, 0
        %v4858 = vsel %vm2197, %v4814, 0
        %v4861 = vsel %vm2197, %v4815, 0
        %v4864 = vsel %vm2197, %v4816, 0
        %v4867 = vsel %vm2197, %v4817, 0
        %4869 = vmatpush.bf16.msra.mxu0 0
        %4870 = vmatpush.bf16.msra.mxu0 0
        %4871 = vmatpush.bf16.msra.mxu0 0
        %4872 = vmatpush.bf16.msra.mxu0 0
        %4873 = vmatpush.bf16.msra.mxu0 %v4846
        %4874 = vmatpush.bf16.msra.mxu0 %v4845
        %4875 = vmatpush.bf16.msra.mxu0 %v4844
        %4876 = vmatpush.bf16.msra.mxu0 %v4843
        %4877 = vmatmul.bf16.gmra.mxu0 %v4852
        %v4878 = vpop.f32.mrf.mxu0
        %v4879 = vadd.f32 0.0, %v4878
        %v4880 = vpop.f32.mrf.mxu0
        %v4881 = vadd.f32 0.0, %v4880
        %4882 = vmatmul.bf16.gmra.mxu0 %v4855
        %v4883 = vpop.f32.mrf.mxu0
        %v4884 = vadd.f32 0.0, %v4883
        %v4885 = vpop.f32.mrf.mxu0
        %v4886 = vadd.f32 0.0, %v4885
        %4887 = vmatmul.bf16.gmra.mxu0 %v4858
        %v4888 = vpop.f32.mrf.mxu0
        %v4889 = vadd.f32 0.0, %v4888
        %v4890 = vpop.f32.mrf.mxu0
        %v4891 = vadd.f32 0.0, %v4890
        %4892 = vmatmul.bf16.gmra.mxu0 %v4861
        %v4893 = vpop.f32.mrf.mxu0
        %v4894 = vadd.f32 0.0, %v4893
        %v4895 = vpop.f32.mrf.mxu0
        %v4896 = vadd.f32 0.0, %v4895
        %4897 = vmatmul.bf16.gmra.mxu0 %v4864
        %v4898 = vpop.f32.mrf.mxu0
        %v4899 = vadd.f32 0.0, %v4898
        %v4900 = vpop.f32.mrf.mxu0
        %v4901 = vadd.f32 0.0, %v4900
        %4902 = vmatmul.bf16.gmra.mxu0 %v4867
        %v4903 = vpop.f32.mrf.mxu0
        %v4904 = vadd.f32 0.0, %v4903
        %v4905 = vpop.f32.mrf.mxu0
        %4906 = vdwg.mxu0
        %v4907 = vadd.f32 %v4790, %v4879
        %v4908 = vadd.f32 %v4791, %v4881
        %v4909 = vadd.f32 %v4792, %v4884
        %v4910 = vadd.f32 %v4793, %v4886
        %v4911 = vadd.f32 %v4794, %v4889
        %v4912 = vadd.f32 %v4795, %v4891
        %v4913 = vadd.f32 %v4796, %v4894
        %v4914 = vadd.f32 %v4797, %v4896
        %v4915 = vadd.f32 %v4798, %v4899
        %v4916 = vadd.f32 %v4799, %v4901
        %v4917 = vadd.f32 %v4800, %v4904
        %v4918 = vld [vmem:[#allocation2 + $0x6] sm:$0xff]
        %v4919 = vld [vmem:[#allocation2 + $0xe] sm:$0xff]
        %v4920 = vld [vmem:[#allocation2 + $0x16] sm:$0xff]
        %v4921 = vld [vmem:[#allocation2 + $0x1e] sm:$0xff]
        %v4922 = vld [vmem:[#allocation2 + $0x26] sm:$0xff]
        %v4923 = vld [vmem:[#allocation2 + $0x2e] sm:$0xff]
        %v4924 = vld [vmem:[#allocation2 + $0x36] sm:$0xff]
        %v4925 = vld [vmem:[#allocation2 + $0x3e] sm:$0xff]
        %v4926 = vld [vmem:[#allocation2 + $0x46] sm:$0xff]
        %v4927 = vld [vmem:[#allocation2 + $0x4e] sm:$0xff]
        %v4928 = vld [vmem:[#allocation2 + $0x56] sm:$0x1]
        %v4929 = vpack.c.bf16 %v4919, %v4918
        %v4930 = vpack.c.bf16 %v4921, %v4920
        %v4931 = vpack.c.bf16 %v4923, %v4922
        %v4932 = vpack.c.bf16 %v4925, %v4924
        %v4933 = vpack.c.bf16 %v4927, %v4926
        %v4934 = vpack.c.bf16 %v4928, %v4928
        %s4935 = scalar_lea.vmem [#allocation10], 192
        %v4936 = vld [vmem:[%s4935] sm:$0xf]
        %v4937 = vld [vmem:[%s4935 + $0x4] sm:$0xf]
        %v4938 = vld [vmem:[%s4935 + $0x8] sm:$0xf]
        %v4939 = vld [vmem:[%s4935 + $0xc] sm:$0xf]
        %v4940 = vld [vmem:[%s4935 + $0x10] sm:$0xf]
        %v4941 = vld [vmem:[%s4935 + $0x14] sm:$0xf]
        %v4942 = vld [vmem:[%s4935 + $0x18] sm:$0xf]
        %v4943 = vld [vmem:[%s4935 + $0x1c] sm:$0xf]
        %v4952 = vunpack.c.l.b16 %v4936
        %v4953 = vunpack.c.l.b16 %v4937
        %v4954 = vunpack.c.l.b16 %v4938
        %v4955 = vunpack.c.l.b16 %v4939
        %v4956 = vunpack.c.l.b16 %v4940
        %v4957 = vunpack.c.l.b16 %v4941
        %v4958 = vunpack.c.l.b16 %v4942
        %v4959 = vunpack.c.l.b16 %v4943
        %v4960 = vpack.c.b16 %v4953, %v4952
        %v4961 = vpack.c.b16 %v4955, %v4954
        %v4962 = vpack.c.b16 %v4957, %v4956
        %v4963 = vpack.c.b16 %v4959, %v4958
        %v4969 = vsel %vm2197, %v4929, 0
        %v4972 = vsel %vm2197, %v4930, 0
        %v4975 = vsel %vm2197, %v4931, 0
        %v4978 = vsel %vm2197, %v4932, 0
        %v4981 = vsel %vm2197, %v4933, 0
        %v4984 = vsel %vm2197, %v4934, 0
        %4986 = vmatpush.bf16.msra.mxu0 0
        %4987 = vmatpush.bf16.msra.mxu0 0
        %4988 = vmatpush.bf16.msra.mxu0 0
        %4989 = vmatpush.bf16.msra.mxu0 0
        %4990 = vmatpush.bf16.msra.mxu0 %v4963
        %4991 = vmatpush.bf16.msra.mxu0 %v4962
        %4992 = vmatpush.bf16.msra.mxu0 %v4961
        %4993 = vmatpush.bf16.msra.mxu0 %v4960
        %4994 = vmatmul.bf16.gmra.mxu0 %v4969
        %v4995 = vpop.f32.mrf.mxu0
        %v4996 = vadd.f32 0.0, %v4995
        %v4997 = vpop.f32.mrf.mxu0
        %v4998 = vadd.f32 0.0, %v4997
        %4999 = vmatmul.bf16.gmra.mxu0 %v4972
        %v5000 = vpop.f32.mrf.mxu0
        %v5001 = vadd.f32 0.0, %v5000
        %v5002 = vpop.f32.mrf.mxu0
        %v5003 = vadd.f32 0.0, %v5002
        %5004 = vmatmul.bf16.gmra.mxu0 %v4975
        %v5005 = vpop.f32.mrf.mxu0
        %v5006 = vadd.f32 0.0, %v5005
        %v5007 = vpop.f32.mrf.mxu0
        %v5008 = vadd.f32 0.0, %v5007
        %5009 = vmatmul.bf16.gmra.mxu0 %v4978
        %v5010 = vpop.f32.mrf.mxu0
        %v5011 = vadd.f32 0.0, %v5010
        %v5012 = vpop.f32.mrf.mxu0
        %v5013 = vadd.f32 0.0, %v5012
        %5014 = vmatmul.bf16.gmra.mxu0 %v4981
        %v5015 = vpop.f32.mrf.mxu0
        %v5016 = vadd.f32 0.0, %v5015
        %v5017 = vpop.f32.mrf.mxu0
        %v5018 = vadd.f32 0.0, %v5017
        %5019 = vmatmul.bf16.gmra.mxu0 %v4984
        %v5020 = vpop.f32.mrf.mxu0
        %v5021 = vadd.f32 0.0, %v5020
        %v5022 = vpop.f32.mrf.mxu0
        %5023 = vdwg.mxu0
        %v5024 = vadd.f32 %v4907, %v4996
        %v5025 = vadd.f32 %v4908, %v4998
        %v5026 = vadd.f32 %v4909, %v5001
        %v5027 = vadd.f32 %v4910, %v5003
        %v5028 = vadd.f32 %v4911, %v5006
        %v5029 = vadd.f32 %v4912, %v5008
        %v5030 = vadd.f32 %v4913, %v5011
        %v5031 = vadd.f32 %v4914, %v5013
        %v5032 = vadd.f32 %v4915, %v5016
        %v5033 = vadd.f32 %v4916, %v5018
        %v5034 = vadd.f32 %v4917, %v5021
        %v5035 = vld [vmem:[%s17] sm:$0x1]
        %v5036 = vld [vmem:[%s17 + $0x1] sm:$0x1]
        %v5037 = vperm.slane %v5035, 0
        %v5038 = vmul.f32 %v5024, %v5037
        %v5039 = vmul.f32 %v5025, %v5037
        %v5040 = vmul.f32 %v5026, %v5037
        %v5041 = vmul.f32 %v5027, %v5037
        %v5042 = vmul.f32 %v5028, %v5037
        %v5043 = vmul.f32 %v5029, %v5037
        %v5044 = vmul.f32 %v5030, %v5037
        %v5045 = vmul.f32 %v5031, %v5037
        %v5046 = vmul.f32 %v5032, %v5037
        %v5047 = vmul.f32 %v5033, %v5037
        %v5048 = vmul.f32 %v5034, %v5037
        %v5049 = vperm.slane %v5036, 0
        %v5050 = vadd.f32 %v5038, %v5049
        %v5051 = vadd.f32 %v5039, %v5049
        %v5052 = vadd.f32 %v5040, %v5049
        %v5053 = vadd.f32 %v5041, %v5049
        %v5054 = vadd.f32 %v5042, %v5049
        %v5055 = vadd.f32 %v5043, %v5049
        %v5056 = vadd.f32 %v5044, %v5049
        %v5057 = vadd.f32 %v5045, %v5049
        %v5058 = vadd.f32 %v5046, %v5049
        %v5059 = vadd.f32 %v5047, %v5049
        %v5060 = vadd.f32 %v5048, %v5049
        %v5061 = vmax.f32 %v5050, 0.0
        %v5062 = vmax.f32 %v5051, 0.0
        %v5063 = vmax.f32 %v5052, 0.0
        %v5064 = vmax.f32 %v5053, 0.0
        %v5065 = vmax.f32 %v5054, 0.0
        %v5066 = vmax.f32 %v5055, 0.0
        %v5067 = vmax.f32 %v5056, 0.0
        %v5068 = vmax.f32 %v5057, 0.0
        %v5069 = vmax.f32 %v5058, 0.0
        %v5070 = vmax.f32 %v5059, 0.0
        %v5071 = vmax.f32 %v5060, 0.0
        %5072 = vst.msk [vmem:[#allocation3] sm:$0xff] %vm2197, %v5061
        %5073 = vst.msk [vmem:[#allocation3 + $0x8] sm:$0xff] %vm2197, %v5062
        %5074 = vst.msk [vmem:[#allocation3 + $0x10] sm:$0xff] %vm2197, %v5063
        %5075 = vst.msk [vmem:[#allocation3 + $0x18] sm:$0xff] %vm2197, %v5064
        %5076 = vst.msk [vmem:[#allocation3 + $0x20] sm:$0xff] %vm2197, %v5065
        %5077 = vst.msk [vmem:[#allocation3 + $0x28] sm:$0xff] %vm2197, %v5066
        %5078 = vst.msk [vmem:[#allocation3 + $0x30] sm:$0xff] %vm2197, %v5067
        %5079 = vst.msk [vmem:[#allocation3 + $0x38] sm:$0xff] %vm2197, %v5068
        %5080 = vst.msk [vmem:[#allocation3 + $0x40] sm:$0xff] %vm2197, %v5069
        %5081 = vst.msk [vmem:[#allocation3 + $0x48] sm:$0xff] %vm2197, %v5070
        %5082 = vst.msk [vmem:[#allocation3 + $0x50] sm:$0x1] %vm2208, %v5071
        %v5083 = vld [vmem:[#allocation3] ss:$3 sm:$0xff]
        %v5084 = vld [vmem:[%s3055] ss:$3 sm:$0xff]
        %v5085 = vld [vmem:[%s3057] ss:$3 sm:$0xff]
        %v5086 = vld [vmem:[%s3059] ss:$3 sm:$0x7]
        %v5087 = vld [vmem:[%s3061] ss:$3 sm:$0xff]
        %v5088 = vld [vmem:[%s3063] ss:$3 sm:$0xff]
        %v5089 = vld [vmem:[%s3065] ss:$3 sm:$0xff]
        %v5090 = vld [vmem:[%s3067] ss:$3 sm:$0x7]
        %v5091 = vld [vmem:[%s3069] ss:$3 sm:$0xff]
        %v5092 = vld [vmem:[%s3071] ss:$3 sm:$0xff]
        %v5093 = vld [vmem:[%s3073] ss:$3 sm:$0xff]
        %v5094 = vld [vmem:[%s3075] ss:$3 sm:$0x7]
        %v5095 = vmax.f32 %v5083, %v5087
        %v5096 = vmax.f32 %v5084, %v5088
        %v5097 = vmax.f32 %v5085, %v5089
        %v5098 = vmax.f32 %v5086, %v5090
        %v5099 = vmax.f32 %v5095, %v5091
        %v5100 = vmax.f32 %v5096, %v5092
        %v5101 = vmax.f32 %v5097, %v5093
        %v5102 = vmax.f32 %v5098, %v5094
        %5107 = vrot.lane.b32.xlu0 %v5099, 64
        %v5108 = vpop.permute.xlu0 %5107
        %5109 = vrot.lane.b32.xlu0 %v5100, 64
        %v5110 = vpop.permute.xlu0 %5109
        %5111 = vrot.lane.b32.xlu0 %v5101, 64
        %v5112 = vpop.permute.xlu0 %5111
        %5113 = vrot.lane.b32.xlu0 %v5102, 64
        %v5114 = vpop.permute.xlu0 %5113
        %v5119 = vsel %vm2197, %v3081, %v5108
        %v5120 = vsel %vm2197, %v3082, %v5110
        %v5121 = vsel %vm2197, %v3083, %v5112
        %v5122 = vsel %vm2197, %v3084, %v5114
        %5123 = vst [vmem:[#allocation2] sm:$0x7] 0.0
        %5124 = vst [vmem:[#allocation2 + $0x1e] sm:$0x7] 0.0
        %5125 = vst [vmem:[#allocation2 + $0x3] sm:$0xff] %v5119
        %5126 = vst [vmem:[#allocation2 + $0xb] sm:$0xff] %v5120
        %5127 = vst [vmem:[#allocation2 + $0x13] sm:$0xff] %v5121
        %5128 = vst [vmem:[#allocation2 + $0x1b] sm:$0x7] %v5122
        %v5129 = vld [vmem:[#allocation2] sm:$0xff]
        %v5130 = vld [vmem:[#allocation2 + $0x8] sm:$0xff]
        %v5131 = vld [vmem:[#allocation2 + $0x10] sm:$0xff]
        %v5132 = vld [vmem:[#allocation2 + $0x18] sm:$0x7]
        %v5133 = vpack.c.bf16 %v5130, %v5129
        %v5134 = vpack.c.bf16 %v5132, %v5131
        %v5135 = vld [vmem:[%s6] sm:$0xf]
        %v5136 = vld [vmem:[%s6 + $0x4] sm:$0xf]
        %v5137 = vld [vmem:[%s6 + $0x8] sm:$0xf]
        %v5138 = vld [vmem:[%s6 + $0xc] sm:$0xf]
        %v5139 = vld [vmem:[%s6 + $0x10] sm:$0xf]
        %v5140 = vld [vmem:[%s6 + $0x14] sm:$0xf]
        %v5141 = vld [vmem:[%s6 + $0x18] sm:$0xf]
        %v5142 = vld [vmem:[%s6 + $0x1c] sm:$0xf]
        %v5143 = vld [vmem:[%s6 + $0x20] sm:$0xf]
        %v5144 = vld [vmem:[%s6 + $0x24] sm:$0xf]
        %v5145 = vld [vmem:[%s6 + $0x28] sm:$0xf]
        %v5146 = vld [vmem:[%s6 + $0x2c] sm:$0xf]
        %v5147 = vld [vmem:[%s6 + $0x30] sm:$0xf]
        %v5148 = vld [vmem:[%s6 + $0x34] sm:$0xf]
        %v5149 = vld [vmem:[%s6 + $0x38] sm:$0xf]
        %v5150 = vld [vmem:[%s6 + $0x3c] sm:$0xf]
        %v5151 = vld [vmem:[#allocation2 + $0x1] sm:$0xff]
        %v5152 = vld [vmem:[#allocation2 + $0x9] sm:$0xff]
        %v5153 = vld [vmem:[#allocation2 + $0x11] sm:$0xff]
        %v5154 = vld [vmem:[#allocation2 + $0x19] sm:$0x7]
        %v5155 = vpack.c.bf16 %v5152, %v5151
        %v5156 = vpack.c.bf16 %v5154, %v5153
        %s5157 = scalar_lea.vmem %s6, 64
        %v5158 = vld [vmem:[%s5157] sm:$0xf]
        %v5159 = vld [vmem:[%s5157 + $0x4] sm:$0xf]
        %v5160 = vld [vmem:[%s5157 + $0x8] sm:$0xf]
        %v5161 = vld [vmem:[%s5157 + $0xc] sm:$0xf]
        %v5162 = vld [vmem:[%s5157 + $0x10] sm:$0xf]
        %v5163 = vld [vmem:[%s5157 + $0x14] sm:$0xf]
        %v5164 = vld [vmem:[%s5157 + $0x18] sm:$0xf]
        %v5165 = vld [vmem:[%s5157 + $0x1c] sm:$0xf]
        %v5166 = vld [vmem:[%s5157 + $0x20] sm:$0xf]
        %v5167 = vld [vmem:[%s5157 + $0x24] sm:$0xf]
        %v5168 = vld [vmem:[%s5157 + $0x28] sm:$0xf]
        %v5169 = vld [vmem:[%s5157 + $0x2c] sm:$0xf]
        %v5170 = vld [vmem:[%s5157 + $0x30] sm:$0xf]
        %v5171 = vld [vmem:[%s5157 + $0x34] sm:$0xf]
        %v5172 = vld [vmem:[%s5157 + $0x38] sm:$0xf]
        %v5173 = vld [vmem:[%s5157 + $0x3c] sm:$0xf]
        %v5190 = vunpack.c.l.b16 %v5158
        %v5191 = vunpack.c.l.b16 %v5159
        %v5192 = vunpack.c.l.b16 %v5160
        %v5193 = vunpack.c.l.b16 %v5161
        %v5194 = vunpack.c.l.b16 %v5162
        %v5195 = vunpack.c.l.b16 %v5163
        %v5196 = vunpack.c.l.b16 %v5164
        %v5197 = vunpack.c.l.b16 %v5165
        %v5198 = vunpack.c.l.b16 %v5166
        %v5199 = vunpack.c.l.b16 %v5167
        %v5200 = vunpack.c.l.b16 %v5168
        %v5201 = vunpack.c.l.b16 %v5169
        %v5202 = vunpack.c.l.b16 %v5170
        %v5203 = vunpack.c.l.b16 %v5171
        %v5204 = vunpack.c.l.b16 %v5172
        %v5205 = vunpack.c.l.b16 %v5173
        %v5206 = vpack.c.b16 %v5191, %v5190
        %v5207 = vpack.c.b16 %v5193, %v5192
        %v5208 = vpack.c.b16 %v5195, %v5194
        %v5209 = vpack.c.b16 %v5197, %v5196
        %v5210 = vpack.c.b16 %v5199, %v5198
        %v5211 = vpack.c.b16 %v5201, %v5200
        %v5212 = vpack.c.b16 %v5203, %v5202
        %v5213 = vpack.c.b16 %v5205, %v5204
        %5222 = vmatpush.bf16.msra.mxu0 %v5213
        %5223 = vmatpush.bf16.msra.mxu0 %v5212
        %5224 = vmatpush.bf16.msra.mxu0 %v5211
        %5225 = vmatpush.bf16.msra.mxu0 %v5210
        %5226 = vmatpush.bf16.msra.mxu0 %v5209
        %5227 = vmatpush.bf16.msra.mxu0 %v5208
        %5228 = vmatpush.bf16.msra.mxu0 %v5207
        %5229 = vmatpush.bf16.msra.mxu0 %v5206
        %5230 = vmatmul.bf16.gmra.mxu0 %v5155
        %v5231 = vpop.f32.mrf.mxu0
        %v5232 = vadd.f32 0.0, %v5231
        %v5233 = vpop.f32.mrf.mxu0
        %v5234 = vadd.f32 0.0, %v5233
        %5235 = vmatmul.bf16.gmra.mxu0 %v5156
        %v5236 = vpop.f32.mrf.mxu0
        %v5237 = vadd.f32 0.0, %v5236
        %v5238 = vpop.f32.mrf.mxu0
        %v5239 = vadd.f32 0.0, %v5238
        %5240 = vdwg.mxu0
        %v5257 = vunpack.c.l.b16 %v5135
        %v5258 = vunpack.c.l.b16 %v5136
        %v5259 = vunpack.c.l.b16 %v5137
        %v5260 = vunpack.c.l.b16 %v5138
        %v5261 = vunpack.c.l.b16 %v5139
        %v5262 = vunpack.c.l.b16 %v5140
        %v5263 = vunpack.c.l.b16 %v5141
        %v5264 = vunpack.c.l.b16 %v5142
        %v5265 = vunpack.c.l.b16 %v5143
        %v5266 = vunpack.c.l.b16 %v5144
        %v5267 = vunpack.c.l.b16 %v5145
        %v5268 = vunpack.c.l.b16 %v5146
        %v5269 = vunpack.c.l.b16 %v5147
        %v5270 = vunpack.c.l.b16 %v5148
        %v5271 = vunpack.c.l.b16 %v5149
        %v5272 = vunpack.c.l.b16 %v5150
        %v5273 = vpack.c.b16 %v5258, %v5257
        %v5274 = vpack.c.b16 %v5260, %v5259
        %v5275 = vpack.c.b16 %v5262, %v5261
        %v5276 = vpack.c.b16 %v5264, %v5263
        %v5277 = vpack.c.b16 %v5266, %v5265
        %v5278 = vpack.c.b16 %v5268, %v5267
        %v5279 = vpack.c.b16 %v5270, %v5269
        %v5280 = vpack.c.b16 %v5272, %v5271
        %5289 = vmatpush.bf16.msra.mxu0 %v5280
        %5290 = vmatpush.bf16.msra.mxu0 %v5279
        %5291 = vmatpush.bf16.msra.mxu0 %v5278
        %5292 = vmatpush.bf16.msra.mxu0 %v5277
        %5293 = vmatpush.bf16.msra.mxu0 %v5276
        %5294 = vmatpush.bf16.msra.mxu0 %v5275
        %5295 = vmatpush.bf16.msra.mxu0 %v5274
        %5296 = vmatpush.bf16.msra.mxu0 %v5273
        %5297 = vmatmul.bf16.gmra.mxu0 %v5133
        %v5298 = vpop.f32.mrf.mxu0
        %v5299 = vadd.f32 %v5232, %v5298
        %v5300 = vpop.f32.mrf.mxu0
        %v5301 = vadd.f32 %v5234, %v5300
        %5302 = vmatmul.bf16.gmra.mxu0 %v5134
        %v5303 = vpop.f32.mrf.mxu0
        %v5304 = vadd.f32 %v5237, %v5303
        %v5305 = vpop.f32.mrf.mxu0
        %v5306 = vadd.f32 %v5239, %v5305
        %5307 = vdwg.mxu0
        %v5308 = vld [vmem:[#allocation2 + $0x2] sm:$0xff]
        %v5309 = vld [vmem:[#allocation2 + $0xa] sm:$0xff]
        %v5310 = vld [vmem:[#allocation2 + $0x12] sm:$0xff]
        %v5311 = vld [vmem:[#allocation2 + $0x1a] sm:$0x7]
        %v5312 = vpack.c.bf16 %v5309, %v5308
        %v5313 = vpack.c.bf16 %v5311, %v5310
        %s5314 = scalar_lea.vmem %s6, 128
        %v5315 = vld [vmem:[%s5314] sm:$0xf]
        %v5316 = vld [vmem:[%s5314 + $0x4] sm:$0xf]
        %v5317 = vld [vmem:[%s5314 + $0x8] sm:$0xf]
        %v5318 = vld [vmem:[%s5314 + $0xc] sm:$0xf]
        %v5319 = vld [vmem:[%s5314 + $0x10] sm:$0xf]
        %v5320 = vld [vmem:[%s5314 + $0x14] sm:$0xf]
        %v5321 = vld [vmem:[%s5314 + $0x18] sm:$0xf]
        %v5322 = vld [vmem:[%s5314 + $0x1c] sm:$0xf]
        %v5323 = vld [vmem:[%s5314 + $0x20] sm:$0xf]
        %v5324 = vld [vmem:[%s5314 + $0x24] sm:$0xf]
        %v5325 = vld [vmem:[%s5314 + $0x28] sm:$0xf]
        %v5326 = vld [vmem:[%s5314 + $0x2c] sm:$0xf]
        %v5327 = vld [vmem:[%s5314 + $0x30] sm:$0xf]
        %v5328 = vld [vmem:[%s5314 + $0x34] sm:$0xf]
        %v5329 = vld [vmem:[%s5314 + $0x38] sm:$0xf]
        %v5330 = vld [vmem:[%s5314 + $0x3c] sm:$0xf]
        %v5347 = vunpack.c.l.b16 %v5315
        %v5348 = vunpack.c.l.b16 %v5316
        %v5349 = vunpack.c.l.b16 %v5317
        %v5350 = vunpack.c.l.b16 %v5318
        %v5351 = vunpack.c.l.b16 %v5319
        %v5352 = vunpack.c.l.b16 %v5320
        %v5353 = vunpack.c.l.b16 %v5321
        %v5354 = vunpack.c.l.b16 %v5322
        %v5355 = vunpack.c.l.b16 %v5323
        %v5356 = vunpack.c.l.b16 %v5324
        %v5357 = vunpack.c.l.b16 %v5325
        %v5358 = vunpack.c.l.b16 %v5326
        %v5359 = vunpack.c.l.b16 %v5327
        %v5360 = vunpack.c.l.b16 %v5328
        %v5361 = vunpack.c.l.b16 %v5329
        %v5362 = vunpack.c.l.b16 %v5330
        %v5363 = vpack.c.b16 %v5348, %v5347
        %v5364 = vpack.c.b16 %v5350, %v5349
        %v5365 = vpack.c.b16 %v5352, %v5351
        %v5366 = vpack.c.b16 %v5354, %v5353
        %v5367 = vpack.c.b16 %v5356, %v5355
        %v5368 = vpack.c.b16 %v5358, %v5357
        %v5369 = vpack.c.b16 %v5360, %v5359
        %v5370 = vpack.c.b16 %v5362, %v5361
        %5379 = vmatpush.bf16.msra.mxu0 %v5370
        %5380 = vmatpush.bf16.msra.mxu0 %v5369
        %5381 = vmatpush.bf16.msra.mxu0 %v5368
        %5382 = vmatpush.bf16.msra.mxu0 %v5367
        %5383 = vmatpush.bf16.msra.mxu0 %v5366
        %5384 = vmatpush.bf16.msra.mxu0 %v5365
        %5385 = vmatpush.bf16.msra.mxu0 %v5364
        %5386 = vmatpush.bf16.msra.mxu0 %v5363
        %5387 = vmatmul.bf16.gmra.mxu0 %v5312
        %v5388 = vpop.f32.mrf.mxu0
        %v5389 = vadd.f32 0.0, %v5388
        %v5390 = vpop.f32.mrf.mxu0
        %v5391 = vadd.f32 0.0, %v5390
        %5392 = vmatmul.bf16.gmra.mxu0 %v5313
        %v5393 = vpop.f32.mrf.mxu0
        %v5394 = vadd.f32 0.0, %v5393
        %v5395 = vpop.f32.mrf.mxu0
        %v5396 = vadd.f32 0.0, %v5395
        %5397 = vdwg.mxu0
        %v5398 = vadd.f32 %v5299, %v5389
        %v5399 = vadd.f32 %v5301, %v5391
        %v5400 = vadd.f32 %v5304, %v5394
        %v5401 = vadd.f32 %v5306, %v5396
        %v5402 = vld [vmem:[#allocation2 + $0x3] sm:$0xff]
        %v5403 = vld [vmem:[#allocation2 + $0xb] sm:$0xff]
        %v5404 = vld [vmem:[#allocation2 + $0x13] sm:$0xff]
        %v5405 = vld [vmem:[#allocation2 + $0x1b] sm:$0x7]
        %v5406 = vpack.c.bf16 %v5403, %v5402
        %v5407 = vpack.c.bf16 %v5405, %v5404
        %s5408 = scalar_lea.vmem %s6, 192
        %v5409 = vld [vmem:[%s5408] sm:$0xf]
        %v5410 = vld [vmem:[%s5408 + $0x4] sm:$0xf]
        %v5411 = vld [vmem:[%s5408 + $0x8] sm:$0xf]
        %v5412 = vld [vmem:[%s5408 + $0xc] sm:$0xf]
        %v5413 = vld [vmem:[%s5408 + $0x10] sm:$0xf]
        %v5414 = vld [vmem:[%s5408 + $0x14] sm:$0xf]
        %v5415 = vld [vmem:[%s5408 + $0x18] sm:$0xf]
        %v5416 = vld [vmem:[%s5408 + $0x1c] sm:$0xf]
        %v5417 = vld [vmem:[%s5408 + $0x20] sm:$0xf]
        %v5418 = vld [vmem:[%s5408 + $0x24] sm:$0xf]
        %v5419 = vld [vmem:[%s5408 + $0x28] sm:$0xf]
        %v5420 = vld [vmem:[%s5408 + $0x2c] sm:$0xf]
        %v5421 = vld [vmem:[%s5408 + $0x30] sm:$0xf]
        %v5422 = vld [vmem:[%s5408 + $0x34] sm:$0xf]
        %v5423 = vld [vmem:[%s5408 + $0x38] sm:$0xf]
        %v5424 = vld [vmem:[%s5408 + $0x3c] sm:$0xf]
        %v5441 = vunpack.c.l.b16 %v5409
        %v5442 = vunpack.c.l.b16 %v5410
        %v5443 = vunpack.c.l.b16 %v5411
        %v5444 = vunpack.c.l.b16 %v5412
        %v5445 = vunpack.c.l.b16 %v5413
        %v5446 = vunpack.c.l.b16 %v5414
        %v5447 = vunpack.c.l.b16 %v5415
        %v5448 = vunpack.c.l.b16 %v5416
        %v5449 = vunpack.c.l.b16 %v5417
        %v5450 = vunpack.c.l.b16 %v5418
        %v5451 = vunpack.c.l.b16 %v5419
        %v5452 = vunpack.c.l.b16 %v5420
        %v5453 = vunpack.c.l.b16 %v5421
        %v5454 = vunpack.c.l.b16 %v5422
        %v5455 = vunpack.c.l.b16 %v5423
        %v5456 = vunpack.c.l.b16 %v5424
        %v5457 = vpack.c.b16 %v5442, %v5441
        %v5458 = vpack.c.b16 %v5444, %v5443
        %v5459 = vpack.c.b16 %v5446, %v5445
        %v5460 = vpack.c.b16 %v5448, %v5447
        %v5461 = vpack.c.b16 %v5450, %v5449
        %v5462 = vpack.c.b16 %v5452, %v5451
        %v5463 = vpack.c.b16 %v5454, %v5453
        %v5464 = vpack.c.b16 %v5456, %v5455
        %5473 = vmatpush.bf16.msra.mxu0 %v5464
        %5474 = vmatpush.bf16.msra.mxu0 %v5463
        %5475 = vmatpush.bf16.msra.mxu0 %v5462
        %5476 = vmatpush.bf16.msra.mxu0 %v5461
        %5477 = vmatpush.bf16.msra.mxu0 %v5460
        %5478 = vmatpush.bf16.msra.mxu0 %v5459
        %5479 = vmatpush.bf16.msra.mxu0 %v5458
        %5480 = vmatpush.bf16.msra.mxu0 %v5457
        %5481 = vmatmul.bf16.gmra.mxu0 %v5406
        %v5482 = vpop.f32.mrf.mxu0
        %v5483 = vadd.f32 0.0, %v5482
        %v5484 = vpop.f32.mrf.mxu0
        %v5485 = vadd.f32 0.0, %v5484
        %5486 = vmatmul.bf16.gmra.mxu0 %v5407
        %v5487 = vpop.f32.mrf.mxu0
        %v5488 = vadd.f32 0.0, %v5487
        %v5489 = vpop.f32.mrf.mxu0
        %v5490 = vadd.f32 0.0, %v5489
        %5491 = vdwg.mxu0
        %v5492 = vadd.f32 %v5398, %v5483
        %v5493 = vadd.f32 %v5399, %v5485
        %v5494 = vadd.f32 %v5400, %v5488
        %v5495 = vadd.f32 %v5401, %v5490
        %v5496 = vld [vmem:[#allocation2 + $0x4] sm:$0xff]
        %v5497 = vld [vmem:[#allocation2 + $0xc] sm:$0xff]
        %v5498 = vld [vmem:[#allocation2 + $0x14] sm:$0xff]
        %v5499 = vld [vmem:[#allocation2 + $0x1c] sm:$0x7]
        %v5500 = vpack.c.bf16 %v5497, %v5496
        %v5501 = vpack.c.bf16 %v5499, %v5498
        %s5502 = scalar_lea.vmem %s6, 256
        %v5503 = vld [vmem:[%s5502] sm:$0xf]
        %v5504 = vld [vmem:[%s5502 + $0x4] sm:$0xf]
        %v5505 = vld [vmem:[%s5502 + $0x8] sm:$0xf]
        %v5506 = vld [vmem:[%s5502 + $0xc] sm:$0xf]
        %v5507 = vld [vmem:[%s5502 + $0x10] sm:$0xf]
        %v5508 = vld [vmem:[%s5502 + $0x14] sm:$0xf]
        %v5509 = vld [vmem:[%s5502 + $0x18] sm:$0xf]
        %v5510 = vld [vmem:[%s5502 + $0x1c] sm:$0xf]
        %v5511 = vld [vmem:[%s5502 + $0x20] sm:$0xf]
        %v5512 = vld [vmem:[%s5502 + $0x24] sm:$0xf]
        %v5513 = vld [vmem:[%s5502 + $0x28] sm:$0xf]
        %v5514 = vld [vmem:[%s5502 + $0x2c] sm:$0xf]
        %v5515 = vld [vmem:[%s5502 + $0x30] sm:$0xf]
        %v5516 = vld [vmem:[%s5502 + $0x34] sm:$0xf]
        %v5517 = vld [vmem:[%s5502 + $0x38] sm:$0xf]
        %v5518 = vld [vmem:[%s5502 + $0x3c] sm:$0xf]
        %v5535 = vunpack.c.l.b16 %v5503
        %v5536 = vunpack.c.l.b16 %v5504
        %v5537 = vunpack.c.l.b16 %v5505
        %v5538 = vunpack.c.l.b16 %v5506
        %v5539 = vunpack.c.l.b16 %v5507
        %v5540 = vunpack.c.l.b16 %v5508
        %v5541 = vunpack.c.l.b16 %v5509
        %v5542 = vunpack.c.l.b16 %v5510
        %v5543 = vunpack.c.l.b16 %v5511
        %v5544 = vunpack.c.l.b16 %v5512
        %v5545 = vunpack.c.l.b16 %v5513
        %v5546 = vunpack.c.l.b16 %v5514
        %v5547 = vunpack.c.l.b16 %v5515
        %v5548 = vunpack.c.l.b16 %v5516
        %v5549 = vunpack.c.l.b16 %v5517
        %v5550 = vunpack.c.l.b16 %v5518
        %v5551 = vpack.c.b16 %v5536, %v5535
        %v5552 = vpack.c.b16 %v5538, %v5537
        %v5553 = vpack.c.b16 %v5540, %v5539
        %v5554 = vpack.c.b16 %v5542, %v5541
        %v5555 = vpack.c.b16 %v5544, %v5543
        %v5556 = vpack.c.b16 %v5546, %v5545
        %v5557 = vpack.c.b16 %v5548, %v5547
        %v5558 = vpack.c.b16 %v5550, %v5549
        %5567 = vmatpush.bf16.msra.mxu0 %v5558
        %5568 = vmatpush.bf16.msra.mxu0 %v5557
        %5569 = vmatpush.bf16.msra.mxu0 %v5556
        %5570 = vmatpush.bf16.msra.mxu0 %v5555
        %5571 = vmatpush.bf16.msra.mxu0 %v5554
        %5572 = vmatpush.bf16.msra.mxu0 %v5553
        %5573 = vmatpush.bf16.msra.mxu0 %v5552
        %5574 = vmatpush.bf16.msra.mxu0 %v5551
        %5575 = vmatmul.bf16.gmra.mxu0 %v5500
        %v5576 = vpop.f32.mrf.mxu0
        %v5577 = vadd.f32 0.0, %v5576
        %v5578 = vpop.f32.mrf.mxu0
        %v5579 = vadd.f32 0.0, %v5578
        %5580 = vmatmul.bf16.gmra.mxu0 %v5501
        %v5581 = vpop.f32.mrf.mxu0
        %v5582 = vadd.f32 0.0, %v5581
        %v5583 = vpop.f32.mrf.mxu0
        %v5584 = vadd.f32 0.0, %v5583
        %5585 = vdwg.mxu0
        %v5586 = vadd.f32 %v5492, %v5577
        %v5587 = vadd.f32 %v5493, %v5579
        %v5588 = vadd.f32 %v5494, %v5582
        %v5589 = vadd.f32 %v5495, %v5584
        %v5590 = vld [vmem:[#allocation2 + $0x5] sm:$0xff]
        %v5591 = vld [vmem:[#allocation2 + $0xd] sm:$0xff]
        %v5592 = vld [vmem:[#allocation2 + $0x15] sm:$0xff]
        %v5593 = vld [vmem:[#allocation2 + $0x1d] sm:$0x7]
        %v5594 = vpack.c.bf16 %v5591, %v5590
        %v5595 = vpack.c.bf16 %v5593, %v5592
        %s5596 = scalar_lea.vmem %s6, 320
        %v5597 = vld [vmem:[%s5596] sm:$0xf]
        %v5598 = vld [vmem:[%s5596 + $0x4] sm:$0xf]
        %v5599 = vld [vmem:[%s5596 + $0x8] sm:$0xf]
        %v5600 = vld [vmem:[%s5596 + $0xc] sm:$0xf]
        %v5601 = vld [vmem:[%s5596 + $0x10] sm:$0xf]
        %v5602 = vld [vmem:[%s5596 + $0x14] sm:$0xf]
        %v5603 = vld [vmem:[%s5596 + $0x18] sm:$0xf]
        %v5604 = vld [vmem:[%s5596 + $0x1c] sm:$0xf]
        %v5605 = vld [vmem:[%s5596 + $0x20] sm:$0xf]
        %v5606 = vld [vmem:[%s5596 + $0x24] sm:$0xf]
        %v5607 = vld [vmem:[%s5596 + $0x28] sm:$0xf]
        %v5608 = vld [vmem:[%s5596 + $0x2c] sm:$0xf]
        %v5609 = vld [vmem:[%s5596 + $0x30] sm:$0xf]
        %v5610 = vld [vmem:[%s5596 + $0x34] sm:$0xf]
        %v5611 = vld [vmem:[%s5596 + $0x38] sm:$0xf]
        %v5612 = vld [vmem:[%s5596 + $0x3c] sm:$0xf]
        %v5629 = vunpack.c.l.b16 %v5597
        %v5630 = vunpack.c.l.b16 %v5598
        %v5631 = vunpack.c.l.b16 %v5599
        %v5632 = vunpack.c.l.b16 %v5600
        %v5633 = vunpack.c.l.b16 %v5601
        %v5634 = vunpack.c.l.b16 %v5602
        %v5635 = vunpack.c.l.b16 %v5603
        %v5636 = vunpack.c.l.b16 %v5604
        %v5637 = vunpack.c.l.b16 %v5605
        %v5638 = vunpack.c.l.b16 %v5606
        %v5639 = vunpack.c.l.b16 %v5607
        %v5640 = vunpack.c.l.b16 %v5608
        %v5641 = vunpack.c.l.b16 %v5609
        %v5642 = vunpack.c.l.b16 %v5610
        %v5643 = vunpack.c.l.b16 %v5611
        %v5644 = vunpack.c.l.b16 %v5612
        %v5645 = vpack.c.b16 %v5630, %v5629
        %v5646 = vpack.c.b16 %v5632, %v5631
        %v5647 = vpack.c.b16 %v5634, %v5633
        %v5648 = vpack.c.b16 %v5636, %v5635
        %v5649 = vpack.c.b16 %v5638, %v5637
        %v5650 = vpack.c.b16 %v5640, %v5639
        %v5651 = vpack.c.b16 %v5642, %v5641
        %v5652 = vpack.c.b16 %v5644, %v5643
        %5661 = vmatpush.bf16.msra.mxu0 %v5652
        %5662 = vmatpush.bf16.msra.mxu0 %v5651
        %5663 = vmatpush.bf16.msra.mxu0 %v5650
        %5664 = vmatpush.bf16.msra.mxu0 %v5649
        %5665 = vmatpush.bf16.msra.mxu0 %v5648
        %5666 = vmatpush.bf16.msra.mxu0 %v5647
        %5667 = vmatpush.bf16.msra.mxu0 %v5646
        %5668 = vmatpush.bf16.msra.mxu0 %v5645
        %5669 = vmatmul.bf16.gmra.mxu0 %v5594
        %v5670 = vpop.f32.mrf.mxu0
        %v5671 = vadd.f32 0.0, %v5670
        %v5672 = vpop.f32.mrf.mxu0
        %v5673 = vadd.f32 0.0, %v5672
        %5674 = vmatmul.bf16.gmra.mxu0 %v5595
        %v5675 = vpop.f32.mrf.mxu0
        %v5676 = vadd.f32 0.0, %v5675
        %v5677 = vpop.f32.mrf.mxu0
        %v5678 = vadd.f32 0.0, %v5677
        %5679 = vdwg.mxu0
        %v5680 = vadd.f32 %v5586, %v5671
        %v5681 = vadd.f32 %v5587, %v5673
        %v5682 = vadd.f32 %v5588, %v5676
        %v5683 = vadd.f32 %v5589, %v5678
        %v5684 = vld [vmem:[#allocation2 + $0x6] sm:$0xff]
        %v5685 = vld [vmem:[#allocation2 + $0xe] sm:$0xff]
        %v5686 = vld [vmem:[#allocation2 + $0x16] sm:$0xff]
        %v5687 = vld [vmem:[#allocation2 + $0x1e] sm:$0x7]
        %v5688 = vpack.c.bf16 %v5685, %v5684
        %v5689 = vpack.c.bf16 %v5687, %v5686
        %s5690 = scalar_lea.vmem %s6, 384
        %v5691 = vld [vmem:[%s5690] sm:$0xf]
        %v5692 = vld [vmem:[%s5690 + $0x4] sm:$0xf]
        %v5693 = vld [vmem:[%s5690 + $0x8] sm:$0xf]
        %v5694 = vld [vmem:[%s5690 + $0xc] sm:$0xf]
        %v5695 = vld [vmem:[%s5690 + $0x10] sm:$0xf]
        %v5696 = vld [vmem:[%s5690 + $0x14] sm:$0xf]
        %v5697 = vld [vmem:[%s5690 + $0x18] sm:$0xf]
        %v5698 = vld [vmem:[%s5690 + $0x1c] sm:$0xf]
        %v5699 = vld [vmem:[%s5690 + $0x20] sm:$0xf]
        %v5700 = vld [vmem:[%s5690 + $0x24] sm:$0xf]
        %v5701 = vld [vmem:[%s5690 + $0x28] sm:$0xf]
        %v5702 = vld [vmem:[%s5690 + $0x2c] sm:$0xf]
        %v5703 = vld [vmem:[%s5690 + $0x30] sm:$0xf]
        %v5704 = vld [vmem:[%s5690 + $0x34] sm:$0xf]
        %v5705 = vld [vmem:[%s5690 + $0x38] sm:$0xf]
        %v5706 = vld [vmem:[%s5690 + $0x3c] sm:$0xf]
        %v5723 = vunpack.c.l.b16 %v5691
        %v5724 = vunpack.c.l.b16 %v5692
        %v5725 = vunpack.c.l.b16 %v5693
        %v5726 = vunpack.c.l.b16 %v5694
        %v5727 = vunpack.c.l.b16 %v5695
        %v5728 = vunpack.c.l.b16 %v5696
        %v5729 = vunpack.c.l.b16 %v5697
        %v5730 = vunpack.c.l.b16 %v5698
        %v5731 = vunpack.c.l.b16 %v5699
        %v5732 = vunpack.c.l.b16 %v5700
        %v5733 = vunpack.c.l.b16 %v5701
        %v5734 = vunpack.c.l.b16 %v5702
        %v5735 = vunpack.c.l.b16 %v5703
        %v5736 = vunpack.c.l.b16 %v5704
        %v5737 = vunpack.c.l.b16 %v5705
        %v5738 = vunpack.c.l.b16 %v5706
        %v5739 = vpack.c.b16 %v5724, %v5723
        %v5740 = vpack.c.b16 %v5726, %v5725
        %v5741 = vpack.c.b16 %v5728, %v5727
        %v5742 = vpack.c.b16 %v5730, %v5729
        %v5743 = vpack.c.b16 %v5732, %v5731
        %v5744 = vpack.c.b16 %v5734, %v5733
        %v5745 = vpack.c.b16 %v5736, %v5735
        %v5746 = vpack.c.b16 %v5738, %v5737
        %5755 = vmatpush.bf16.msra.mxu0 %v5746
        %5756 = vmatpush.bf16.msra.mxu0 %v5745
        %5757 = vmatpush.bf16.msra.mxu0 %v5744
        %5758 = vmatpush.bf16.msra.mxu0 %v5743
        %5759 = vmatpush.bf16.msra.mxu0 %v5742
        %5760 = vmatpush.bf16.msra.mxu0 %v5741
        %5761 = vmatpush.bf16.msra.mxu0 %v5740
        %5762 = vmatpush.bf16.msra.mxu0 %v5739
        %5763 = vmatmul.bf16.gmra.mxu0 %v5688
        %v5764 = vpop.f32.mrf.mxu0
        %v5765 = vadd.f32 0.0, %v5764
        %v5766 = vpop.f32.mrf.mxu0
        %v5767 = vadd.f32 0.0, %v5766
        %5768 = vmatmul.bf16.gmra.mxu0 %v5689
        %v5769 = vpop.f32.mrf.mxu0
        %v5770 = vadd.f32 0.0, %v5769
        %v5771 = vpop.f32.mrf.mxu0
        %v5772 = vadd.f32 0.0, %v5771
        %5773 = vdwg.mxu0
        %v5774 = vadd.f32 %v5680, %v5765
        %v5775 = vadd.f32 %v5681, %v5767
        %v5776 = vadd.f32 %v5682, %v5770
        %v5777 = vadd.f32 %v5683, %v5772
        %v5778 = vld [vmem:[%s18] sm:$0x1]
        %v5779 = vld [vmem:[%s18 + $0x1] sm:$0x1]
        %v5780 = vperm.slane %v5778, 0
        %v5781 = vmul.f32 %v5774, %v5780
        %v5782 = vmul.f32 %v5775, %v5780
        %v5783 = vmul.f32 %v5776, %v5780
        %v5784 = vmul.f32 %v5777, %v5780
        %v5785 = vperm.slane %v5779, 0
        %v5786 = vadd.f32 %v5781, %v5785
        %v5787 = vadd.f32 %v5782, %v5785
        %v5788 = vadd.f32 %v5783, %v5785
        %v5789 = vadd.f32 %v5784, %v5785
        %v5790 = vmax.f32 %v5786, 0.0
        %v5791 = vmax.f32 %v5787, 0.0
        %v5792 = vmax.f32 %v5788, 0.0
        %v5793 = vmax.f32 %v5789, 0.0
        %5794 = vst [vmem:[#allocation3] sm:$0xff] %v5790
        %5795 = vst [vmem:[#allocation3 + $0x8] sm:$0xff] %v5791
        %5796 = vst [vmem:[#allocation3 + $0x10] sm:$0xff] %v5792
        %5797 = vst [vmem:[#allocation3 + $0x18] sm:$0x7] %v5793
        %v5798 = vld [vmem:[#allocation3] ss:$3 sm:$0xff]
        %v5799 = vld [vmem:[%s3055] ss:$3 sm:$0x1]
        %v5800 = vld [vmem:[%s3061] ss:$3 sm:$0xff]
        %v5801 = vld [vmem:[%s3063] ss:$3 sm:$0x1]
        %v5802 = vld [vmem:[%s3069] ss:$3 sm:$0xff]
        %v5803 = vld [vmem:[%s3071] ss:$3 sm:$0x1]
        %v5804 = vmax.f32 %v5798, %v5800
        %v5805 = vmax.f32 %v5799, %v5801
        %v5806 = vmax.f32 %v5804, %v5802
        %v5807 = vmax.f32 %v5805, %v5803
        %5808 = vst [vmem:[#allocation2] sm:$0x7] 0.0
        %5809 = vst [vmem:[#allocation2 + $0xc] sm:$0x7] 0.0
        %5810 = vst [vmem:[#allocation2 + $0x3] sm:$0xff] %v5806
        %5811 = vst [vmem:[#allocation2 + $0xb] sm:$0x1] %v5807
        %v5812 = vld [vmem:[#allocation2] sm:$0xff]
        %v5813 = vld [vmem:[#allocation2 + $0x8] sm:$0x1]
        %v5814 = vpack.c.bf16 %v5813, %v5812
        %v5815 = vld [vmem:[#allocation12] sm:$0xf]
        %v5816 = vld [vmem:[#allocation12 + $0x4] sm:$0xf]
        %v5817 = vld [vmem:[#allocation12 + $0x8] sm:$0xf]
        %v5818 = vld [vmem:[#allocation12 + $0xc] sm:$0xf]
        %v5819 = vld [vmem:[#allocation12 + $0x10] sm:$0xf]
        %v5820 = vld [vmem:[#allocation12 + $0x14] sm:$0xf]
        %v5821 = vld [vmem:[#allocation12 + $0x18] sm:$0xf]
        %v5822 = vld [vmem:[#allocation12 + $0x1c] sm:$0xf]
        %v5823 = vld [vmem:[#allocation12 + $0x20] sm:$0xf]
        %v5824 = vld [vmem:[#allocation12 + $0x24] sm:$0xf]
        %v5825 = vld [vmem:[#allocation12 + $0x28] sm:$0xf]
        %v5826 = vld [vmem:[#allocation12 + $0x2c] sm:$0xf]
        %v5827 = vld [vmem:[#allocation12 + $0x30] sm:$0xf]
        %v5828 = vld [vmem:[#allocation12 + $0x34] sm:$0xf]
        %v5829 = vld [vmem:[#allocation12 + $0x38] sm:$0xf]
        %v5830 = vld [vmem:[#allocation12 + $0x3c] sm:$0xf]
        %v5831 = vld [vmem:[#allocation2 + $0x1] sm:$0xff]
        %v5832 = vld [vmem:[#allocation2 + $0x9] sm:$0x1]
        %v5833 = vpack.c.bf16 %v5832, %v5831
        %s5834 = scalar_lea.vmem [#allocation12], 64
        %v5835 = vld [vmem:[%s5834] sm:$0xf]
        %v5836 = vld [vmem:[%s5834 + $0x4] sm:$0xf]
        %v5837 = vld [vmem:[%s5834 + $0x8] sm:$0xf]
        %v5838 = vld [vmem:[%s5834 + $0xc] sm:$0xf]
        %v5839 = vld [vmem:[%s5834 + $0x10] sm:$0xf]
        %v5840 = vld [vmem:[%s5834 + $0x14] sm:$0xf]
        %v5841 = vld [vmem:[%s5834 + $0x18] sm:$0xf]
        %v5842 = vld [vmem:[%s5834 + $0x1c] sm:$0xf]
        %v5843 = vld [vmem:[%s5834 + $0x20] sm:$0xf]
        %v5844 = vld [vmem:[%s5834 + $0x24] sm:$0xf]
        %v5845 = vld [vmem:[%s5834 + $0x28] sm:$0xf]
        %v5846 = vld [vmem:[%s5834 + $0x2c] sm:$0xf]
        %v5847 = vld [vmem:[%s5834 + $0x30] sm:$0xf]
        %v5848 = vld [vmem:[%s5834 + $0x34] sm:$0xf]
        %v5849 = vld [vmem:[%s5834 + $0x38] sm:$0xf]
        %v5850 = vld [vmem:[%s5834 + $0x3c] sm:$0xf]
        %v5867 = vunpack.c.l.b16 %v5835
        %v5868 = vunpack.c.l.b16 %v5836
        %v5869 = vunpack.c.l.b16 %v5837
        %v5870 = vunpack.c.l.b16 %v5838
        %v5871 = vunpack.c.l.b16 %v5839
        %v5872 = vunpack.c.l.b16 %v5840
        %v5873 = vunpack.c.l.b16 %v5841
        %v5874 = vunpack.c.l.b16 %v5842
        %v5875 = vunpack.c.l.b16 %v5843
        %v5876 = vunpack.c.l.b16 %v5844
        %v5877 = vunpack.c.l.b16 %v5845
        %v5878 = vunpack.c.l.b16 %v5846
        %v5879 = vunpack.c.l.b16 %v5847
        %v5880 = vunpack.c.l.b16 %v5848
        %v5881 = vunpack.c.l.b16 %v5849
        %v5882 = vunpack.c.l.b16 %v5850
        %v5883 = vpack.c.b16 %v5868, %v5867
        %v5884 = vpack.c.b16 %v5870, %v5869
        %v5885 = vpack.c.b16 %v5872, %v5871
        %v5886 = vpack.c.b16 %v5874, %v5873
        %v5887 = vpack.c.b16 %v5876, %v5875
        %v5888 = vpack.c.b16 %v5878, %v5877
        %v5889 = vpack.c.b16 %v5880, %v5879
        %v5890 = vpack.c.b16 %v5882, %v5881
        %5899 = vmatpush.bf16.msra.mxu0 %v5890
        %5900 = vmatpush.bf16.msra.mxu0 %v5889
        %5901 = vmatpush.bf16.msra.mxu0 %v5888
        %5902 = vmatpush.bf16.msra.mxu0 %v5887
        %5903 = vmatpush.bf16.msra.mxu0 %v5886
        %5904 = vmatpush.bf16.msra.mxu0 %v5885
        %5905 = vmatpush.bf16.msra.mxu0 %v5884
        %5906 = vmatpush.bf16.msra.mxu0 %v5883
        %5907 = vmatmul.bf16.gmra.mxu0 %v5833
        %v5908 = vpop.f32.mrf.mxu0
        %v5909 = vadd.f32 0.0, %v5908
        %v5910 = vpop.f32.mrf.mxu0
        %v5911 = vadd.f32 0.0, %v5910
        %5912 = vdwg.mxu0
        %v5929 = vunpack.c.l.b16 %v5815
        %v5930 = vunpack.c.l.b16 %v5816
        %v5931 = vunpack.c.l.b16 %v5817
        %v5932 = vunpack.c.l.b16 %v5818
        %v5933 = vunpack.c.l.b16 %v5819
        %v5934 = vunpack.c.l.b16 %v5820
        %v5935 = vunpack.c.l.b16 %v5821
        %v5936 = vunpack.c.l.b16 %v5822
        %v5937 = vunpack.c.l.b16 %v5823
        %v5938 = vunpack.c.l.b16 %v5824
        %v5939 = vunpack.c.l.b16 %v5825
        %v5940 = vunpack.c.l.b16 %v5826
        %v5941 = vunpack.c.l.b16 %v5827
        %v5942 = vunpack.c.l.b16 %v5828
        %v5943 = vunpack.c.l.b16 %v5829
        %v5944 = vunpack.c.l.b16 %v5830
        %v5945 = vpack.c.b16 %v5930, %v5929
        %v5946 = vpack.c.b16 %v5932, %v5931
        %v5947 = vpack.c.b16 %v5934, %v5933
        %v5948 = vpack.c.b16 %v5936, %v5935
        %v5949 = vpack.c.b16 %v5938, %v5937
        %v5950 = vpack.c.b16 %v5940, %v5939
        %v5951 = vpack.c.b16 %v5942, %v5941
        %v5952 = vpack.c.b16 %v5944, %v5943
        %5961 = vmatpush.bf16.msra.mxu0 %v5952
        %5962 = vmatpush.bf16.msra.mxu0 %v5951
        %5963 = vmatpush.bf16.msra.mxu0 %v5950
        %5964 = vmatpush.bf16.msra.mxu0 %v5949
        %5965 = vmatpush.bf16.msra.mxu0 %v5948
        %5966 = vmatpush.bf16.msra.mxu0 %v5947
        %5967 = vmatpush.bf16.msra.mxu0 %v5946
        %5968 = vmatpush.bf16.msra.mxu0 %v5945
        %5969 = vmatmul.bf16.gmra.mxu0 %v5814
        %v5970 = vpop.f32.mrf.mxu0
        %v5971 = vadd.f32 %v5909, %v5970
        %v5972 = vpop.f32.mrf.mxu0
        %v5973 = vadd.f32 %v5911, %v5972
        %5974 = vdwg.mxu0
        %v5975 = vld [vmem:[#allocation2 + $0x2] sm:$0xff]
        %v5976 = vld [vmem:[#allocation2 + $0xa] sm:$0x1]
        %v5977 = vpack.c.bf16 %v5976, %v5975
        %s5978 = scalar_lea.vmem [#allocation12], 128
        %v5979 = vld [vmem:[%s5978] sm:$0xf]
        %v5980 = vld [vmem:[%s5978 + $0x4] sm:$0xf]
        %v5981 = vld [vmem:[%s5978 + $0x8] sm:$0xf]
        %v5982 = vld [vmem:[%s5978 + $0xc] sm:$0xf]
        %v5983 = vld [vmem:[%s5978 + $0x10] sm:$0xf]
        %v5984 = vld [vmem:[%s5978 + $0x14] sm:$0xf]
        %v5985 = vld [vmem:[%s5978 + $0x18] sm:$0xf]
        %v5986 = vld [vmem:[%s5978 + $0x1c] sm:$0xf]
        %v5987 = vld [vmem:[%s5978 + $0x20] sm:$0xf]
        %v5988 = vld [vmem:[%s5978 + $0x24] sm:$0xf]
        %v5989 = vld [vmem:[%s5978 + $0x28] sm:$0xf]
        %v5990 = vld [vmem:[%s5978 + $0x2c] sm:$0xf]
        %v5991 = vld [vmem:[%s5978 + $0x30] sm:$0xf]
        %v5992 = vld [vmem:[%s5978 + $0x34] sm:$0xf]
        %v5993 = vld [vmem:[%s5978 + $0x38] sm:$0xf]
        %v5994 = vld [vmem:[%s5978 + $0x3c] sm:$0xf]
        %v6011 = vunpack.c.l.b16 %v5979
        %v6012 = vunpack.c.l.b16 %v5980
        %v6013 = vunpack.c.l.b16 %v5981
        %v6014 = vunpack.c.l.b16 %v5982
        %v6015 = vunpack.c.l.b16 %v5983
        %v6016 = vunpack.c.l.b16 %v5984
        %v6017 = vunpack.c.l.b16 %v5985
        %v6018 = vunpack.c.l.b16 %v5986
        %v6019 = vunpack.c.l.b16 %v5987
        %v6020 = vunpack.c.l.b16 %v5988
        %v6021 = vunpack.c.l.b16 %v5989
        %v6022 = vunpack.c.l.b16 %v5990
        %v6023 = vunpack.c.l.b16 %v5991
        %v6024 = vunpack.c.l.b16 %v5992
        %v6025 = vunpack.c.l.b16 %v5993
        %v6026 = vunpack.c.l.b16 %v5994
        %v6027 = vpack.c.b16 %v6012, %v6011
        %v6028 = vpack.c.b16 %v6014, %v6013
        %v6029 = vpack.c.b16 %v6016, %v6015
        %v6030 = vpack.c.b16 %v6018, %v6017
        %v6031 = vpack.c.b16 %v6020, %v6019
        %v6032 = vpack.c.b16 %v6022, %v6021
        %v6033 = vpack.c.b16 %v6024, %v6023
        %v6034 = vpack.c.b16 %v6026, %v6025
        %6043 = vmatpush.bf16.msra.mxu0 %v6034
        %6044 = vmatpush.bf16.msra.mxu0 %v6033
        %6045 = vmatpush.bf16.msra.mxu0 %v6032
        %6046 = vmatpush.bf16.msra.mxu0 %v6031
        %6047 = vmatpush.bf16.msra.mxu0 %v6030
        %6048 = vmatpush.bf16.msra.mxu0 %v6029
        %6049 = vmatpush.bf16.msra.mxu0 %v6028
        %6050 = vmatpush.bf16.msra.mxu0 %v6027
        %6051 = vmatmul.bf16.gmra.mxu0 %v5977
        %v6052 = vpop.f32.mrf.mxu0
        %v6053 = vadd.f32 0.0, %v6052
        %v6054 = vpop.f32.mrf.mxu0
        %v6055 = vadd.f32 0.0, %v6054
        %6056 = vdwg.mxu0
        %v6057 = vadd.f32 %v5971, %v6053
        %v6058 = vadd.f32 %v5973, %v6055
        %v6059 = vld [vmem:[#allocation2 + $0x3] sm:$0xff]
        %v6060 = vld [vmem:[#allocation2 + $0xb] sm:$0x1]
        %v6061 = vpack.c.bf16 %v6060, %v6059
        %s6062 = scalar_lea.vmem [#allocation12], 192
        %v6063 = vld [vmem:[%s6062] sm:$0xf]
        %v6064 = vld [vmem:[%s6062 + $0x4] sm:$0xf]
        %v6065 = vld [vmem:[%s6062 + $0x8] sm:$0xf]
        %v6066 = vld [vmem:[%s6062 + $0xc] sm:$0xf]
        %v6067 = vld [vmem:[%s6062 + $0x10] sm:$0xf]
        %v6068 = vld [vmem:[%s6062 + $0x14] sm:$0xf]
        %v6069 = vld [vmem:[%s6062 + $0x18] sm:$0xf]
        %v6070 = vld [vmem:[%s6062 + $0x1c] sm:$0xf]
        %v6071 = vld [vmem:[%s6062 + $0x20] sm:$0xf]
        %v6072 = vld [vmem:[%s6062 + $0x24] sm:$0xf]
        %v6073 = vld [vmem:[%s6062 + $0x28] sm:$0xf]
        %v6074 = vld [vmem:[%s6062 + $0x2c] sm:$0xf]
        %v6075 = vld [vmem:[%s6062 + $0x30] sm:$0xf]
        %v6076 = vld [vmem:[%s6062 + $0x34] sm:$0xf]
        %v6077 = vld [vmem:[%s6062 + $0x38] sm:$0xf]
        %v6078 = vld [vmem:[%s6062 + $0x3c] sm:$0xf]
        %v6095 = vunpack.c.l.b16 %v6063
        %v6096 = vunpack.c.l.b16 %v6064
        %v6097 = vunpack.c.l.b16 %v6065
        %v6098 = vunpack.c.l.b16 %v6066
        %v6099 = vunpack.c.l.b16 %v6067
        %v6100 = vunpack.c.l.b16 %v6068
        %v6101 = vunpack.c.l.b16 %v6069
        %v6102 = vunpack.c.l.b16 %v6070
        %v6103 = vunpack.c.l.b16 %v6071
        %v6104 = vunpack.c.l.b16 %v6072
        %v6105 = vunpack.c.l.b16 %v6073
        %v6106 = vunpack.c.l.b16 %v6074
        %v6107 = vunpack.c.l.b16 %v6075
        %v6108 = vunpack.c.l.b16 %v6076
        %v6109 = vunpack.c.l.b16 %v6077
        %v6110 = vunpack.c.l.b16 %v6078
        %v6111 = vpack.c.b16 %v6096, %v6095
        %v6112 = vpack.c.b16 %v6098, %v6097
        %v6113 = vpack.c.b16 %v6100, %v6099
        %v6114 = vpack.c.b16 %v6102, %v6101
        %v6115 = vpack.c.b16 %v6104, %v6103
        %v6116 = vpack.c.b16 %v6106, %v6105
        %v6117 = vpack.c.b16 %v6108, %v6107
        %v6118 = vpack.c.b16 %v6110, %v6109
        %6127 = vmatpush.bf16.msra.mxu0 %v6118
        %6128 = vmatpush.bf16.msra.mxu0 %v6117
        %6129 = vmatpush.bf16.msra.mxu0 %v6116
        %6130 = vmatpush.bf16.msra.mxu0 %v6115
        %6131 = vmatpush.bf16.msra.mxu0 %v6114
        %6132 = vmatpush.bf16.msra.mxu0 %v6113
        %6133 = vmatpush.bf16.msra.mxu0 %v6112
        %6134 = vmatpush.bf16.msra.mxu0 %v6111
        %6135 = vmatmul.bf16.gmra.mxu0 %v6061
        %v6136 = vpop.f32.mrf.mxu0
        %v6137 = vadd.f32 0.0, %v6136
        %v6138 = vpop.f32.mrf.mxu0
        %v6139 = vadd.f32 0.0, %v6138
        %6140 = vdwg.mxu0
        %v6141 = vadd.f32 %v6057, %v6137
        %v6142 = vadd.f32 %v6058, %v6139
        %v6143 = vld [vmem:[#allocation2 + $0x4] sm:$0xff]
        %v6144 = vld [vmem:[#allocation2 + $0xc] sm:$0x1]
        %v6145 = vpack.c.bf16 %v6144, %v6143
        %s6146 = scalar_lea.vmem [#allocation12], 256
        %v6147 = vld [vmem:[%s6146] sm:$0xf]
        %v6148 = vld [vmem:[%s6146 + $0x4] sm:$0xf]
        %v6149 = vld [vmem:[%s6146 + $0x8] sm:$0xf]
        %v6150 = vld [vmem:[%s6146 + $0xc] sm:$0xf]
        %v6151 = vld [vmem:[%s6146 + $0x10] sm:$0xf]
        %v6152 = vld [vmem:[%s6146 + $0x14] sm:$0xf]
        %v6153 = vld [vmem:[%s6146 + $0x18] sm:$0xf]
        %v6154 = vld [vmem:[%s6146 + $0x1c] sm:$0xf]
        %v6155 = vld [vmem:[%s6146 + $0x20] sm:$0xf]
        %v6156 = vld [vmem:[%s6146 + $0x24] sm:$0xf]
        %v6157 = vld [vmem:[%s6146 + $0x28] sm:$0xf]
        %v6158 = vld [vmem:[%s6146 + $0x2c] sm:$0xf]
        %v6159 = vld [vmem:[%s6146 + $0x30] sm:$0xf]
        %v6160 = vld [vmem:[%s6146 + $0x34] sm:$0xf]
        %v6161 = vld [vmem:[%s6146 + $0x38] sm:$0xf]
        %v6162 = vld [vmem:[%s6146 + $0x3c] sm:$0xf]
        %v6179 = vunpack.c.l.b16 %v6147
        %v6180 = vunpack.c.l.b16 %v6148
        %v6181 = vunpack.c.l.b16 %v6149
        %v6182 = vunpack.c.l.b16 %v6150
        %v6183 = vunpack.c.l.b16 %v6151
        %v6184 = vunpack.c.l.b16 %v6152
        %v6185 = vunpack.c.l.b16 %v6153
        %v6186 = vunpack.c.l.b16 %v6154
        %v6187 = vunpack.c.l.b16 %v6155
        %v6188 = vunpack.c.l.b16 %v6156
        %v6189 = vunpack.c.l.b16 %v6157
        %v6190 = vunpack.c.l.b16 %v6158
        %v6191 = vunpack.c.l.b16 %v6159
        %v6192 = vunpack.c.l.b16 %v6160
        %v6193 = vunpack.c.l.b16 %v6161
        %v6194 = vunpack.c.l.b16 %v6162
        %v6195 = vpack.c.b16 %v6180, %v6179
        %v6196 = vpack.c.b16 %v6182, %v6181
        %v6197 = vpack.c.b16 %v6184, %v6183
        %v6198 = vpack.c.b16 %v6186, %v6185
        %v6199 = vpack.c.b16 %v6188, %v6187
        %v6200 = vpack.c.b16 %v6190, %v6189
        %v6201 = vpack.c.b16 %v6192, %v6191
        %v6202 = vpack.c.b16 %v6194, %v6193
        %6211 = vmatpush.bf16.msra.mxu0 %v6202
        %6212 = vmatpush.bf16.msra.mxu0 %v6201
        %6213 = vmatpush.bf16.msra.mxu0 %v6200
        %6214 = vmatpush.bf16.msra.mxu0 %v6199
        %6215 = vmatpush.bf16.msra.mxu0 %v6198
        %6216 = vmatpush.bf16.msra.mxu0 %v6197
        %6217 = vmatpush.bf16.msra.mxu0 %v6196
        %6218 = vmatpush.bf16.msra.mxu0 %v6195
        %6219 = vmatmul.bf16.gmra.mxu0 %v6145
        %v6220 = vpop.f32.mrf.mxu0
        %v6221 = vadd.f32 0.0, %v6220
        %v6222 = vpop.f32.mrf.mxu0
        %v6223 = vadd.f32 0.0, %v6222
        %6224 = vdwg.mxu0
        %v6225 = vadd.f32 %v6141, %v6221
        %v6226 = vadd.f32 %v6142, %v6223
        %v6227 = vld [vmem:[#allocation2 + $0x5] sm:$0xff]
        %v6228 = vld [vmem:[#allocation2 + $0xd] sm:$0x1]
        %v6229 = vpack.c.bf16 %v6228, %v6227
        %s6230 = scalar_lea.vmem [#allocation12], 320
        %v6231 = vld [vmem:[%s6230] sm:$0xf]
        %v6232 = vld [vmem:[%s6230 + $0x4] sm:$0xf]
        %v6233 = vld [vmem:[%s6230 + $0x8] sm:$0xf]
        %v6234 = vld [vmem:[%s6230 + $0xc] sm:$0xf]
        %v6235 = vld [vmem:[%s6230 + $0x10] sm:$0xf]
        %v6236 = vld [vmem:[%s6230 + $0x14] sm:$0xf]
        %v6237 = vld [vmem:[%s6230 + $0x18] sm:$0xf]
        %v6238 = vld [vmem:[%s6230 + $0x1c] sm:$0xf]
        %v6239 = vld [vmem:[%s6230 + $0x20] sm:$0xf]
        %v6240 = vld [vmem:[%s6230 + $0x24] sm:$0xf]
        %v6241 = vld [vmem:[%s6230 + $0x28] sm:$0xf]
        %v6242 = vld [vmem:[%s6230 + $0x2c] sm:$0xf]
        %v6243 = vld [vmem:[%s6230 + $0x30] sm:$0xf]
        %v6244 = vld [vmem:[%s6230 + $0x34] sm:$0xf]
        %v6245 = vld [vmem:[%s6230 + $0x38] sm:$0xf]
        %v6246 = vld [vmem:[%s6230 + $0x3c] sm:$0xf]
        %v6263 = vunpack.c.l.b16 %v6231
        %v6264 = vunpack.c.l.b16 %v6232
        %v6265 = vunpack.c.l.b16 %v6233
        %v6266 = vunpack.c.l.b16 %v6234
        %v6267 = vunpack.c.l.b16 %v6235
        %v6268 = vunpack.c.l.b16 %v6236
        %v6269 = vunpack.c.l.b16 %v6237
        %v6270 = vunpack.c.l.b16 %v6238
        %v6271 = vunpack.c.l.b16 %v6239
        %v6272 = vunpack.c.l.b16 %v6240
        %v6273 = vunpack.c.l.b16 %v6241
        %v6274 = vunpack.c.l.b16 %v6242
        %v6275 = vunpack.c.l.b16 %v6243
        %v6276 = vunpack.c.l.b16 %v6244
        %v6277 = vunpack.c.l.b16 %v6245
        %v6278 = vunpack.c.l.b16 %v6246
        %v6279 = vpack.c.b16 %v6264, %v6263
        %v6280 = vpack.c.b16 %v6266, %v6265
        %v6281 = vpack.c.b16 %v6268, %v6267
        %v6282 = vpack.c.b16 %v6270, %v6269
        %v6283 = vpack.c.b16 %v6272, %v6271
        %v6284 = vpack.c.b16 %v6274, %v6273
        %v6285 = vpack.c.b16 %v6276, %v6275
        %v6286 = vpack.c.b16 %v6278, %v6277
        %6295 = vmatpush.bf16.msra.mxu0 %v6286
        %6296 = vmatpush.bf16.msra.mxu0 %v6285
        %6297 = vmatpush.bf16.msra.mxu0 %v6284
        %6298 = vmatpush.bf16.msra.mxu0 %v6283
        %6299 = vmatpush.bf16.msra.mxu0 %v6282
        %6300 = vmatpush.bf16.msra.mxu0 %v6281
        %6301 = vmatpush.bf16.msra.mxu0 %v6280
        %6302 = vmatpush.bf16.msra.mxu0 %v6279
        %6303 = vmatmul.bf16.gmra.mxu0 %v6229
        %v6304 = vpop.f32.mrf.mxu0
        %v6305 = vadd.f32 0.0, %v6304
        %v6306 = vpop.f32.mrf.mxu0
        %v6307 = vadd.f32 0.0, %v6306
        %6308 = vdwg.mxu0
        %v6309 = vadd.f32 %v6225, %v6305
        %v6310 = vadd.f32 %v6226, %v6307
        %v6311 = vld [vmem:[#allocation2 + $0x6] sm:$0xff]
        %v6312 = vld [vmem:[#allocation2 + $0xe] sm:$0x1]
        %v6313 = vpack.c.bf16 %v6312, %v6311
        %s6314 = scalar_lea.vmem [#allocation12], 384
        %v6315 = vld [vmem:[%s6314] sm:$0xf]
        %v6316 = vld [vmem:[%s6314 + $0x4] sm:$0xf]
        %v6317 = vld [vmem:[%s6314 + $0x8] sm:$0xf]
        %v6318 = vld [vmem:[%s6314 + $0xc] sm:$0xf]
        %v6319 = vld [vmem:[%s6314 + $0x10] sm:$0xf]
        %v6320 = vld [vmem:[%s6314 + $0x14] sm:$0xf]
        %v6321 = vld [vmem:[%s6314 + $0x18] sm:$0xf]
        %v6322 = vld [vmem:[%s6314 + $0x1c] sm:$0xf]
        %v6323 = vld [vmem:[%s6314 + $0x20] sm:$0xf]
        %v6324 = vld [vmem:[%s6314 + $0x24] sm:$0xf]
        %v6325 = vld [vmem:[%s6314 + $0x28] sm:$0xf]
        %v6326 = vld [vmem:[%s6314 + $0x2c] sm:$0xf]
        %v6327 = vld [vmem:[%s6314 + $0x30] sm:$0xf]
        %v6328 = vld [vmem:[%s6314 + $0x34] sm:$0xf]
        %v6329 = vld [vmem:[%s6314 + $0x38] sm:$0xf]
        %v6330 = vld [vmem:[%s6314 + $0x3c] sm:$0xf]
        %v6347 = vunpack.c.l.b16 %v6315
        %v6348 = vunpack.c.l.b16 %v6316
        %v6349 = vunpack.c.l.b16 %v6317
        %v6350 = vunpack.c.l.b16 %v6318
        %v6351 = vunpack.c.l.b16 %v6319
        %v6352 = vunpack.c.l.b16 %v6320
        %v6353 = vunpack.c.l.b16 %v6321
        %v6354 = vunpack.c.l.b16 %v6322
        %v6355 = vunpack.c.l.b16 %v6323
        %v6356 = vunpack.c.l.b16 %v6324
        %v6357 = vunpack.c.l.b16 %v6325
        %v6358 = vunpack.c.l.b16 %v6326
        %v6359 = vunpack.c.l.b16 %v6327
        %v6360 = vunpack.c.l.b16 %v6328
        %v6361 = vunpack.c.l.b16 %v6329
        %v6362 = vunpack.c.l.b16 %v6330
        %v6363 = vpack.c.b16 %v6348, %v6347
        %v6364 = vpack.c.b16 %v6350, %v6349
        %v6365 = vpack.c.b16 %v6352, %v6351
        %v6366 = vpack.c.b16 %v6354, %v6353
        %v6367 = vpack.c.b16 %v6356, %v6355
        %v6368 = vpack.c.b16 %v6358, %v6357
        %v6369 = vpack.c.b16 %v6360, %v6359
        %v6370 = vpack.c.b16 %v6362, %v6361
        %6379 = vmatpush.bf16.msra.mxu0 %v6370
        %6380 = vmatpush.bf16.msra.mxu0 %v6369
        %6381 = vmatpush.bf16.msra.mxu0 %v6368
        %6382 = vmatpush.bf16.msra.mxu0 %v6367
        %6383 = vmatpush.bf16.msra.mxu0 %v6366
        %6384 = vmatpush.bf16.msra.mxu0 %v6365
        %6385 = vmatpush.bf16.msra.mxu0 %v6364
        %6386 = vmatpush.bf16.msra.mxu0 %v6363
        %6387 = vmatmul.bf16.gmra.mxu0 %v6313
        %v6388 = vpop.f32.mrf.mxu0
        %v6389 = vadd.f32 0.0, %v6388
        %v6390 = vpop.f32.mrf.mxu0
        %v6391 = vadd.f32 0.0, %v6390
        %6392 = vdwg.mxu0
        %v6393 = vadd.f32 %v6309, %v6389
        %v6394 = vadd.f32 %v6310, %v6391
        %v6395 = vld [vmem:[%s19] sm:$0x1]
        %v6396 = vld [vmem:[%s19 + $0x1] sm:$0x1]
        %v6397 = vperm.slane %v6395, 0
        %v6398 = vmul.f32 %v6393, %v6397
        %v6399 = vmul.f32 %v6394, %v6397
        %v6400 = vperm.slane %v6396, 0
        %v6401 = vadd.f32 %v6398, %v6400
        %v6402 = vadd.f32 %v6399, %v6400
        %v6403 = vmax.f32 %v6401, 0.0
        %v6404 = vmax.f32 %v6402, 0.0
        %6405 = vst [vmem:[#allocation3] sm:$0xff] %v6403
        %6406 = vst [vmem:[#allocation3 + $0x8] sm:$0x1] %v6404
        %v6407 = vld [vmem:[#allocation3] ss:$3 sm:$0x7]
        %v6408 = vld [vmem:[%s3061] ss:$3 sm:$0x7]
        %v6409 = vld [vmem:[%s3069] ss:$3 sm:$0x7]
        %v6410 = vmax.f32 %v6407, %v6408
        %v6411 = vmax.f32 %v6410, %v6409
        %6412 = vst [vmem:[#allocation2] sm:$0x1] 0.0
        %6413 = vst [vmem:[#allocation2 + $0x4] sm:$0x1] 0.0
        %6414 = vst [vmem:[#allocation2 + $0x1] sm:$0x7] %v6411
        %v6415 = vld [vmem:[#allocation2] sm:$0x7]
        %v6416 = vpack.c.bf16 %v6415, %v6415
        %v6417 = vld [vmem:[#allocation13] sm:$0xf]
        %v6418 = vld [vmem:[#allocation13 + $0x4] sm:$0xf]
        %v6419 = vld [vmem:[#allocation13 + $0x8] sm:$0xf]
        %v6420 = vld [vmem:[#allocation13 + $0xc] sm:$0xf]
        %v6421 = vld [vmem:[#allocation13 + $0x10] sm:$0xf]
        %v6422 = vld [vmem:[#allocation13 + $0x14] sm:$0xf]
        %v6423 = vld [vmem:[#allocation13 + $0x18] sm:$0xf]
        %v6424 = vld [vmem:[#allocation13 + $0x1c] sm:$0xf]
        %v6425 = vld [vmem:[#allocation13 + $0x20] sm:$0xf]
        %v6426 = vld [vmem:[#allocation13 + $0x24] sm:$0xf]
        %v6427 = vld [vmem:[#allocation13 + $0x28] sm:$0xf]
        %v6428 = vld [vmem:[#allocation13 + $0x2c] sm:$0xf]
        %v6429 = vld [vmem:[#allocation13 + $0x30] sm:$0xf]
        %v6430 = vld [vmem:[#allocation13 + $0x34] sm:$0xf]
        %v6431 = vld [vmem:[#allocation13 + $0x38] sm:$0xf]
        %v6432 = vld [vmem:[#allocation13 + $0x3c] sm:$0xf]
        %v6433 = vld [vmem:[#allocation2 + $0x1] sm:$0x7]
        %v6434 = vpack.c.bf16 %v6433, %v6433
        %s6435 = scalar_lea.vmem [#allocation13], 64
        %v6436 = vld [vmem:[%s6435] sm:$0xf]
        %v6437 = vld [vmem:[%s6435 + $0x4] sm:$0xf]
        %v6438 = vld [vmem:[%s6435 + $0x8] sm:$0xf]
        %v6439 = vld [vmem:[%s6435 + $0xc] sm:$0xf]
        %v6440 = vld [vmem:[%s6435 + $0x10] sm:$0xf]
        %v6441 = vld [vmem:[%s6435 + $0x14] sm:$0xf]
        %v6442 = vld [vmem:[%s6435 + $0x18] sm:$0xf]
        %v6443 = vld [vmem:[%s6435 + $0x1c] sm:$0xf]
        %v6444 = vld [vmem:[%s6435 + $0x20] sm:$0xf]
        %v6445 = vld [vmem:[%s6435 + $0x24] sm:$0xf]
        %v6446 = vld [vmem:[%s6435 + $0x28] sm:$0xf]
        %v6447 = vld [vmem:[%s6435 + $0x2c] sm:$0xf]
        %v6448 = vld [vmem:[%s6435 + $0x30] sm:$0xf]
        %v6449 = vld [vmem:[%s6435 + $0x34] sm:$0xf]
        %v6450 = vld [vmem:[%s6435 + $0x38] sm:$0xf]
        %v6451 = vld [vmem:[%s6435 + $0x3c] sm:$0xf]
        %v6468 = vunpack.c.l.b16 %v6436
        %v6469 = vunpack.c.l.b16 %v6437
        %v6470 = vunpack.c.l.b16 %v6438
        %v6471 = vunpack.c.l.b16 %v6439
        %v6472 = vunpack.c.l.b16 %v6440
        %v6473 = vunpack.c.l.b16 %v6441
        %v6474 = vunpack.c.l.b16 %v6442
        %v6475 = vunpack.c.l.b16 %v6443
        %v6476 = vunpack.c.l.b16 %v6444
        %v6477 = vunpack.c.l.b16 %v6445
        %v6478 = vunpack.c.l.b16 %v6446
        %v6479 = vunpack.c.l.b16 %v6447
        %v6480 = vunpack.c.l.b16 %v6448
        %v6481 = vunpack.c.l.b16 %v6449
        %v6482 = vunpack.c.l.b16 %v6450
        %v6483 = vunpack.c.l.b16 %v6451
        %v6484 = vpack.c.b16 %v6469, %v6468
        %v6485 = vpack.c.b16 %v6471, %v6470
        %v6486 = vpack.c.b16 %v6473, %v6472
        %v6487 = vpack.c.b16 %v6475, %v6474
        %v6488 = vpack.c.b16 %v6477, %v6476
        %v6489 = vpack.c.b16 %v6479, %v6478
        %v6490 = vpack.c.b16 %v6481, %v6480
        %v6491 = vpack.c.b16 %v6483, %v6482
        %6500 = vmatpush.bf16.msra.mxu0 %v6491
        %6501 = vmatpush.bf16.msra.mxu0 %v6490
        %6502 = vmatpush.bf16.msra.mxu0 %v6489
        %6503 = vmatpush.bf16.msra.mxu0 %v6488
        %6504 = vmatpush.bf16.msra.mxu0 %v6487
        %6505 = vmatpush.bf16.msra.mxu0 %v6486
        %6506 = vmatpush.bf16.msra.mxu0 %v6485
        %6507 = vmatpush.bf16.msra.mxu0 %v6484
        %6508 = vmatmul.bf16.gmra.mxu0 %v6434
        %v6509 = vpop.f32.mrf.mxu0
        %v6510 = vadd.f32 0.0, %v6509
        %v6511 = vpop.f32.mrf.mxu0
        %6512 = vdwg.mxu0
        %v6529 = vunpack.c.l.b16 %v6417
        %v6530 = vunpack.c.l.b16 %v6418
        %v6531 = vunpack.c.l.b16 %v6419
        %v6532 = vunpack.c.l.b16 %v6420
        %v6533 = vunpack.c.l.b16 %v6421
        %v6534 = vunpack.c.l.b16 %v6422
        %v6535 = vunpack.c.l.b16 %v6423
        %v6536 = vunpack.c.l.b16 %v6424
        %v6537 = vunpack.c.l.b16 %v6425
        %v6538 = vunpack.c.l.b16 %v6426
        %v6539 = vunpack.c.l.b16 %v6427
        %v6540 = vunpack.c.l.b16 %v6428
        %v6541 = vunpack.c.l.b16 %v6429
        %v6542 = vunpack.c.l.b16 %v6430
        %v6543 = vunpack.c.l.b16 %v6431
        %v6544 = vunpack.c.l.b16 %v6432
        %v6545 = vpack.c.b16 %v6530, %v6529
        %v6546 = vpack.c.b16 %v6532, %v6531
        %v6547 = vpack.c.b16 %v6534, %v6533
        %v6548 = vpack.c.b16 %v6536, %v6535
        %v6549 = vpack.c.b16 %v6538, %v6537
        %v6550 = vpack.c.b16 %v6540, %v6539
        %v6551 = vpack.c.b16 %v6542, %v6541
        %v6552 = vpack.c.b16 %v6544, %v6543
        %6561 = vmatpush.bf16.msra.mxu0 %v6552
        %6562 = vmatpush.bf16.msra.mxu0 %v6551
        %6563 = vmatpush.bf16.msra.mxu0 %v6550
        %6564 = vmatpush.bf16.msra.mxu0 %v6549
        %6565 = vmatpush.bf16.msra.mxu0 %v6548
        %6566 = vmatpush.bf16.msra.mxu0 %v6547
        %6567 = vmatpush.bf16.msra.mxu0 %v6546
        %6568 = vmatpush.bf16.msra.mxu0 %v6545
        %6569 = vmatmul.bf16.gmra.mxu0 %v6416
        %v6570 = vpop.f32.mrf.mxu0
        %v6571 = vadd.f32 %v6510, %v6570
        %v6572 = vpop.f32.mrf.mxu0
        %6573 = vdwg.mxu0
        %v6574 = vld [vmem:[#allocation2 + $0x2] sm:$0x7]
        %v6575 = vpack.c.bf16 %v6574, %v6574
        %s6576 = scalar_lea.vmem [#allocation13], 128
        %v6577 = vld [vmem:[%s6576] sm:$0xf]
        %v6578 = vld [vmem:[%s6576 + $0x4] sm:$0xf]
        %v6579 = vld [vmem:[%s6576 + $0x8] sm:$0xf]
        %v6580 = vld [vmem:[%s6576 + $0xc] sm:$0xf]
        %v6581 = vld [vmem:[%s6576 + $0x10] sm:$0xf]
        %v6582 = vld [vmem:[%s6576 + $0x14] sm:$0xf]
        %v6583 = vld [vmem:[%s6576 + $0x18] sm:$0xf]
        %v6584 = vld [vmem:[%s6576 + $0x1c] sm:$0xf]
        %v6585 = vld [vmem:[%s6576 + $0x20] sm:$0xf]
        %v6586 = vld [vmem:[%s6576 + $0x24] sm:$0xf]
        %v6587 = vld [vmem:[%s6576 + $0x28] sm:$0xf]
        %v6588 = vld [vmem:[%s6576 + $0x2c] sm:$0xf]
        %v6589 = vld [vmem:[%s6576 + $0x30] sm:$0xf]
        %v6590 = vld [vmem:[%s6576 + $0x34] sm:$0xf]
        %v6591 = vld [vmem:[%s6576 + $0x38] sm:$0xf]
        %v6592 = vld [vmem:[%s6576 + $0x3c] sm:$0xf]
        %v6609 = vunpack.c.l.b16 %v6577
        %v6610 = vunpack.c.l.b16 %v6578
        %v6611 = vunpack.c.l.b16 %v6579
        %v6612 = vunpack.c.l.b16 %v6580
        %v6613 = vunpack.c.l.b16 %v6581
        %v6614 = vunpack.c.l.b16 %v6582
        %v6615 = vunpack.c.l.b16 %v6583
        %v6616 = vunpack.c.l.b16 %v6584
        %v6617 = vunpack.c.l.b16 %v6585
        %v6618 = vunpack.c.l.b16 %v6586
        %v6619 = vunpack.c.l.b16 %v6587
        %v6620 = vunpack.c.l.b16 %v6588
        %v6621 = vunpack.c.l.b16 %v6589
        %v6622 = vunpack.c.l.b16 %v6590
        %v6623 = vunpack.c.l.b16 %v6591
        %v6624 = vunpack.c.l.b16 %v6592
        %v6625 = vpack.c.b16 %v6610, %v6609
        %v6626 = vpack.c.b16 %v6612, %v6611
        %v6627 = vpack.c.b16 %v6614, %v6613
        %v6628 = vpack.c.b16 %v6616, %v6615
        %v6629 = vpack.c.b16 %v6618, %v6617
        %v6630 = vpack.c.b16 %v6620, %v6619
        %v6631 = vpack.c.b16 %v6622, %v6621
        %v6632 = vpack.c.b16 %v6624, %v6623
        %6641 = vmatpush.bf16.msra.mxu0 %v6632
        %6642 = vmatpush.bf16.msra.mxu0 %v6631
        %6643 = vmatpush.bf16.msra.mxu0 %v6630
        %6644 = vmatpush.bf16.msra.mxu0 %v6629
        %6645 = vmatpush.bf16.msra.mxu0 %v6628
        %6646 = vmatpush.bf16.msra.mxu0 %v6627
        %6647 = vmatpush.bf16.msra.mxu0 %v6626
        %6648 = vmatpush.bf16.msra.mxu0 %v6625
        %6649 = vmatmul.bf16.gmra.mxu0 %v6575
        %v6650 = vpop.f32.mrf.mxu0
        %v6651 = vadd.f32 0.0, %v6650
        %v6652 = vpop.f32.mrf.mxu0
        %6653 = vdwg.mxu0
        %v6654 = vadd.f32 %v6571, %v6651
        %v6655 = vld [vmem:[%s20] sm:$0x1]
        %v6656 = vld [vmem:[%s20 + $0x1] sm:$0x1]
        %v6657 = vperm.slane %v6655, 0
        %v6658 = vmul.f32 %v6654, %v6657
        %v6659 = vperm.slane %v6656, 0
        %v6660 = vadd.f32 %v6658, %v6659
        %v6661 = vmax.f32 %v6660, 0.0
        %6662 = vst [vmem:[#allocation2] sm:$0x1] 0.0
        %6663 = vst [vmem:[#allocation2 + $0x4] sm:$0x1] 0.0
        %6664 = vst [vmem:[#allocation2 + $0x1] sm:$0x7] %v6661
        %v6665 = vld [vmem:[#allocation2] sm:$0x7]
        %v6666 = vpack.c.bf16 %v6665, %v6665
        %v6667 = vld [vmem:[#allocation15] sm:$0xf]
        %v6668 = vld [vmem:[#allocation15 + $0x4] sm:$0xf]
        %v6669 = vld [vmem:[#allocation15 + $0x8] sm:$0xf]
        %v6670 = vld [vmem:[#allocation15 + $0xc] sm:$0xf]
        %v6671 = vld [vmem:[#allocation15 + $0x10] sm:$0xf]
        %v6672 = vld [vmem:[#allocation15 + $0x14] sm:$0xf]
        %v6673 = vld [vmem:[#allocation15 + $0x18] sm:$0xf]
        %v6674 = vld [vmem:[#allocation15 + $0x1c] sm:$0xf]
        %v6675 = vld [vmem:[#allocation15 + $0x20] sm:$0xf]
        %v6676 = vld [vmem:[#allocation15 + $0x24] sm:$0xf]
        %v6677 = vld [vmem:[#allocation15 + $0x28] sm:$0xf]
        %v6678 = vld [vmem:[#allocation15 + $0x2c] sm:$0xf]
        %v6679 = vld [vmem:[#allocation15 + $0x30] sm:$0xf]
        %v6680 = vld [vmem:[#allocation15 + $0x34] sm:$0xf]
        %v6681 = vld [vmem:[#allocation15 + $0x38] sm:$0xf]
        %v6682 = vld [vmem:[#allocation15 + $0x3c] sm:$0xf]
        %v6683 = vld [vmem:[#allocation2 + $0x1] sm:$0x7]
        %v6684 = vpack.c.bf16 %v6683, %v6683
        %s6685 = scalar_lea.vmem [#allocation15], 64
        %v6686 = vld [vmem:[%s6685] sm:$0xf]
        %v6687 = vld [vmem:[%s6685 + $0x4] sm:$0xf]
        %v6688 = vld [vmem:[%s6685 + $0x8] sm:$0xf]
        %v6689 = vld [vmem:[%s6685 + $0xc] sm:$0xf]
        %v6690 = vld [vmem:[%s6685 + $0x10] sm:$0xf]
        %v6691 = vld [vmem:[%s6685 + $0x14] sm:$0xf]
        %v6692 = vld [vmem:[%s6685 + $0x18] sm:$0xf]
        %v6693 = vld [vmem:[%s6685 + $0x1c] sm:$0xf]
        %v6694 = vld [vmem:[%s6685 + $0x20] sm:$0xf]
        %v6695 = vld [vmem:[%s6685 + $0x24] sm:$0xf]
        %v6696 = vld [vmem:[%s6685 + $0x28] sm:$0xf]
        %v6697 = vld [vmem:[%s6685 + $0x2c] sm:$0xf]
        %v6698 = vld [vmem:[%s6685 + $0x30] sm:$0xf]
        %v6699 = vld [vmem:[%s6685 + $0x34] sm:$0xf]
        %v6700 = vld [vmem:[%s6685 + $0x38] sm:$0xf]
        %v6701 = vld [vmem:[%s6685 + $0x3c] sm:$0xf]
        %v6718 = vunpack.c.l.b16 %v6686
        %v6719 = vunpack.c.l.b16 %v6687
        %v6720 = vunpack.c.l.b16 %v6688
        %v6721 = vunpack.c.l.b16 %v6689
        %v6722 = vunpack.c.l.b16 %v6690
        %v6723 = vunpack.c.l.b16 %v6691
        %v6724 = vunpack.c.l.b16 %v6692
        %v6725 = vunpack.c.l.b16 %v6693
        %v6726 = vunpack.c.l.b16 %v6694
        %v6727 = vunpack.c.l.b16 %v6695
        %v6728 = vunpack.c.l.b16 %v6696
        %v6729 = vunpack.c.l.b16 %v6697
        %v6730 = vunpack.c.l.b16 %v6698
        %v6731 = vunpack.c.l.b16 %v6699
        %v6732 = vunpack.c.l.b16 %v6700
        %v6733 = vunpack.c.l.b16 %v6701
        %v6734 = vpack.c.b16 %v6719, %v6718
        %v6735 = vpack.c.b16 %v6721, %v6720
        %v6736 = vpack.c.b16 %v6723, %v6722
        %v6737 = vpack.c.b16 %v6725, %v6724
        %v6738 = vpack.c.b16 %v6727, %v6726
        %v6739 = vpack.c.b16 %v6729, %v6728
        %v6740 = vpack.c.b16 %v6731, %v6730
        %v6741 = vpack.c.b16 %v6733, %v6732
        %6750 = vmatpush.bf16.msra.mxu0 %v6741
        %6751 = vmatpush.bf16.msra.mxu0 %v6740
        %6752 = vmatpush.bf16.msra.mxu0 %v6739
        %6753 = vmatpush.bf16.msra.mxu0 %v6738
        %6754 = vmatpush.bf16.msra.mxu0 %v6737
        %6755 = vmatpush.bf16.msra.mxu0 %v6736
        %6756 = vmatpush.bf16.msra.mxu0 %v6735
        %6757 = vmatpush.bf16.msra.mxu0 %v6734
        %6758 = vmatmul.bf16.gmra.mxu0 %v6684
        %v6759 = vpop.f32.mrf.mxu0
        %v6760 = vadd.f32 0.0, %v6759
        %v6761 = vpop.f32.mrf.mxu0
        %6762 = vdwg.mxu0
        %v6779 = vunpack.c.l.b16 %v6667
        %v6780 = vunpack.c.l.b16 %v6668
        %v6781 = vunpack.c.l.b16 %v6669
        %v6782 = vunpack.c.l.b16 %v6670
        %v6783 = vunpack.c.l.b16 %v6671
        %v6784 = vunpack.c.l.b16 %v6672
        %v6785 = vunpack.c.l.b16 %v6673
        %v6786 = vunpack.c.l.b16 %v6674
        %v6787 = vunpack.c.l.b16 %v6675
        %v6788 = vunpack.c.l.b16 %v6676
        %v6789 = vunpack.c.l.b16 %v6677
        %v6790 = vunpack.c.l.b16 %v6678
        %v6791 = vunpack.c.l.b16 %v6679
        %v6792 = vunpack.c.l.b16 %v6680
        %v6793 = vunpack.c.l.b16 %v6681
        %v6794 = vunpack.c.l.b16 %v6682
        %v6795 = vpack.c.b16 %v6780, %v6779
        %v6796 = vpack.c.b16 %v6782, %v6781
        %v6797 = vpack.c.b16 %v6784, %v6783
        %v6798 = vpack.c.b16 %v6786, %v6785
        %v6799 = vpack.c.b16 %v6788, %v6787
        %v6800 = vpack.c.b16 %v6790, %v6789
        %v6801 = vpack.c.b16 %v6792, %v6791
        %v6802 = vpack.c.b16 %v6794, %v6793
        %6811 = vmatpush.bf16.msra.mxu0 %v6802
        %6812 = vmatpush.bf16.msra.mxu0 %v6801
        %6813 = vmatpush.bf16.msra.mxu0 %v6800
        %6814 = vmatpush.bf16.msra.mxu0 %v6799
        %6815 = vmatpush.bf16.msra.mxu0 %v6798
        %6816 = vmatpush.bf16.msra.mxu0 %v6797
        %6817 = vmatpush.bf16.msra.mxu0 %v6796
        %6818 = vmatpush.bf16.msra.mxu0 %v6795
        %6819 = vmatmul.bf16.gmra.mxu0 %v6666
        %v6820 = vpop.f32.mrf.mxu0
        %v6821 = vadd.f32 %v6760, %v6820
        %v6822 = vpop.f32.mrf.mxu0
        %6823 = vdwg.mxu0
        %v6824 = vld [vmem:[#allocation2 + $0x2] sm:$0x7]
        %v6825 = vpack.c.bf16 %v6824, %v6824
        %s6826 = scalar_lea.vmem [#allocation15], 128
        %v6827 = vld [vmem:[%s6826] sm:$0xf]
        %v6828 = vld [vmem:[%s6826 + $0x4] sm:$0xf]
        %v6829 = vld [vmem:[%s6826 + $0x8] sm:$0xf]
        %v6830 = vld [vmem:[%s6826 + $0xc] sm:$0xf]
        %v6831 = vld [vmem:[%s6826 + $0x10] sm:$0xf]
        %v6832 = vld [vmem:[%s6826 + $0x14] sm:$0xf]
        %v6833 = vld [vmem:[%s6826 + $0x18] sm:$0xf]
        %v6834 = vld [vmem:[%s6826 + $0x1c] sm:$0xf]
        %v6835 = vld [vmem:[%s6826 + $0x20] sm:$0xf]
        %v6836 = vld [vmem:[%s6826 + $0x24] sm:$0xf]
        %v6837 = vld [vmem:[%s6826 + $0x28] sm:$0xf]
        %v6838 = vld [vmem:[%s6826 + $0x2c] sm:$0xf]
        %v6839 = vld [vmem:[%s6826 + $0x30] sm:$0xf]
        %v6840 = vld [vmem:[%s6826 + $0x34] sm:$0xf]
        %v6841 = vld [vmem:[%s6826 + $0x38] sm:$0xf]
        %v6842 = vld [vmem:[%s6826 + $0x3c] sm:$0xf]
        %v6859 = vunpack.c.l.b16 %v6827
        %v6860 = vunpack.c.l.b16 %v6828
        %v6861 = vunpack.c.l.b16 %v6829
        %v6862 = vunpack.c.l.b16 %v6830
        %v6863 = vunpack.c.l.b16 %v6831
        %v6864 = vunpack.c.l.b16 %v6832
        %v6865 = vunpack.c.l.b16 %v6833
        %v6866 = vunpack.c.l.b16 %v6834
        %v6867 = vunpack.c.l.b16 %v6835
        %v6868 = vunpack.c.l.b16 %v6836
        %v6869 = vunpack.c.l.b16 %v6837
        %v6870 = vunpack.c.l.b16 %v6838
        %v6871 = vunpack.c.l.b16 %v6839
        %v6872 = vunpack.c.l.b16 %v6840
        %v6873 = vunpack.c.l.b16 %v6841
        %v6874 = vunpack.c.l.b16 %v6842
        %v6875 = vpack.c.b16 %v6860, %v6859
        %v6876 = vpack.c.b16 %v6862, %v6861
        %v6877 = vpack.c.b16 %v6864, %v6863
        %v6878 = vpack.c.b16 %v6866, %v6865
        %v6879 = vpack.c.b16 %v6868, %v6867
        %v6880 = vpack.c.b16 %v6870, %v6869
        %v6881 = vpack.c.b16 %v6872, %v6871
        %v6882 = vpack.c.b16 %v6874, %v6873
        %6891 = vmatpush.bf16.msra.mxu0 %v6882
        %6892 = vmatpush.bf16.msra.mxu0 %v6881
        %6893 = vmatpush.bf16.msra.mxu0 %v6880
        %6894 = vmatpush.bf16.msra.mxu0 %v6879
        %6895 = vmatpush.bf16.msra.mxu0 %v6878
        %6896 = vmatpush.bf16.msra.mxu0 %v6877
        %6897 = vmatpush.bf16.msra.mxu0 %v6876
        %6898 = vmatpush.bf16.msra.mxu0 %v6875
        %6899 = vmatmul.bf16.gmra.mxu0 %v6825
        %v6900 = vpop.f32.mrf.mxu0
        %v6901 = vadd.f32 0.0, %v6900
        %v6902 = vpop.f32.mrf.mxu0
        %6903 = vdwg.mxu0
        %v6904 = vadd.f32 %v6821, %v6901
        %v6905 = vld [vmem:[%s21] sm:$0x1]
        %v6906 = vld [vmem:[%s21 + $0x1] sm:$0x1]
        %v6907 = vperm.slane %v6905, 0
        %v6908 = vmul.f32 %v6904, %v6907
        %v6909 = vperm.slane %v6906, 0
        %v6910 = vadd.f32 %v6908, %v6909
        %v6911 = vmax.f32 %v6910, 0.0
        %6912 = vst [vmem:[#allocation2] sm:$0x1] 0.0
        %6913 = vst [vmem:[#allocation2 + $0x4] sm:$0x1] 0.0
        %6914 = vst [vmem:[#allocation2 + $0x1] sm:$0x7] %v6911
        %v6915 = vld [vmem:[#allocation2] sm:$0x7]
        %v6916 = vpack.c.bf16 %v6915, %v6915
        %v6917 = vld [vmem:[#allocation16] sm:$0xf]
        %v6918 = vld [vmem:[#allocation16 + $0x4] sm:$0xf]
        %v6919 = vld [vmem:[#allocation16 + $0x8] sm:$0xf]
        %v6920 = vld [vmem:[#allocation16 + $0xc] sm:$0xf]
        %v6921 = vld [vmem:[#allocation16 + $0x10] sm:$0xf]
        %v6922 = vld [vmem:[#allocation16 + $0x14] sm:$0xf]
        %v6923 = vld [vmem:[#allocation16 + $0x18] sm:$0xf]
        %v6924 = vld [vmem:[#allocation16 + $0x1c] sm:$0xf]
        %v6925 = vld [vmem:[#allocation16 + $0x20] sm:$0xf]
        %v6926 = vld [vmem:[#allocation16 + $0x24] sm:$0xf]
        %v6927 = vld [vmem:[#allocation16 + $0x28] sm:$0xf]
        %v6928 = vld [vmem:[#allocation16 + $0x2c] sm:$0xf]
        %v6929 = vld [vmem:[#allocation16 + $0x30] sm:$0xf]
        %v6930 = vld [vmem:[#allocation16 + $0x34] sm:$0xf]
        %v6931 = vld [vmem:[#allocation16 + $0x38] sm:$0xf]
        %v6932 = vld [vmem:[#allocation16 + $0x3c] sm:$0xf]
        %v6933 = vld [vmem:[#allocation2 + $0x1] sm:$0x7]
        %v6934 = vpack.c.bf16 %v6933, %v6933
        %s6935 = scalar_lea.vmem [#allocation16], 64
        %v6936 = vld [vmem:[%s6935] sm:$0xf]
        %v6937 = vld [vmem:[%s6935 + $0x4] sm:$0xf]
        %v6938 = vld [vmem:[%s6935 + $0x8] sm:$0xf]
        %v6939 = vld [vmem:[%s6935 + $0xc] sm:$0xf]
        %v6940 = vld [vmem:[%s6935 + $0x10] sm:$0xf]
        %v6941 = vld [vmem:[%s6935 + $0x14] sm:$0xf]
        %v6942 = vld [vmem:[%s6935 + $0x18] sm:$0xf]
        %v6943 = vld [vmem:[%s6935 + $0x1c] sm:$0xf]
        %v6944 = vld [vmem:[%s6935 + $0x20] sm:$0xf]
        %v6945 = vld [vmem:[%s6935 + $0x24] sm:$0xf]
        %v6946 = vld [vmem:[%s6935 + $0x28] sm:$0xf]
        %v6947 = vld [vmem:[%s6935 + $0x2c] sm:$0xf]
        %v6948 = vld [vmem:[%s6935 + $0x30] sm:$0xf]
        %v6949 = vld [vmem:[%s6935 + $0x34] sm:$0xf]
        %v6950 = vld [vmem:[%s6935 + $0x38] sm:$0xf]
        %v6951 = vld [vmem:[%s6935 + $0x3c] sm:$0xf]
        %v6968 = vunpack.c.l.b16 %v6936
        %v6969 = vunpack.c.l.b16 %v6937
        %v6970 = vunpack.c.l.b16 %v6938
        %v6971 = vunpack.c.l.b16 %v6939
        %v6972 = vunpack.c.l.b16 %v6940
        %v6973 = vunpack.c.l.b16 %v6941
        %v6974 = vunpack.c.l.b16 %v6942
        %v6975 = vunpack.c.l.b16 %v6943
        %v6976 = vunpack.c.l.b16 %v6944
        %v6977 = vunpack.c.l.b16 %v6945
        %v6978 = vunpack.c.l.b16 %v6946
        %v6979 = vunpack.c.l.b16 %v6947
        %v6980 = vunpack.c.l.b16 %v6948
        %v6981 = vunpack.c.l.b16 %v6949
        %v6982 = vunpack.c.l.b16 %v6950
        %v6983 = vunpack.c.l.b16 %v6951
        %v6984 = vpack.c.b16 %v6969, %v6968
        %v6985 = vpack.c.b16 %v6971, %v6970
        %v6986 = vpack.c.b16 %v6973, %v6972
        %v6987 = vpack.c.b16 %v6975, %v6974
        %v6988 = vpack.c.b16 %v6977, %v6976
        %v6989 = vpack.c.b16 %v6979, %v6978
        %v6990 = vpack.c.b16 %v6981, %v6980
        %v6991 = vpack.c.b16 %v6983, %v6982
        %7000 = vmatpush.bf16.msra.mxu0 %v6991
        %7001 = vmatpush.bf16.msra.mxu0 %v6990
        %7002 = vmatpush.bf16.msra.mxu0 %v6989
        %7003 = vmatpush.bf16.msra.mxu0 %v6988
        %7004 = vmatpush.bf16.msra.mxu0 %v6987
        %7005 = vmatpush.bf16.msra.mxu0 %v6986
        %7006 = vmatpush.bf16.msra.mxu0 %v6985
        %7007 = vmatpush.bf16.msra.mxu0 %v6984
        %7008 = vmatmul.bf16.gmra.mxu0 %v6934
        %v7009 = vpop.f32.mrf.mxu0
        %v7010 = vadd.f32 0.0, %v7009
        %v7011 = vpop.f32.mrf.mxu0
        %7012 = vdwg.mxu0
        %v7029 = vunpack.c.l.b16 %v6917
        %v7030 = vunpack.c.l.b16 %v6918
        %v7031 = vunpack.c.l.b16 %v6919
        %v7032 = vunpack.c.l.b16 %v6920
        %v7033 = vunpack.c.l.b16 %v6921
        %v7034 = vunpack.c.l.b16 %v6922
        %v7035 = vunpack.c.l.b16 %v6923
        %v7036 = vunpack.c.l.b16 %v6924
        %v7037 = vunpack.c.l.b16 %v6925
        %v7038 = vunpack.c.l.b16 %v6926
        %v7039 = vunpack.c.l.b16 %v6927
        %v7040 = vunpack.c.l.b16 %v6928
        %v7041 = vunpack.c.l.b16 %v6929
        %v7042 = vunpack.c.l.b16 %v6930
        %v7043 = vunpack.c.l.b16 %v6931
        %v7044 = vunpack.c.l.b16 %v6932
        %v7045 = vpack.c.b16 %v7030, %v7029
        %v7046 = vpack.c.b16 %v7032, %v7031
        %v7047 = vpack.c.b16 %v7034, %v7033
        %v7048 = vpack.c.b16 %v7036, %v7035
        %v7049 = vpack.c.b16 %v7038, %v7037
        %v7050 = vpack.c.b16 %v7040, %v7039
        %v7051 = vpack.c.b16 %v7042, %v7041
        %v7052 = vpack.c.b16 %v7044, %v7043
        %7061 = vmatpush.bf16.msra.mxu0 %v7052
        %7062 = vmatpush.bf16.msra.mxu0 %v7051
        %7063 = vmatpush.bf16.msra.mxu0 %v7050
        %7064 = vmatpush.bf16.msra.mxu0 %v7049
        %7065 = vmatpush.bf16.msra.mxu0 %v7048
        %7066 = vmatpush.bf16.msra.mxu0 %v7047
        %7067 = vmatpush.bf16.msra.mxu0 %v7046
        %7068 = vmatpush.bf16.msra.mxu0 %v7045
        %7069 = vmatmul.bf16.gmra.mxu0 %v6916
        %v7070 = vpop.f32.mrf.mxu0
        %v7071 = vadd.f32 %v7010, %v7070
        %v7072 = vpop.f32.mrf.mxu0
        %7073 = vdwg.mxu0
        %v7074 = vld [vmem:[#allocation2 + $0x2] sm:$0x7]
        %v7075 = vpack.c.bf16 %v7074, %v7074
        %s7076 = scalar_lea.vmem [#allocation16], 128
        %v7077 = vld [vmem:[%s7076] sm:$0xf]
        %v7078 = vld [vmem:[%s7076 + $0x4] sm:$0xf]
        %v7079 = vld [vmem:[%s7076 + $0x8] sm:$0xf]
        %v7080 = vld [vmem:[%s7076 + $0xc] sm:$0xf]
        %v7081 = vld [vmem:[%s7076 + $0x10] sm:$0xf]
        %v7082 = vld [vmem:[%s7076 + $0x14] sm:$0xf]
        %v7083 = vld [vmem:[%s7076 + $0x18] sm:$0xf]
        %v7084 = vld [vmem:[%s7076 + $0x1c] sm:$0xf]
        %v7085 = vld [vmem:[%s7076 + $0x20] sm:$0xf]
        %v7086 = vld [vmem:[%s7076 + $0x24] sm:$0xf]
        %v7087 = vld [vmem:[%s7076 + $0x28] sm:$0xf]
        %v7088 = vld [vmem:[%s7076 + $0x2c] sm:$0xf]
        %v7089 = vld [vmem:[%s7076 + $0x30] sm:$0xf]
        %v7090 = vld [vmem:[%s7076 + $0x34] sm:$0xf]
        %v7091 = vld [vmem:[%s7076 + $0x38] sm:$0xf]
        %v7092 = vld [vmem:[%s7076 + $0x3c] sm:$0xf]
        %v7109 = vunpack.c.l.b16 %v7077
        %v7110 = vunpack.c.l.b16 %v7078
        %v7111 = vunpack.c.l.b16 %v7079
        %v7112 = vunpack.c.l.b16 %v7080
        %v7113 = vunpack.c.l.b16 %v7081
        %v7114 = vunpack.c.l.b16 %v7082
        %v7115 = vunpack.c.l.b16 %v7083
        %v7116 = vunpack.c.l.b16 %v7084
        %v7117 = vunpack.c.l.b16 %v7085
        %v7118 = vunpack.c.l.b16 %v7086
        %v7119 = vunpack.c.l.b16 %v7087
        %v7120 = vunpack.c.l.b16 %v7088
        %v7121 = vunpack.c.l.b16 %v7089
        %v7122 = vunpack.c.l.b16 %v7090
        %v7123 = vunpack.c.l.b16 %v7091
        %v7124 = vunpack.c.l.b16 %v7092
        %v7125 = vpack.c.b16 %v7110, %v7109
        %v7126 = vpack.c.b16 %v7112, %v7111
        %v7127 = vpack.c.b16 %v7114, %v7113
        %v7128 = vpack.c.b16 %v7116, %v7115
        %v7129 = vpack.c.b16 %v7118, %v7117
        %v7130 = vpack.c.b16 %v7120, %v7119
        %v7131 = vpack.c.b16 %v7122, %v7121
        %v7132 = vpack.c.b16 %v7124, %v7123
        %7141 = vmatpush.bf16.msra.mxu0 %v7132
        %7142 = vmatpush.bf16.msra.mxu0 %v7131
        %7143 = vmatpush.bf16.msra.mxu0 %v7130
        %7144 = vmatpush.bf16.msra.mxu0 %v7129
        %7145 = vmatpush.bf16.msra.mxu0 %v7128
        %7146 = vmatpush.bf16.msra.mxu0 %v7127
        %7147 = vmatpush.bf16.msra.mxu0 %v7126
        %7148 = vmatpush.bf16.msra.mxu0 %v7125
        %7149 = vmatmul.bf16.gmra.mxu0 %v7075
        %v7150 = vpop.f32.mrf.mxu0
        %v7151 = vadd.f32 0.0, %v7150
        %v7152 = vpop.f32.mrf.mxu0
        %7153 = vdwg.mxu0
        %v7154 = vadd.f32 %v7071, %v7151
        %v7155 = vld [vmem:[%s22] sm:$0x1]
        %v7156 = vld [vmem:[%s22 + $0x1] sm:$0x1]
        %v7157 = vperm.slane %v7155, 0
        %v7158 = vmul.f32 %v7154, %v7157
        %v7159 = vperm.slane %v7156, 0
        %v7160 = vadd.f32 %v7158, %v7159
        %v7161 = vmax.f32 %v7160, 0.0
        %7162 = vst [vmem:[#allocation2] sm:$0x1] 0.0
        %7163 = vst [vmem:[#allocation2 + $0x4] sm:$0x1] 0.0
        %7164 = vst [vmem:[#allocation2 + $0x1] sm:$0x7] %v7161
        %v7165 = vld [vmem:[#allocation2] sm:$0x7]
        %v7166 = vpack.c.bf16 %v7165, %v7165
        %v7167 = vld [vmem:[#allocation18] sm:$0xf]
        %v7168 = vld [vmem:[#allocation18 + $0x4] sm:$0xf]
        %v7169 = vld [vmem:[#allocation18 + $0x8] sm:$0xf]
        %v7170 = vld [vmem:[#allocation18 + $0xc] sm:$0xf]
        %v7171 = vld [vmem:[#allocation18 + $0x10] sm:$0xf]
        %v7172 = vld [vmem:[#allocation18 + $0x14] sm:$0xf]
        %v7173 = vld [vmem:[#allocation18 + $0x18] sm:$0xf]
        %v7174 = vld [vmem:[#allocation18 + $0x1c] sm:$0xf]
        %v7175 = vld [vmem:[#allocation18 + $0x20] sm:$0xf]
        %v7176 = vld [vmem:[#allocation18 + $0x24] sm:$0xf]
        %v7177 = vld [vmem:[#allocation18 + $0x28] sm:$0xf]
        %v7178 = vld [vmem:[#allocation18 + $0x2c] sm:$0xf]
        %v7179 = vld [vmem:[#allocation18 + $0x30] sm:$0xf]
        %v7180 = vld [vmem:[#allocation18 + $0x34] sm:$0xf]
        %v7181 = vld [vmem:[#allocation18 + $0x38] sm:$0xf]
        %v7182 = vld [vmem:[#allocation18 + $0x3c] sm:$0xf]
        %v7183 = vld [vmem:[#allocation2 + $0x1] sm:$0x7]
        %v7184 = vpack.c.bf16 %v7183, %v7183
        %s7185 = scalar_lea.vmem [#allocation18], 64
        %v7186 = vld [vmem:[%s7185] sm:$0xf]
        %v7187 = vld [vmem:[%s7185 + $0x4] sm:$0xf]
        %v7188 = vld [vmem:[%s7185 + $0x8] sm:$0xf]
        %v7189 = vld [vmem:[%s7185 + $0xc] sm:$0xf]
        %v7190 = vld [vmem:[%s7185 + $0x10] sm:$0xf]
        %v7191 = vld [vmem:[%s7185 + $0x14] sm:$0xf]
        %v7192 = vld [vmem:[%s7185 + $0x18] sm:$0xf]
        %v7193 = vld [vmem:[%s7185 + $0x1c] sm:$0xf]
        %v7194 = vld [vmem:[%s7185 + $0x20] sm:$0xf]
        %v7195 = vld [vmem:[%s7185 + $0x24] sm:$0xf]
        %v7196 = vld [vmem:[%s7185 + $0x28] sm:$0xf]
        %v7197 = vld [vmem:[%s7185 + $0x2c] sm:$0xf]
        %v7198 = vld [vmem:[%s7185 + $0x30] sm:$0xf]
        %v7199 = vld [vmem:[%s7185 + $0x34] sm:$0xf]
        %v7200 = vld [vmem:[%s7185 + $0x38] sm:$0xf]
        %v7201 = vld [vmem:[%s7185 + $0x3c] sm:$0xf]
        %v7218 = vunpack.c.l.b16 %v7186
        %v7219 = vunpack.c.l.b16 %v7187
        %v7220 = vunpack.c.l.b16 %v7188
        %v7221 = vunpack.c.l.b16 %v7189
        %v7222 = vunpack.c.l.b16 %v7190
        %v7223 = vunpack.c.l.b16 %v7191
        %v7224 = vunpack.c.l.b16 %v7192
        %v7225 = vunpack.c.l.b16 %v7193
        %v7226 = vunpack.c.l.b16 %v7194
        %v7227 = vunpack.c.l.b16 %v7195
        %v7228 = vunpack.c.l.b16 %v7196
        %v7229 = vunpack.c.l.b16 %v7197
        %v7230 = vunpack.c.l.b16 %v7198
        %v7231 = vunpack.c.l.b16 %v7199
        %v7232 = vunpack.c.l.b16 %v7200
        %v7233 = vunpack.c.l.b16 %v7201
        %v7234 = vpack.c.b16 %v7219, %v7218
        %v7235 = vpack.c.b16 %v7221, %v7220
        %v7236 = vpack.c.b16 %v7223, %v7222
        %v7237 = vpack.c.b16 %v7225, %v7224
        %v7238 = vpack.c.b16 %v7227, %v7226
        %v7239 = vpack.c.b16 %v7229, %v7228
        %v7240 = vpack.c.b16 %v7231, %v7230
        %v7241 = vpack.c.b16 %v7233, %v7232
        %7250 = vmatpush.bf16.msra.mxu0 %v7241
        %7251 = vmatpush.bf16.msra.mxu0 %v7240
        %7252 = vmatpush.bf16.msra.mxu0 %v7239
        %7253 = vmatpush.bf16.msra.mxu0 %v7238
        %7254 = vmatpush.bf16.msra.mxu0 %v7237
        %7255 = vmatpush.bf16.msra.mxu0 %v7236
        %7256 = vmatpush.bf16.msra.mxu0 %v7235
        %7257 = vmatpush.bf16.msra.mxu0 %v7234
        %7258 = vmatmul.bf16.gmra.mxu0 %v7184
        %v7259 = vpop.f32.mrf.mxu0
        %v7260 = vadd.f32 0.0, %v7259
        %v7261 = vpop.f32.mrf.mxu0
        %7262 = vdwg.mxu0
        %v7279 = vunpack.c.l.b16 %v7167
        %v7280 = vunpack.c.l.b16 %v7168
        %v7281 = vunpack.c.l.b16 %v7169
        %v7282 = vunpack.c.l.b16 %v7170
        %v7283 = vunpack.c.l.b16 %v7171
        %v7284 = vunpack.c.l.b16 %v7172
        %v7285 = vunpack.c.l.b16 %v7173
        %v7286 = vunpack.c.l.b16 %v7174
        %v7287 = vunpack.c.l.b16 %v7175
        %v7288 = vunpack.c.l.b16 %v7176
        %v7289 = vunpack.c.l.b16 %v7177
        %v7290 = vunpack.c.l.b16 %v7178
        %v7291 = vunpack.c.l.b16 %v7179
        %v7292 = vunpack.c.l.b16 %v7180
        %v7293 = vunpack.c.l.b16 %v7181
        %v7294 = vunpack.c.l.b16 %v7182
        %v7295 = vpack.c.b16 %v7280, %v7279
        %v7296 = vpack.c.b16 %v7282, %v7281
        %v7297 = vpack.c.b16 %v7284, %v7283
        %v7298 = vpack.c.b16 %v7286, %v7285
        %v7299 = vpack.c.b16 %v7288, %v7287
        %v7300 = vpack.c.b16 %v7290, %v7289
        %v7301 = vpack.c.b16 %v7292, %v7291
        %v7302 = vpack.c.b16 %v7294, %v7293
        %7311 = vmatpush.bf16.msra.mxu0 %v7302
        %7312 = vmatpush.bf16.msra.mxu0 %v7301
        %7313 = vmatpush.bf16.msra.mxu0 %v7300
        %7314 = vmatpush.bf16.msra.mxu0 %v7299
        %7315 = vmatpush.bf16.msra.mxu0 %v7298
        %7316 = vmatpush.bf16.msra.mxu0 %v7297
        %7317 = vmatpush.bf16.msra.mxu0 %v7296
        %7318 = vmatpush.bf16.msra.mxu0 %v7295
        %7319 = vmatmul.bf16.gmra.mxu0 %v7166
        %v7320 = vpop.f32.mrf.mxu0
        %v7321 = vadd.f32 %v7260, %v7320
        %v7322 = vpop.f32.mrf.mxu0
        %7323 = vdwg.mxu0
        %v7324 = vld [vmem:[#allocation2 + $0x2] sm:$0x7]
        %v7325 = vpack.c.bf16 %v7324, %v7324
        %s7326 = scalar_lea.vmem [#allocation18], 128
        %v7327 = vld [vmem:[%s7326] sm:$0xf]
        %v7328 = vld [vmem:[%s7326 + $0x4] sm:$0xf]
        %v7329 = vld [vmem:[%s7326 + $0x8] sm:$0xf]
        %v7330 = vld [vmem:[%s7326 + $0xc] sm:$0xf]
        %v7331 = vld [vmem:[%s7326 + $0x10] sm:$0xf]
        %v7332 = vld [vmem:[%s7326 + $0x14] sm:$0xf]
        %v7333 = vld [vmem:[%s7326 + $0x18] sm:$0xf]
        %v7334 = vld [vmem:[%s7326 + $0x1c] sm:$0xf]
        %v7335 = vld [vmem:[%s7326 + $0x20] sm:$0xf]
        %v7336 = vld [vmem:[%s7326 + $0x24] sm:$0xf]
        %v7337 = vld [vmem:[%s7326 + $0x28] sm:$0xf]
        %v7338 = vld [vmem:[%s7326 + $0x2c] sm:$0xf]
        %v7339 = vld [vmem:[%s7326 + $0x30] sm:$0xf]
        %v7340 = vld [vmem:[%s7326 + $0x34] sm:$0xf]
        %v7341 = vld [vmem:[%s7326 + $0x38] sm:$0xf]
        %v7342 = vld [vmem:[%s7326 + $0x3c] sm:$0xf]
        %v7359 = vunpack.c.l.b16 %v7327
        %v7360 = vunpack.c.l.b16 %v7328
        %v7361 = vunpack.c.l.b16 %v7329
        %v7362 = vunpack.c.l.b16 %v7330
        %v7363 = vunpack.c.l.b16 %v7331
        %v7364 = vunpack.c.l.b16 %v7332
        %v7365 = vunpack.c.l.b16 %v7333
        %v7366 = vunpack.c.l.b16 %v7334
        %v7367 = vunpack.c.l.b16 %v7335
        %v7368 = vunpack.c.l.b16 %v7336
        %v7369 = vunpack.c.l.b16 %v7337
        %v7370 = vunpack.c.l.b16 %v7338
        %v7371 = vunpack.c.l.b16 %v7339
        %v7372 = vunpack.c.l.b16 %v7340
        %v7373 = vunpack.c.l.b16 %v7341
        %v7374 = vunpack.c.l.b16 %v7342
        %v7375 = vpack.c.b16 %v7360, %v7359
        %v7376 = vpack.c.b16 %v7362, %v7361
        %v7377 = vpack.c.b16 %v7364, %v7363
        %v7378 = vpack.c.b16 %v7366, %v7365
        %v7379 = vpack.c.b16 %v7368, %v7367
        %v7380 = vpack.c.b16 %v7370, %v7369
        %v7381 = vpack.c.b16 %v7372, %v7371
        %v7382 = vpack.c.b16 %v7374, %v7373
        %7391 = vmatpush.bf16.msra.mxu0 %v7382
        %7392 = vmatpush.bf16.msra.mxu0 %v7381
        %7393 = vmatpush.bf16.msra.mxu0 %v7380
        %7394 = vmatpush.bf16.msra.mxu0 %v7379
        %7395 = vmatpush.bf16.msra.mxu0 %v7378
        %7396 = vmatpush.bf16.msra.mxu0 %v7377
        %7397 = vmatpush.bf16.msra.mxu0 %v7376
        %7398 = vmatpush.bf16.msra.mxu0 %v7375
        %7399 = vmatmul.bf16.gmra.mxu0 %v7325
        %v7400 = vpop.f32.mrf.mxu0
        %v7401 = vadd.f32 0.0, %v7400
        %v7402 = vpop.f32.mrf.mxu0
        %7403 = vdwg.mxu0
        %v7404 = vadd.f32 %v7321, %v7401
        %v7405 = vld [vmem:[#allocation22] sm:$0x1]
        %v7406 = vld [vmem:[#allocation22 + $0x1] sm:$0x1]
        %v7407 = vperm.slane %v7405, 0
        %v7408 = vmul.f32 %v7404, %v7407
        %v7409 = vperm.slane %v7406, 0
        %v7410 = vadd.f32 %v7408, %v7409
        %v7411 = vmax.f32 %v7410, 0.0
        %7412 = vst [vmem:[#allocation2] sm:$0x1] 0.0
        %7413 = vst [vmem:[#allocation2 + $0x4] sm:$0x1] 0.0
        %7414 = vst [vmem:[#allocation2 + $0x1] sm:$0x7] %v7411
        %v7415 = vld [vmem:[#allocation2] sm:$0x7]
        %v7416 = vpack.c.bf16 %v7415, %v7415
        %v7417 = vld [vmem:[#allocation19] sm:$0xf]
        %v7418 = vld [vmem:[#allocation19 + $0x4] sm:$0xf]
        %v7419 = vld [vmem:[#allocation19 + $0x8] sm:$0xf]
        %v7420 = vld [vmem:[#allocation19 + $0xc] sm:$0xf]
        %v7421 = vld [vmem:[#allocation19 + $0x10] sm:$0xf]
        %v7422 = vld [vmem:[#allocation19 + $0x14] sm:$0xf]
        %v7423 = vld [vmem:[#allocation19 + $0x18] sm:$0xf]
        %v7424 = vld [vmem:[#allocation19 + $0x1c] sm:$0xf]
        %v7425 = vld [vmem:[#allocation19 + $0x20] sm:$0xf]
        %v7426 = vld [vmem:[#allocation19 + $0x24] sm:$0xf]
        %v7427 = vld [vmem:[#allocation19 + $0x28] sm:$0xf]
        %v7428 = vld [vmem:[#allocation19 + $0x2c] sm:$0xf]
        %v7429 = vld [vmem:[#allocation19 + $0x30] sm:$0xf]
        %v7430 = vld [vmem:[#allocation19 + $0x34] sm:$0xf]
        %v7431 = vld [vmem:[#allocation19 + $0x38] sm:$0xf]
        %v7432 = vld [vmem:[#allocation19 + $0x3c] sm:$0xf]
        %v7433 = vld [vmem:[#allocation2 + $0x1] sm:$0x7]
        %v7434 = vpack.c.bf16 %v7433, %v7433
        %s7435 = scalar_lea.vmem [#allocation19], 64
        %v7436 = vld [vmem:[%s7435] sm:$0xf]
        %v7437 = vld [vmem:[%s7435 + $0x4] sm:$0xf]
        %v7438 = vld [vmem:[%s7435 + $0x8] sm:$0xf]
        %v7439 = vld [vmem:[%s7435 + $0xc] sm:$0xf]
        %v7440 = vld [vmem:[%s7435 + $0x10] sm:$0xf]
        %v7441 = vld [vmem:[%s7435 + $0x14] sm:$0xf]
        %v7442 = vld [vmem:[%s7435 + $0x18] sm:$0xf]
        %v7443 = vld [vmem:[%s7435 + $0x1c] sm:$0xf]
        %v7444 = vld [vmem:[%s7435 + $0x20] sm:$0xf]
        %v7445 = vld [vmem:[%s7435 + $0x24] sm:$0xf]
        %v7446 = vld [vmem:[%s7435 + $0x28] sm:$0xf]
        %v7447 = vld [vmem:[%s7435 + $0x2c] sm:$0xf]
        %v7448 = vld [vmem:[%s7435 + $0x30] sm:$0xf]
        %v7449 = vld [vmem:[%s7435 + $0x34] sm:$0xf]
        %v7450 = vld [vmem:[%s7435 + $0x38] sm:$0xf]
        %v7451 = vld [vmem:[%s7435 + $0x3c] sm:$0xf]
        %v7468 = vunpack.c.l.b16 %v7436
        %v7469 = vunpack.c.l.b16 %v7437
        %v7470 = vunpack.c.l.b16 %v7438
        %v7471 = vunpack.c.l.b16 %v7439
        %v7472 = vunpack.c.l.b16 %v7440
        %v7473 = vunpack.c.l.b16 %v7441
        %v7474 = vunpack.c.l.b16 %v7442
        %v7475 = vunpack.c.l.b16 %v7443
        %v7476 = vunpack.c.l.b16 %v7444
        %v7477 = vunpack.c.l.b16 %v7445
        %v7478 = vunpack.c.l.b16 %v7446
        %v7479 = vunpack.c.l.b16 %v7447
        %v7480 = vunpack.c.l.b16 %v7448
        %v7481 = vunpack.c.l.b16 %v7449
        %v7482 = vunpack.c.l.b16 %v7450
        %v7483 = vunpack.c.l.b16 %v7451
        %v7484 = vpack.c.b16 %v7469, %v7468
        %v7485 = vpack.c.b16 %v7471, %v7470
        %v7486 = vpack.c.b16 %v7473, %v7472
        %v7487 = vpack.c.b16 %v7475, %v7474
        %v7488 = vpack.c.b16 %v7477, %v7476
        %v7489 = vpack.c.b16 %v7479, %v7478
        %v7490 = vpack.c.b16 %v7481, %v7480
        %v7491 = vpack.c.b16 %v7483, %v7482
        %7500 = vmatpush.bf16.msra.mxu0 %v7491
        %7501 = vmatpush.bf16.msra.mxu0 %v7490
        %7502 = vmatpush.bf16.msra.mxu0 %v7489
        %7503 = vmatpush.bf16.msra.mxu0 %v7488
        %7504 = vmatpush.bf16.msra.mxu0 %v7487
        %7505 = vmatpush.bf16.msra.mxu0 %v7486
        %7506 = vmatpush.bf16.msra.mxu0 %v7485
        %7507 = vmatpush.bf16.msra.mxu0 %v7484
        %7508 = vmatmul.bf16.gmra.mxu0 %v7434
        %v7509 = vpop.f32.mrf.mxu0
        %v7510 = vadd.f32 0.0, %v7509
        %v7511 = vpop.f32.mrf.mxu0
        %7512 = vdwg.mxu0
        %v7529 = vunpack.c.l.b16 %v7417
        %v7530 = vunpack.c.l.b16 %v7418
        %v7531 = vunpack.c.l.b16 %v7419
        %v7532 = vunpack.c.l.b16 %v7420
        %v7533 = vunpack.c.l.b16 %v7421
        %v7534 = vunpack.c.l.b16 %v7422
        %v7535 = vunpack.c.l.b16 %v7423
        %v7536 = vunpack.c.l.b16 %v7424
        %v7537 = vunpack.c.l.b16 %v7425
        %v7538 = vunpack.c.l.b16 %v7426
        %v7539 = vunpack.c.l.b16 %v7427
        %v7540 = vunpack.c.l.b16 %v7428
        %v7541 = vunpack.c.l.b16 %v7429
        %v7542 = vunpack.c.l.b16 %v7430
        %v7543 = vunpack.c.l.b16 %v7431
        %v7544 = vunpack.c.l.b16 %v7432
        %v7545 = vpack.c.b16 %v7530, %v7529
        %v7546 = vpack.c.b16 %v7532, %v7531
        %v7547 = vpack.c.b16 %v7534, %v7533
        %v7548 = vpack.c.b16 %v7536, %v7535
        %v7549 = vpack.c.b16 %v7538, %v7537
        %v7550 = vpack.c.b16 %v7540, %v7539
        %v7551 = vpack.c.b16 %v7542, %v7541
        %v7552 = vpack.c.b16 %v7544, %v7543
        %7561 = vmatpush.bf16.msra.mxu0 %v7552
        %7562 = vmatpush.bf16.msra.mxu0 %v7551
        %7563 = vmatpush.bf16.msra.mxu0 %v7550
        %7564 = vmatpush.bf16.msra.mxu0 %v7549
        %7565 = vmatpush.bf16.msra.mxu0 %v7548
        %7566 = vmatpush.bf16.msra.mxu0 %v7547
        %7567 = vmatpush.bf16.msra.mxu0 %v7546
        %7568 = vmatpush.bf16.msra.mxu0 %v7545
        %7569 = vmatmul.bf16.gmra.mxu0 %v7416
        %v7570 = vpop.f32.mrf.mxu0
        %v7571 = vadd.f32 %v7510, %v7570
        %v7572 = vpop.f32.mrf.mxu0
        %7573 = vdwg.mxu0
        %v7574 = vld [vmem:[#allocation2 + $0x2] sm:$0x7]
        %v7575 = vpack.c.bf16 %v7574, %v7574
        %s7576 = scalar_lea.vmem [#allocation19], 128
        %v7577 = vld [vmem:[%s7576] sm:$0xf]
        %v7578 = vld [vmem:[%s7576 + $0x4] sm:$0xf]
        %v7579 = vld [vmem:[%s7576 + $0x8] sm:$0xf]
        %v7580 = vld [vmem:[%s7576 + $0xc] sm:$0xf]
        %v7581 = vld [vmem:[%s7576 + $0x10] sm:$0xf]
        %v7582 = vld [vmem:[%s7576 + $0x14] sm:$0xf]
        %v7583 = vld [vmem:[%s7576 + $0x18] sm:$0xf]
        %v7584 = vld [vmem:[%s7576 + $0x1c] sm:$0xf]
        %v7585 = vld [vmem:[%s7576 + $0x20] sm:$0xf]
        %v7586 = vld [vmem:[%s7576 + $0x24] sm:$0xf]
        %v7587 = vld [vmem:[%s7576 + $0x28] sm:$0xf]
        %v7588 = vld [vmem:[%s7576 + $0x2c] sm:$0xf]
        %v7589 = vld [vmem:[%s7576 + $0x30] sm:$0xf]
        %v7590 = vld [vmem:[%s7576 + $0x34] sm:$0xf]
        %v7591 = vld [vmem:[%s7576 + $0x38] sm:$0xf]
        %v7592 = vld [vmem:[%s7576 + $0x3c] sm:$0xf]
        %v7609 = vunpack.c.l.b16 %v7577
        %v7610 = vunpack.c.l.b16 %v7578
        %v7611 = vunpack.c.l.b16 %v7579
        %v7612 = vunpack.c.l.b16 %v7580
        %v7613 = vunpack.c.l.b16 %v7581
        %v7614 = vunpack.c.l.b16 %v7582
        %v7615 = vunpack.c.l.b16 %v7583
        %v7616 = vunpack.c.l.b16 %v7584
        %v7617 = vunpack.c.l.b16 %v7585
        %v7618 = vunpack.c.l.b16 %v7586
        %v7619 = vunpack.c.l.b16 %v7587
        %v7620 = vunpack.c.l.b16 %v7588
        %v7621 = vunpack.c.l.b16 %v7589
        %v7622 = vunpack.c.l.b16 %v7590
        %v7623 = vunpack.c.l.b16 %v7591
        %v7624 = vunpack.c.l.b16 %v7592
        %v7625 = vpack.c.b16 %v7610, %v7609
        %v7626 = vpack.c.b16 %v7612, %v7611
        %v7627 = vpack.c.b16 %v7614, %v7613
        %v7628 = vpack.c.b16 %v7616, %v7615
        %v7629 = vpack.c.b16 %v7618, %v7617
        %v7630 = vpack.c.b16 %v7620, %v7619
        %v7631 = vpack.c.b16 %v7622, %v7621
        %v7632 = vpack.c.b16 %v7624, %v7623
        %7641 = vmatpush.bf16.msra.mxu0 %v7632
        %7642 = vmatpush.bf16.msra.mxu0 %v7631
        %7643 = vmatpush.bf16.msra.mxu0 %v7630
        %7644 = vmatpush.bf16.msra.mxu0 %v7629
        %7645 = vmatpush.bf16.msra.mxu0 %v7628
        %7646 = vmatpush.bf16.msra.mxu0 %v7627
        %7647 = vmatpush.bf16.msra.mxu0 %v7626
        %7648 = vmatpush.bf16.msra.mxu0 %v7625
        %7649 = vmatmul.bf16.gmra.mxu0 %v7575
        %v7650 = vpop.f32.mrf.mxu0
        %v7651 = vadd.f32 0.0, %v7650
        %v7652 = vpop.f32.mrf.mxu0
        %7653 = vdwg.mxu0
        %v7654 = vadd.f32 %v7571, %v7651
        %v7655 = vld [vmem:[#allocation24] sm:$0x1]
        %v7656 = vld [vmem:[#allocation24 + $0x1] sm:$0x1]
        %v7657 = vperm.slane %v7655, 0
        %v7658 = vmul.f32 %v7654, %v7657
        %v7659 = vperm.slane %v7656, 0
        %v7660 = vadd.f32 %v7658, %v7659
        %v7661 = vmax.f32 %v7660, 0.0
        %7662 = vst [vmem:[#allocation2] sm:$0x1] 0.0
        %7663 = vst [vmem:[#allocation2 + $0x4] sm:$0x1] 0.0
        %7664 = vst [vmem:[#allocation2 + $0x1] sm:$0x7] %v7661
        %v7665 = vld [vmem:[#allocation2] sm:$0x7]
        %v7666 = vpack.c.bf16 %v7665, %v7665
        %v7667 = vld [vmem:[#allocation21] sm:$0xf]
        %v7668 = vld [vmem:[#allocation21 + $0x4] sm:$0xf]
        %v7669 = vld [vmem:[#allocation21 + $0x8] sm:$0xf]
        %v7670 = vld [vmem:[#allocation21 + $0xc] sm:$0xf]
        %v7671 = vld [vmem:[#allocation21 + $0x10] sm:$0xf]
        %v7672 = vld [vmem:[#allocation21 + $0x14] sm:$0xf]
        %v7673 = vld [vmem:[#allocation21 + $0x18] sm:$0xf]
        %v7674 = vld [vmem:[#allocation21 + $0x1c] sm:$0xf]
        %v7675 = vld [vmem:[#allocation21 + $0x20] sm:$0xf]
        %v7676 = vld [vmem:[#allocation21 + $0x24] sm:$0xf]
        %v7677 = vld [vmem:[#allocation21 + $0x28] sm:$0xf]
        %v7678 = vld [vmem:[#allocation21 + $0x2c] sm:$0xf]
        %v7679 = vld [vmem:[#allocation21 + $0x30] sm:$0xf]
        %v7680 = vld [vmem:[#allocation21 + $0x34] sm:$0xf]
        %v7681 = vld [vmem:[#allocation21 + $0x38] sm:$0xf]
        %v7682 = vld [vmem:[#allocation21 + $0x3c] sm:$0xf]
        %v7683 = vld [vmem:[#allocation2 + $0x1] sm:$0x7]
        %v7684 = vpack.c.bf16 %v7683, %v7683
        %s7685 = scalar_lea.vmem [#allocation21], 64
        %v7686 = vld [vmem:[%s7685] sm:$0xf]
        %v7687 = vld [vmem:[%s7685 + $0x4] sm:$0xf]
        %v7688 = vld [vmem:[%s7685 + $0x8] sm:$0xf]
        %v7689 = vld [vmem:[%s7685 + $0xc] sm:$0xf]
        %v7690 = vld [vmem:[%s7685 + $0x10] sm:$0xf]
        %v7691 = vld [vmem:[%s7685 + $0x14] sm:$0xf]
        %v7692 = vld [vmem:[%s7685 + $0x18] sm:$0xf]
        %v7693 = vld [vmem:[%s7685 + $0x1c] sm:$0xf]
        %v7694 = vld [vmem:[%s7685 + $0x20] sm:$0xf]
        %v7695 = vld [vmem:[%s7685 + $0x24] sm:$0xf]
        %v7696 = vld [vmem:[%s7685 + $0x28] sm:$0xf]
        %v7697 = vld [vmem:[%s7685 + $0x2c] sm:$0xf]
        %v7698 = vld [vmem:[%s7685 + $0x30] sm:$0xf]
        %v7699 = vld [vmem:[%s7685 + $0x34] sm:$0xf]
        %v7700 = vld [vmem:[%s7685 + $0x38] sm:$0xf]
        %v7701 = vld [vmem:[%s7685 + $0x3c] sm:$0xf]
        %v7718 = vunpack.c.l.b16 %v7686
        %v7719 = vunpack.c.l.b16 %v7687
        %v7720 = vunpack.c.l.b16 %v7688
        %v7721 = vunpack.c.l.b16 %v7689
        %v7722 = vunpack.c.l.b16 %v7690
        %v7723 = vunpack.c.l.b16 %v7691
        %v7724 = vunpack.c.l.b16 %v7692
        %v7725 = vunpack.c.l.b16 %v7693
        %v7726 = vunpack.c.l.b16 %v7694
        %v7727 = vunpack.c.l.b16 %v7695
        %v7728 = vunpack.c.l.b16 %v7696
        %v7729 = vunpack.c.l.b16 %v7697
        %v7730 = vunpack.c.l.b16 %v7698
        %v7731 = vunpack.c.l.b16 %v7699
        %v7732 = vunpack.c.l.b16 %v7700
        %v7733 = vunpack.c.l.b16 %v7701
        %v7734 = vpack.c.b16 %v7719, %v7718
        %v7735 = vpack.c.b16 %v7721, %v7720
        %v7736 = vpack.c.b16 %v7723, %v7722
        %v7737 = vpack.c.b16 %v7725, %v7724
        %v7738 = vpack.c.b16 %v7727, %v7726
        %v7739 = vpack.c.b16 %v7729, %v7728
        %v7740 = vpack.c.b16 %v7731, %v7730
        %v7741 = vpack.c.b16 %v7733, %v7732
        %7750 = vmatpush.bf16.msra.mxu0 %v7741
        %7751 = vmatpush.bf16.msra.mxu0 %v7740
        %7752 = vmatpush.bf16.msra.mxu0 %v7739
        %7753 = vmatpush.bf16.msra.mxu0 %v7738
        %7754 = vmatpush.bf16.msra.mxu0 %v7737
        %7755 = vmatpush.bf16.msra.mxu0 %v7736
        %7756 = vmatpush.bf16.msra.mxu0 %v7735
        %7757 = vmatpush.bf16.msra.mxu0 %v7734
        %7758 = vmatmul.bf16.gmra.mxu0 %v7684
        %v7759 = vpop.f32.mrf.mxu0
        %v7760 = vadd.f32 0.0, %v7759
        %v7761 = vpop.f32.mrf.mxu0
        %7762 = vdwg.mxu0
        %v7779 = vunpack.c.l.b16 %v7667
        %v7780 = vunpack.c.l.b16 %v7668
        %v7781 = vunpack.c.l.b16 %v7669
        %v7782 = vunpack.c.l.b16 %v7670
        %v7783 = vunpack.c.l.b16 %v7671
        %v7784 = vunpack.c.l.b16 %v7672
        %v7785 = vunpack.c.l.b16 %v7673
        %v7786 = vunpack.c.l.b16 %v7674
        %v7787 = vunpack.c.l.b16 %v7675
        %v7788 = vunpack.c.l.b16 %v7676
        %v7789 = vunpack.c.l.b16 %v7677
        %v7790 = vunpack.c.l.b16 %v7678
        %v7791 = vunpack.c.l.b16 %v7679
        %v7792 = vunpack.c.l.b16 %v7680
        %v7793 = vunpack.c.l.b16 %v7681
        %v7794 = vunpack.c.l.b16 %v7682
        %v7795 = vpack.c.b16 %v7780, %v7779
        %v7796 = vpack.c.b16 %v7782, %v7781
        %v7797 = vpack.c.b16 %v7784, %v7783
        %v7798 = vpack.c.b16 %v7786, %v7785
        %v7799 = vpack.c.b16 %v7788, %v7787
        %v7800 = vpack.c.b16 %v7790, %v7789
        %v7801 = vpack.c.b16 %v7792, %v7791
        %v7802 = vpack.c.b16 %v7794, %v7793
        %7811 = vmatpush.bf16.msra.mxu0 %v7802
        %7812 = vmatpush.bf16.msra.mxu0 %v7801
        %7813 = vmatpush.bf16.msra.mxu0 %v7800
        %7814 = vmatpush.bf16.msra.mxu0 %v7799
        %7815 = vmatpush.bf16.msra.mxu0 %v7798
        %7816 = vmatpush.bf16.msra.mxu0 %v7797
        %7817 = vmatpush.bf16.msra.mxu0 %v7796
        %7818 = vmatpush.bf16.msra.mxu0 %v7795
        %7819 = vmatmul.bf16.gmra.mxu0 %v7666
        %v7820 = vpop.f32.mrf.mxu0
        %v7821 = vadd.f32 %v7760, %v7820
        %v7822 = vpop.f32.mrf.mxu0
        %7823 = vdwg.mxu0
        %v7824 = vld [vmem:[#allocation2 + $0x2] sm:$0x7]
        %v7825 = vpack.c.bf16 %v7824, %v7824
        %s7826 = scalar_lea.vmem [#allocation21], 128
        %v7827 = vld [vmem:[%s7826] sm:$0xf]
        %v7828 = vld [vmem:[%s7826 + $0x4] sm:$0xf]
        %v7829 = vld [vmem:[%s7826 + $0x8] sm:$0xf]
        %v7830 = vld [vmem:[%s7826 + $0xc] sm:$0xf]
        %v7831 = vld [vmem:[%s7826 + $0x10] sm:$0xf]
        %v7832 = vld [vmem:[%s7826 + $0x14] sm:$0xf]
        %v7833 = vld [vmem:[%s7826 + $0x18] sm:$0xf]
        %v7834 = vld [vmem:[%s7826 + $0x1c] sm:$0xf]
        %v7835 = vld [vmem:[%s7826 + $0x20] sm:$0xf]
        %v7836 = vld [vmem:[%s7826 + $0x24] sm:$0xf]
        %v7837 = vld [vmem:[%s7826 + $0x28] sm:$0xf]
        %v7838 = vld [vmem:[%s7826 + $0x2c] sm:$0xf]
        %v7839 = vld [vmem:[%s7826 + $0x30] sm:$0xf]
        %v7840 = vld [vmem:[%s7826 + $0x34] sm:$0xf]
        %v7841 = vld [vmem:[%s7826 + $0x38] sm:$0xf]
        %v7842 = vld [vmem:[%s7826 + $0x3c] sm:$0xf]
        %v7859 = vunpack.c.l.b16 %v7827
        %v7860 = vunpack.c.l.b16 %v7828
        %v7861 = vunpack.c.l.b16 %v7829
        %v7862 = vunpack.c.l.b16 %v7830
        %v7863 = vunpack.c.l.b16 %v7831
        %v7864 = vunpack.c.l.b16 %v7832
        %v7865 = vunpack.c.l.b16 %v7833
        %v7866 = vunpack.c.l.b16 %v7834
        %v7867 = vunpack.c.l.b16 %v7835
        %v7868 = vunpack.c.l.b16 %v7836
        %v7869 = vunpack.c.l.b16 %v7837
        %v7870 = vunpack.c.l.b16 %v7838
        %v7871 = vunpack.c.l.b16 %v7839
        %v7872 = vunpack.c.l.b16 %v7840
        %v7873 = vunpack.c.l.b16 %v7841
        %v7874 = vunpack.c.l.b16 %v7842
        %v7875 = vpack.c.b16 %v7860, %v7859
        %v7876 = vpack.c.b16 %v7862, %v7861
        %v7877 = vpack.c.b16 %v7864, %v7863
        %v7878 = vpack.c.b16 %v7866, %v7865
        %v7879 = vpack.c.b16 %v7868, %v7867
        %v7880 = vpack.c.b16 %v7870, %v7869
        %v7881 = vpack.c.b16 %v7872, %v7871
        %v7882 = vpack.c.b16 %v7874, %v7873
        %7891 = vmatpush.bf16.msra.mxu0 %v7882
        %7892 = vmatpush.bf16.msra.mxu0 %v7881
        %7893 = vmatpush.bf16.msra.mxu0 %v7880
        %7894 = vmatpush.bf16.msra.mxu0 %v7879
        %7895 = vmatpush.bf16.msra.mxu0 %v7878
        %7896 = vmatpush.bf16.msra.mxu0 %v7877
        %7897 = vmatpush.bf16.msra.mxu0 %v7876
        %7898 = vmatpush.bf16.msra.mxu0 %v7875
        %7899 = vmatmul.bf16.gmra.mxu0 %v7825
        %v7900 = vpop.f32.mrf.mxu0
        %v7901 = vadd.f32 0.0, %v7900
        %v7902 = vpop.f32.mrf.mxu0
        %7903 = vdwg.mxu0
        %v7904 = vadd.f32 %v7821, %v7901
        %v7905 = vld [vmem:[%s25] sm:$0x1]
        %v7906 = vld [vmem:[%s25 + $0x1] sm:$0x1]
        %v7907 = vperm.slane %v7905, 0
        %v7908 = vmul.f32 %v7904, %v7907
        %v7909 = vperm.slane %v7906, 0
        %v7910 = vadd.f32 %v7908, %v7909
        %v7911 = vmax.f32 %v7910, 0.0
        %7912 = vst [vmem:[#allocation3] sm:$0x7] %v7911
        %v7913 = vld [vmem:[#allocation3] ss:$3 sm:$0x1]
        %v7914 = vld [vmem:[%s3061] ss:$3 sm:$0x1]
        %v7915 = vld [vmem:[%s3069] ss:$3 sm:$0x1]
        %v7916 = vmax.f32 %v7913, %v7914
        %v7917 = vmax.f32 %v7916, %v7915
        %7918 = vst [vmem:[%s1009] sm:$0x1] %v7917
        %s7919 = sand.u32 %s611, 1
        %s7920 = scalar_lea.sflag [#allocation6], %s7919
        %s7921 = sand.u32 %s611, 1
        %s7922 = scalar_lea.vmem [#allocation25], %s7921
        // Predicated region
        $region177: #{tpu_custom_call.1} parent=123 // pred_check
          %p7923 = pneg %p621
        $region178: #{tpu_custom_call.1} parent=123 // pred_check_branch
          %7925 = sbr.rel (%p7923) target = $region180
        $region179: #{tpu_custom_call.1} parent=123 // pred_region
          %7927 = vsyncadd %s7920, 0
          %s7928 = scalar_lea.hbm %s26, %s47
          %s7930 = sshll.u32 %s7922, 4
          %s7931 = int_to_ptr.vmem [resolvable:$true] %s7930
          %s7932 = sshll.u32 %s7928, 4
          %s7933 = int_to_ptr.hbm [resolvable:$true] %s7932
          %7935 = dma.vmem_to_hbm [thread:$0]  %s7931, 16, %s7933, %s7920
        $region180: #{tpu_custom_call.1} parent=123 // pred_fallthru
          _
      $region124: #{tpu_custom_call.1} parent=5 // pred_fallthru
        _
      %p7936 = scmp.le.s32.totalorder 2, %s42
      // Predicated region
      $region181: #{tpu_custom_call.1} parent=5 // pred_check
        %p7937 = pneg %p7936
      $region182: #{tpu_custom_call.1} parent=5 // pred_check_branch
        %7939 = sbr.rel (%p7937) target = $region184
      $region183: #{tpu_custom_call.1} parent=5 // pred_region
        %s7940 = ssub.s32 %s42, 2
        // Predicated region
        $region185: #{tpu_custom_call.1} parent=183 // pred_check
          %p7941 = pneg %p627
        $region186: #{tpu_custom_call.1} parent=183 // pred_check_branch
          %7943 = sbr.rel (%p7941) target = $region188
        $region187: #{tpu_custom_call.1} parent=183 // pred_region
          %s7944 = sand.u32 %s612, 1
          %s7945 = scalar_lea.sflag [#allocation6], %s7944
          %s7946 = sand.u32 %s612, 1
          %s7947 = scalar_lea.vmem [#allocation25], %s7946
          %7949 = dma.done %s7945, 16
        $region188: #{tpu_custom_call.1} parent=183 // pred_fallthru
          _
      $region184: #{tpu_custom_call.1} parent=5 // pred_fallthru
        _
    $region6: #{tpu_custom_call.1} parent=1 // loop_footer
      %s46 = sadd.s32 1, %s42
    $region7: #{tpu_custom_call.1} parent=1 // loop_footer_branch
      %41 = sbr.rel target = $region3
    $region8: #{tpu_custom_call.1} parent=1 // loop_exit
      _
    %7950 = vsyncpa [#allocation5], 1
    %s7951 = scalar_lea.sflag [#allocation5], 1
    %7952 = vsyncpa %s7951, 1
    %7953 = vsyncpa [#allocation8], 1
    %7954 = vsyncpa [#allocation11], 1
    %7955 = vsyncpa [#allocation14], 1
    %7956 = vsyncpa [#allocation17], 1
    %7957 = vsyncpa [#allocation20], 1
    %7958 = vsyncpa [#allocation23], 1
    %7959 = vsyncpa [#allocation6], 1
    %s7960 = scalar_lea.sflag [#allocation6], 1
    %7961 = vsyncpa %s7960, 1

</llo_original>
